<compile_context>
chip_gen: v7x
topology: tpu7x:2x2x1
jax: 0.10.0
libtpu: 0.0.40
codegen_flags: <defaults>
</compile_context>

<pallas_src>
import numpy as np
import jax
import jax.numpy as jnp
from jax.experimental import pallas as pl
from jax.experimental.pallas import tpu as pltpu

# ----------------------- small hyper-parameters (consistent with SAINT.__init__) -------
CATEGORIES = (3, 4, 5)
NUM_CATEGORIES = len(CATEGORIES)               # 3
TOTAL_TOKENS = sum(CATEGORIES)                 # 12 (num_special_tokens = 0)
NUM_CONTINUOUS = 2
DIM = 32
DEPTH = 2
HEADS = 2
DIM_HEAD = 16
INNER = HEADS * DIM_HEAD                       # 32
NFEATS = NUM_CATEGORIES + NUM_CONTINUOUS       # 5
BATCH = 2
FF_MULT = 4
FF_HID = FF_MULT * DIM                         # 128
LN_EPS = 1e-5
SCALE = DIM_HEAD ** -0.5
MASK_NEG = -1e30
OUT_W = 128                                    # lane-dense output slab width
HEAD_HID = 128                                 # fused (mlp1 | mlp2) hidden, lane padded

# ------- packed-parameter slab layouts ---------------------------------------------
# per-layer "vector" slab rows (each row is a (1, 256) lane-padded bias/gain vector)
_VG1, _VB1, _VBO, _VG2, _VB2, _VBF1, _VBF2 = range(7)
VEC_ROWS = 8
VEC_W = 2 * FF_HID                             # 256
# fused head slab row offsets (all 8-sublane aligned)
HW1_OFF = 0                                    # rows [0, 32)   : fused first-layer weight
HW2_OFF = DIM                                  # rows [32, 160) : fused second-layer weight
HB1_OFF = HW2_OFF + HEAD_HID                   # row 160        : fused first-layer bias
HB2_OFF = 168                                  # row 168        : fused second-layer bias
HEAD_ROWS = 176


# ------------------------------------ shared math --------------------------------------
def _dot(a, b):
    """a @ b with f32 accumulation.  HIGHEST: Precision.HIGH is not supported by the
    Mosaic dot lowering and DEFAULT (1-pass bf16) would not hold the 2e-3 tolerance."""
    return jax.lax.dot_general(a, b, (((1,), (0,)), ((), ())),
                               precision=jax.lax.Precision.HIGHEST,
                               preferred_element_type=jnp.float32)


def _dot_t(a, b):
    """a @ b.T (contract last dims)."""
    return jax.lax.dot_general(a, b, (((1,), (1,)), ((), ())),
                               precision=jax.lax.Precision.HIGHEST,
                               preferred_element_type=jnp.float32)


def _layernorm(x, g, b):
    mu = jnp.mean(x, axis=-1, keepdims=True)
    xc = x - mu
    var = jnp.mean(xc * xc, axis=-1, keepdims=True)
    return xc * jax.lax.rsqrt(var + LN_EPS) * g + b


# ------------------------------------ fused Pallas kernel ------------------------------
def _saint_kernel(x_ref, wqkv_ref, wo_ref, wf1_ref, wf2_ref, vec_ref, head_ref, o_ref):
    x = x_ref[...]                                     # (BFP, DIM), rows padded to 16
    n = x.shape[0]

    # Block-diagonal (per-batch-row) attention bias, built in-kernel.
    # row block id = floor(row / NFEATS); float path avoids vector integer division.
    ri = jax.lax.broadcasted_iota(jnp.int32, (n, n), 0).astype(jnp.float32)
    ci = jax.lax.broadcasted_iota(jnp.int32, (n, n), 1).astype(jnp.float32)
    rb = jnp.floor(ri * (1.0 / NFEATS))
    cb = jnp.floor(ci * (1.0 / NFEATS))
    attn_bias = jnp.where(rb == cb, jnp.float32(0.0), jnp.float32(MASK_NEG))

    for l in range(DEPTH):
        vec = vec_ref[l]                               # (8, 256) per-layer vectors
        g1 = vec[_VG1:_VG1 + 1, :DIM]
        b1 = vec[_VB1:_VB1 + 1, :DIM]
        bo = vec[_VBO:_VBO + 1, :DIM]
        g2 = vec[_VG2:_VG2 + 1, :DIM]
        b2 = vec[_VB2:_VB2 + 1, :DIM]
        bf1 = vec[_VBF1:_VBF1 + 1, :]                  # (1, 256)
        bf2 = vec[_VBF2:_VBF2 + 1, :DIM]

        # --- PreNorm(dim, Residual(Attention)) -> Attn(LN(x)) + LN(x) ---
        xn = _layernorm(x, g1, b1)
        qkv = _dot(xn, wqkv_ref[l])                    # ONE fused (BFP, 96) QKV matmul
        wo = wo_ref[l]                                 # (INNER, DIM)
        o = None
        for h in range(HEADS):
            qh = qkv[:, h * DIM_HEAD:(h + 1) * DIM_HEAD]
            kh = qkv[:, INNER + h * DIM_HEAD:INNER + (h + 1) * DIM_HEAD]
            vh = qkv[:, 2 * INNER + h * DIM_HEAD:2 * INNER + (h + 1) * DIM_HEAD]
            s = _dot_t(qh, kh) * SCALE + attn_bias     # block-diagonal over batch
            s = s - jnp.max(s, axis=-1, keepdims=True)
            e = jnp.exp(s)
            a = e * pl.reciprocal(jnp.sum(e, axis=-1, keepdims=True), approx=True)
            hv = _dot(a, vh)                           # (BFP, DIM_HEAD)
            c = _dot(hv, wo[h * DIM_HEAD:(h + 1) * DIM_HEAD, :])  # Wo row-split
            o = c if o is None else o + c              # sum heads; no concatenate
        x1 = o + bo + xn

        # --- PreNorm(dim, Residual(GEGLU FeedForward)) -> FF(LN(x1)) + LN(x1) ---
        xn2 = _layernorm(x1, g2, b2)
        ff1 = _dot(xn2, wf1_ref[l]) + bf1              # ONE fused (BFP, 256) FF1 matmul
        hg = ff1[:, :FF_HID] * jax.nn.gelu(ff1[:, FF_HID:], approximate=True)
        x = _dot(hg, wf2_ref[l]) + bf2 + xn2

    # --- fused (mlp1 | mlp2) heads: lane-dense block-diagonal matmuls over all rows ---
    hw1 = head_ref[HW1_OFF:HW1_OFF + DIM, :]           # (32, 128)
    hw2 = head_ref[HW2_OFF:HW2_OFF + HEAD_HID, :]      # (128, 128)
    hb1 = head_ref[HB1_OFF:HB1_OFF + 1, :]             # (1, 128)
    hb2 = head_ref[HB2_OFF:HB2_OFF + 1, :]             # (1, 128)
    h = jnp.maximum(_dot(x, hw1) + hb1, 0.0)
    o_ref[...] = _dot(h, hw2) + hb2                    # single unmasked (BFP, 128) store


def _full_spec(a):
    zeros = (0,) * a.ndim
    return pl.BlockSpec(tuple(a.shape), lambda i, z=zeros: z)


def saint_forward(x_categ_enc, x_cont_enc, packed):
    """SAINT.forward: x = transformer(x_categ, x_cont); mlp1/mlp2 on cat/cont slices."""
    B = x_categ_enc.shape[0]
    bf = B * NFEATS
    bfp = ((bf + 7) // 8) * 8                          # pad rows to a sublane multiple

    # wrapper-side concat + pad (free layout plumbing; no in-kernel masked row copies)
    x = jnp.concatenate([x_categ_enc, x_cont_enc], axis=1).reshape(bf, DIM)
    x = jnp.pad(x, ((0, bfp - bf), (0, 0)))

    in_arrays = [x, packed["wqkv"], packed["wo"], packed["wf1"], packed["wf2"],
                 packed["vec"], packed["head"]]

    flops_layer = (2 * bfp * DIM * (3 * INNER)                  # fused QKV
                   + HEADS * (4 * bfp * bfp * DIM_HEAD          # scores + attn@v
                              + 2 * bfp * DIM_HEAD * DIM)       # Wo row-split
                   + 2 * bfp * DIM * (2 * FF_HID)               # fused FF1 (GEGLU)
                   + 2 * bfp * FF_HID * DIM)                    # FF2
    flops = (DEPTH * flops_layer
             + 2 * bfp * DIM * HEAD_HID + 2 * bfp * HEAD_HID * OUT_W)
    transcendentals = DEPTH * (HEADS * bfp * bfp + bfp * FF_HID)
    bytes_accessed = 4 * (sum(int(np.prod(a.shape)) for a in in_arrays) + bfp * OUT_W)

    out = pl.pallas_call(
        _saint_kernel,
        grid=(1,),
        in_specs=[_full_spec(a) for a in in_arrays],
        out_specs=pl.BlockSpec((bfp, OUT_W), lambda i: (0, 0)),
        out_shape=jax.ShapeDtypeStruct((bfp, OUT_W), jnp.float32),
        compiler_params=pltpu.CompilerParams(dimension_semantics=("arbitrary",)),
        cost_estimate=pl.CostEstimate(flops=flops, transcendentals=transcendentals,
                                      bytes_accessed=bytes_accessed),
    )(*in_arrays)

    out3 = out[:bf].reshape(B, NFEATS, OUT_W)
    cat_outs = out3[:, :NUM_CATEGORIES, :TOTAL_TOKENS]
    con_outs = out3[:, NUM_CATEGORIES:, TOTAL_TOKENS:TOTAL_TOKENS + 1]
    return cat_outs, con_outs


# --------------------- parameter packing (PyTorch layout -> kernel slabs) --------------
def pack_params(params):
    L = params["layers"]

    wqkv = jnp.stack([lp["wqkv"] for lp in L])          # (DEPTH, DIM, 3*INNER)
    wo = jnp.stack([lp["wo"] for lp in L])              # (DEPTH, INNER, DIM)
    wf1 = jnp.stack([lp["wf1"] for lp in L])            # (DEPTH, DIM, 2*FF_HID)
    wf2 = jnp.stack([lp["wf2"] for lp in L])            # (DEPTH, FF_HID, DIM)

    # per-layer vector slab: one (8, 256) block per layer
    vec = np.zeros((DEPTH, VEC_ROWS, VEC_W), np.float32)
    for l, lp in enumerate(L):
        vec[l, _VG1, :DIM] = np.asarray(lp["g1"]).reshape(-1)
        vec[l, _VB1, :DIM] = np.asarray(lp["b1"]).reshape(-1)
        vec[l, _VBO, :DIM] = np.asarray(lp["bo"]).reshape(-1)
        vec[l, _VG2, :DIM] = np.asarray(lp["g2"]).reshape(-1)
        vec[l, _VB2, :DIM] = np.asarray(lp["b2"]).reshape(-1)
        vec[l, _VBF1, :2 * FF_HID] = np.asarray(lp["bf1"]).reshape(-1)
        vec[l, _VBF2, :DIM] = np.asarray(lp["bf2"]).reshape(-1)

    # fused head slab: mlp1 and mlp2 packed block-diagonally into lane-dense weights
    m1, m2 = params["mlp1"], params["mlp2"]
    h1w = 2 * TOTAL_TOKENS                               # mlp1 hidden width (24)
    head = np.zeros((HEAD_ROWS, OUT_W), np.float32)
    head[HW1_OFF:HW1_OFF + DIM, 0:h1w] = np.asarray(m1["w1"])
    head[HW1_OFF:HW1_OFF + DIM, h1w:h1w + NUM_CONTINUOUS] = np.asarray(m2["w1"])
    head[HW2_OFF:HW2_OFF + h1w, 0:TOTAL_TOKENS] = np.asarray(m1["w2"])
    head[HW2_OFF + h1w:HW2_OFF + h1w + NUM_CONTINUOUS,
         TOTAL_TOKENS:TOTAL_TOKENS + 1] = np.asarray(m2["w2"])
    head[HB1_OFF, 0:h1w] = np.asarray(m1["b1"]).reshape(-1)
    head[HB1_OFF, h1w:h1w + NUM_CONTINUOUS] = np.asarray(m2["b1"]).reshape(-1)
    head[HB2_OFF, 0:TOTAL_TOKENS] = np.asarray(m1["b2"]).reshape(-1)
    head[HB2_OFF, TOTAL_TOKENS:TOTAL_TOKENS + 1] = np.asarray(m2["b2"]).reshape(-1)

    return dict(wqkv=wqkv, wo=wo, wf1=wf1, wf2=wf2,
                vec=jnp.asarray(vec), head=jnp.asarray(head))


# ------------------------------- pure-JAX reference (PyTorch layout) --------------------
def _transformer_layer_math(x, p):
    """One SAINT 'col' transformer block for a single batch row. x: (nfeats, dim)."""
    xn = _layernorm(x, p["g1"], p["b1"])
    qkv = _dot(xn, p["wqkv"])                              # (n, 3*inner), no bias
    q, k, v = qkv[:, :INNER], qkv[:, INNER:2 * INNER], qkv[:, 2 * INNER:]
    heads_out = []
    for h in range(HEADS):
        sl = slice(h * DIM_HEAD, (h + 1) * DIM_HEAD)
        qh, kh, vh = q[:, sl], k[:, sl], v[:, sl]
        s = _dot_t(qh, kh) * SCALE
        s = s - jnp.max(s, axis=-1, keepdims=True)
        e = jnp.exp(s)
        attn = e / jnp.sum(e, axis=-1, keepdims=True)
        heads_out.append(_dot(attn, vh))
    o = jnp.concatenate(heads_out, axis=-1)
    o = _dot(o, p["wo"]) + p["bo"]
    x1 = o + xn
    xn2 = _layernorm(x1, p["g2"], p["b2"])
    h1 = _dot(xn2, p["wf1"]) + p["bf1"]
    a, gates = h1[:, :FF_HID], h1[:, FF_HID:]
    hg = a * jax.nn.gelu(gates, approximate=True)
    ff = _dot(hg, p["wf2"]) + p["bf2"]
    return ff + xn2


def _simple_mlp_math(x, p):
    h = jnp.maximum(_dot(x, p["w1"]) + p["b1"], 0.0)
    return _dot(h, p["w2"]) + p["b2"]


def saint_forward_ref(x_categ_enc, x_cont_enc, params):
    x = jnp.concatenate([x_categ_enc, x_cont_enc], axis=1)
    B = x.shape[0]
    for lp in params["layers"]:
        x = jnp.stack([_transformer_layer_math(x[b], lp) for b in range(B)])
    cat = jnp.stack([_simple_mlp_math(x[b, :NUM_CATEGORIES], params["mlp1"]) for b in range(B)])
    con = jnp.stack([_simple_mlp_math(x[b, NUM_CATEGORIES:], params["mlp2"]) for b in range(B)])
    return cat, con


# --------------------------------- parameter init --------------------------------------
def _linear(key, fan_in, fan_out, bias=True):
    kw, kb = jax.random.split(key)
    bound = 1.0 / float(np.sqrt(fan_in))
    w = jax.random.uniform(kw, (fan_in, fan_out), jnp.float32, -bound, bound)
    if not bias:
        return w, None
    b = jax.random.uniform(kb, (1, fan_out), jnp.float32, -bound, bound)
    return w, b


def init_params(key):
    params = {"layers": []}
    for _ in range(DEPTH):
        key, k1, k2, k3, k4 = jax.random.split(key, 5)
        wqkv, _ = _linear(k1, DIM, 3 * INNER, bias=False)
        wo, bo = _linear(k2, INNER, DIM)
        wf1, bf1 = _linear(k3, DIM, 2 * FF_HID)
        wf2, bf2 = _linear(k4, FF_HID, DIM)
        params["layers"].append(dict(
            g1=jnp.ones((1, DIM), jnp.float32), b1=jnp.zeros((1, DIM), jnp.float32),
            wqkv=wqkv, wo=wo, bo=bo,
            g2=jnp.ones((1, DIM), jnp.float32), b2=jnp.zeros((1, DIM), jnp.float32),
            wf1=wf1, bf1=bf1, wf2=wf2, bf2=bf2))
    key, k1, k2, k3, k4 = jax.random.split(key, 5)
    w1, b1 = _linear(k1, DIM, 2 * TOTAL_TOKENS)
    w2, b2 = _linear(k2, 2 * TOTAL_TOKENS, TOTAL_TOKENS)
    params["mlp1"] = dict(w1=w1, b1=b1, w2=w2, b2=b2)        # simple_MLP([dim, 2*T, T])
    w1, b1 = _linear(k3, DIM, NUM_CONTINUOUS)
    w2, b2 = _linear(k4, NUM_CONTINUOUS, 1)
    params["mlp2"] = dict(w1=w1, b1=b1, w2=w2, b2=b2)        # simple_MLP([dim, n_cont, 1])
    return params


# --------------------------------------- main ------------------------------------------
if __name__ == "__main__":
    key = jax.random.PRNGKey(0)
    kp, kc, kn = jax.random.split(key, 3)
    params = init_params(kp)
    packed = pack_params(params)

    x_categ_enc = jax.random.normal(kc, (BATCH, NUM_CATEGORIES, DIM), jnp.float32)
    x_cont_enc = jax.random.normal(kn, (BATCH, NUM_CONTINUOUS, DIM), jnp.float32)

    fwd = jax.jit(saint_forward)
    cat_outs, con_outs = fwd(x_categ_enc, x_cont_enc, packed)
    jax.block_until_ready((cat_outs, con_outs))

    assert cat_outs.shape == (BATCH, NUM_CATEGORIES, TOTAL_TOKENS)
    assert con_outs.shape == (BATCH, NUM_CONTINUOUS, 1)

    cat_ref, con_ref = saint_forward_ref(x_categ_enc, x_cont_enc, params)
    np.testing.assert_allclose(np.asarray(cat_outs), np.asarray(cat_ref), rtol=2e-3, atol=2e-3)
    np.testing.assert_allclose(np.asarray(con_outs), np.asarray(con_ref), rtol=2e-3, atol=2e-3)

    print("KERNEL_OK")
</pallas_src>

<mosaic_0001>
module attributes {stable_mosaic.version = 11 : i64} {
  func.func @_saint_kernel(%arg0: i32, %arg1: memref<16x32xf32, #tpu.memory_space<vmem>>, %arg2: memref<2x32x96xf32, #tpu.memory_space<vmem>>, %arg3: memref<2x32x32xf32, #tpu.memory_space<vmem>>, %arg4: memref<2x32x256xf32, #tpu.memory_space<vmem>>, %arg5: memref<2x128x32xf32, #tpu.memory_space<vmem>>, %arg6: memref<2x8x256xf32, #tpu.memory_space<vmem>>, %arg7: memref<176x128xf32, #tpu.memory_space<vmem>>, %arg8: memref<16x128xf32, #tpu.memory_space<vmem>>) attributes {dimension_semantics = [#tpu.dimension_semantics<arbitrary>], iteration_bounds = array<i64: 1>, scalar_prefetch = 0 : i64, scratch_operands = 0 : i64, tpu.core_type = #tpu.core_type<tc>, window_params = [{pipeline_mode = #tpu.pipeline_mode<synchronous>, transform_indices = @transform_0, window_bounds = array<i64: 16, 32>}, {pipeline_mode = #tpu.pipeline_mode<synchronous>, transform_indices = @transform_1, window_bounds = array<i64: 2, 32, 96>}, {pipeline_mode = #tpu.pipeline_mode<synchronous>, transform_indices = @transform_2, window_bounds = array<i64: 2, 32, 32>}, {pipeline_mode = #tpu.pipeline_mode<synchronous>, transform_indices = @transform_3, window_bounds = array<i64: 2, 32, 256>}, {pipeline_mode = #tpu.pipeline_mode<synchronous>, transform_indices = @transform_4, window_bounds = array<i64: 2, 128, 32>}, {pipeline_mode = #tpu.pipeline_mode<synchronous>, transform_indices = @transform_5, window_bounds = array<i64: 2, 8, 256>}, {pipeline_mode = #tpu.pipeline_mode<synchronous>, transform_indices = @transform_6, window_bounds = array<i64: 176, 128>}, {pipeline_mode = #tpu.pipeline_mode<synchronous>, transform_indices = @transform_7, window_bounds = array<i64: 16, 128>}]} {
    %c0 = arith.constant 0 : index
    %c0_0 = arith.constant 0 : index
    %0 = vector.load %arg1[%c0, %c0_0] : memref<16x32xf32, #tpu.memory_space<vmem>>, vector<16x32xf32>
    %1 = tpu.iota {dimensions = array<i32: 0>} : vector<16x16xi32>
    %2 = arith.sitofp %1 : vector<16x16xi32> to vector<16x16xf32>
    %3 = tpu.iota {dimensions = array<i32: 1>} : vector<16x16xi32>
    %4 = arith.sitofp %3 : vector<16x16xi32> to vector<16x16xf32>
    %cst = arith.constant 2.000000e-01 : f32
    %5 = vector.broadcast %cst : f32 to vector<16x16xf32>
    %6 = arith.mulf %2, %5 : vector<16x16xf32>
    %7 = math.floor %6 : vector<16x16xf32>
    %cst_1 = arith.constant 2.000000e-01 : f32
    %8 = vector.broadcast %cst_1 : f32 to vector<16x16xf32>
    %9 = arith.mulf %4, %8 : vector<16x16xf32>
    %10 = math.floor %9 : vector<16x16xf32>
    %11 = arith.cmpf oeq, %7, %10 : vector<16x16xf32>
    %cst_2 = arith.constant 0.000000e+00 : f32
    %cst_3 = arith.constant -1.000000e+30 : f32
    %12 = vector.broadcast %cst_2 : f32 to vector<16x16xf32>
    %13 = vector.broadcast %cst_3 : f32 to vector<16x16xf32>
    %14 = arith.select %11, %12, %13 : vector<16x16xi1>, vector<16x16xf32>
    %c0_4 = arith.constant 0 : index
    %c0_5 = arith.constant 0 : index
    %c0_6 = arith.constant 0 : index
    %15 = vector.load %arg6[%c0_4, %c0_5, %c0_6] : memref<2x8x256xf32, #tpu.memory_space<vmem>>, vector<1x8x256xf32>
    %16 = vector.shape_cast %15 : vector<1x8x256xf32> to vector<8x256xf32>
    %17 = vector.extract_strided_slice %16 {offsets = [0, 0], sizes = [1, 32], strides = [1, 1]} : vector<8x256xf32> to vector<1x32xf32>
    %18 = vector.extract_strided_slice %16 {offsets = [1, 0], sizes = [1, 32], strides = [1, 1]} : vector<8x256xf32> to vector<1x32xf32>
    %19 = vector.extract_strided_slice %16 {offsets = [2, 0], sizes = [1, 32], strides = [1, 1]} : vector<8x256xf32> to vector<1x32xf32>
    %20 = vector.extract_strided_slice %16 {offsets = [3, 0], sizes = [1, 32], strides = [1, 1]} : vector<8x256xf32> to vector<1x32xf32>
    %21 = vector.extract_strided_slice %16 {offsets = [4, 0], sizes = [1, 32], strides = [1, 1]} : vector<8x256xf32> to vector<1x32xf32>
    %22 = vector.extract_strided_slice %16 {offsets = [5, 0], sizes = [1, 256], strides = [1, 1]} : vector<8x256xf32> to vector<1x256xf32>
    %23 = vector.extract_strided_slice %16 {offsets = [6, 0], sizes = [1, 32], strides = [1, 1]} : vector<8x256xf32> to vector<1x32xf32>
    %cst_7 = arith.constant dense<0.000000e+00> : vector<16xf32>
    %24 = vector.multi_reduction <add>, %0, %cst_7 [1] : vector<16x32xf32> to vector<16xf32>
    %25 = vector.shape_cast %24 : vector<16xf32> to vector<16x1xf32>
    %cst_8 = arith.constant 3.200000e+01 : f32
    %26 = vector.broadcast %cst_8 : f32 to vector<16x1xf32>
    %27 = arith.divf %25, %26 : vector<16x1xf32>
    %28 = vector.broadcast %27 : vector<16x1xf32> to vector<16x32xf32>
    %29 = arith.subf %0, %28 : vector<16x32xf32>
    %30 = arith.mulf %29, %29 : vector<16x32xf32>
    %cst_9 = arith.constant dense<0.000000e+00> : vector<16xf32>
    %31 = vector.multi_reduction <add>, %30, %cst_9 [1] : vector<16x32xf32> to vector<16xf32>
    %32 = vector.shape_cast %31 : vector<16xf32> to vector<16x1xf32>
    %cst_10 = arith.constant 3.200000e+01 : f32
    %33 = vector.broadcast %cst_10 : f32 to vector<16x1xf32>
    %34 = arith.divf %32, %33 : vector<16x1xf32>
    %cst_11 = arith.constant 9.99999974E-6 : f32
    %35 = vector.broadcast %cst_11 : f32 to vector<16x1xf32>
    %36 = arith.addf %34, %35 : vector<16x1xf32>
    %37 = math.rsqrt %36 : vector<16x1xf32>
    %38 = vector.broadcast %37 : vector<16x1xf32> to vector<16x32xf32>
    %39 = arith.mulf %29, %38 : vector<16x32xf32>
    %40 = vector.broadcast %17 : vector<1x32xf32> to vector<16x32xf32>
    %41 = arith.mulf %39, %40 : vector<16x32xf32>
    %42 = vector.broadcast %18 : vector<1x32xf32> to vector<16x32xf32>
    %43 = arith.addf %41, %42 : vector<16x32xf32>
    %c0_12 = arith.constant 0 : index
    %c0_13 = arith.constant 0 : index
    %c0_14 = arith.constant 0 : index
    %44 = vector.load %arg2[%c0_12, %c0_13, %c0_14] : memref<2x32x96xf32, #tpu.memory_space<vmem>>, vector<1x32x96xf32>
    %45 = vector.shape_cast %44 : vector<1x32x96xf32> to vector<32x96xf32>
    %cst_15 = arith.constant dense<0.000000e+00> : vector<16x96xf32>
    %46 = tpu.matmul %43, %45, %cst_15 {dimension_numbers = #tpu.dot_dimension_numbers<[1], [0], [0], [1], [0, 0, 1, 1], [], []>, precision = #tpu.contract_precision<fp32>} : vector<16x32xf32>, vector<32x96xf32>, vector<16x96xf32> -> vector<16x96xf32>
    %c0_16 = arith.constant 0 : index
    %c0_17 = arith.constant 0 : index
    %c0_18 = arith.constant 0 : index
    %47 = vector.load %arg3[%c0_16, %c0_17, %c0_18] : memref<2x32x32xf32, #tpu.memory_space<vmem>>, vector<1x32x32xf32>
    %48 = vector.shape_cast %47 : vector<1x32x32xf32> to vector<32x32xf32>
    %49 = vector.extract_strided_slice %46 {offsets = [0, 0], sizes = [16, 16], strides = [1, 1]} : vector<16x96xf32> to vector<16x16xf32>
    %50 = vector.extract_strided_slice %46 {offsets = [0, 32], sizes = [16, 16], strides = [1, 1]} : vector<16x96xf32> to vector<16x16xf32>
    %51 = vector.extract_strided_slice %46 {offsets = [0, 64], sizes = [16, 16], strides = [1, 1]} : vector<16x96xf32> to vector<16x16xf32>
    %cst_19 = arith.constant dense<0.000000e+00> : vector<16x16xf32>
    %52 = tpu.matmul %49, %50, %cst_19 {dimension_numbers = #tpu.dot_dimension_numbers<[1], [1], [0], [0], [0, 0, 1, 0], [], []>, precision = #tpu.contract_precision<fp32>} : vector<16x16xf32>, vector<16x16xf32>, vector<16x16xf32> -> vector<16x16xf32>
    %cst_20 = arith.constant 2.500000e-01 : f32
    %53 = vector.broadcast %cst_20 : f32 to vector<16x16xf32>
    %54 = arith.mulf %52, %53 : vector<16x16xf32>
    %55 = arith.addf %54, %14 : vector<16x16xf32>
    %cst_21 = arith.constant dense<0xFF800000> : vector<16xf32>
    %56 = vector.multi_reduction <maximumf>, %55, %cst_21 [1] : vector<16x16xf32> to vector<16xf32>
    %57 = vector.shape_cast %56 : vector<16xf32> to vector<16x1xf32>
    %58 = vector.broadcast %57 : vector<16x1xf32> to vector<16x16xf32>
    %59 = arith.subf %55, %58 : vector<16x16xf32>
    %60 = math.exp %59 : vector<16x16xf32>
    %cst_22 = arith.constant dense<0.000000e+00> : vector<16xf32>
    %61 = vector.multi_reduction <add>, %60, %cst_22 [1] : vector<16x16xf32> to vector<16xf32>
    %62 = vector.shape_cast %61 : vector<16xf32> to vector<16x1xf32>
    %63 = tpu.reciprocal %62 {approx = true} : vector<16x1xf32> -> vector<16x1xf32>
    %64 = vector.broadcast %63 : vector<16x1xf32> to vector<16x16xf32>
    %65 = arith.mulf %60, %64 : vector<16x16xf32>
    %cst_23 = arith.constant dense<0.000000e+00> : vector<16x16xf32>
    %66 = tpu.matmul %65, %51, %cst_23 {dimension_numbers = #tpu.dot_dimension_numbers<[1], [0], [0], [1], [0, 0, 1, 1], [], []>, precision = #tpu.contract_precision<fp32>} : vector<16x16xf32>, vector<16x16xf32>, vector<16x16xf32> -> vector<16x16xf32>
    %67 = vector.extract_strided_slice %48 {offsets = [0, 0], sizes = [16, 32], strides = [1, 1]} : vector<32x32xf32> to vector<16x32xf32>
    %cst_24 = arith.constant dense<0.000000e+00> : vector<16x32xf32>
    %68 = tpu.matmul %66, %67, %cst_24 {dimension_numbers = #tpu.dot_dimension_numbers<[1], [0], [0], [1], [0, 0, 1, 1], [], []>, precision = #tpu.contract_precision<fp32>} : vector<16x16xf32>, vector<16x32xf32>, vector<16x32xf32> -> vector<16x32xf32>
    %69 = vector.extract_strided_slice %46 {offsets = [0, 16], sizes = [16, 16], strides = [1, 1]} : vector<16x96xf32> to vector<16x16xf32>
    %70 = vector.extract_strided_slice %46 {offsets = [0, 48], sizes = [16, 16], strides = [1, 1]} : vector<16x96xf32> to vector<16x16xf32>
    %71 = vector.extract_strided_slice %46 {offsets = [0, 80], sizes = [16, 16], strides = [1, 1]} : vector<16x96xf32> to vector<16x16xf32>
    %cst_25 = arith.constant dense<0.000000e+00> : vector<16x16xf32>
    %72 = tpu.matmul %69, %70, %cst_25 {dimension_numbers = #tpu.dot_dimension_numbers<[1], [1], [0], [0], [0, 0, 1, 0], [], []>, precision = #tpu.contract_precision<fp32>} : vector<16x16xf32>, vector<16x16xf32>, vector<16x16xf32> -> vector<16x16xf32>
    %cst_26 = arith.constant 2.500000e-01 : f32
    %73 = vector.broadcast %cst_26 : f32 to vector<16x16xf32>
    %74 = arith.mulf %72, %73 : vector<16x16xf32>
    %75 = arith.addf %74, %14 : vector<16x16xf32>
    %cst_27 = arith.constant dense<0xFF800000> : vector<16xf32>
    %76 = vector.multi_reduction <maximumf>, %75, %cst_27 [1] : vector<16x16xf32> to vector<16xf32>
    %77 = vector.shape_cast %76 : vector<16xf32> to vector<16x1xf32>
    %78 = vector.broadcast %77 : vector<16x1xf32> to vector<16x16xf32>
    %79 = arith.subf %75, %78 : vector<16x16xf32>
    %80 = math.exp %79 : vector<16x16xf32>
    %cst_28 = arith.constant dense<0.000000e+00> : vector<16xf32>
    %81 = vector.multi_reduction <add>, %80, %cst_28 [1] : vector<16x16xf32> to vector<16xf32>
    %82 = vector.shape_cast %81 : vector<16xf32> to vector<16x1xf32>
    %83 = tpu.reciprocal %82 {approx = true} : vector<16x1xf32> -> vector<16x1xf32>
    %84 = vector.broadcast %83 : vector<16x1xf32> to vector<16x16xf32>
    %85 = arith.mulf %80, %84 : vector<16x16xf32>
    %cst_29 = arith.constant dense<0.000000e+00> : vector<16x16xf32>
    %86 = tpu.matmul %85, %71, %cst_29 {dimension_numbers = #tpu.dot_dimension_numbers<[1], [0], [0], [1], [0, 0, 1, 1], [], []>, precision = #tpu.contract_precision<fp32>} : vector<16x16xf32>, vector<16x16xf32>, vector<16x16xf32> -> vector<16x16xf32>
    %87 = vector.extract_strided_slice %48 {offsets = [16, 0], sizes = [16, 32], strides = [1, 1]} : vector<32x32xf32> to vector<16x32xf32>
    %cst_30 = arith.constant dense<0.000000e+00> : vector<16x32xf32>
    %88 = tpu.matmul %86, %87, %cst_30 {dimension_numbers = #tpu.dot_dimension_numbers<[1], [0], [0], [1], [0, 0, 1, 1], [], []>, precision = #tpu.contract_precision<fp32>} : vector<16x16xf32>, vector<16x32xf32>, vector<16x32xf32> -> vector<16x32xf32>
    %89 = arith.addf %68, %88 : vector<16x32xf32>
    %90 = vector.broadcast %19 : vector<1x32xf32> to vector<16x32xf32>
    %91 = arith.addf %89, %90 : vector<16x32xf32>
    %92 = arith.addf %91, %43 : vector<16x32xf32>
    %cst_31 = arith.constant dense<0.000000e+00> : vector<16xf32>
    %93 = vector.multi_reduction <add>, %92, %cst_31 [1] : vector<16x32xf32> to vector<16xf32>
    %94 = vector.shape_cast %93 : vector<16xf32> to vector<16x1xf32>
    %cst_32 = arith.constant 3.200000e+01 : f32
    %95 = vector.broadcast %cst_32 : f32 to vector<16x1xf32>
    %96 = arith.divf %94, %95 : vector<16x1xf32>
    %97 = vector.broadcast %96 : vector<16x1xf32> to vector<16x32xf32>
    %98 = arith.subf %92, %97 : vector<16x32xf32>
    %99 = arith.mulf %98, %98 : vector<16x32xf32>
    %cst_33 = arith.constant dense<0.000000e+00> : vector<16xf32>
    %100 = vector.multi_reduction <add>, %99, %cst_33 [1] : vector<16x32xf32> to vector<16xf32>
    %101 = vector.shape_cast %100 : vector<16xf32> to vector<16x1xf32>
    %cst_34 = arith.constant 3.200000e+01 : f32
    %102 = vector.broadcast %cst_34 : f32 to vector<16x1xf32>
    %103 = arith.divf %101, %102 : vector<16x1xf32>
    %cst_35 = arith.constant 9.99999974E-6 : f32
    %104 = vector.broadcast %cst_35 : f32 to vector<16x1xf32>
    %105 = arith.addf %103, %104 : vector<16x1xf32>
    %106 = math.rsqrt %105 : vector<16x1xf32>
    %107 = vector.broadcast %106 : vector<16x1xf32> to vector<16x32xf32>
    %108 = arith.mulf %98, %107 : vector<16x32xf32>
    %109 = vector.broadcast %20 : vector<1x32xf32> to vector<16x32xf32>
    %110 = arith.mulf %108, %109 : vector<16x32xf32>
    %111 = vector.broadcast %21 : vector<1x32xf32> to vector<16x32xf32>
    %112 = arith.addf %110, %111 : vector<16x32xf32>
    %c0_36 = arith.constant 0 : index
    %c0_37 = arith.constant 0 : index
    %c0_38 = arith.constant 0 : index
    %113 = vector.load %arg4[%c0_36, %c0_37, %c0_38] : memref<2x32x256xf32, #tpu.memory_space<vmem>>, vector<1x32x256xf32>
    %114 = vector.shape_cast %113 : vector<1x32x256xf32> to vector<32x256xf32>
    %cst_39 = arith.constant dense<0.000000e+00> : vector<16x256xf32>
    %115 = tpu.matmul %112, %114, %cst_39 {dimension_numbers = #tpu.dot_dimension_numbers<[1], [0], [0], [1], [0, 0, 1, 1], [], []>, precision = #tpu.contract_precision<fp32>} : vector<16x32xf32>, vector<32x256xf32>, vector<16x256xf32> -> vector<16x256xf32>
    %116 = vector.broadcast %22 : vector<1x256xf32> to vector<16x256xf32>
    %117 = arith.addf %115, %116 : vector<16x256xf32>
    %118 = vector.extract_strided_slice %117 {offsets = [0, 0], sizes = [16, 128], strides = [1, 1]} : vector<16x256xf32> to vector<16x128xf32>
    %119 = vector.extract_strided_slice %117 {offsets = [0, 128], sizes = [16, 128], strides = [1, 1]} : vector<16x256xf32> to vector<16x128xf32>
    %120 = arith.mulf %119, %119 : vector<16x128xf32>
    %121 = arith.mulf %119, %120 : vector<16x128xf32>
    %cst_40 = arith.constant 4.471500e-02 : f32
    %122 = vector.broadcast %cst_40 : f32 to vector<16x128xf32>
    %123 = arith.mulf %122, %121 : vector<16x128xf32>
    %124 = arith.addf %119, %123 : vector<16x128xf32>
    %cst_41 = arith.constant 0.797884583 : f32
    %125 = vector.broadcast %cst_41 : f32 to vector<16x128xf32>
    %126 = arith.mulf %125, %124 : vector<16x128xf32>
    %127 = math.tanh %126 : vector<16x128xf32>
    %cst_42 = arith.constant 1.000000e+00 : f32
    %128 = vector.broadcast %cst_42 : f32 to vector<16x128xf32>
    %129 = arith.addf %128, %127 : vector<16x128xf32>
    %cst_43 = arith.constant 5.000000e-01 : f32
    %130 = vector.broadcast %cst_43 : f32 to vector<16x128xf32>
    %131 = arith.mulf %130, %129 : vector<16x128xf32>
    %132 = arith.mulf %119, %131 : vector<16x128xf32>
    %133 = arith.mulf %118, %132 : vector<16x128xf32>
    %c0_44 = arith.constant 0 : index
    %c0_45 = arith.constant 0 : index
    %c0_46 = arith.constant 0 : index
    %134 = vector.load %arg5[%c0_44, %c0_45, %c0_46] : memref<2x128x32xf32, #tpu.memory_space<vmem>>, vector<1x128x32xf32>
    %135 = vector.shape_cast %134 : vector<1x128x32xf32> to vector<128x32xf32>
    %cst_47 = arith.constant dense<0.000000e+00> : vector<16x32xf32>
    %136 = tpu.matmul %133, %135, %cst_47 {dimension_numbers = #tpu.dot_dimension_numbers<[1], [0], [0], [1], [0, 0, 1, 1], [], []>, precision = #tpu.contract_precision<fp32>} : vector<16x128xf32>, vector<128x32xf32>, vector<16x32xf32> -> vector<16x32xf32>
    %137 = vector.broadcast %23 : vector<1x32xf32> to vector<16x32xf32>
    %138 = arith.addf %136, %137 : vector<16x32xf32>
    %139 = arith.addf %138, %112 : vector<16x32xf32>
    %c1 = arith.constant 1 : index
    %c0_48 = arith.constant 0 : index
    %c0_49 = arith.constant 0 : index
    %140 = vector.load %arg6[%c1, %c0_48, %c0_49] : memref<2x8x256xf32, #tpu.memory_space<vmem>>, vector<1x8x256xf32>
    %141 = vector.shape_cast %140 : vector<1x8x256xf32> to vector<8x256xf32>
    %142 = vector.extract_strided_slice %141 {offsets = [0, 0], sizes = [1, 32], strides = [1, 1]} : vector<8x256xf32> to vector<1x32xf32>
    %143 = vector.extract_strided_slice %141 {offsets = [1, 0], sizes = [1, 32], strides = [1, 1]} : vector<8x256xf32> to vector<1x32xf32>
    %144 = vector.extract_strided_slice %141 {offsets = [2, 0], sizes = [1, 32], strides = [1, 1]} : vector<8x256xf32> to vector<1x32xf32>
    %145 = vector.extract_strided_slice %141 {offsets = [3, 0], sizes = [1, 32], strides = [1, 1]} : vector<8x256xf32> to vector<1x32xf32>
    %146 = vector.extract_strided_slice %141 {offsets = [4, 0], sizes = [1, 32], strides = [1, 1]} : vector<8x256xf32> to vector<1x32xf32>
    %147 = vector.extract_strided_slice %141 {offsets = [5, 0], sizes = [1, 256], strides = [1, 1]} : vector<8x256xf32> to vector<1x256xf32>
    %148 = vector.extract_strided_slice %141 {offsets = [6, 0], sizes = [1, 32], strides = [1, 1]} : vector<8x256xf32> to vector<1x32xf32>
    %cst_50 = arith.constant dense<0.000000e+00> : vector<16xf32>
    %149 = vector.multi_reduction <add>, %139, %cst_50 [1] : vector<16x32xf32> to vector<16xf32>
    %150 = vector.shape_cast %149 : vector<16xf32> to vector<16x1xf32>
    %cst_51 = arith.constant 3.200000e+01 : f32
    %151 = vector.broadcast %cst_51 : f32 to vector<16x1xf32>
    %152 = arith.divf %150, %151 : vector<16x1xf32>
    %153 = vector.broadcast %152 : vector<16x1xf32> to vector<16x32xf32>
    %154 = arith.subf %139, %153 : vector<16x32xf32>
    %155 = arith.mulf %154, %154 : vector<16x32xf32>
    %cst_52 = arith.constant dense<0.000000e+00> : vector<16xf32>
    %156 = vector.multi_reduction <add>, %155, %cst_52 [1] : vector<16x32xf32> to vector<16xf32>
    %157 = vector.shape_cast %156 : vector<16xf32> to vector<16x1xf32>
    %cst_53 = arith.constant 3.200000e+01 : f32
    %158 = vector.broadcast %cst_53 : f32 to vector<16x1xf32>
    %159 = arith.divf %157, %158 : vector<16x1xf32>
    %cst_54 = arith.constant 9.99999974E-6 : f32
    %160 = vector.broadcast %cst_54 : f32 to vector<16x1xf32>
    %161 = arith.addf %159, %160 : vector<16x1xf32>
    %162 = math.rsqrt %161 : vector<16x1xf32>
    %163 = vector.broadcast %162 : vector<16x1xf32> to vector<16x32xf32>
    %164 = arith.mulf %154, %163 : vector<16x32xf32>
    %165 = vector.broadcast %142 : vector<1x32xf32> to vector<16x32xf32>
    %166 = arith.mulf %164, %165 : vector<16x32xf32>
    %167 = vector.broadcast %143 : vector<1x32xf32> to vector<16x32xf32>
    %168 = arith.addf %166, %167 : vector<16x32xf32>
    %c1_55 = arith.constant 1 : index
    %c0_56 = arith.constant 0 : index
    %c0_57 = arith.constant 0 : index
    %169 = vector.load %arg2[%c1_55, %c0_56, %c0_57] : memref<2x32x96xf32, #tpu.memory_space<vmem>>, vector<1x32x96xf32>
    %170 = vector.shape_cast %169 : vector<1x32x96xf32> to vector<32x96xf32>
    %cst_58 = arith.constant dense<0.000000e+00> : vector<16x96xf32>
    %171 = tpu.matmul %168, %170, %cst_58 {dimension_numbers = #tpu.dot_dimension_numbers<[1], [0], [0], [1], [0, 0, 1, 1], [], []>, precision = #tpu.contract_precision<fp32>} : vector<16x32xf32>, vector<32x96xf32>, vector<16x96xf32> -> vector<16x96xf32>
    %c1_59 = arith.constant 1 : index
    %c0_60 = arith.constant 0 : index
    %c0_61 = arith.constant 0 : index
    %172 = vector.load %arg3[%c1_59, %c0_60, %c0_61] : memref<2x32x32xf32, #tpu.memory_space<vmem>>, vector<1x32x32xf32>
    %173 = vector.shape_cast %172 : vector<1x32x32xf32> to vector<32x32xf32>
    %174 = vector.extract_strided_slice %171 {offsets = [0, 0], sizes = [16, 16], strides = [1, 1]} : vector<16x96xf32> to vector<16x16xf32>
    %175 = vector.extract_strided_slice %171 {offsets = [0, 32], sizes = [16, 16], strides = [1, 1]} : vector<16x96xf32> to vector<16x16xf32>
    %176 = vector.extract_strided_slice %171 {offsets = [0, 64], sizes = [16, 16], strides = [1, 1]} : vector<16x96xf32> to vector<16x16xf32>
    %cst_62 = arith.constant dense<0.000000e+00> : vector<16x16xf32>
    %177 = tpu.matmul %174, %175, %cst_62 {dimension_numbers = #tpu.dot_dimension_numbers<[1], [1], [0], [0], [0, 0, 1, 0], [], []>, precision = #tpu.contract_precision<fp32>} : vector<16x16xf32>, vector<16x16xf32>, vector<16x16xf32> -> vector<16x16xf32>
    %cst_63 = arith.constant 2.500000e-01 : f32
    %178 = vector.broadcast %cst_63 : f32 to vector<16x16xf32>
    %179 = arith.mulf %177, %178 : vector<16x16xf32>
    %180 = arith.addf %179, %14 : vector<16x16xf32>
    %cst_64 = arith.constant dense<0xFF800000> : vector<16xf32>
    %181 = vector.multi_reduction <maximumf>, %180, %cst_64 [1] : vector<16x16xf32> to vector<16xf32>
    %182 = vector.shape_cast %181 : vector<16xf32> to vector<16x1xf32>
    %183 = vector.broadcast %182 : vector<16x1xf32> to vector<16x16xf32>
    %184 = arith.subf %180, %183 : vector<16x16xf32>
    %185 = math.exp %184 : vector<16x16xf32>
    %cst_65 = arith.constant dense<0.000000e+00> : vector<16xf32>
    %186 = vector.multi_reduction <add>, %185, %cst_65 [1] : vector<16x16xf32> to vector<16xf32>
    %187 = vector.shape_cast %186 : vector<16xf32> to vector<16x1xf32>
    %188 = tpu.reciprocal %187 {approx = true} : vector<16x1xf32> -> vector<16x1xf32>
    %189 = vector.broadcast %188 : vector<16x1xf32> to vector<16x16xf32>
    %190 = arith.mulf %185, %189 : vector<16x16xf32>
    %cst_66 = arith.constant dense<0.000000e+00> : vector<16x16xf32>
    %191 = tpu.matmul %190, %176, %cst_66 {dimension_numbers = #tpu.dot_dimension_numbers<[1], [0], [0], [1], [0, 0, 1, 1], [], []>, precision = #tpu.contract_precision<fp32>} : vector<16x16xf32>, vector<16x16xf32>, vector<16x16xf32> -> vector<16x16xf32>
    %192 = vector.extract_strided_slice %173 {offsets = [0, 0], sizes = [16, 32], strides = [1, 1]} : vector<32x32xf32> to vector<16x32xf32>
    %cst_67 = arith.constant dense<0.000000e+00> : vector<16x32xf32>
    %193 = tpu.matmul %191, %192, %cst_67 {dimension_numbers = #tpu.dot_dimension_numbers<[1], [0], [0], [1], [0, 0, 1, 1], [], []>, precision = #tpu.contract_precision<fp32>} : vector<16x16xf32>, vector<16x32xf32>, vector<16x32xf32> -> vector<16x32xf32>
    %194 = vector.extract_strided_slice %171 {offsets = [0, 16], sizes = [16, 16], strides = [1, 1]} : vector<16x96xf32> to vector<16x16xf32>
    %195 = vector.extract_strided_slice %171 {offsets = [0, 48], sizes = [16, 16], strides = [1, 1]} : vector<16x96xf32> to vector<16x16xf32>
    %196 = vector.extract_strided_slice %171 {offsets = [0, 80], sizes = [16, 16], strides = [1, 1]} : vector<16x96xf32> to vector<16x16xf32>
    %cst_68 = arith.constant dense<0.000000e+00> : vector<16x16xf32>
    %197 = tpu.matmul %194, %195, %cst_68 {dimension_numbers = #tpu.dot_dimension_numbers<[1], [1], [0], [0], [0, 0, 1, 0], [], []>, precision = #tpu.contract_precision<fp32>} : vector<16x16xf32>, vector<16x16xf32>, vector<16x16xf32> -> vector<16x16xf32>
    %cst_69 = arith.constant 2.500000e-01 : f32
    %198 = vector.broadcast %cst_69 : f32 to vector<16x16xf32>
    %199 = arith.mulf %197, %198 : vector<16x16xf32>
    %200 = arith.addf %199, %14 : vector<16x16xf32>
    %cst_70 = arith.constant dense<0xFF800000> : vector<16xf32>
    %201 = vector.multi_reduction <maximumf>, %200, %cst_70 [1] : vector<16x16xf32> to vector<16xf32>
    %202 = vector.shape_cast %201 : vector<16xf32> to vector<16x1xf32>
    %203 = vector.broadcast %202 : vector<16x1xf32> to vector<16x16xf32>
    %204 = arith.subf %200, %203 : vector<16x16xf32>
    %205 = math.exp %204 : vector<16x16xf32>
    %cst_71 = arith.constant dense<0.000000e+00> : vector<16xf32>
    %206 = vector.multi_reduction <add>, %205, %cst_71 [1] : vector<16x16xf32> to vector<16xf32>
    %207 = vector.shape_cast %206 : vector<16xf32> to vector<16x1xf32>
    %208 = tpu.reciprocal %207 {approx = true} : vector<16x1xf32> -> vector<16x1xf32>
    %209 = vector.broadcast %208 : vector<16x1xf32> to vector<16x16xf32>
    %210 = arith.mulf %205, %209 : vector<16x16xf32>
    %cst_72 = arith.constant dense<0.000000e+00> : vector<16x16xf32>
    %211 = tpu.matmul %210, %196, %cst_72 {dimension_numbers = #tpu.dot_dimension_numbers<[1], [0], [0], [1], [0, 0, 1, 1], [], []>, precision = #tpu.contract_precision<fp32>} : vector<16x16xf32>, vector<16x16xf32>, vector<16x16xf32> -> vector<16x16xf32>
    %212 = vector.extract_strided_slice %173 {offsets = [16, 0], sizes = [16, 32], strides = [1, 1]} : vector<32x32xf32> to vector<16x32xf32>
    %cst_73 = arith.constant dense<0.000000e+00> : vector<16x32xf32>
    %213 = tpu.matmul %211, %212, %cst_73 {dimension_numbers = #tpu.dot_dimension_numbers<[1], [0], [0], [1], [0, 0, 1, 1], [], []>, precision = #tpu.contract_precision<fp32>} : vector<16x16xf32>, vector<16x32xf32>, vector<16x32xf32> -> vector<16x32xf32>
    %214 = arith.addf %193, %213 : vector<16x32xf32>
    %215 = vector.broadcast %144 : vector<1x32xf32> to vector<16x32xf32>
    %216 = arith.addf %214, %215 : vector<16x32xf32>
    %217 = arith.addf %216, %168 : vector<16x32xf32>
    %cst_74 = arith.constant dense<0.000000e+00> : vector<16xf32>
    %218 = vector.multi_reduction <add>, %217, %cst_74 [1] : vector<16x32xf32> to vector<16xf32>
    %219 = vector.shape_cast %218 : vector<16xf32> to vector<16x1xf32>
    %cst_75 = arith.constant 3.200000e+01 : f32
    %220 = vector.broadcast %cst_75 : f32 to vector<16x1xf32>
    %221 = arith.divf %219, %220 : vector<16x1xf32>
    %222 = vector.broadcast %221 : vector<16x1xf32> to vector<16x32xf32>
    %223 = arith.subf %217, %222 : vector<16x32xf32>
    %224 = arith.mulf %223, %223 : vector<16x32xf32>
    %cst_76 = arith.constant dense<0.000000e+00> : vector<16xf32>
    %225 = vector.multi_reduction <add>, %224, %cst_76 [1] : vector<16x32xf32> to vector<16xf32>
    %226 = vector.shape_cast %225 : vector<16xf32> to vector<16x1xf32>
    %cst_77 = arith.constant 3.200000e+01 : f32
    %227 = vector.broadcast %cst_77 : f32 to vector<16x1xf32>
    %228 = arith.divf %226, %227 : vector<16x1xf32>
    %cst_78 = arith.constant 9.99999974E-6 : f32
    %229 = vector.broadcast %cst_78 : f32 to vector<16x1xf32>
    %230 = arith.addf %228, %229 : vector<16x1xf32>
    %231 = math.rsqrt %230 : vector<16x1xf32>
    %232 = vector.broadcast %231 : vector<16x1xf32> to vector<16x32xf32>
    %233 = arith.mulf %223, %232 : vector<16x32xf32>
    %234 = vector.broadcast %145 : vector<1x32xf32> to vector<16x32xf32>
    %235 = arith.mulf %233, %234 : vector<16x32xf32>
    %236 = vector.broadcast %146 : vector<1x32xf32> to vector<16x32xf32>
    %237 = arith.addf %235, %236 : vector<16x32xf32>
    %c1_79 = arith.constant 1 : index
    %c0_80 = arith.constant 0 : index
    %c0_81 = arith.constant 0 : index
    %238 = vector.load %arg4[%c1_79, %c0_80, %c0_81] : memref<2x32x256xf32, #tpu.memory_space<vmem>>, vector<1x32x256xf32>
    %239 = vector.shape_cast %238 : vector<1x32x256xf32> to vector<32x256xf32>
    %cst_82 = arith.constant dense<0.000000e+00> : vector<16x256xf32>
    %240 = tpu.matmul %237, %239, %cst_82 {dimension_numbers = #tpu.dot_dimension_numbers<[1], [0], [0], [1], [0, 0, 1, 1], [], []>, precision = #tpu.contract_precision<fp32>} : vector<16x32xf32>, vector<32x256xf32>, vector<16x256xf32> -> vector<16x256xf32>
    %241 = vector.broadcast %147 : vector<1x256xf32> to vector<16x256xf32>
    %242 = arith.addf %240, %241 : vector<16x256xf32>
    %243 = vector.extract_strided_slice %242 {offsets = [0, 0], sizes = [16, 128], strides = [1, 1]} : vector<16x256xf32> to vector<16x128xf32>
    %244 = vector.extract_strided_slice %242 {offsets = [0, 128], sizes = [16, 128], strides = [1, 1]} : vector<16x256xf32> to vector<16x128xf32>
    %245 = arith.mulf %244, %244 : vector<16x128xf32>
    %246 = arith.mulf %244, %245 : vector<16x128xf32>
    %cst_83 = arith.constant 4.471500e-02 : f32
    %247 = vector.broadcast %cst_83 : f32 to vector<16x128xf32>
    %248 = arith.mulf %247, %246 : vector<16x128xf32>
    %249 = arith.addf %244, %248 : vector<16x128xf32>
    %cst_84 = arith.constant 0.797884583 : f32
    %250 = vector.broadcast %cst_84 : f32 to vector<16x128xf32>
    %251 = arith.mulf %250, %249 : vector<16x128xf32>
    %252 = math.tanh %251 : vector<16x128xf32>
    %cst_85 = arith.constant 1.000000e+00 : f32
    %253 = vector.broadcast %cst_85 : f32 to vector<16x128xf32>
    %254 = arith.addf %253, %252 : vector<16x128xf32>
    %cst_86 = arith.constant 5.000000e-01 : f32
    %255 = vector.broadcast %cst_86 : f32 to vector<16x128xf32>
    %256 = arith.mulf %255, %254 : vector<16x128xf32>
    %257 = arith.mulf %244, %256 : vector<16x128xf32>
    %258 = arith.mulf %243, %257 : vector<16x128xf32>
    %c1_87 = arith.constant 1 : index
    %c0_88 = arith.constant 0 : index
    %c0_89 = arith.constant 0 : index
    %259 = vector.load %arg5[%c1_87, %c0_88, %c0_89] : memref<2x128x32xf32, #tpu.memory_space<vmem>>, vector<1x128x32xf32>
    %260 = vector.shape_cast %259 : vector<1x128x32xf32> to vector<128x32xf32>
    %cst_90 = arith.constant dense<0.000000e+00> : vector<16x32xf32>
    %261 = tpu.matmul %258, %260, %cst_90 {dimension_numbers = #tpu.dot_dimension_numbers<[1], [0], [0], [1], [0, 0, 1, 1], [], []>, precision = #tpu.contract_precision<fp32>} : vector<16x128xf32>, vector<128x32xf32>, vector<16x32xf32> -> vector<16x32xf32>
    %262 = vector.broadcast %148 : vector<1x32xf32> to vector<16x32xf32>
    %263 = arith.addf %261, %262 : vector<16x32xf32>
    %264 = arith.addf %263, %237 : vector<16x32xf32>
    %c0_91 = arith.constant 0 : index
    %c0_92 = arith.constant 0 : index
    %265 = vector.load %arg7[%c0_91, %c0_92] : memref<176x128xf32, #tpu.memory_space<vmem>>, vector<32x128xf32>
    %c32 = arith.constant 32 : index
    %c0_93 = arith.constant 0 : index
    %266 = vector.load %arg7[%c32, %c0_93] : memref<176x128xf32, #tpu.memory_space<vmem>>, vector<128x128xf32>
    %c160 = arith.constant 160 : index
    %c0_94 = arith.constant 0 : index
    %267 = vector.load %arg7[%c160, %c0_94] : memref<176x128xf32, #tpu.memory_space<vmem>>, vector<1x128xf32>
    %c168 = arith.constant 168 : index
    %c0_95 = arith.constant 0 : index
    %268 = vector.load %arg7[%c168, %c0_95] : memref<176x128xf32, #tpu.memory_space<vmem>>, vector<1x128xf32>
    %cst_96 = arith.constant dense<0.000000e+00> : vector<16x128xf32>
    %269 = tpu.matmul %264, %265, %cst_96 {dimension_numbers = #tpu.dot_dimension_numbers<[1], [0], [0], [1], [0, 0, 1, 1], [], []>, precision = #tpu.contract_precision<fp32>} : vector<16x32xf32>, vector<32x128xf32>, vector<16x128xf32> -> vector<16x128xf32>
    %270 = vector.broadcast %267 : vector<1x128xf32> to vector<16x128xf32>
    %271 = arith.addf %269, %270 : vector<16x128xf32>
    %cst_97 = arith.constant 0.000000e+00 : f32
    %272 = vector.broadcast %cst_97 : f32 to vector<16x128xf32>
    %273 = arith.maximumf %271, %272 : vector<16x128xf32>
    %cst_98 = arith.constant dense<0.000000e+00> : vector<16x128xf32>
    %274 = tpu.matmul %273, %266, %cst_98 {dimension_numbers = #tpu.dot_dimension_numbers<[1], [0], [0], [1], [0, 0, 1, 1], [], []>, precision = #tpu.contract_precision<fp32>} : vector<16x128xf32>, vector<128x128xf32>, vector<16x128xf32> -> vector<16x128xf32>
    %275 = vector.broadcast %268 : vector<1x128xf32> to vector<16x128xf32>
    %276 = arith.addf %274, %275 : vector<16x128xf32>
    %c0_99 = arith.constant 0 : index
    %c0_100 = arith.constant 0 : index
    %277 = vector.load %arg8[%c0_99, %c0_100] : memref<16x128xf32, #tpu.memory_space<vmem>>, vector<16x128xf32>
    tpu.vector_store %arg8[%c0_99, %c0_100], %276 {strides = array<i32>} : memref<16x128xf32, #tpu.memory_space<vmem>>, vector<16x128xf32>,
    return
  }
  func.func @transform_0(%arg0: i32) -> (i32, i32) {
    %c0_i32 = arith.constant 0 : i32
    %c0_i32_0 = arith.constant 0 : i32
    %c0_i32_1 = arith.constant 0 : i32
    return %c0_i32, %c0_i32_0 : i32, i32
  }
  func.func @transform_1(%arg0: i32) -> (i32, i32, i32) {
    %c0_i32 = arith.constant 0 : i32
    %c0_i32_0 = arith.constant 0 : i32
    %c0_i32_1 = arith.constant 0 : i32
    %c0_i32_2 = arith.constant 0 : i32
    return %c0_i32, %c0_i32_0, %c0_i32_1 : i32, i32, i32
  }
  func.func @transform_2(%arg0: i32) -> (i32, i32, i32) {
    %c0_i32 = arith.constant 0 : i32
    %c0_i32_0 = arith.constant 0 : i32
    %c0_i32_1 = arith.constant 0 : i32
    %c0_i32_2 = arith.constant 0 : i32
    return %c0_i32, %c0_i32_0, %c0_i32_1 : i32, i32, i32
  }
  func.func @transform_3(%arg0: i32) -> (i32, i32, i32) {
    %c0_i32 = arith.constant 0 : i32
    %c0_i32_0 = arith.constant 0 : i32
    %c0_i32_1 = arith.constant 0 : i32
    %c0_i32_2 = arith.constant 0 : i32
    return %c0_i32, %c0_i32_0, %c0_i32_1 : i32, i32, i32
  }
  func.func @transform_4(%arg0: i32) -> (i32, i32, i32) {
    %c0_i32 = arith.constant 0 : i32
    %c0_i32_0 = arith.constant 0 : i32
    %c0_i32_1 = arith.constant 0 : i32
    %c0_i32_2 = arith.constant 0 : i32
    return %c0_i32, %c0_i32_0, %c0_i32_1 : i32, i32, i32
  }
  func.func @transform_5(%arg0: i32) -> (i32, i32, i32) {
    %c0_i32 = arith.constant 0 : i32
    %c0_i32_0 = arith.constant 0 : i32
    %c0_i32_1 = arith.constant 0 : i32
    %c0_i32_2 = arith.constant 0 : i32
    return %c0_i32, %c0_i32_0, %c0_i32_1 : i32, i32, i32
  }
  func.func @transform_6(%arg0: i32) -> (i32, i32) {
    %c0_i32 = arith.constant 0 : i32
    %c0_i32_0 = arith.constant 0 : i32
    %c0_i32_1 = arith.constant 0 : i32
    return %c0_i32, %c0_i32_0 : i32, i32
  }
  func.func @transform_7(%arg0: i32) -> (i32, i32) {
    %c0_i32 = arith.constant 0 : i32
    %c0_i32_0 = arith.constant 0 : i32
    %c0_i32_1 = arith.constant 0 : i32
    return %c0_i32, %c0_i32_0 : i32, i32
  }
}

</mosaic_0001>

<llo_original>
// kernel: saint_forward.1
$region0: #{saint_forward.1}
  #allocation0 [shape = 'u32[]', space=smem, size = 0x4, offset = 0x4, fixed_abs, tag = 'smem constant byte address 0x4 - core index']
  #allocation1 [shape = 'u32[144,128]{1,0:T(1,128)}', space=vmem, size = 0x12000, scoped, tag = 'internal scratch']
  %s0 = inlined_call_operand.vmem [shape: f32[16,32], index: 0, kind: input, shape index: {}]
  %s1 = inlined_call_operand.vmem [shape: f32[2,32,96], index: 1, kind: input, shape index: {}]
  %s2 = inlined_call_operand.hbm [shape: f32[2,32,32], index: 2, kind: input, shape index: {}]
  %s3 = inlined_call_operand.vmem [shape: f32[2,32,256], index: 3, kind: input, shape index: {}]
  %s4 = inlined_call_operand.vmem [shape: f32[2,128,32], index: 4, kind: input, shape index: {}]
  %s5 = inlined_call_operand.hbm [shape: f32[2,8,256], index: 5, kind: input, shape index: {}]
  %s6 = inlined_call_operand.vmem [shape: f32[176,128], index: 6, kind: input, shape index: {}]
  %s7 = inlined_call_operand.vmem [shape: f32[16,128], index: 7, kind: output, shape index: {}]
  %s8 = sld [smem:[#allocation0]]
  $region46: #{saint_forward.1} parent=0
    _
  %s10 = ssub.s32 1, %s8
  %s11 = scalar_select 0, %s10, %s8
  $region1: #{saint_forward.1} parent=0
    #allocation2 [shape = 'u8[32768]{0}', space=vmem, size = 0x8000, scoped, tag = 'input window, operand 2, single buffered']
    #allocation3 [shape = 's32[1]{0}', space=sflag, size = 0x4, scoped, tag = 'scoped memory for saint_forward.1']
    #allocation4 [shape = 'u8[16384]{0}', space=vmem, size = 0x4000, scoped, tag = 'input window, operand 5, single buffered']
    #allocation5 [shape = 's32[1]{0}', space=sflag, size = 0x4, scoped, tag = 'scoped memory for saint_forward.1']
    %12 = vsyncpa [#allocation3], 0
    %13 = vsyncpa [#allocation5], 0
    // Predicated region
    $region2: #{saint_forward.1} parent=1 // pred_check
      _
    $region3: #{saint_forward.1} parent=1 // pred_check_branch
      %15 = sbr.rel (0) target = $region5
    $region4: #{saint_forward.1} parent=1 // pred_region
      _
    $region5: #{saint_forward.1} parent=1 // pred_fallthru
      _
    // Predicated region
    $region6: #{saint_forward.1} parent=1 // pred_check
      _
    $region7: #{saint_forward.1} parent=1 // pred_check_branch
      %17 = sbr.rel (0) target = $region9
    $region8: #{saint_forward.1} parent=1 // pred_region
      _
    $region9: #{saint_forward.1} parent=1 // pred_fallthru
      _
    // Predicated region
    $region10: #{saint_forward.1} parent=1 // pred_check
      _
    $region11: #{saint_forward.1} parent=1 // pred_check_branch
      %19 = sbr.rel (0) target = $region13
    $region12: #{saint_forward.1} parent=1 // pred_region
      %s21 = ssub.s32 1024, 1024
      %22 = vsyncadd [#allocation3], %s21
      %s23 = sshll.u32 [#allocation2], 4
      %s24 = int_to_ptr.vmem [resolvable:$true] %s23
      %29 = dma.hbm_to_vmem [thread:$0]  %s2, 1024, %s24, [#allocation3], 128, 128, 8
    $region13: #{saint_forward.1} parent=1 // pred_fallthru
      _
    // Predicated region
    $region14: #{saint_forward.1} parent=1 // pred_check
      _
    $region15: #{saint_forward.1} parent=1 // pred_check_branch
      %31 = sbr.rel (0) target = $region17
    $region16: #{saint_forward.1} parent=1 // pred_region
      _
    $region17: #{saint_forward.1} parent=1 // pred_fallthru
      _
    // Predicated region
    $region18: #{saint_forward.1} parent=1 // pred_check
      _
    $region19: #{saint_forward.1} parent=1 // pred_check_branch
      %33 = sbr.rel (0) target = $region21
    $region20: #{saint_forward.1} parent=1 // pred_region
      _
    $region21: #{saint_forward.1} parent=1 // pred_fallthru
      _
    // Predicated region
    $region22: #{saint_forward.1} parent=1 // pred_check
      _
    $region23: #{saint_forward.1} parent=1 // pred_check_branch
      %35 = sbr.rel (0) target = $region25
    $region24: #{saint_forward.1} parent=1 // pred_region
      %s37 = ssub.s32 512, 512
      %38 = vsyncadd [#allocation5], %s37
      %s39 = sshll.u32 [#allocation4], 4
      %s40 = int_to_ptr.vmem [resolvable:$true] %s39
      %45 = dma.hbm_to_vmem [thread:$0]  %s5, 512, %s40, [#allocation5], 256, 256, 16
    $region25: #{saint_forward.1} parent=1 // pred_fallthru
      _
    // Predicated region
    $region26: #{saint_forward.1} parent=1 // pred_check
      _
    $region27: #{saint_forward.1} parent=1 // pred_check_branch
      %47 = sbr.rel (0) target = $region29
    $region28: #{saint_forward.1} parent=1 // pred_region
      _
    $region29: #{saint_forward.1} parent=1 // pred_fallthru
      _
    // Predicated region
    $region30: #{saint_forward.1} parent=1 // pred_check
      _
    $region31: #{saint_forward.1} parent=1 // pred_check_branch
      %49 = sbr.rel (0) target = $region33
    $region32: #{saint_forward.1} parent=1 // pred_region
      %50 = dma.done [#allocation3], 1024
    $region33: #{saint_forward.1} parent=1 // pred_fallthru
      _
    // Predicated region
    $region34: #{saint_forward.1} parent=1 // pred_check
      _
    $region35: #{saint_forward.1} parent=1 // pred_check_branch
      %52 = sbr.rel (0) target = $region37
    $region36: #{saint_forward.1} parent=1 // pred_region
      %53 = dma.done [#allocation5], 512
    $region37: #{saint_forward.1} parent=1 // pred_fallthru
      _
    %v54 = vld [vmem:[%s0] sm:$0xff]
    %v55 = vld [vmem:[%s0 + $0x8] sm:$0xff]
    %v56 = vlaneseq
    %v57 = vshrl.u32 %v56, 7
    %v58 = vadd.s32 %v57, 8
    %v59 = vcvt.s32.f32 %v57
    %v60 = vcvt.s32.f32 %v58
    %v61 = vlaneseq
    %v62 = vand.u32 %v61, 127
    %v63 = vcvt.s32.f32 %v62
    %v64 = vmul.f32 %v59, 0.2
    %v65 = vmul.f32 %v60, 0.2
    %v66 = vfloor.f32 %v64
    %v67 = vfloor.f32 %v65
    %v68 = vmul.f32 %v63, 0.2
    %v69 = vfloor.f32 %v68
    %vm70 = vcmp.eq.f32.partialorder %v66, %v69
    %vm71 = vcmp.eq.f32.partialorder %v67, %v69
    %v72 = vsel %vm70, 0.0, -1e+30
    %v73 = vsel %vm71, 0.0, -1e+30
    %v74 = vld [vmem:[#allocation4] sm:$0xff]
    %v75 = vld [vmem:[#allocation4 + $0x8] sm:$0xff]
    %vm76 = vcmask 261120
    %v77 = vsel %vm76, %v54, 0.0
    %78 = vadd.xlane.f32.xlu0 %v77
    %v79 = vpop.xlane.xlu0 %78
    %v80 = vsel %vm76, %v55, 0.0
    %81 = vadd.xlane.f32.xlu0 %v80
    %v82 = vpop.xlane.xlu0 %81
    %v83 = vrcp.pop 32.0
    %v84 = vmul.f32 %v79, %v83
    %v85 = vmul.f32 %v82, %v83
    %v86 = vsub.f32 %v54, %v84
    %v87 = vsub.f32 %v55, %v85
    %v88 = vmul.f32 %v86, %v86
    %v89 = vmul.f32 %v87, %v87
    %v90 = vsel %vm76, %v88, 0.0
    %91 = vadd.xlane.f32.xlu0 %v90
    %v92 = vpop.xlane.xlu0 %91
    %v93 = vsel %vm76, %v89, 0.0
    %94 = vadd.xlane.f32.xlu0 %v93
    %v95 = vpop.xlane.xlu0 %94
    %v96 = vmul.f32 %v92, %v83
    %v97 = vmul.f32 %v95, %v83
    %v98 = vadd.f32 %v96, 1e-05
    %v99 = vadd.f32 %v97, 1e-05
    %v100 = vrsqrt.pop %v98
    %v101 = vrsqrt.pop %v99
    %v102 = vmul.f32 %v86, %v100
    %v103 = vmul.f32 %v87, %v101
    %v104 = vlaneseq
    %v105 = vshrl.u32 %v104, 7
    %v106 = vsub.s32 0, %v105
    %v107 = vrot.slane %v74, %v106
    %v108 = vmul.f32 %v102, %v107
    %v109 = vmul.f32 %v103, %v107
    %v110 = vlaneseq
    %v111 = vshrl.u32 %v110, 7
    %v112 = vsub.s32 1, %v111
    %v113 = vrot.slane %v74, %v112
    %v114 = vadd.f32 %v108, %v113
    %v115 = vadd.f32 %v109, %v113
    %v116 = vld [vmem:[%s1] sm:$0xff]
    %v117 = vld [vmem:[%s1 + $0x8] sm:$0xff]
    %v118 = vld [vmem:[%s1 + $0x10] sm:$0xff]
    %v119 = vld [vmem:[%s1 + $0x18] sm:$0xff]
    %v121 = vsel %vm76, %v114, 0
    %v124 = vsel %vm76, %v115, 0
    %126 = vmatprep.subr.mxu0 0.0
    %v127 = vand.u32 %v116, 4294901760
    %128 = vmatpush1.msra.mxu0 %v127
    %129 = vmatprep.subr.mxu0 0.0
    %v130 = vand.u32 %v117, 4294901760
    %131 = vmatpush1.msra.mxu0 %v130
    %132 = vmatprep.subr.mxu0 0.0
    %v133 = vand.u32 %v118, 4294901760
    %134 = vmatpush1.msra.mxu0 %v133
    %135 = vmatprep.subr.mxu0 0.0
    %v136 = vand.u32 %v119, 4294901760
    %137 = vmatpush1.msra.mxu0 %v136
    %138 = vmatprep.subr.mxu0 0.0
    %139 = vmatpush1.msra.mxu0 0.0
    %140 = vmatprep.subr.mxu0 0.0
    %141 = vmatpush1.msra.mxu0 0.0
    %142 = vmatprep.subr.mxu0 0.0
    %143 = vmatpush1.msra.mxu0 0.0
    %144 = vmatprep.subr.mxu0 0.0
    %145 = vmatpush1.msra.mxu0 0.0
    %146 = vmatprep.subr.mxu0 0.0
    %147 = vmatpush1.msra.mxu0 0.0
    %148 = vmatprep.subr.mxu0 0.0
    %149 = vmatpush1.msra.mxu0 0.0
    %150 = vmatprep.subr.mxu0 0.0
    %151 = vmatpush1.msra.mxu0 0.0
    %152 = vmatprep.subr.mxu0 0.0
    %153 = vmatpush1.msra.mxu0 0.0
    %154 = vmatprep.subr.mxu0 0.0
    %155 = vmatpush1.msra.mxu0 0.0
    %156 = vmatprep.subr.mxu0 0.0
    %157 = vmatpush1.msra.mxu0 0.0
    %158 = vmatprep.subr.mxu0 0.0
    %159 = vmatpush1.msra.mxu0 0.0
    %160 = vmatprep.subr.mxu0 0.0
    %161 = vmatpush1.msra.mxu0 0.0
    %162 = vmatprep.subr.mxu0 0.0
    %163 = vmatpush1.msra.mxu0 0.0
    %164 = vmatprep.subr.mxu0 0.0
    %165 = vmatpush1.msra.mxu0 0.0
    %166 = vmatprep.subr.mxu0 0.0
    %167 = vmatpush1.msra.mxu0 0.0
    %168 = vmatprep.subr.mxu0 0.0
    %169 = vmatpush1.msra.mxu0 0.0
    %170 = vmatprep.subr.mxu0 0.0
    %171 = vmatpush1.msra.mxu0 0.0
    %172 = vmatprep.subr.mxu0 0.0
    %173 = vmatpush1.msra.mxu0 0.0
    %174 = vmatprep.subr.mxu0 0.0
    %175 = vmatpush1.msra.mxu0 0.0
    %176 = vmatprep.subr.mxu0 0.0
    %177 = vmatpush1.msra.mxu0 0.0
    %178 = vmatprep.subr.mxu0 0.0
    %179 = vmatpush1.msra.mxu0 0.0
    %180 = vmatprep.subr.mxu0 0.0
    %181 = vmatpush1.msra.mxu0 0.0
    %182 = vmatprep.subr.mxu0 0.0
    %183 = vmatpush1.msra.mxu0 0.0
    %184 = vmatprep.subr.mxu0 0.0
    %185 = vmatpush1.msra.mxu0 0.0
    %186 = vmatprep.subr.mxu0 0.0
    %187 = vmatpush1.msra.mxu0 0.0
    %188 = vmatprep.subr.mxu0 0.0
    %189 = vmatpush1.msra.mxu0 0.0
    %190 = vmatprep.subr.mxu0 0.0
    %191 = vmatpush1.msra.mxu0 0.0
    %192 = vmatprep.subr.mxu0 0.0
    %193 = vmatpush1.msra.mxu0 0.0
    %194 = vmatprep.mubr.f32.mxu0 0.0
    %v195 = vand.u32 %v121, 4294901760
    %v196 = vsub.f32 %v121, %v195
    %v197 = vand.u32 %v196, 4294901760
    %v198 = vsub.f32 %v196, %v197
    %v199 = vand.u32 %v198, 4294901760
    %200 = vmatmul.mubr.f32.gmra.mrb[0].mxu0 %v199
    %v201 = vpop.f32.mrb[0].mxu0
    %v202 = vadd.f32 0.0, %v201
    %v203 = vpop.f32.mrb[0].mxu0
    %204 = vmatprep.mubr.f32.mxu0 0.0
    %v205 = vand.u32 %v124, 4294901760
    %v206 = vsub.f32 %v124, %v205
    %v207 = vand.u32 %v206, 4294901760
    %v208 = vsub.f32 %v206, %v207
    %v209 = vand.u32 %v208, 4294901760
    %210 = vmatmul.mubr.f32.gmra.mrb[0].mxu0 %v209
    %v211 = vpop.f32.mrb[0].mxu0
    %v212 = vadd.f32 0.0, %v211
    %v213 = vpop.f32.mrb[0].mxu0
    %214 = vdwg.mxu0
    %215 = vmatprep.subr.mxu0 0.0
    %v216 = vand.u32 %v116, 4294901760
    %v217 = vsub.f32 %v116, %v216
    %v218 = vand.u32 %v217, 4294901760
    %v219 = vsub.f32 %v217, %v218
    %v220 = vand.u32 %v219, 4294901760
    %221 = vmatpush1.msra.mxu0 %v220
    %222 = vmatprep.subr.mxu0 0.0
    %v223 = vand.u32 %v117, 4294901760
    %v224 = vsub.f32 %v117, %v223
    %v225 = vand.u32 %v224, 4294901760
    %v226 = vsub.f32 %v224, %v225
    %v227 = vand.u32 %v226, 4294901760
    %228 = vmatpush1.msra.mxu0 %v227
    %229 = vmatprep.subr.mxu0 0.0
    %v230 = vand.u32 %v118, 4294901760
    %v231 = vsub.f32 %v118, %v230
    %v232 = vand.u32 %v231, 4294901760
    %v233 = vsub.f32 %v231, %v232
    %v234 = vand.u32 %v233, 4294901760
    %235 = vmatpush1.msra.mxu0 %v234
    %236 = vmatprep.subr.mxu0 0.0
    %v237 = vand.u32 %v119, 4294901760
    %v238 = vsub.f32 %v119, %v237
    %v239 = vand.u32 %v238, 4294901760
    %v240 = vsub.f32 %v238, %v239
    %v241 = vand.u32 %v240, 4294901760
    %242 = vmatpush1.msra.mxu0 %v241
    %243 = vmatprep.subr.mxu0 0.0
    %244 = vmatpush1.msra.mxu0 0.0
    %245 = vmatprep.subr.mxu0 0.0
    %246 = vmatpush1.msra.mxu0 0.0
    %247 = vmatprep.subr.mxu0 0.0
    %248 = vmatpush1.msra.mxu0 0.0
    %249 = vmatprep.subr.mxu0 0.0
    %250 = vmatpush1.msra.mxu0 0.0
    %251 = vmatprep.subr.mxu0 0.0
    %252 = vmatpush1.msra.mxu0 0.0
    %253 = vmatprep.subr.mxu0 0.0
    %254 = vmatpush1.msra.mxu0 0.0
    %255 = vmatprep.subr.mxu0 0.0
    %256 = vmatpush1.msra.mxu0 0.0
    %257 = vmatprep.subr.mxu0 0.0
    %258 = vmatpush1.msra.mxu0 0.0
    %259 = vmatprep.subr.mxu0 0.0
    %260 = vmatpush1.msra.mxu0 0.0
    %261 = vmatprep.subr.mxu0 0.0
    %262 = vmatpush1.msra.mxu0 0.0
    %263 = vmatprep.subr.mxu0 0.0
    %264 = vmatpush1.msra.mxu0 0.0
    %265 = vmatprep.subr.mxu0 0.0
    %266 = vmatpush1.msra.mxu0 0.0
    %267 = vmatprep.subr.mxu0 0.0
    %268 = vmatpush1.msra.mxu0 0.0
    %269 = vmatprep.subr.mxu0 0.0
    %270 = vmatpush1.msra.mxu0 0.0
    %271 = vmatprep.subr.mxu0 0.0
    %272 = vmatpush1.msra.mxu0 0.0
    %273 = vmatprep.subr.mxu0 0.0
    %274 = vmatpush1.msra.mxu0 0.0
    %275 = vmatprep.subr.mxu0 0.0
    %276 = vmatpush1.msra.mxu0 0.0
    %277 = vmatprep.subr.mxu0 0.0
    %278 = vmatpush1.msra.mxu0 0.0
    %279 = vmatprep.subr.mxu0 0.0
    %280 = vmatpush1.msra.mxu0 0.0
    %281 = vmatprep.subr.mxu0 0.0
    %282 = vmatpush1.msra.mxu0 0.0
    %283 = vmatprep.subr.mxu0 0.0
    %284 = vmatpush1.msra.mxu0 0.0
    %285 = vmatprep.subr.mxu0 0.0
    %286 = vmatpush1.msra.mxu0 0.0
    %287 = vmatprep.subr.mxu0 0.0
    %288 = vmatpush1.msra.mxu0 0.0
    %289 = vmatprep.subr.mxu0 0.0
    %290 = vmatpush1.msra.mxu0 0.0
    %291 = vmatprep.subr.mxu0 0.0
    %292 = vmatpush1.msra.mxu0 0.0
    %293 = vmatprep.subr.mxu0 0.0
    %294 = vmatpush1.msra.mxu0 0.0
    %295 = vmatprep.subr.mxu0 0.0
    %296 = vmatpush1.msra.mxu0 0.0
    %297 = vmatprep.subr.mxu0 0.0
    %298 = vmatpush1.msra.mxu0 0.0
    %299 = vmatprep.mubr.f32.mxu0 0.0
    %v300 = vand.u32 %v121, 4294901760
    %301 = vmatmul.mubr.f32.gmra.mrb[0].mxu0 %v300
    %v302 = vpop.f32.mrb[0].mxu0
    %v303 = vadd.f32 %v202, %v302
    %v304 = vpop.f32.mrb[0].mxu0
    %305 = vmatprep.mubr.f32.mxu0 0.0
    %v306 = vand.u32 %v124, 4294901760
    %307 = vmatmul.mubr.f32.gmra.mrb[0].mxu0 %v306
    %v308 = vpop.f32.mrb[0].mxu0
    %v309 = vadd.f32 %v212, %v308
    %v310 = vpop.f32.mrb[0].mxu0
    %311 = vdwg.mxu0
    %312 = vmatprep.subr.mxu0 0.0
    %v313 = vand.u32 %v116, 4294901760
    %v314 = vsub.f32 %v116, %v313
    %315 = vmatpush1.msra.mxu0 %v314
    %316 = vmatprep.subr.mxu0 0.0
    %v317 = vand.u32 %v117, 4294901760
    %v318 = vsub.f32 %v117, %v317
    %319 = vmatpush1.msra.mxu0 %v318
    %320 = vmatprep.subr.mxu0 0.0
    %v321 = vand.u32 %v118, 4294901760
    %v322 = vsub.f32 %v118, %v321
    %323 = vmatpush1.msra.mxu0 %v322
    %324 = vmatprep.subr.mxu0 0.0
    %v325 = vand.u32 %v119, 4294901760
    %v326 = vsub.f32 %v119, %v325
    %327 = vmatpush1.msra.mxu0 %v326
    %328 = vmatprep.subr.mxu0 0.0
    %329 = vmatpush1.msra.mxu0 0.0
    %330 = vmatprep.subr.mxu0 0.0
    %331 = vmatpush1.msra.mxu0 0.0
    %332 = vmatprep.subr.mxu0 0.0
    %333 = vmatpush1.msra.mxu0 0.0
    %334 = vmatprep.subr.mxu0 0.0
    %335 = vmatpush1.msra.mxu0 0.0
    %336 = vmatprep.subr.mxu0 0.0
    %337 = vmatpush1.msra.mxu0 0.0
    %338 = vmatprep.subr.mxu0 0.0
    %339 = vmatpush1.msra.mxu0 0.0
    %340 = vmatprep.subr.mxu0 0.0
    %341 = vmatpush1.msra.mxu0 0.0
    %342 = vmatprep.subr.mxu0 0.0
    %343 = vmatpush1.msra.mxu0 0.0
    %344 = vmatprep.subr.mxu0 0.0
    %345 = vmatpush1.msra.mxu0 0.0
    %346 = vmatprep.subr.mxu0 0.0
    %347 = vmatpush1.msra.mxu0 0.0
    %348 = vmatprep.subr.mxu0 0.0
    %349 = vmatpush1.msra.mxu0 0.0
    %350 = vmatprep.subr.mxu0 0.0
    %351 = vmatpush1.msra.mxu0 0.0
    %352 = vmatprep.subr.mxu0 0.0
    %353 = vmatpush1.msra.mxu0 0.0
    %354 = vmatprep.subr.mxu0 0.0
    %355 = vmatpush1.msra.mxu0 0.0
    %356 = vmatprep.subr.mxu0 0.0
    %357 = vmatpush1.msra.mxu0 0.0
    %358 = vmatprep.subr.mxu0 0.0
    %359 = vmatpush1.msra.mxu0 0.0
    %360 = vmatprep.subr.mxu0 0.0
    %361 = vmatpush1.msra.mxu0 0.0
    %362 = vmatprep.subr.mxu0 0.0
    %363 = vmatpush1.msra.mxu0 0.0
    %364 = vmatprep.subr.mxu0 0.0
    %365 = vmatpush1.msra.mxu0 0.0
    %366 = vmatprep.subr.mxu0 0.0
    %367 = vmatpush1.msra.mxu0 0.0
    %368 = vmatprep.subr.mxu0 0.0
    %369 = vmatpush1.msra.mxu0 0.0
    %370 = vmatprep.subr.mxu0 0.0
    %371 = vmatpush1.msra.mxu0 0.0
    %372 = vmatprep.subr.mxu0 0.0
    %373 = vmatpush1.msra.mxu0 0.0
    %374 = vmatprep.subr.mxu0 0.0
    %375 = vmatpush1.msra.mxu0 0.0
    %376 = vmatprep.subr.mxu0 0.0
    %377 = vmatpush1.msra.mxu0 0.0
    %378 = vmatprep.subr.mxu0 0.0
    %379 = vmatpush1.msra.mxu0 0.0
    %380 = vmatprep.subr.mxu0 0.0
    %381 = vmatpush1.msra.mxu0 0.0
    %382 = vmatprep.subr.mxu0 0.0
    %383 = vmatpush1.msra.mxu0 0.0
    %384 = vmatprep.mubr.f32.mxu0 0.0
    %v385 = vand.u32 %v121, 4294901760
    %v386 = vsub.f32 %v121, %v385
    %387 = vmatmul.mubr.f32.gmra.mrb[0].mxu0 %v386
    %v388 = vpop.f32.mrb[0].mxu0
    %v389 = vadd.f32 %v303, %v388
    %v390 = vpop.f32.mrb[0].mxu0
    %391 = vmatprep.mubr.f32.mxu0 0.0
    %v392 = vand.u32 %v124, 4294901760
    %v393 = vsub.f32 %v124, %v392
    %394 = vmatmul.mubr.f32.gmra.mrb[0].mxu0 %v393
    %v395 = vpop.f32.mrb[0].mxu0
    %v396 = vadd.f32 %v309, %v395
    %v397 = vpop.f32.mrb[0].mxu0
    %398 = vdwg.mxu0
    %399 = vmatprep.subr.mxu0 0.0
    %v400 = vand.u32 %v116, 4294901760
    %401 = vmatpush1.msra.mxu0 %v400
    %402 = vmatprep.subr.mxu0 0.0
    %v403 = vand.u32 %v117, 4294901760
    %404 = vmatpush1.msra.mxu0 %v403
    %405 = vmatprep.subr.mxu0 0.0
    %v406 = vand.u32 %v118, 4294901760
    %407 = vmatpush1.msra.mxu0 %v406
    %408 = vmatprep.subr.mxu0 0.0
    %v409 = vand.u32 %v119, 4294901760
    %410 = vmatpush1.msra.mxu0 %v409
    %411 = vmatprep.subr.mxu0 0.0
    %412 = vmatpush1.msra.mxu0 0.0
    %413 = vmatprep.subr.mxu0 0.0
    %414 = vmatpush1.msra.mxu0 0.0
    %415 = vmatprep.subr.mxu0 0.0
    %416 = vmatpush1.msra.mxu0 0.0
    %417 = vmatprep.subr.mxu0 0.0
    %418 = vmatpush1.msra.mxu0 0.0
    %419 = vmatprep.subr.mxu0 0.0
    %420 = vmatpush1.msra.mxu0 0.0
    %421 = vmatprep.subr.mxu0 0.0
    %422 = vmatpush1.msra.mxu0 0.0
    %423 = vmatprep.subr.mxu0 0.0
    %424 = vmatpush1.msra.mxu0 0.0
    %425 = vmatprep.subr.mxu0 0.0
    %426 = vmatpush1.msra.mxu0 0.0
    %427 = vmatprep.subr.mxu0 0.0
    %428 = vmatpush1.msra.mxu0 0.0
    %429 = vmatprep.subr.mxu0 0.0
    %430 = vmatpush1.msra.mxu0 0.0
    %431 = vmatprep.subr.mxu0 0.0
    %432 = vmatpush1.msra.mxu0 0.0
    %433 = vmatprep.subr.mxu0 0.0
    %434 = vmatpush1.msra.mxu0 0.0
    %435 = vmatprep.subr.mxu0 0.0
    %436 = vmatpush1.msra.mxu0 0.0
    %437 = vmatprep.subr.mxu0 0.0
    %438 = vmatpush1.msra.mxu0 0.0
    %439 = vmatprep.subr.mxu0 0.0
    %440 = vmatpush1.msra.mxu0 0.0
    %441 = vmatprep.subr.mxu0 0.0
    %442 = vmatpush1.msra.mxu0 0.0
    %443 = vmatprep.subr.mxu0 0.0
    %444 = vmatpush1.msra.mxu0 0.0
    %445 = vmatprep.subr.mxu0 0.0
    %446 = vmatpush1.msra.mxu0 0.0
    %447 = vmatprep.subr.mxu0 0.0
    %448 = vmatpush1.msra.mxu0 0.0
    %449 = vmatprep.subr.mxu0 0.0
    %450 = vmatpush1.msra.mxu0 0.0
    %451 = vmatprep.subr.mxu0 0.0
    %452 = vmatpush1.msra.mxu0 0.0
    %453 = vmatprep.subr.mxu0 0.0
    %454 = vmatpush1.msra.mxu0 0.0
    %455 = vmatprep.subr.mxu0 0.0
    %456 = vmatpush1.msra.mxu0 0.0
    %457 = vmatprep.subr.mxu0 0.0
    %458 = vmatpush1.msra.mxu0 0.0
    %459 = vmatprep.subr.mxu0 0.0
    %460 = vmatpush1.msra.mxu0 0.0
    %461 = vmatprep.subr.mxu0 0.0
    %462 = vmatpush1.msra.mxu0 0.0
    %463 = vmatprep.subr.mxu0 0.0
    %464 = vmatpush1.msra.mxu0 0.0
    %465 = vmatprep.subr.mxu0 0.0
    %466 = vmatpush1.msra.mxu0 0.0
    %467 = vmatprep.mubr.f32.mxu0 0.0
    %v468 = vand.u32 %v121, 4294901760
    %v469 = vsub.f32 %v121, %v468
    %v470 = vand.u32 %v469, 4294901760
    %471 = vmatmul.mubr.f32.gmra.mrb[0].mxu0 %v470
    %v472 = vpop.f32.mrb[0].mxu0
    %v473 = vadd.f32 %v389, %v472
    %v474 = vpop.f32.mrb[0].mxu0
    %475 = vmatprep.mubr.f32.mxu0 0.0
    %v476 = vand.u32 %v124, 4294901760
    %v477 = vsub.f32 %v124, %v476
    %v478 = vand.u32 %v477, 4294901760
    %479 = vmatmul.mubr.f32.gmra.mrb[0].mxu0 %v478
    %v480 = vpop.f32.mrb[0].mxu0
    %v481 = vadd.f32 %v396, %v480
    %v482 = vpop.f32.mrb[0].mxu0
    %483 = vdwg.mxu0
    %484 = vmatprep.subr.mxu0 0.0
    %v485 = vand.u32 %v116, 4294901760
    %v486 = vsub.f32 %v116, %v485
    %v487 = vand.u32 %v486, 4294901760
    %488 = vmatpush1.msra.mxu0 %v487
    %489 = vmatprep.subr.mxu0 0.0
    %v490 = vand.u32 %v117, 4294901760
    %v491 = vsub.f32 %v117, %v490
    %v492 = vand.u32 %v491, 4294901760
    %493 = vmatpush1.msra.mxu0 %v492
    %494 = vmatprep.subr.mxu0 0.0
    %v495 = vand.u32 %v118, 4294901760
    %v496 = vsub.f32 %v118, %v495
    %v497 = vand.u32 %v496, 4294901760
    %498 = vmatpush1.msra.mxu0 %v497
    %499 = vmatprep.subr.mxu0 0.0
    %v500 = vand.u32 %v119, 4294901760
    %v501 = vsub.f32 %v119, %v500
    %v502 = vand.u32 %v501, 4294901760
    %503 = vmatpush1.msra.mxu0 %v502
    %504 = vmatprep.subr.mxu0 0.0
    %505 = vmatpush1.msra.mxu0 0.0
    %506 = vmatprep.subr.mxu0 0.0
    %507 = vmatpush1.msra.mxu0 0.0
    %508 = vmatprep.subr.mxu0 0.0
    %509 = vmatpush1.msra.mxu0 0.0
    %510 = vmatprep.subr.mxu0 0.0
    %511 = vmatpush1.msra.mxu0 0.0
    %512 = vmatprep.subr.mxu0 0.0
    %513 = vmatpush1.msra.mxu0 0.0
    %514 = vmatprep.subr.mxu0 0.0
    %515 = vmatpush1.msra.mxu0 0.0
    %516 = vmatprep.subr.mxu0 0.0
    %517 = vmatpush1.msra.mxu0 0.0
    %518 = vmatprep.subr.mxu0 0.0
    %519 = vmatpush1.msra.mxu0 0.0
    %520 = vmatprep.subr.mxu0 0.0
    %521 = vmatpush1.msra.mxu0 0.0
    %522 = vmatprep.subr.mxu0 0.0
    %523 = vmatpush1.msra.mxu0 0.0
    %524 = vmatprep.subr.mxu0 0.0
    %525 = vmatpush1.msra.mxu0 0.0
    %526 = vmatprep.subr.mxu0 0.0
    %527 = vmatpush1.msra.mxu0 0.0
    %528 = vmatprep.subr.mxu0 0.0
    %529 = vmatpush1.msra.mxu0 0.0
    %530 = vmatprep.subr.mxu0 0.0
    %531 = vmatpush1.msra.mxu0 0.0
    %532 = vmatprep.subr.mxu0 0.0
    %533 = vmatpush1.msra.mxu0 0.0
    %534 = vmatprep.subr.mxu0 0.0
    %535 = vmatpush1.msra.mxu0 0.0
    %536 = vmatprep.subr.mxu0 0.0
    %537 = vmatpush1.msra.mxu0 0.0
    %538 = vmatprep.subr.mxu0 0.0
    %539 = vmatpush1.msra.mxu0 0.0
    %540 = vmatprep.subr.mxu0 0.0
    %541 = vmatpush1.msra.mxu0 0.0
    %542 = vmatprep.subr.mxu0 0.0
    %543 = vmatpush1.msra.mxu0 0.0
    %544 = vmatprep.subr.mxu0 0.0
    %545 = vmatpush1.msra.mxu0 0.0
    %546 = vmatprep.subr.mxu0 0.0
    %547 = vmatpush1.msra.mxu0 0.0
    %548 = vmatprep.subr.mxu0 0.0
    %549 = vmatpush1.msra.mxu0 0.0
    %550 = vmatprep.subr.mxu0 0.0
    %551 = vmatpush1.msra.mxu0 0.0
    %552 = vmatprep.subr.mxu0 0.0
    %553 = vmatpush1.msra.mxu0 0.0
    %554 = vmatprep.subr.mxu0 0.0
    %555 = vmatpush1.msra.mxu0 0.0
    %556 = vmatprep.subr.mxu0 0.0
    %557 = vmatpush1.msra.mxu0 0.0
    %558 = vmatprep.subr.mxu0 0.0
    %559 = vmatpush1.msra.mxu0 0.0
    %560 = vmatprep.mubr.f32.mxu0 0.0
    %v561 = vand.u32 %v121, 4294901760
    %562 = vmatmul.mubr.f32.gmra.mrb[0].mxu0 %v561
    %v563 = vpop.f32.mrb[0].mxu0
    %v564 = vadd.f32 %v473, %v563
    %v565 = vpop.f32.mrb[0].mxu0
    %566 = vmatprep.mubr.f32.mxu0 0.0
    %v567 = vand.u32 %v124, 4294901760
    %568 = vmatmul.mubr.f32.gmra.mrb[0].mxu0 %v567
    %v569 = vpop.f32.mrb[0].mxu0
    %v570 = vadd.f32 %v481, %v569
    %v571 = vpop.f32.mrb[0].mxu0
    %572 = vdwg.mxu0
    %573 = vmatprep.subr.mxu0 0.0
    %v574 = vand.u32 %v116, 4294901760
    %575 = vmatpush1.msra.mxu0 %v574
    %576 = vmatprep.subr.mxu0 0.0
    %v577 = vand.u32 %v117, 4294901760
    %578 = vmatpush1.msra.mxu0 %v577
    %579 = vmatprep.subr.mxu0 0.0
    %v580 = vand.u32 %v118, 4294901760
    %581 = vmatpush1.msra.mxu0 %v580
    %582 = vmatprep.subr.mxu0 0.0
    %v583 = vand.u32 %v119, 4294901760
    %584 = vmatpush1.msra.mxu0 %v583
    %585 = vmatprep.subr.mxu0 0.0
    %586 = vmatpush1.msra.mxu0 0.0
    %587 = vmatprep.subr.mxu0 0.0
    %588 = vmatpush1.msra.mxu0 0.0
    %589 = vmatprep.subr.mxu0 0.0
    %590 = vmatpush1.msra.mxu0 0.0
    %591 = vmatprep.subr.mxu0 0.0
    %592 = vmatpush1.msra.mxu0 0.0
    %593 = vmatprep.subr.mxu0 0.0
    %594 = vmatpush1.msra.mxu0 0.0
    %595 = vmatprep.subr.mxu0 0.0
    %596 = vmatpush1.msra.mxu0 0.0
    %597 = vmatprep.subr.mxu0 0.0
    %598 = vmatpush1.msra.mxu0 0.0
    %599 = vmatprep.subr.mxu0 0.0
    %600 = vmatpush1.msra.mxu0 0.0
    %601 = vmatprep.subr.mxu0 0.0
    %602 = vmatpush1.msra.mxu0 0.0
    %603 = vmatprep.subr.mxu0 0.0
    %604 = vmatpush1.msra.mxu0 0.0
    %605 = vmatprep.subr.mxu0 0.0
    %606 = vmatpush1.msra.mxu0 0.0
    %607 = vmatprep.subr.mxu0 0.0
    %608 = vmatpush1.msra.mxu0 0.0
    %609 = vmatprep.subr.mxu0 0.0
    %610 = vmatpush1.msra.mxu0 0.0
    %611 = vmatprep.subr.mxu0 0.0
    %612 = vmatpush1.msra.mxu0 0.0
    %613 = vmatprep.subr.mxu0 0.0
    %614 = vmatpush1.msra.mxu0 0.0
    %615 = vmatprep.subr.mxu0 0.0
    %616 = vmatpush1.msra.mxu0 0.0
    %617 = vmatprep.subr.mxu0 0.0
    %618 = vmatpush1.msra.mxu0 0.0
    %619 = vmatprep.subr.mxu0 0.0
    %620 = vmatpush1.msra.mxu0 0.0
    %621 = vmatprep.subr.mxu0 0.0
    %622 = vmatpush1.msra.mxu0 0.0
    %623 = vmatprep.subr.mxu0 0.0
    %624 = vmatpush1.msra.mxu0 0.0
    %625 = vmatprep.subr.mxu0 0.0
    %626 = vmatpush1.msra.mxu0 0.0
    %627 = vmatprep.subr.mxu0 0.0
    %628 = vmatpush1.msra.mxu0 0.0
    %629 = vmatprep.subr.mxu0 0.0
    %630 = vmatpush1.msra.mxu0 0.0
    %631 = vmatprep.subr.mxu0 0.0
    %632 = vmatpush1.msra.mxu0 0.0
    %633 = vmatprep.subr.mxu0 0.0
    %634 = vmatpush1.msra.mxu0 0.0
    %635 = vmatprep.subr.mxu0 0.0
    %636 = vmatpush1.msra.mxu0 0.0
    %637 = vmatprep.subr.mxu0 0.0
    %638 = vmatpush1.msra.mxu0 0.0
    %639 = vmatprep.subr.mxu0 0.0
    %640 = vmatpush1.msra.mxu0 0.0
    %641 = vmatprep.mubr.f32.mxu0 0.0
    %v642 = vand.u32 %v121, 4294901760
    %643 = vmatmul.mubr.f32.gmra.mrb[0].mxu0 %v642
    %v644 = vpop.f32.mrb[0].mxu0
    %v645 = vadd.f32 %v564, %v644
    %v646 = vpop.f32.mrb[0].mxu0
    %647 = vmatprep.mubr.f32.mxu0 0.0
    %v648 = vand.u32 %v124, 4294901760
    %649 = vmatmul.mubr.f32.gmra.mrb[0].mxu0 %v648
    %v650 = vpop.f32.mrb[0].mxu0
    %v651 = vadd.f32 %v570, %v650
    %v652 = vpop.f32.mrb[0].mxu0
    %653 = vdwg.mxu0
    %v654 = vld [vmem:[#allocation2] sm:$0xff]
    %v655 = vld [vmem:[#allocation2 + $0x8] sm:$0xff]
    %v656 = vld [vmem:[#allocation2 + $0x10] sm:$0xff]
    %v657 = vld [vmem:[#allocation2 + $0x18] sm:$0xff]
    %660 = vrot.lane.b32.xlu0 %v645, 96
    %v661 = vpop.permute.xlu0 %660
    %662 = vrot.lane.b32.xlu0 %v651, 96
    %v663 = vpop.permute.xlu0 %662
    %vm664 = vcmask 130048
    %v665 = vsel %vm664, %v645, 0
    %v667 = vsel %vm664, %v651, 0
    %v669 = vsel %vm664, %v661, 0
    %v671 = vsel %vm664, %v663, 0
    %673 = vmatprep.subr.mxu0 0.0
    %v674 = vand.u32 %v669, 4294901760
    %675 = vmatpush1.xpose.msra.mxu0 %v674
    %676 = vmatprep.subr.mxu0 0.0
    %v677 = vand.u32 %v671, 4294901760
    %678 = vmatpush1.xpose.msra.mxu0 %v677
    %679 = vmatprep.subr.mxu0 0.0
    %680 = vmatpush1.xpose.msra.mxu0 0.0
    %681 = vmatprep.subr.mxu0 0.0
    %682 = vmatpush1.xpose.msra.mxu0 0.0
    %683 = vmatprep.subr.mxu0 0.0
    %684 = vmatpush1.xpose.msra.mxu0 0.0
    %685 = vmatprep.subr.mxu0 0.0
    %686 = vmatpush1.xpose.msra.mxu0 0.0
    %687 = vmatprep.subr.mxu0 0.0
    %688 = vmatpush1.xpose.msra.mxu0 0.0
    %689 = vmatprep.subr.mxu0 0.0
    %690 = vmatpush1.xpose.msra.mxu0 0.0
    %691 = vmatprep.subr.mxu0 0.0
    %692 = vmatpush1.xpose.msra.mxu0 0.0
    %693 = vmatprep.subr.mxu0 0.0
    %694 = vmatpush1.xpose.msra.mxu0 0.0
    %695 = vmatprep.subr.mxu0 0.0
    %696 = vmatpush1.xpose.msra.mxu0 0.0
    %697 = vmatprep.subr.mxu0 0.0
    %698 = vmatpush1.xpose.msra.mxu0 0.0
    %699 = vmatprep.subr.mxu0 0.0
    %700 = vmatpush1.xpose.msra.mxu0 0.0
    %701 = vmatprep.subr.mxu0 0.0
    %702 = vmatpush1.xpose.msra.mxu0 0.0
    %703 = vmatprep.subr.mxu0 0.0
    %704 = vmatpush1.xpose.msra.mxu0 0.0
    %705 = vmatprep.subr.mxu0 0.0
    %706 = vmatpush1.xpose.msra.mxu0 0.0
    %707 = vmatprep.subr.mxu0 0.0
    %708 = vmatpush1.xpose.msra.mxu0 0.0
    %709 = vmatprep.subr.mxu0 0.0
    %710 = vmatpush1.xpose.msra.mxu0 0.0
    %711 = vmatprep.subr.mxu0 0.0
    %712 = vmatpush1.xpose.msra.mxu0 0.0
    %713 = vmatprep.subr.mxu0 0.0
    %714 = vmatpush1.xpose.msra.mxu0 0.0
    %715 = vmatprep.subr.mxu0 0.0
    %716 = vmatpush1.xpose.msra.mxu0 0.0
    %717 = vmatprep.subr.mxu0 0.0
    %718 = vmatpush1.xpose.msra.mxu0 0.0
    %719 = vmatprep.subr.mxu0 0.0
    %720 = vmatpush1.xpose.msra.mxu0 0.0
    %721 = vmatprep.subr.mxu0 0.0
    %722 = vmatpush1.xpose.msra.mxu0 0.0
    %723 = vmatprep.subr.mxu0 0.0
    %724 = vmatpush1.xpose.msra.mxu0 0.0
    %725 = vmatprep.subr.mxu0 0.0
    %726 = vmatpush1.xpose.msra.mxu0 0.0
    %727 = vmatprep.subr.mxu0 0.0
    %728 = vmatpush1.xpose.msra.mxu0 0.0
    %729 = vmatprep.subr.mxu0 0.0
    %730 = vmatpush1.xpose.msra.mxu0 0.0
    %731 = vmatprep.subr.mxu0 0.0
    %732 = vmatpush1.xpose.msra.mxu0 0.0
    %733 = vmatprep.subr.mxu0 0.0
    %734 = vmatpush1.xpose.msra.mxu0 0.0
    %735 = vmatprep.subr.mxu0 0.0
    %736 = vmatpush1.xpose.msra.mxu0 0.0
    %737 = vmatprep.subr.mxu0 0.0
    %738 = vmatpush1.xpose.msra.mxu0 0.0
    %739 = vmatprep.mubr.f32.mxu0 0.0
    %v740 = vand.u32 %v665, 4294901760
    %v741 = vsub.f32 %v665, %v740
    %v742 = vand.u32 %v741, 4294901760
    %v743 = vsub.f32 %v741, %v742
    %v744 = vand.u32 %v743, 4294901760
    %745 = vmatmul.mubr.f32.gmra.mrb[0].mxu0 %v744
    %v746 = vpop.f32.mrb[0].mxu0
    %v747 = vadd.f32 0.0, %v746
    %v748 = vpop.f32.mrb[0].mxu0
    %749 = vmatprep.mubr.f32.mxu0 0.0
    %v750 = vand.u32 %v667, 4294901760
    %v751 = vsub.f32 %v667, %v750
    %v752 = vand.u32 %v751, 4294901760
    %v753 = vsub.f32 %v751, %v752
    %v754 = vand.u32 %v753, 4294901760
    %755 = vmatmul.mubr.f32.gmra.mrb[0].mxu0 %v754
    %v756 = vpop.f32.mrb[0].mxu0
    %v757 = vadd.f32 0.0, %v756
    %v758 = vpop.f32.mrb[0].mxu0
    %759 = vdwg.mxu0
    %760 = vmatprep.subr.mxu0 0.0
    %v761 = vand.u32 %v669, 4294901760
    %v762 = vsub.f32 %v669, %v761
    %v763 = vand.u32 %v762, 4294901760
    %v764 = vsub.f32 %v762, %v763
    %v765 = vand.u32 %v764, 4294901760
    %766 = vmatpush1.xpose.msra.mxu0 %v765
    %767 = vmatprep.subr.mxu0 0.0
    %v768 = vand.u32 %v671, 4294901760
    %v769 = vsub.f32 %v671, %v768
    %v770 = vand.u32 %v769, 4294901760
    %v771 = vsub.f32 %v769, %v770
    %v772 = vand.u32 %v771, 4294901760
    %773 = vmatpush1.xpose.msra.mxu0 %v772
    %774 = vmatprep.subr.mxu0 0.0
    %775 = vmatpush1.xpose.msra.mxu0 0.0
    %776 = vmatprep.subr.mxu0 0.0
    %777 = vmatpush1.xpose.msra.mxu0 0.0
    %778 = vmatprep.subr.mxu0 0.0
    %779 = vmatpush1.xpose.msra.mxu0 0.0
    %780 = vmatprep.subr.mxu0 0.0
    %781 = vmatpush1.xpose.msra.mxu0 0.0
    %782 = vmatprep.subr.mxu0 0.0
    %783 = vmatpush1.xpose.msra.mxu0 0.0
    %784 = vmatprep.subr.mxu0 0.0
    %785 = vmatpush1.xpose.msra.mxu0 0.0
    %786 = vmatprep.subr.mxu0 0.0
    %787 = vmatpush1.xpose.msra.mxu0 0.0
    %788 = vmatprep.subr.mxu0 0.0
    %789 = vmatpush1.xpose.msra.mxu0 0.0
    %790 = vmatprep.subr.mxu0 0.0
    %791 = vmatpush1.xpose.msra.mxu0 0.0
    %792 = vmatprep.subr.mxu0 0.0
    %793 = vmatpush1.xpose.msra.mxu0 0.0
    %794 = vmatprep.subr.mxu0 0.0
    %795 = vmatpush1.xpose.msra.mxu0 0.0
    %796 = vmatprep.subr.mxu0 0.0
    %797 = vmatpush1.xpose.msra.mxu0 0.0
    %798 = vmatprep.subr.mxu0 0.0
    %799 = vmatpush1.xpose.msra.mxu0 0.0
    %800 = vmatprep.subr.mxu0 0.0
    %801 = vmatpush1.xpose.msra.mxu0 0.0
    %802 = vmatprep.subr.mxu0 0.0
    %803 = vmatpush1.xpose.msra.mxu0 0.0
    %804 = vmatprep.subr.mxu0 0.0
    %805 = vmatpush1.xpose.msra.mxu0 0.0
    %806 = vmatprep.subr.mxu0 0.0
    %807 = vmatpush1.xpose.msra.mxu0 0.0
    %808 = vmatprep.subr.mxu0 0.0
    %809 = vmatpush1.xpose.msra.mxu0 0.0
    %810 = vmatprep.subr.mxu0 0.0
    %811 = vmatpush1.xpose.msra.mxu0 0.0
    %812 = vmatprep.subr.mxu0 0.0
    %813 = vmatpush1.xpose.msra.mxu0 0.0
    %814 = vmatprep.subr.mxu0 0.0
    %815 = vmatpush1.xpose.msra.mxu0 0.0
    %816 = vmatprep.subr.mxu0 0.0
    %817 = vmatpush1.xpose.msra.mxu0 0.0
    %818 = vmatprep.subr.mxu0 0.0
    %819 = vmatpush1.xpose.msra.mxu0 0.0
    %820 = vmatprep.subr.mxu0 0.0
    %821 = vmatpush1.xpose.msra.mxu0 0.0
    %822 = vmatprep.subr.mxu0 0.0
    %823 = vmatpush1.xpose.msra.mxu0 0.0
    %824 = vmatprep.subr.mxu0 0.0
    %825 = vmatpush1.xpose.msra.mxu0 0.0
    %826 = vmatprep.subr.mxu0 0.0
    %827 = vmatpush1.xpose.msra.mxu0 0.0
    %828 = vmatprep.subr.mxu0 0.0
    %829 = vmatpush1.xpose.msra.mxu0 0.0
    %830 = vmatprep.subr.mxu0 0.0
    %831 = vmatpush1.xpose.msra.mxu0 0.0
    %832 = vmatprep.subr.mxu0 0.0
    %833 = vmatpush1.xpose.msra.mxu0 0.0
    %834 = vmatprep.mubr.f32.mxu0 0.0
    %v835 = vand.u32 %v665, 4294901760
    %836 = vmatmul.mubr.f32.gmra.mrb[0].mxu0 %v835
    %v837 = vpop.f32.mrb[0].mxu0
    %v838 = vadd.f32 %v747, %v837
    %v839 = vpop.f32.mrb[0].mxu0
    %840 = vmatprep.mubr.f32.mxu0 0.0
    %v841 = vand.u32 %v667, 4294901760
    %842 = vmatmul.mubr.f32.gmra.mrb[0].mxu0 %v841
    %v843 = vpop.f32.mrb[0].mxu0
    %v844 = vadd.f32 %v757, %v843
    %v845 = vpop.f32.mrb[0].mxu0
    %846 = vdwg.mxu0
    %847 = vmatprep.subr.mxu0 0.0
    %v848 = vand.u32 %v669, 4294901760
    %v849 = vsub.f32 %v669, %v848
    %850 = vmatpush1.xpose.msra.mxu0 %v849
    %851 = vmatprep.subr.mxu0 0.0
    %v852 = vand.u32 %v671, 4294901760
    %v853 = vsub.f32 %v671, %v852
    %854 = vmatpush1.xpose.msra.mxu0 %v853
    %855 = vmatprep.subr.mxu0 0.0
    %856 = vmatpush1.xpose.msra.mxu0 0.0
    %857 = vmatprep.subr.mxu0 0.0
    %858 = vmatpush1.xpose.msra.mxu0 0.0
    %859 = vmatprep.subr.mxu0 0.0
    %860 = vmatpush1.xpose.msra.mxu0 0.0
    %861 = vmatprep.subr.mxu0 0.0
    %862 = vmatpush1.xpose.msra.mxu0 0.0
    %863 = vmatprep.subr.mxu0 0.0
    %864 = vmatpush1.xpose.msra.mxu0 0.0
    %865 = vmatprep.subr.mxu0 0.0
    %866 = vmatpush1.xpose.msra.mxu0 0.0
    %867 = vmatprep.subr.mxu0 0.0
    %868 = vmatpush1.xpose.msra.mxu0 0.0
    %869 = vmatprep.subr.mxu0 0.0
    %870 = vmatpush1.xpose.msra.mxu0 0.0
    %871 = vmatprep.subr.mxu0 0.0
    %872 = vmatpush1.xpose.msra.mxu0 0.0
    %873 = vmatprep.subr.mxu0 0.0
    %874 = vmatpush1.xpose.msra.mxu0 0.0
    %875 = vmatprep.subr.mxu0 0.0
    %876 = vmatpush1.xpose.msra.mxu0 0.0
    %877 = vmatprep.subr.mxu0 0.0
    %878 = vmatpush1.xpose.msra.mxu0 0.0
    %879 = vmatprep.subr.mxu0 0.0
    %880 = vmatpush1.xpose.msra.mxu0 0.0
    %881 = vmatprep.subr.mxu0 0.0
    %882 = vmatpush1.xpose.msra.mxu0 0.0
    %883 = vmatprep.subr.mxu0 0.0
    %884 = vmatpush1.xpose.msra.mxu0 0.0
    %885 = vmatprep.subr.mxu0 0.0
    %886 = vmatpush1.xpose.msra.mxu0 0.0
    %887 = vmatprep.subr.mxu0 0.0
    %888 = vmatpush1.xpose.msra.mxu0 0.0
    %889 = vmatprep.subr.mxu0 0.0
    %890 = vmatpush1.xpose.msra.mxu0 0.0
    %891 = vmatprep.subr.mxu0 0.0
    %892 = vmatpush1.xpose.msra.mxu0 0.0
    %893 = vmatprep.subr.mxu0 0.0
    %894 = vmatpush1.xpose.msra.mxu0 0.0
    %895 = vmatprep.subr.mxu0 0.0
    %896 = vmatpush1.xpose.msra.mxu0 0.0
    %897 = vmatprep.subr.mxu0 0.0
    %898 = vmatpush1.xpose.msra.mxu0 0.0
    %899 = vmatprep.subr.mxu0 0.0
    %900 = vmatpush1.xpose.msra.mxu0 0.0
    %901 = vmatprep.subr.mxu0 0.0
    %902 = vmatpush1.xpose.msra.mxu0 0.0
    %903 = vmatprep.subr.mxu0 0.0
    %904 = vmatpush1.xpose.msra.mxu0 0.0
    %905 = vmatprep.subr.mxu0 0.0
    %906 = vmatpush1.xpose.msra.mxu0 0.0
    %907 = vmatprep.subr.mxu0 0.0
    %908 = vmatpush1.xpose.msra.mxu0 0.0
    %909 = vmatprep.subr.mxu0 0.0
    %910 = vmatpush1.xpose.msra.mxu0 0.0
    %911 = vmatprep.subr.mxu0 0.0
    %912 = vmatpush1.xpose.msra.mxu0 0.0
    %913 = vmatprep.subr.mxu0 0.0
    %914 = vmatpush1.xpose.msra.mxu0 0.0
    %915 = vmatprep.mubr.f32.mxu0 0.0
    %v916 = vand.u32 %v665, 4294901760
    %v917 = vsub.f32 %v665, %v916
    %918 = vmatmul.mubr.f32.gmra.mrb[0].mxu0 %v917
    %v919 = vpop.f32.mrb[0].mxu0
    %v920 = vadd.f32 %v838, %v919
    %v921 = vpop.f32.mrb[0].mxu0
    %922 = vmatprep.mubr.f32.mxu0 0.0
    %v923 = vand.u32 %v667, 4294901760
    %v924 = vsub.f32 %v667, %v923
    %925 = vmatmul.mubr.f32.gmra.mrb[0].mxu0 %v924
    %v926 = vpop.f32.mrb[0].mxu0
    %v927 = vadd.f32 %v844, %v926
    %v928 = vpop.f32.mrb[0].mxu0
    %929 = vdwg.mxu0
    %930 = vmatprep.subr.mxu0 0.0
    %v931 = vand.u32 %v669, 4294901760
    %932 = vmatpush1.xpose.msra.mxu0 %v931
    %933 = vmatprep.subr.mxu0 0.0
    %v934 = vand.u32 %v671, 4294901760
    %935 = vmatpush1.xpose.msra.mxu0 %v934
    %936 = vmatprep.subr.mxu0 0.0
    %937 = vmatpush1.xpose.msra.mxu0 0.0
    %938 = vmatprep.subr.mxu0 0.0
    %939 = vmatpush1.xpose.msra.mxu0 0.0
    %940 = vmatprep.subr.mxu0 0.0
    %941 = vmatpush1.xpose.msra.mxu0 0.0
    %942 = vmatprep.subr.mxu0 0.0
    %943 = vmatpush1.xpose.msra.mxu0 0.0
    %944 = vmatprep.subr.mxu0 0.0
    %945 = vmatpush1.xpose.msra.mxu0 0.0
    %946 = vmatprep.subr.mxu0 0.0
    %947 = vmatpush1.xpose.msra.mxu0 0.0
    %948 = vmatprep.subr.mxu0 0.0
    %949 = vmatpush1.xpose.msra.mxu0 0.0
    %950 = vmatprep.subr.mxu0 0.0
    %951 = vmatpush1.xpose.msra.mxu0 0.0
    %952 = vmatprep.subr.mxu0 0.0
    %953 = vmatpush1.xpose.msra.mxu0 0.0
    %954 = vmatprep.subr.mxu0 0.0
    %955 = vmatpush1.xpose.msra.mxu0 0.0
    %956 = vmatprep.subr.mxu0 0.0
    %957 = vmatpush1.xpose.msra.mxu0 0.0
    %958 = vmatprep.subr.mxu0 0.0
    %959 = vmatpush1.xpose.msra.mxu0 0.0
    %960 = vmatprep.subr.mxu0 0.0
    %961 = vmatpush1.xpose.msra.mxu0 0.0
    %962 = vmatprep.subr.mxu0 0.0
    %963 = vmatpush1.xpose.msra.mxu0 0.0
    %964 = vmatprep.subr.mxu0 0.0
    %965 = vmatpush1.xpose.msra.mxu0 0.0
    %966 = vmatprep.subr.mxu0 0.0
    %967 = vmatpush1.xpose.msra.mxu0 0.0
    %968 = vmatprep.subr.mxu0 0.0
    %969 = vmatpush1.xpose.msra.mxu0 0.0
    %970 = vmatprep.subr.mxu0 0.0
    %971 = vmatpush1.xpose.msra.mxu0 0.0
    %972 = vmatprep.subr.mxu0 0.0
    %973 = vmatpush1.xpose.msra.mxu0 0.0
    %974 = vmatprep.subr.mxu0 0.0
    %975 = vmatpush1.xpose.msra.mxu0 0.0
    %976 = vmatprep.subr.mxu0 0.0
    %977 = vmatpush1.xpose.msra.mxu0 0.0
    %978 = vmatprep.subr.mxu0 0.0
    %979 = vmatpush1.xpose.msra.mxu0 0.0
    %980 = vmatprep.subr.mxu0 0.0
    %981 = vmatpush1.xpose.msra.mxu0 0.0
    %982 = vmatprep.subr.mxu0 0.0
    %983 = vmatpush1.xpose.msra.mxu0 0.0
    %984 = vmatprep.subr.mxu0 0.0
    %985 = vmatpush1.xpose.msra.mxu0 0.0
    %986 = vmatprep.subr.mxu0 0.0
    %987 = vmatpush1.xpose.msra.mxu0 0.0
    %988 = vmatprep.subr.mxu0 0.0
    %989 = vmatpush1.xpose.msra.mxu0 0.0
    %990 = vmatprep.subr.mxu0 0.0
    %991 = vmatpush1.xpose.msra.mxu0 0.0
    %992 = vmatprep.subr.mxu0 0.0
    %993 = vmatpush1.xpose.msra.mxu0 0.0
    %994 = vmatprep.subr.mxu0 0.0
    %995 = vmatpush1.xpose.msra.mxu0 0.0
    %996 = vmatprep.mubr.f32.mxu0 0.0
    %v997 = vand.u32 %v665, 4294901760
    %v998 = vsub.f32 %v665, %v997
    %v999 = vand.u32 %v998, 4294901760
    %1000 = vmatmul.mubr.f32.gmra.mrb[0].mxu0 %v999
    %v1001 = vpop.f32.mrb[0].mxu0
    %v1002 = vadd.f32 %v920, %v1001
    %v1003 = vpop.f32.mrb[0].mxu0
    %1004 = vmatprep.mubr.f32.mxu0 0.0
    %v1005 = vand.u32 %v667, 4294901760
    %v1006 = vsub.f32 %v667, %v1005
    %v1007 = vand.u32 %v1006, 4294901760
    %1008 = vmatmul.mubr.f32.gmra.mrb[0].mxu0 %v1007
    %v1009 = vpop.f32.mrb[0].mxu0
    %v1010 = vadd.f32 %v927, %v1009
    %v1011 = vpop.f32.mrb[0].mxu0
    %1012 = vdwg.mxu0
    %1013 = vmatprep.subr.mxu0 0.0
    %v1014 = vand.u32 %v669, 4294901760
    %v1015 = vsub.f32 %v669, %v1014
    %v1016 = vand.u32 %v1015, 4294901760
    %1017 = vmatpush1.xpose.msra.mxu0 %v1016
    %1018 = vmatprep.subr.mxu0 0.0
    %v1019 = vand.u32 %v671, 4294901760
    %v1020 = vsub.f32 %v671, %v1019
    %v1021 = vand.u32 %v1020, 4294901760
    %1022 = vmatpush1.xpose.msra.mxu0 %v1021
    %1023 = vmatprep.subr.mxu0 0.0
    %1024 = vmatpush1.xpose.msra.mxu0 0.0
    %1025 = vmatprep.subr.mxu0 0.0
    %1026 = vmatpush1.xpose.msra.mxu0 0.0
    %1027 = vmatprep.subr.mxu0 0.0
    %1028 = vmatpush1.xpose.msra.mxu0 0.0
    %1029 = vmatprep.subr.mxu0 0.0
    %1030 = vmatpush1.xpose.msra.mxu0 0.0
    %1031 = vmatprep.subr.mxu0 0.0
    %1032 = vmatpush1.xpose.msra.mxu0 0.0
    %1033 = vmatprep.subr.mxu0 0.0
    %1034 = vmatpush1.xpose.msra.mxu0 0.0
    %1035 = vmatprep.subr.mxu0 0.0
    %1036 = vmatpush1.xpose.msra.mxu0 0.0
    %1037 = vmatprep.subr.mxu0 0.0
    %1038 = vmatpush1.xpose.msra.mxu0 0.0
    %1039 = vmatprep.subr.mxu0 0.0
    %1040 = vmatpush1.xpose.msra.mxu0 0.0
    %1041 = vmatprep.subr.mxu0 0.0
    %1042 = vmatpush1.xpose.msra.mxu0 0.0
    %1043 = vmatprep.subr.mxu0 0.0
    %1044 = vmatpush1.xpose.msra.mxu0 0.0
    %1045 = vmatprep.subr.mxu0 0.0
    %1046 = vmatpush1.xpose.msra.mxu0 0.0
    %1047 = vmatprep.subr.mxu0 0.0
    %1048 = vmatpush1.xpose.msra.mxu0 0.0
    %1049 = vmatprep.subr.mxu0 0.0
    %1050 = vmatpush1.xpose.msra.mxu0 0.0
    %1051 = vmatprep.subr.mxu0 0.0
    %1052 = vmatpush1.xpose.msra.mxu0 0.0
    %1053 = vmatprep.subr.mxu0 0.0
    %1054 = vmatpush1.xpose.msra.mxu0 0.0
    %1055 = vmatprep.subr.mxu0 0.0
    %1056 = vmatpush1.xpose.msra.mxu0 0.0
    %1057 = vmatprep.subr.mxu0 0.0
    %1058 = vmatpush1.xpose.msra.mxu0 0.0
    %1059 = vmatprep.subr.mxu0 0.0
    %1060 = vmatpush1.xpose.msra.mxu0 0.0
    %1061 = vmatprep.subr.mxu0 0.0
    %1062 = vmatpush1.xpose.msra.mxu0 0.0
    %1063 = vmatprep.subr.mxu0 0.0
    %1064 = vmatpush1.xpose.msra.mxu0 0.0
    %1065 = vmatprep.subr.mxu0 0.0
    %1066 = vmatpush1.xpose.msra.mxu0 0.0
    %1067 = vmatprep.subr.mxu0 0.0
    %1068 = vmatpush1.xpose.msra.mxu0 0.0
    %1069 = vmatprep.subr.mxu0 0.0
    %1070 = vmatpush1.xpose.msra.mxu0 0.0
    %1071 = vmatprep.subr.mxu0 0.0
    %1072 = vmatpush1.xpose.msra.mxu0 0.0
    %1073 = vmatprep.subr.mxu0 0.0
    %1074 = vmatpush1.xpose.msra.mxu0 0.0
    %1075 = vmatprep.subr.mxu0 0.0
    %1076 = vmatpush1.xpose.msra.mxu0 0.0
    %1077 = vmatprep.subr.mxu0 0.0
    %1078 = vmatpush1.xpose.msra.mxu0 0.0
    %1079 = vmatprep.subr.mxu0 0.0
    %1080 = vmatpush1.xpose.msra.mxu0 0.0
    %1081 = vmatprep.subr.mxu0 0.0
    %1082 = vmatpush1.xpose.msra.mxu0 0.0
    %1083 = vmatprep.mubr.f32.mxu0 0.0
    %v1084 = vand.u32 %v665, 4294901760
    %1085 = vmatmul.mubr.f32.gmra.mrb[0].mxu0 %v1084
    %v1086 = vpop.f32.mrb[0].mxu0
    %v1087 = vadd.f32 %v1002, %v1086
    %v1088 = vpop.f32.mrb[0].mxu0
    %1089 = vmatprep.mubr.f32.mxu0 0.0
    %v1090 = vand.u32 %v667, 4294901760
    %1091 = vmatmul.mubr.f32.gmra.mrb[0].mxu0 %v1090
    %v1092 = vpop.f32.mrb[0].mxu0
    %v1093 = vadd.f32 %v1010, %v1092
    %v1094 = vpop.f32.mrb[0].mxu0
    %1095 = vdwg.mxu0
    %1096 = vmatprep.subr.mxu0 0.0
    %v1097 = vand.u32 %v669, 4294901760
    %1098 = vmatpush1.xpose.msra.mxu0 %v1097
    %1099 = vmatprep.subr.mxu0 0.0
    %v1100 = vand.u32 %v671, 4294901760
    %1101 = vmatpush1.xpose.msra.mxu0 %v1100
    %1102 = vmatprep.subr.mxu0 0.0
    %1103 = vmatpush1.xpose.msra.mxu0 0.0
    %1104 = vmatprep.subr.mxu0 0.0
    %1105 = vmatpush1.xpose.msra.mxu0 0.0
    %1106 = vmatprep.subr.mxu0 0.0
    %1107 = vmatpush1.xpose.msra.mxu0 0.0
    %1108 = vmatprep.subr.mxu0 0.0
    %1109 = vmatpush1.xpose.msra.mxu0 0.0
    %1110 = vmatprep.subr.mxu0 0.0
    %1111 = vmatpush1.xpose.msra.mxu0 0.0
    %1112 = vmatprep.subr.mxu0 0.0
    %1113 = vmatpush1.xpose.msra.mxu0 0.0
    %1114 = vmatprep.subr.mxu0 0.0
    %1115 = vmatpush1.xpose.msra.mxu0 0.0
    %1116 = vmatprep.subr.mxu0 0.0
    %1117 = vmatpush1.xpose.msra.mxu0 0.0
    %1118 = vmatprep.subr.mxu0 0.0
    %1119 = vmatpush1.xpose.msra.mxu0 0.0
    %1120 = vmatprep.subr.mxu0 0.0
    %1121 = vmatpush1.xpose.msra.mxu0 0.0
    %1122 = vmatprep.subr.mxu0 0.0
    %1123 = vmatpush1.xpose.msra.mxu0 0.0
    %1124 = vmatprep.subr.mxu0 0.0
    %1125 = vmatpush1.xpose.msra.mxu0 0.0
    %1126 = vmatprep.subr.mxu0 0.0
    %1127 = vmatpush1.xpose.msra.mxu0 0.0
    %1128 = vmatprep.subr.mxu0 0.0
    %1129 = vmatpush1.xpose.msra.mxu0 0.0
    %1130 = vmatprep.subr.mxu0 0.0
    %1131 = vmatpush1.xpose.msra.mxu0 0.0
    %1132 = vmatprep.subr.mxu0 0.0
    %1133 = vmatpush1.xpose.msra.mxu0 0.0
    %1134 = vmatprep.subr.mxu0 0.0
    %1135 = vmatpush1.xpose.msra.mxu0 0.0
    %1136 = vmatprep.subr.mxu0 0.0
    %1137 = vmatpush1.xpose.msra.mxu0 0.0
    %1138 = vmatprep.subr.mxu0 0.0
    %1139 = vmatpush1.xpose.msra.mxu0 0.0
    %1140 = vmatprep.subr.mxu0 0.0
    %1141 = vmatpush1.xpose.msra.mxu0 0.0
    %1142 = vmatprep.subr.mxu0 0.0
    %1143 = vmatpush1.xpose.msra.mxu0 0.0
    %1144 = vmatprep.subr.mxu0 0.0
    %1145 = vmatpush1.xpose.msra.mxu0 0.0
    %1146 = vmatprep.subr.mxu0 0.0
    %1147 = vmatpush1.xpose.msra.mxu0 0.0
    %1148 = vmatprep.subr.mxu0 0.0
    %1149 = vmatpush1.xpose.msra.mxu0 0.0
    %1150 = vmatprep.subr.mxu0 0.0
    %1151 = vmatpush1.xpose.msra.mxu0 0.0
    %1152 = vmatprep.subr.mxu0 0.0
    %1153 = vmatpush1.xpose.msra.mxu0 0.0
    %1154 = vmatprep.subr.mxu0 0.0
    %1155 = vmatpush1.xpose.msra.mxu0 0.0
    %1156 = vmatprep.subr.mxu0 0.0
    %1157 = vmatpush1.xpose.msra.mxu0 0.0
    %1158 = vmatprep.subr.mxu0 0.0
    %1159 = vmatpush1.xpose.msra.mxu0 0.0
    %1160 = vmatprep.subr.mxu0 0.0
    %1161 = vmatpush1.xpose.msra.mxu0 0.0
    %1162 = vmatprep.mubr.f32.mxu0 0.0
    %v1163 = vand.u32 %v665, 4294901760
    %1164 = vmatmul.mubr.f32.gmra.mrb[0].mxu0 %v1163
    %v1165 = vpop.f32.mrb[0].mxu0
    %v1166 = vadd.f32 %v1087, %v1165
    %v1167 = vpop.f32.mrb[0].mxu0
    %1168 = vmatprep.mubr.f32.mxu0 0.0
    %v1169 = vand.u32 %v667, 4294901760
    %1170 = vmatmul.mubr.f32.gmra.mrb[0].mxu0 %v1169
    %v1171 = vpop.f32.mrb[0].mxu0
    %v1172 = vadd.f32 %v1093, %v1171
    %v1173 = vpop.f32.mrb[0].mxu0
    %1174 = vdwg.mxu0
    %v1175 = vmul.f32 %v1166, 0.25
    %v1176 = vmul.f32 %v1172, 0.25
    %v1177 = vadd.f32 %v1175, %v72
    %v1178 = vadd.f32 %v1176, %v73
    %v1179 = vsel %vm664, %v1177, -inf
    %1180 = vmax.xlane.f32.xlu0 %v1179
    %v1181 = vpop.xlane.xlu0 %1180
    %v1182 = vsel %vm664, %v1178, -inf
    %1183 = vmax.xlane.f32.xlu0 %v1182
    %v1184 = vpop.xlane.xlu0 %1183
    %v1185 = vsub.f32 %v1177, %v1181
    %v1186 = vsub.f32 %v1178, %v1184
    %v1187 = vmul.f32 %v1185, 1.442695
    %v1188 = vpow.pop %v1187
    %v1189 = vmul.f32 %v1186, 1.442695
    %v1190 = vpow.pop %v1189
    %v1191 = vsel %vm664, %v1188, 0.0
    %1192 = vadd.xlane.f32.xlu0 %v1191
    %v1193 = vpop.xlane.xlu0 %1192
    %v1194 = vsel %vm664, %v1190, 0.0
    %1195 = vadd.xlane.f32.xlu0 %v1194
    %v1196 = vpop.xlane.xlu0 %1195
    %v1197 = vrcp.pop %v1193
    %v1198 = vrcp.pop %v1196
    %v1199 = vmul.f32 %v1188, %v1197
    %v1200 = vmul.f32 %v1190, %v1198
    %1201 = vrot.lane.b32.xlu0 %v645, 64
    %v1202 = vpop.permute.xlu0 %1201
    %1203 = vrot.lane.b32.xlu0 %v651, 64
    %v1204 = vpop.permute.xlu0 %1203
    %v1208 = vsel %vm664, %v1199, 0
    %v1211 = vsel %vm664, %v1200, 0
    %1213 = vmatprep.subr.mxu0 0.0
    %v1214 = vand.u32 %v1202, 4294901760
    %1215 = vmatpush1.msra.mxu0 %v1214
    %1216 = vmatprep.subr.mxu0 0.0
    %v1217 = vand.u32 %v1204, 4294901760
    %1218 = vmatpush1.msra.mxu0 %v1217
    %1219 = vmatprep.subr.mxu0 0.0
    %1220 = vmatpush1.msra.mxu0 0.0
    %1221 = vmatprep.subr.mxu0 0.0
    %1222 = vmatpush1.msra.mxu0 0.0
    %1223 = vmatprep.subr.mxu0 0.0
    %1224 = vmatpush1.msra.mxu0 0.0
    %1225 = vmatprep.subr.mxu0 0.0
    %1226 = vmatpush1.msra.mxu0 0.0
    %1227 = vmatprep.subr.mxu0 0.0
    %1228 = vmatpush1.msra.mxu0 0.0
    %1229 = vmatprep.subr.mxu0 0.0
    %1230 = vmatpush1.msra.mxu0 0.0
    %1231 = vmatprep.subr.mxu0 0.0
    %1232 = vmatpush1.msra.mxu0 0.0
    %1233 = vmatprep.subr.mxu0 0.0
    %1234 = vmatpush1.msra.mxu0 0.0
    %1235 = vmatprep.subr.mxu0 0.0
    %1236 = vmatpush1.msra.mxu0 0.0
    %1237 = vmatprep.subr.mxu0 0.0
    %1238 = vmatpush1.msra.mxu0 0.0
    %1239 = vmatprep.subr.mxu0 0.0
    %1240 = vmatpush1.msra.mxu0 0.0
    %1241 = vmatprep.subr.mxu0 0.0
    %1242 = vmatpush1.msra.mxu0 0.0
    %1243 = vmatprep.subr.mxu0 0.0
    %1244 = vmatpush1.msra.mxu0 0.0
    %1245 = vmatprep.subr.mxu0 0.0
    %1246 = vmatpush1.msra.mxu0 0.0
    %1247 = vmatprep.subr.mxu0 0.0
    %1248 = vmatpush1.msra.mxu0 0.0
    %1249 = vmatprep.subr.mxu0 0.0
    %1250 = vmatpush1.msra.mxu0 0.0
    %1251 = vmatprep.subr.mxu0 0.0
    %1252 = vmatpush1.msra.mxu0 0.0
    %1253 = vmatprep.subr.mxu0 0.0
    %1254 = vmatpush1.msra.mxu0 0.0
    %1255 = vmatprep.subr.mxu0 0.0
    %1256 = vmatpush1.msra.mxu0 0.0
    %1257 = vmatprep.subr.mxu0 0.0
    %1258 = vmatpush1.msra.mxu0 0.0
    %1259 = vmatprep.subr.mxu0 0.0
    %1260 = vmatpush1.msra.mxu0 0.0
    %1261 = vmatprep.subr.mxu0 0.0
    %1262 = vmatpush1.msra.mxu0 0.0
    %1263 = vmatprep.subr.mxu0 0.0
    %1264 = vmatpush1.msra.mxu0 0.0
    %1265 = vmatprep.subr.mxu0 0.0
    %1266 = vmatpush1.msra.mxu0 0.0
    %1267 = vmatprep.subr.mxu0 0.0
    %1268 = vmatpush1.msra.mxu0 0.0
    %1269 = vmatprep.subr.mxu0 0.0
    %1270 = vmatpush1.msra.mxu0 0.0
    %1271 = vmatprep.subr.mxu0 0.0
    %1272 = vmatpush1.msra.mxu0 0.0
    %1273 = vmatprep.subr.mxu0 0.0
    %1274 = vmatpush1.msra.mxu0 0.0
    %1275 = vmatprep.subr.mxu0 0.0
    %1276 = vmatpush1.msra.mxu0 0.0
    %1277 = vmatprep.subr.mxu0 0.0
    %1278 = vmatpush1.msra.mxu0 0.0
    %1279 = vmatprep.mubr.f32.mxu0 0.0
    %v1280 = vand.u32 %v1208, 4294901760
    %v1281 = vsub.f32 %v1208, %v1280
    %v1282 = vand.u32 %v1281, 4294901760
    %v1283 = vsub.f32 %v1281, %v1282
    %v1284 = vand.u32 %v1283, 4294901760
    %1285 = vmatmul.mubr.f32.gmra.mrb[0].mxu0 %v1284
    %v1286 = vpop.f32.mrb[0].mxu0
    %v1287 = vadd.f32 0.0, %v1286
    %v1288 = vpop.f32.mrb[0].mxu0
    %1289 = vmatprep.mubr.f32.mxu0 0.0
    %v1290 = vand.u32 %v1211, 4294901760
    %v1291 = vsub.f32 %v1211, %v1290
    %v1292 = vand.u32 %v1291, 4294901760
    %v1293 = vsub.f32 %v1291, %v1292
    %v1294 = vand.u32 %v1293, 4294901760
    %1295 = vmatmul.mubr.f32.gmra.mrb[0].mxu0 %v1294
    %v1296 = vpop.f32.mrb[0].mxu0
    %v1297 = vadd.f32 0.0, %v1296
    %v1298 = vpop.f32.mrb[0].mxu0
    %1299 = vdwg.mxu0
    %1300 = vmatprep.subr.mxu0 0.0
    %v1301 = vand.u32 %v1202, 4294901760
    %v1302 = vsub.f32 %v1202, %v1301
    %v1303 = vand.u32 %v1302, 4294901760
    %v1304 = vsub.f32 %v1302, %v1303
    %v1305 = vand.u32 %v1304, 4294901760
    %1306 = vmatpush1.msra.mxu0 %v1305
    %1307 = vmatprep.subr.mxu0 0.0
    %v1308 = vand.u32 %v1204, 4294901760
    %v1309 = vsub.f32 %v1204, %v1308
    %v1310 = vand.u32 %v1309, 4294901760
    %v1311 = vsub.f32 %v1309, %v1310
    %v1312 = vand.u32 %v1311, 4294901760
    %1313 = vmatpush1.msra.mxu0 %v1312
    %1314 = vmatprep.subr.mxu0 0.0
    %1315 = vmatpush1.msra.mxu0 0.0
    %1316 = vmatprep.subr.mxu0 0.0
    %1317 = vmatpush1.msra.mxu0 0.0
    %1318 = vmatprep.subr.mxu0 0.0
    %1319 = vmatpush1.msra.mxu0 0.0
    %1320 = vmatprep.subr.mxu0 0.0
    %1321 = vmatpush1.msra.mxu0 0.0
    %1322 = vmatprep.subr.mxu0 0.0
    %1323 = vmatpush1.msra.mxu0 0.0
    %1324 = vmatprep.subr.mxu0 0.0
    %1325 = vmatpush1.msra.mxu0 0.0
    %1326 = vmatprep.subr.mxu0 0.0
    %1327 = vmatpush1.msra.mxu0 0.0
    %1328 = vmatprep.subr.mxu0 0.0
    %1329 = vmatpush1.msra.mxu0 0.0
    %1330 = vmatprep.subr.mxu0 0.0
    %1331 = vmatpush1.msra.mxu0 0.0
    %1332 = vmatprep.subr.mxu0 0.0
    %1333 = vmatpush1.msra.mxu0 0.0
    %1334 = vmatprep.subr.mxu0 0.0
    %1335 = vmatpush1.msra.mxu0 0.0
    %1336 = vmatprep.subr.mxu0 0.0
    %1337 = vmatpush1.msra.mxu0 0.0
    %1338 = vmatprep.subr.mxu0 0.0
    %1339 = vmatpush1.msra.mxu0 0.0
    %1340 = vmatprep.subr.mxu0 0.0
    %1341 = vmatpush1.msra.mxu0 0.0
    %1342 = vmatprep.subr.mxu0 0.0
    %1343 = vmatpush1.msra.mxu0 0.0
    %1344 = vmatprep.subr.mxu0 0.0
    %1345 = vmatpush1.msra.mxu0 0.0
    %1346 = vmatprep.subr.mxu0 0.0
    %1347 = vmatpush1.msra.mxu0 0.0
    %1348 = vmatprep.subr.mxu0 0.0
    %1349 = vmatpush1.msra.mxu0 0.0
    %1350 = vmatprep.subr.mxu0 0.0
    %1351 = vmatpush1.msra.mxu0 0.0
    %1352 = vmatprep.subr.mxu0 0.0
    %1353 = vmatpush1.msra.mxu0 0.0
    %1354 = vmatprep.subr.mxu0 0.0
    %1355 = vmatpush1.msra.mxu0 0.0
    %1356 = vmatprep.subr.mxu0 0.0
    %1357 = vmatpush1.msra.mxu0 0.0
    %1358 = vmatprep.subr.mxu0 0.0
    %1359 = vmatpush1.msra.mxu0 0.0
    %1360 = vmatprep.subr.mxu0 0.0
    %1361 = vmatpush1.msra.mxu0 0.0
    %1362 = vmatprep.subr.mxu0 0.0
    %1363 = vmatpush1.msra.mxu0 0.0
    %1364 = vmatprep.subr.mxu0 0.0
    %1365 = vmatpush1.msra.mxu0 0.0
    %1366 = vmatprep.subr.mxu0 0.0
    %1367 = vmatpush1.msra.mxu0 0.0
    %1368 = vmatprep.subr.mxu0 0.0
    %1369 = vmatpush1.msra.mxu0 0.0
    %1370 = vmatprep.subr.mxu0 0.0
    %1371 = vmatpush1.msra.mxu0 0.0
    %1372 = vmatprep.subr.mxu0 0.0
    %1373 = vmatpush1.msra.mxu0 0.0
    %1374 = vmatprep.mubr.f32.mxu0 0.0
    %v1375 = vand.u32 %v1208, 4294901760
    %1376 = vmatmul.mubr.f32.gmra.mrb[0].mxu0 %v1375
    %v1377 = vpop.f32.mrb[0].mxu0
    %v1378 = vadd.f32 %v1287, %v1377
    %v1379 = vpop.f32.mrb[0].mxu0
    %1380 = vmatprep.mubr.f32.mxu0 0.0
    %v1381 = vand.u32 %v1211, 4294901760
    %1382 = vmatmul.mubr.f32.gmra.mrb[0].mxu0 %v1381
    %v1383 = vpop.f32.mrb[0].mxu0
    %v1384 = vadd.f32 %v1297, %v1383
    %v1385 = vpop.f32.mrb[0].mxu0
    %1386 = vdwg.mxu0
    %1387 = vmatprep.subr.mxu0 0.0
    %v1388 = vand.u32 %v1202, 4294901760
    %v1389 = vsub.f32 %v1202, %v1388
    %1390 = vmatpush1.msra.mxu0 %v1389
    %1391 = vmatprep.subr.mxu0 0.0
    %v1392 = vand.u32 %v1204, 4294901760
    %v1393 = vsub.f32 %v1204, %v1392
    %1394 = vmatpush1.msra.mxu0 %v1393
    %1395 = vmatprep.subr.mxu0 0.0
    %1396 = vmatpush1.msra.mxu0 0.0
    %1397 = vmatprep.subr.mxu0 0.0
    %1398 = vmatpush1.msra.mxu0 0.0
    %1399 = vmatprep.subr.mxu0 0.0
    %1400 = vmatpush1.msra.mxu0 0.0
    %1401 = vmatprep.subr.mxu0 0.0
    %1402 = vmatpush1.msra.mxu0 0.0
    %1403 = vmatprep.subr.mxu0 0.0
    %1404 = vmatpush1.msra.mxu0 0.0
    %1405 = vmatprep.subr.mxu0 0.0
    %1406 = vmatpush1.msra.mxu0 0.0
    %1407 = vmatprep.subr.mxu0 0.0
    %1408 = vmatpush1.msra.mxu0 0.0
    %1409 = vmatprep.subr.mxu0 0.0
    %1410 = vmatpush1.msra.mxu0 0.0
    %1411 = vmatprep.subr.mxu0 0.0
    %1412 = vmatpush1.msra.mxu0 0.0
    %1413 = vmatprep.subr.mxu0 0.0
    %1414 = vmatpush1.msra.mxu0 0.0
    %1415 = vmatprep.subr.mxu0 0.0
    %1416 = vmatpush1.msra.mxu0 0.0
    %1417 = vmatprep.subr.mxu0 0.0
    %1418 = vmatpush1.msra.mxu0 0.0
    %1419 = vmatprep.subr.mxu0 0.0
    %1420 = vmatpush1.msra.mxu0 0.0
    %1421 = vmatprep.subr.mxu0 0.0
    %1422 = vmatpush1.msra.mxu0 0.0
    %1423 = vmatprep.subr.mxu0 0.0
    %1424 = vmatpush1.msra.mxu0 0.0
    %1425 = vmatprep.subr.mxu0 0.0
    %1426 = vmatpush1.msra.mxu0 0.0
    %1427 = vmatprep.subr.mxu0 0.0
    %1428 = vmatpush1.msra.mxu0 0.0
    %1429 = vmatprep.subr.mxu0 0.0
    %1430 = vmatpush1.msra.mxu0 0.0
    %1431 = vmatprep.subr.mxu0 0.0
    %1432 = vmatpush1.msra.mxu0 0.0
    %1433 = vmatprep.subr.mxu0 0.0
    %1434 = vmatpush1.msra.mxu0 0.0
    %1435 = vmatprep.subr.mxu0 0.0
    %1436 = vmatpush1.msra.mxu0 0.0
    %1437 = vmatprep.subr.mxu0 0.0
    %1438 = vmatpush1.msra.mxu0 0.0
    %1439 = vmatprep.subr.mxu0 0.0
    %1440 = vmatpush1.msra.mxu0 0.0
    %1441 = vmatprep.subr.mxu0 0.0
    %1442 = vmatpush1.msra.mxu0 0.0
    %1443 = vmatprep.subr.mxu0 0.0
    %1444 = vmatpush1.msra.mxu0 0.0
    %1445 = vmatprep.subr.mxu0 0.0
    %1446 = vmatpush1.msra.mxu0 0.0
    %1447 = vmatprep.subr.mxu0 0.0
    %1448 = vmatpush1.msra.mxu0 0.0
    %1449 = vmatprep.subr.mxu0 0.0
    %1450 = vmatpush1.msra.mxu0 0.0
    %1451 = vmatprep.subr.mxu0 0.0
    %1452 = vmatpush1.msra.mxu0 0.0
    %1453 = vmatprep.subr.mxu0 0.0
    %1454 = vmatpush1.msra.mxu0 0.0
    %1455 = vmatprep.mubr.f32.mxu0 0.0
    %v1456 = vand.u32 %v1208, 4294901760
    %v1457 = vsub.f32 %v1208, %v1456
    %1458 = vmatmul.mubr.f32.gmra.mrb[0].mxu0 %v1457
    %v1459 = vpop.f32.mrb[0].mxu0
    %v1460 = vadd.f32 %v1378, %v1459
    %v1461 = vpop.f32.mrb[0].mxu0
    %1462 = vmatprep.mubr.f32.mxu0 0.0
    %v1463 = vand.u32 %v1211, 4294901760
    %v1464 = vsub.f32 %v1211, %v1463
    %1465 = vmatmul.mubr.f32.gmra.mrb[0].mxu0 %v1464
    %v1466 = vpop.f32.mrb[0].mxu0
    %v1467 = vadd.f32 %v1384, %v1466
    %v1468 = vpop.f32.mrb[0].mxu0
    %1469 = vdwg.mxu0
    %1470 = vmatprep.subr.mxu0 0.0
    %v1471 = vand.u32 %v1202, 4294901760
    %1472 = vmatpush1.msra.mxu0 %v1471
    %1473 = vmatprep.subr.mxu0 0.0
    %v1474 = vand.u32 %v1204, 4294901760
    %1475 = vmatpush1.msra.mxu0 %v1474
    %1476 = vmatprep.subr.mxu0 0.0
    %1477 = vmatpush1.msra.mxu0 0.0
    %1478 = vmatprep.subr.mxu0 0.0
    %1479 = vmatpush1.msra.mxu0 0.0
    %1480 = vmatprep.subr.mxu0 0.0
    %1481 = vmatpush1.msra.mxu0 0.0
    %1482 = vmatprep.subr.mxu0 0.0
    %1483 = vmatpush1.msra.mxu0 0.0
    %1484 = vmatprep.subr.mxu0 0.0
    %1485 = vmatpush1.msra.mxu0 0.0
    %1486 = vmatprep.subr.mxu0 0.0
    %1487 = vmatpush1.msra.mxu0 0.0
    %1488 = vmatprep.subr.mxu0 0.0
    %1489 = vmatpush1.msra.mxu0 0.0
    %1490 = vmatprep.subr.mxu0 0.0
    %1491 = vmatpush1.msra.mxu0 0.0
    %1492 = vmatprep.subr.mxu0 0.0
    %1493 = vmatpush1.msra.mxu0 0.0
    %1494 = vmatprep.subr.mxu0 0.0
    %1495 = vmatpush1.msra.mxu0 0.0
    %1496 = vmatprep.subr.mxu0 0.0
    %1497 = vmatpush1.msra.mxu0 0.0
    %1498 = vmatprep.subr.mxu0 0.0
    %1499 = vmatpush1.msra.mxu0 0.0
    %1500 = vmatprep.subr.mxu0 0.0
    %1501 = vmatpush1.msra.mxu0 0.0
    %1502 = vmatprep.subr.mxu0 0.0
    %1503 = vmatpush1.msra.mxu0 0.0
    %1504 = vmatprep.subr.mxu0 0.0
    %1505 = vmatpush1.msra.mxu0 0.0
    %1506 = vmatprep.subr.mxu0 0.0
    %1507 = vmatpush1.msra.mxu0 0.0
    %1508 = vmatprep.subr.mxu0 0.0
    %1509 = vmatpush1.msra.mxu0 0.0
    %1510 = vmatprep.subr.mxu0 0.0
    %1511 = vmatpush1.msra.mxu0 0.0
    %1512 = vmatprep.subr.mxu0 0.0
    %1513 = vmatpush1.msra.mxu0 0.0
    %1514 = vmatprep.subr.mxu0 0.0
    %1515 = vmatpush1.msra.mxu0 0.0
    %1516 = vmatprep.subr.mxu0 0.0
    %1517 = vmatpush1.msra.mxu0 0.0
    %1518 = vmatprep.subr.mxu0 0.0
    %1519 = vmatpush1.msra.mxu0 0.0
    %1520 = vmatprep.subr.mxu0 0.0
    %1521 = vmatpush1.msra.mxu0 0.0
    %1522 = vmatprep.subr.mxu0 0.0
    %1523 = vmatpush1.msra.mxu0 0.0
    %1524 = vmatprep.subr.mxu0 0.0
    %1525 = vmatpush1.msra.mxu0 0.0
    %1526 = vmatprep.subr.mxu0 0.0
    %1527 = vmatpush1.msra.mxu0 0.0
    %1528 = vmatprep.subr.mxu0 0.0
    %1529 = vmatpush1.msra.mxu0 0.0
    %1530 = vmatprep.subr.mxu0 0.0
    %1531 = vmatpush1.msra.mxu0 0.0
    %1532 = vmatprep.subr.mxu0 0.0
    %1533 = vmatpush1.msra.mxu0 0.0
    %1534 = vmatprep.subr.mxu0 0.0
    %1535 = vmatpush1.msra.mxu0 0.0
    %1536 = vmatprep.mubr.f32.mxu0 0.0
    %v1537 = vand.u32 %v1208, 4294901760
    %v1538 = vsub.f32 %v1208, %v1537
    %v1539 = vand.u32 %v1538, 4294901760
    %1540 = vmatmul.mubr.f32.gmra.mrb[0].mxu0 %v1539
    %v1541 = vpop.f32.mrb[0].mxu0
    %v1542 = vadd.f32 %v1460, %v1541
    %v1543 = vpop.f32.mrb[0].mxu0
    %1544 = vmatprep.mubr.f32.mxu0 0.0
    %v1545 = vand.u32 %v1211, 4294901760
    %v1546 = vsub.f32 %v1211, %v1545
    %v1547 = vand.u32 %v1546, 4294901760
    %1548 = vmatmul.mubr.f32.gmra.mrb[0].mxu0 %v1547
    %v1549 = vpop.f32.mrb[0].mxu0
    %v1550 = vadd.f32 %v1467, %v1549
    %v1551 = vpop.f32.mrb[0].mxu0
    %1552 = vdwg.mxu0
    %1553 = vmatprep.subr.mxu0 0.0
    %v1554 = vand.u32 %v1202, 4294901760
    %v1555 = vsub.f32 %v1202, %v1554
    %v1556 = vand.u32 %v1555, 4294901760
    %1557 = vmatpush1.msra.mxu0 %v1556
    %1558 = vmatprep.subr.mxu0 0.0
    %v1559 = vand.u32 %v1204, 4294901760
    %v1560 = vsub.f32 %v1204, %v1559
    %v1561 = vand.u32 %v1560, 4294901760
    %1562 = vmatpush1.msra.mxu0 %v1561
    %1563 = vmatprep.subr.mxu0 0.0
    %1564 = vmatpush1.msra.mxu0 0.0
    %1565 = vmatprep.subr.mxu0 0.0
    %1566 = vmatpush1.msra.mxu0 0.0
    %1567 = vmatprep.subr.mxu0 0.0
    %1568 = vmatpush1.msra.mxu0 0.0
    %1569 = vmatprep.subr.mxu0 0.0
    %1570 = vmatpush1.msra.mxu0 0.0
    %1571 = vmatprep.subr.mxu0 0.0
    %1572 = vmatpush1.msra.mxu0 0.0
    %1573 = vmatprep.subr.mxu0 0.0
    %1574 = vmatpush1.msra.mxu0 0.0
    %1575 = vmatprep.subr.mxu0 0.0
    %1576 = vmatpush1.msra.mxu0 0.0
    %1577 = vmatprep.subr.mxu0 0.0
    %1578 = vmatpush1.msra.mxu0 0.0
    %1579 = vmatprep.subr.mxu0 0.0
    %1580 = vmatpush1.msra.mxu0 0.0
    %1581 = vmatprep.subr.mxu0 0.0
    %1582 = vmatpush1.msra.mxu0 0.0
    %1583 = vmatprep.subr.mxu0 0.0
    %1584 = vmatpush1.msra.mxu0 0.0
    %1585 = vmatprep.subr.mxu0 0.0
    %1586 = vmatpush1.msra.mxu0 0.0
    %1587 = vmatprep.subr.mxu0 0.0
    %1588 = vmatpush1.msra.mxu0 0.0
    %1589 = vmatprep.subr.mxu0 0.0
    %1590 = vmatpush1.msra.mxu0 0.0
    %1591 = vmatprep.subr.mxu0 0.0
    %1592 = vmatpush1.msra.mxu0 0.0
    %1593 = vmatprep.subr.mxu0 0.0
    %1594 = vmatpush1.msra.mxu0 0.0
    %1595 = vmatprep.subr.mxu0 0.0
    %1596 = vmatpush1.msra.mxu0 0.0
    %1597 = vmatprep.subr.mxu0 0.0
    %1598 = vmatpush1.msra.mxu0 0.0
    %1599 = vmatprep.subr.mxu0 0.0
    %1600 = vmatpush1.msra.mxu0 0.0
    %1601 = vmatprep.subr.mxu0 0.0
    %1602 = vmatpush1.msra.mxu0 0.0
    %1603 = vmatprep.subr.mxu0 0.0
    %1604 = vmatpush1.msra.mxu0 0.0
    %1605 = vmatprep.subr.mxu0 0.0
    %1606 = vmatpush1.msra.mxu0 0.0
    %1607 = vmatprep.subr.mxu0 0.0
    %1608 = vmatpush1.msra.mxu0 0.0
    %1609 = vmatprep.subr.mxu0 0.0
    %1610 = vmatpush1.msra.mxu0 0.0
    %1611 = vmatprep.subr.mxu0 0.0
    %1612 = vmatpush1.msra.mxu0 0.0
    %1613 = vmatprep.subr.mxu0 0.0
    %1614 = vmatpush1.msra.mxu0 0.0
    %1615 = vmatprep.subr.mxu0 0.0
    %1616 = vmatpush1.msra.mxu0 0.0
    %1617 = vmatprep.subr.mxu0 0.0
    %1618 = vmatpush1.msra.mxu0 0.0
    %1619 = vmatprep.subr.mxu0 0.0
    %1620 = vmatpush1.msra.mxu0 0.0
    %1621 = vmatprep.subr.mxu0 0.0
    %1622 = vmatpush1.msra.mxu0 0.0
    %1623 = vmatprep.mubr.f32.mxu0 0.0
    %v1624 = vand.u32 %v1208, 4294901760
    %1625 = vmatmul.mubr.f32.gmra.mrb[0].mxu0 %v1624
    %v1626 = vpop.f32.mrb[0].mxu0
    %v1627 = vadd.f32 %v1542, %v1626
    %v1628 = vpop.f32.mrb[0].mxu0
    %1629 = vmatprep.mubr.f32.mxu0 0.0
    %v1630 = vand.u32 %v1211, 4294901760
    %1631 = vmatmul.mubr.f32.gmra.mrb[0].mxu0 %v1630
    %v1632 = vpop.f32.mrb[0].mxu0
    %v1633 = vadd.f32 %v1550, %v1632
    %v1634 = vpop.f32.mrb[0].mxu0
    %1635 = vdwg.mxu0
    %1636 = vmatprep.subr.mxu0 0.0
    %v1637 = vand.u32 %v1202, 4294901760
    %1638 = vmatpush1.msra.mxu0 %v1637
    %1639 = vmatprep.subr.mxu0 0.0
    %v1640 = vand.u32 %v1204, 4294901760
    %1641 = vmatpush1.msra.mxu0 %v1640
    %1642 = vmatprep.subr.mxu0 0.0
    %1643 = vmatpush1.msra.mxu0 0.0
    %1644 = vmatprep.subr.mxu0 0.0
    %1645 = vmatpush1.msra.mxu0 0.0
    %1646 = vmatprep.subr.mxu0 0.0
    %1647 = vmatpush1.msra.mxu0 0.0
    %1648 = vmatprep.subr.mxu0 0.0
    %1649 = vmatpush1.msra.mxu0 0.0
    %1650 = vmatprep.subr.mxu0 0.0
    %1651 = vmatpush1.msra.mxu0 0.0
    %1652 = vmatprep.subr.mxu0 0.0
    %1653 = vmatpush1.msra.mxu0 0.0
    %1654 = vmatprep.subr.mxu0 0.0
    %1655 = vmatpush1.msra.mxu0 0.0
    %1656 = vmatprep.subr.mxu0 0.0
    %1657 = vmatpush1.msra.mxu0 0.0
    %1658 = vmatprep.subr.mxu0 0.0
    %1659 = vmatpush1.msra.mxu0 0.0
    %1660 = vmatprep.subr.mxu0 0.0
    %1661 = vmatpush1.msra.mxu0 0.0
    %1662 = vmatprep.subr.mxu0 0.0
    %1663 = vmatpush1.msra.mxu0 0.0
    %1664 = vmatprep.subr.mxu0 0.0
    %1665 = vmatpush1.msra.mxu0 0.0
    %1666 = vmatprep.subr.mxu0 0.0
    %1667 = vmatpush1.msra.mxu0 0.0
    %1668 = vmatprep.subr.mxu0 0.0
    %1669 = vmatpush1.msra.mxu0 0.0
    %1670 = vmatprep.subr.mxu0 0.0
    %1671 = vmatpush1.msra.mxu0 0.0
    %1672 = vmatprep.subr.mxu0 0.0
    %1673 = vmatpush1.msra.mxu0 0.0
    %1674 = vmatprep.subr.mxu0 0.0
    %1675 = vmatpush1.msra.mxu0 0.0
    %1676 = vmatprep.subr.mxu0 0.0
    %1677 = vmatpush1.msra.mxu0 0.0
    %1678 = vmatprep.subr.mxu0 0.0
    %1679 = vmatpush1.msra.mxu0 0.0
    %1680 = vmatprep.subr.mxu0 0.0
    %1681 = vmatpush1.msra.mxu0 0.0
    %1682 = vmatprep.subr.mxu0 0.0
    %1683 = vmatpush1.msra.mxu0 0.0
    %1684 = vmatprep.subr.mxu0 0.0
    %1685 = vmatpush1.msra.mxu0 0.0
    %1686 = vmatprep.subr.mxu0 0.0
    %1687 = vmatpush1.msra.mxu0 0.0
    %1688 = vmatprep.subr.mxu0 0.0
    %1689 = vmatpush1.msra.mxu0 0.0
    %1690 = vmatprep.subr.mxu0 0.0
    %1691 = vmatpush1.msra.mxu0 0.0
    %1692 = vmatprep.subr.mxu0 0.0
    %1693 = vmatpush1.msra.mxu0 0.0
    %1694 = vmatprep.subr.mxu0 0.0
    %1695 = vmatpush1.msra.mxu0 0.0
    %1696 = vmatprep.subr.mxu0 0.0
    %1697 = vmatpush1.msra.mxu0 0.0
    %1698 = vmatprep.subr.mxu0 0.0
    %1699 = vmatpush1.msra.mxu0 0.0
    %1700 = vmatprep.subr.mxu0 0.0
    %1701 = vmatpush1.msra.mxu0 0.0
    %1702 = vmatprep.mubr.f32.mxu0 0.0
    %v1703 = vand.u32 %v1208, 4294901760
    %1704 = vmatmul.mubr.f32.gmra.mrb[0].mxu0 %v1703
    %v1705 = vpop.f32.mrb[0].mxu0
    %v1706 = vadd.f32 %v1627, %v1705
    %v1707 = vpop.f32.mrb[0].mxu0
    %1708 = vmatprep.mubr.f32.mxu0 0.0
    %v1709 = vand.u32 %v1211, 4294901760
    %1710 = vmatmul.mubr.f32.gmra.mrb[0].mxu0 %v1709
    %v1711 = vpop.f32.mrb[0].mxu0
    %v1712 = vadd.f32 %v1633, %v1711
    %v1713 = vpop.f32.mrb[0].mxu0
    %1714 = vdwg.mxu0
    %1715 = vrot.lane.b32.xlu0 %v645, 112
    %v1716 = vpop.permute.xlu0 %1715
    %1717 = vrot.lane.b32.xlu0 %v651, 112
    %v1718 = vpop.permute.xlu0 %1717
    %1719 = vrot.lane.b32.xlu0 %v645, 80
    %v1720 = vpop.permute.xlu0 %1719
    %1721 = vrot.lane.b32.xlu0 %v651, 80
    %v1722 = vpop.permute.xlu0 %1721
    %v1723 = vsel %vm664, %v1716, 0
    %v1725 = vsel %vm664, %v1718, 0
    %v1727 = vsel %vm664, %v1720, 0
    %v1729 = vsel %vm664, %v1722, 0
    %1731 = vmatprep.subr.mxu0 0.0
    %v1732 = vand.u32 %v1727, 4294901760
    %1733 = vmatpush1.xpose.msra.mxu0 %v1732
    %1734 = vmatprep.subr.mxu0 0.0
    %v1735 = vand.u32 %v1729, 4294901760
    %1736 = vmatpush1.xpose.msra.mxu0 %v1735
    %1737 = vmatprep.subr.mxu0 0.0
    %1738 = vmatpush1.xpose.msra.mxu0 0.0
    %1739 = vmatprep.subr.mxu0 0.0
    %1740 = vmatpush1.xpose.msra.mxu0 0.0
    %1741 = vmatprep.subr.mxu0 0.0
    %1742 = vmatpush1.xpose.msra.mxu0 0.0
    %1743 = vmatprep.subr.mxu0 0.0
    %1744 = vmatpush1.xpose.msra.mxu0 0.0
    %1745 = vmatprep.subr.mxu0 0.0
    %1746 = vmatpush1.xpose.msra.mxu0 0.0
    %1747 = vmatprep.subr.mxu0 0.0
    %1748 = vmatpush1.xpose.msra.mxu0 0.0
    %1749 = vmatprep.subr.mxu0 0.0
    %1750 = vmatpush1.xpose.msra.mxu0 0.0
    %1751 = vmatprep.subr.mxu0 0.0
    %1752 = vmatpush1.xpose.msra.mxu0 0.0
    %1753 = vmatprep.subr.mxu0 0.0
    %1754 = vmatpush1.xpose.msra.mxu0 0.0
    %1755 = vmatprep.subr.mxu0 0.0
    %1756 = vmatpush1.xpose.msra.mxu0 0.0
    %1757 = vmatprep.subr.mxu0 0.0
    %1758 = vmatpush1.xpose.msra.mxu0 0.0
    %1759 = vmatprep.subr.mxu0 0.0
    %1760 = vmatpush1.xpose.msra.mxu0 0.0
    %1761 = vmatprep.subr.mxu0 0.0
    %1762 = vmatpush1.xpose.msra.mxu0 0.0
    %1763 = vmatprep.subr.mxu0 0.0
    %1764 = vmatpush1.xpose.msra.mxu0 0.0
    %1765 = vmatprep.subr.mxu0 0.0
    %1766 = vmatpush1.xpose.msra.mxu0 0.0
    %1767 = vmatprep.subr.mxu0 0.0
    %1768 = vmatpush1.xpose.msra.mxu0 0.0
    %1769 = vmatprep.subr.mxu0 0.0
    %1770 = vmatpush1.xpose.msra.mxu0 0.0
    %1771 = vmatprep.subr.mxu0 0.0
    %1772 = vmatpush1.xpose.msra.mxu0 0.0
    %1773 = vmatprep.subr.mxu0 0.0
    %1774 = vmatpush1.xpose.msra.mxu0 0.0
    %1775 = vmatprep.subr.mxu0 0.0
    %1776 = vmatpush1.xpose.msra.mxu0 0.0
    %1777 = vmatprep.subr.mxu0 0.0
    %1778 = vmatpush1.xpose.msra.mxu0 0.0
    %1779 = vmatprep.subr.mxu0 0.0
    %1780 = vmatpush1.xpose.msra.mxu0 0.0
    %1781 = vmatprep.subr.mxu0 0.0
    %1782 = vmatpush1.xpose.msra.mxu0 0.0
    %1783 = vmatprep.subr.mxu0 0.0
    %1784 = vmatpush1.xpose.msra.mxu0 0.0
    %1785 = vmatprep.subr.mxu0 0.0
    %1786 = vmatpush1.xpose.msra.mxu0 0.0
    %1787 = vmatprep.subr.mxu0 0.0
    %1788 = vmatpush1.xpose.msra.mxu0 0.0
    %1789 = vmatprep.subr.mxu0 0.0
    %1790 = vmatpush1.xpose.msra.mxu0 0.0
    %1791 = vmatprep.subr.mxu0 0.0
    %1792 = vmatpush1.xpose.msra.mxu0 0.0
    %1793 = vmatprep.subr.mxu0 0.0
    %1794 = vmatpush1.xpose.msra.mxu0 0.0
    %1795 = vmatprep.subr.mxu0 0.0
    %1796 = vmatpush1.xpose.msra.mxu0 0.0
    %1797 = vmatprep.mubr.f32.mxu0 0.0
    %v1798 = vand.u32 %v1723, 4294901760
    %v1799 = vsub.f32 %v1723, %v1798
    %v1800 = vand.u32 %v1799, 4294901760
    %v1801 = vsub.f32 %v1799, %v1800
    %v1802 = vand.u32 %v1801, 4294901760
    %1803 = vmatmul.mubr.f32.gmra.mrb[0].mxu0 %v1802
    %v1804 = vpop.f32.mrb[0].mxu0
    %v1805 = vadd.f32 0.0, %v1804
    %v1806 = vpop.f32.mrb[0].mxu0
    %1807 = vmatprep.mubr.f32.mxu0 0.0
    %v1808 = vand.u32 %v1725, 4294901760
    %v1809 = vsub.f32 %v1725, %v1808
    %v1810 = vand.u32 %v1809, 4294901760
    %v1811 = vsub.f32 %v1809, %v1810
    %v1812 = vand.u32 %v1811, 4294901760
    %1813 = vmatmul.mubr.f32.gmra.mrb[0].mxu0 %v1812
    %v1814 = vpop.f32.mrb[0].mxu0
    %v1815 = vadd.f32 0.0, %v1814
    %v1816 = vpop.f32.mrb[0].mxu0
    %1817 = vdwg.mxu0
    %1818 = vmatprep.subr.mxu0 0.0
    %v1819 = vand.u32 %v1727, 4294901760
    %v1820 = vsub.f32 %v1727, %v1819
    %v1821 = vand.u32 %v1820, 4294901760
    %v1822 = vsub.f32 %v1820, %v1821
    %v1823 = vand.u32 %v1822, 4294901760
    %1824 = vmatpush1.xpose.msra.mxu0 %v1823
    %1825 = vmatprep.subr.mxu0 0.0
    %v1826 = vand.u32 %v1729, 4294901760
    %v1827 = vsub.f32 %v1729, %v1826
    %v1828 = vand.u32 %v1827, 4294901760
    %v1829 = vsub.f32 %v1827, %v1828
    %v1830 = vand.u32 %v1829, 4294901760
    %1831 = vmatpush1.xpose.msra.mxu0 %v1830
    %1832 = vmatprep.subr.mxu0 0.0
    %1833 = vmatpush1.xpose.msra.mxu0 0.0
    %1834 = vmatprep.subr.mxu0 0.0
    %1835 = vmatpush1.xpose.msra.mxu0 0.0
    %1836 = vmatprep.subr.mxu0 0.0
    %1837 = vmatpush1.xpose.msra.mxu0 0.0
    %1838 = vmatprep.subr.mxu0 0.0
    %1839 = vmatpush1.xpose.msra.mxu0 0.0
    %1840 = vmatprep.subr.mxu0 0.0
    %1841 = vmatpush1.xpose.msra.mxu0 0.0
    %1842 = vmatprep.subr.mxu0 0.0
    %1843 = vmatpush1.xpose.msra.mxu0 0.0
    %1844 = vmatprep.subr.mxu0 0.0
    %1845 = vmatpush1.xpose.msra.mxu0 0.0
    %1846 = vmatprep.subr.mxu0 0.0
    %1847 = vmatpush1.xpose.msra.mxu0 0.0
    %1848 = vmatprep.subr.mxu0 0.0
    %1849 = vmatpush1.xpose.msra.mxu0 0.0
    %1850 = vmatprep.subr.mxu0 0.0
    %1851 = vmatpush1.xpose.msra.mxu0 0.0
    %1852 = vmatprep.subr.mxu0 0.0
    %1853 = vmatpush1.xpose.msra.mxu0 0.0
    %1854 = vmatprep.subr.mxu0 0.0
    %1855 = vmatpush1.xpose.msra.mxu0 0.0
    %1856 = vmatprep.subr.mxu0 0.0
    %1857 = vmatpush1.xpose.msra.mxu0 0.0
    %1858 = vmatprep.subr.mxu0 0.0
    %1859 = vmatpush1.xpose.msra.mxu0 0.0
    %1860 = vmatprep.subr.mxu0 0.0
    %1861 = vmatpush1.xpose.msra.mxu0 0.0
    %1862 = vmatprep.subr.mxu0 0.0
    %1863 = vmatpush1.xpose.msra.mxu0 0.0
    %1864 = vmatprep.subr.mxu0 0.0
    %1865 = vmatpush1.xpose.msra.mxu0 0.0
    %1866 = vmatprep.subr.mxu0 0.0
    %1867 = vmatpush1.xpose.msra.mxu0 0.0
    %1868 = vmatprep.subr.mxu0 0.0
    %1869 = vmatpush1.xpose.msra.mxu0 0.0
    %1870 = vmatprep.subr.mxu0 0.0
    %1871 = vmatpush1.xpose.msra.mxu0 0.0
    %1872 = vmatprep.subr.mxu0 0.0
    %1873 = vmatpush1.xpose.msra.mxu0 0.0
    %1874 = vmatprep.subr.mxu0 0.0
    %1875 = vmatpush1.xpose.msra.mxu0 0.0
    %1876 = vmatprep.subr.mxu0 0.0
    %1877 = vmatpush1.xpose.msra.mxu0 0.0
    %1878 = vmatprep.subr.mxu0 0.0
    %1879 = vmatpush1.xpose.msra.mxu0 0.0
    %1880 = vmatprep.subr.mxu0 0.0
    %1881 = vmatpush1.xpose.msra.mxu0 0.0
    %1882 = vmatprep.subr.mxu0 0.0
    %1883 = vmatpush1.xpose.msra.mxu0 0.0
    %1884 = vmatprep.subr.mxu0 0.0
    %1885 = vmatpush1.xpose.msra.mxu0 0.0
    %1886 = vmatprep.subr.mxu0 0.0
    %1887 = vmatpush1.xpose.msra.mxu0 0.0
    %1888 = vmatprep.subr.mxu0 0.0
    %1889 = vmatpush1.xpose.msra.mxu0 0.0
    %1890 = vmatprep.subr.mxu0 0.0
    %1891 = vmatpush1.xpose.msra.mxu0 0.0
    %1892 = vmatprep.mubr.f32.mxu0 0.0
    %v1893 = vand.u32 %v1723, 4294901760
    %1894 = vmatmul.mubr.f32.gmra.mrb[0].mxu0 %v1893
    %v1895 = vpop.f32.mrb[0].mxu0
    %v1896 = vadd.f32 %v1805, %v1895
    %v1897 = vpop.f32.mrb[0].mxu0
    %1898 = vmatprep.mubr.f32.mxu0 0.0
    %v1899 = vand.u32 %v1725, 4294901760
    %1900 = vmatmul.mubr.f32.gmra.mrb[0].mxu0 %v1899
    %v1901 = vpop.f32.mrb[0].mxu0
    %v1902 = vadd.f32 %v1815, %v1901
    %v1903 = vpop.f32.mrb[0].mxu0
    %1904 = vdwg.mxu0
    %1905 = vmatprep.subr.mxu0 0.0
    %v1906 = vand.u32 %v1727, 4294901760
    %v1907 = vsub.f32 %v1727, %v1906
    %1908 = vmatpush1.xpose.msra.mxu0 %v1907
    %1909 = vmatprep.subr.mxu0 0.0
    %v1910 = vand.u32 %v1729, 4294901760
    %v1911 = vsub.f32 %v1729, %v1910
    %1912 = vmatpush1.xpose.msra.mxu0 %v1911
    %1913 = vmatprep.subr.mxu0 0.0
    %1914 = vmatpush1.xpose.msra.mxu0 0.0
    %1915 = vmatprep.subr.mxu0 0.0
    %1916 = vmatpush1.xpose.msra.mxu0 0.0
    %1917 = vmatprep.subr.mxu0 0.0
    %1918 = vmatpush1.xpose.msra.mxu0 0.0
    %1919 = vmatprep.subr.mxu0 0.0
    %1920 = vmatpush1.xpose.msra.mxu0 0.0
    %1921 = vmatprep.subr.mxu0 0.0
    %1922 = vmatpush1.xpose.msra.mxu0 0.0
    %1923 = vmatprep.subr.mxu0 0.0
    %1924 = vmatpush1.xpose.msra.mxu0 0.0
    %1925 = vmatprep.subr.mxu0 0.0
    %1926 = vmatpush1.xpose.msra.mxu0 0.0
    %1927 = vmatprep.subr.mxu0 0.0
    %1928 = vmatpush1.xpose.msra.mxu0 0.0
    %1929 = vmatprep.subr.mxu0 0.0
    %1930 = vmatpush1.xpose.msra.mxu0 0.0
    %1931 = vmatprep.subr.mxu0 0.0
    %1932 = vmatpush1.xpose.msra.mxu0 0.0
    %1933 = vmatprep.subr.mxu0 0.0
    %1934 = vmatpush1.xpose.msra.mxu0 0.0
    %1935 = vmatprep.subr.mxu0 0.0
    %1936 = vmatpush1.xpose.msra.mxu0 0.0
    %1937 = vmatprep.subr.mxu0 0.0
    %1938 = vmatpush1.xpose.msra.mxu0 0.0
    %1939 = vmatprep.subr.mxu0 0.0
    %1940 = vmatpush1.xpose.msra.mxu0 0.0
    %1941 = vmatprep.subr.mxu0 0.0
    %1942 = vmatpush1.xpose.msra.mxu0 0.0
    %1943 = vmatprep.subr.mxu0 0.0
    %1944 = vmatpush1.xpose.msra.mxu0 0.0
    %1945 = vmatprep.subr.mxu0 0.0
    %1946 = vmatpush1.xpose.msra.mxu0 0.0
    %1947 = vmatprep.subr.mxu0 0.0
    %1948 = vmatpush1.xpose.msra.mxu0 0.0
    %1949 = vmatprep.subr.mxu0 0.0
    %1950 = vmatpush1.xpose.msra.mxu0 0.0
    %1951 = vmatprep.subr.mxu0 0.0
    %1952 = vmatpush1.xpose.msra.mxu0 0.0
    %1953 = vmatprep.subr.mxu0 0.0
    %1954 = vmatpush1.xpose.msra.mxu0 0.0
    %1955 = vmatprep.subr.mxu0 0.0
    %1956 = vmatpush1.xpose.msra.mxu0 0.0
    %1957 = vmatprep.subr.mxu0 0.0
    %1958 = vmatpush1.xpose.msra.mxu0 0.0
    %1959 = vmatprep.subr.mxu0 0.0
    %1960 = vmatpush1.xpose.msra.mxu0 0.0
    %1961 = vmatprep.subr.mxu0 0.0
    %1962 = vmatpush1.xpose.msra.mxu0 0.0
    %1963 = vmatprep.subr.mxu0 0.0
    %1964 = vmatpush1.xpose.msra.mxu0 0.0
    %1965 = vmatprep.subr.mxu0 0.0
    %1966 = vmatpush1.xpose.msra.mxu0 0.0
    %1967 = vmatprep.subr.mxu0 0.0
    %1968 = vmatpush1.xpose.msra.mxu0 0.0
    %1969 = vmatprep.subr.mxu0 0.0
    %1970 = vmatpush1.xpose.msra.mxu0 0.0
    %1971 = vmatprep.subr.mxu0 0.0
    %1972 = vmatpush1.xpose.msra.mxu0 0.0
    %1973 = vmatprep.mubr.f32.mxu0 0.0
    %v1974 = vand.u32 %v1723, 4294901760
    %v1975 = vsub.f32 %v1723, %v1974
    %1976 = vmatmul.mubr.f32.gmra.mrb[0].mxu0 %v1975
    %v1977 = vpop.f32.mrb[0].mxu0
    %v1978 = vadd.f32 %v1896, %v1977
    %v1979 = vpop.f32.mrb[0].mxu0
    %1980 = vmatprep.mubr.f32.mxu0 0.0
    %v1981 = vand.u32 %v1725, 4294901760
    %v1982 = vsub.f32 %v1725, %v1981
    %1983 = vmatmul.mubr.f32.gmra.mrb[0].mxu0 %v1982
    %v1984 = vpop.f32.mrb[0].mxu0
    %v1985 = vadd.f32 %v1902, %v1984
    %v1986 = vpop.f32.mrb[0].mxu0
    %1987 = vdwg.mxu0
    %1988 = vmatprep.subr.mxu0 0.0
    %v1989 = vand.u32 %v1727, 4294901760
    %1990 = vmatpush1.xpose.msra.mxu0 %v1989
    %1991 = vmatprep.subr.mxu0 0.0
    %v1992 = vand.u32 %v1729, 4294901760
    %1993 = vmatpush1.xpose.msra.mxu0 %v1992
    %1994 = vmatprep.subr.mxu0 0.0
    %1995 = vmatpush1.xpose.msra.mxu0 0.0
    %1996 = vmatprep.subr.mxu0 0.0
    %1997 = vmatpush1.xpose.msra.mxu0 0.0
    %1998 = vmatprep.subr.mxu0 0.0
    %1999 = vmatpush1.xpose.msra.mxu0 0.0
    %2000 = vmatprep.subr.mxu0 0.0
    %2001 = vmatpush1.xpose.msra.mxu0 0.0
    %2002 = vmatprep.subr.mxu0 0.0
    %2003 = vmatpush1.xpose.msra.mxu0 0.0
    %2004 = vmatprep.subr.mxu0 0.0
    %2005 = vmatpush1.xpose.msra.mxu0 0.0
    %2006 = vmatprep.subr.mxu0 0.0
    %2007 = vmatpush1.xpose.msra.mxu0 0.0
    %2008 = vmatprep.subr.mxu0 0.0
    %2009 = vmatpush1.xpose.msra.mxu0 0.0
    %2010 = vmatprep.subr.mxu0 0.0
    %2011 = vmatpush1.xpose.msra.mxu0 0.0
    %2012 = vmatprep.subr.mxu0 0.0
    %2013 = vmatpush1.xpose.msra.mxu0 0.0
    %2014 = vmatprep.subr.mxu0 0.0
    %2015 = vmatpush1.xpose.msra.mxu0 0.0
    %2016 = vmatprep.subr.mxu0 0.0
    %2017 = vmatpush1.xpose.msra.mxu0 0.0
    %2018 = vmatprep.subr.mxu0 0.0
    %2019 = vmatpush1.xpose.msra.mxu0 0.0
    %2020 = vmatprep.subr.mxu0 0.0
    %2021 = vmatpush1.xpose.msra.mxu0 0.0
    %2022 = vmatprep.subr.mxu0 0.0
    %2023 = vmatpush1.xpose.msra.mxu0 0.0
    %2024 = vmatprep.subr.mxu0 0.0
    %2025 = vmatpush1.xpose.msra.mxu0 0.0
    %2026 = vmatprep.subr.mxu0 0.0
    %2027 = vmatpush1.xpose.msra.mxu0 0.0
    %2028 = vmatprep.subr.mxu0 0.0
    %2029 = vmatpush1.xpose.msra.mxu0 0.0
    %2030 = vmatprep.subr.mxu0 0.0
    %2031 = vmatpush1.xpose.msra.mxu0 0.0
    %2032 = vmatprep.subr.mxu0 0.0
    %2033 = vmatpush1.xpose.msra.mxu0 0.0
    %2034 = vmatprep.subr.mxu0 0.0
    %2035 = vmatpush1.xpose.msra.mxu0 0.0
    %2036 = vmatprep.subr.mxu0 0.0
    %2037 = vmatpush1.xpose.msra.mxu0 0.0
    %2038 = vmatprep.subr.mxu0 0.0
    %2039 = vmatpush1.xpose.msra.mxu0 0.0
    %2040 = vmatprep.subr.mxu0 0.0
    %2041 = vmatpush1.xpose.msra.mxu0 0.0
    %2042 = vmatprep.subr.mxu0 0.0
    %2043 = vmatpush1.xpose.msra.mxu0 0.0
    %2044 = vmatprep.subr.mxu0 0.0
    %2045 = vmatpush1.xpose.msra.mxu0 0.0
    %2046 = vmatprep.subr.mxu0 0.0
    %2047 = vmatpush1.xpose.msra.mxu0 0.0
    %2048 = vmatprep.subr.mxu0 0.0
    %2049 = vmatpush1.xpose.msra.mxu0 0.0
    %2050 = vmatprep.subr.mxu0 0.0
    %2051 = vmatpush1.xpose.msra.mxu0 0.0
    %2052 = vmatprep.subr.mxu0 0.0
    %2053 = vmatpush1.xpose.msra.mxu0 0.0
    %2054 = vmatprep.mubr.f32.mxu0 0.0
    %v2055 = vand.u32 %v1723, 4294901760
    %v2056 = vsub.f32 %v1723, %v2055
    %v2057 = vand.u32 %v2056, 4294901760
    %2058 = vmatmul.mubr.f32.gmra.mrb[0].mxu0 %v2057
    %v2059 = vpop.f32.mrb[0].mxu0
    %v2060 = vadd.f32 %v1978, %v2059
    %v2061 = vpop.f32.mrb[0].mxu0
    %2062 = vmatprep.mubr.f32.mxu0 0.0
    %v2063 = vand.u32 %v1725, 4294901760
    %v2064 = vsub.f32 %v1725, %v2063
    %v2065 = vand.u32 %v2064, 4294901760
    %2066 = vmatmul.mubr.f32.gmra.mrb[0].mxu0 %v2065
    %v2067 = vpop.f32.mrb[0].mxu0
    %v2068 = vadd.f32 %v1985, %v2067
    %v2069 = vpop.f32.mrb[0].mxu0
    %2070 = vdwg.mxu0
    %2071 = vmatprep.subr.mxu0 0.0
    %v2072 = vand.u32 %v1727, 4294901760
    %v2073 = vsub.f32 %v1727, %v2072
    %v2074 = vand.u32 %v2073, 4294901760
    %2075 = vmatpush1.xpose.msra.mxu0 %v2074
    %2076 = vmatprep.subr.mxu0 0.0
    %v2077 = vand.u32 %v1729, 4294901760
    %v2078 = vsub.f32 %v1729, %v2077
    %v2079 = vand.u32 %v2078, 4294901760
    %2080 = vmatpush1.xpose.msra.mxu0 %v2079
    %2081 = vmatprep.subr.mxu0 0.0
    %2082 = vmatpush1.xpose.msra.mxu0 0.0
    %2083 = vmatprep.subr.mxu0 0.0
    %2084 = vmatpush1.xpose.msra.mxu0 0.0
    %2085 = vmatprep.subr.mxu0 0.0
    %2086 = vmatpush1.xpose.msra.mxu0 0.0
    %2087 = vmatprep.subr.mxu0 0.0
    %2088 = vmatpush1.xpose.msra.mxu0 0.0
    %2089 = vmatprep.subr.mxu0 0.0
    %2090 = vmatpush1.xpose.msra.mxu0 0.0
    %2091 = vmatprep.subr.mxu0 0.0
    %2092 = vmatpush1.xpose.msra.mxu0 0.0
    %2093 = vmatprep.subr.mxu0 0.0
    %2094 = vmatpush1.xpose.msra.mxu0 0.0
    %2095 = vmatprep.subr.mxu0 0.0
    %2096 = vmatpush1.xpose.msra.mxu0 0.0
    %2097 = vmatprep.subr.mxu0 0.0
    %2098 = vmatpush1.xpose.msra.mxu0 0.0
    %2099 = vmatprep.subr.mxu0 0.0
    %2100 = vmatpush1.xpose.msra.mxu0 0.0
    %2101 = vmatprep.subr.mxu0 0.0
    %2102 = vmatpush1.xpose.msra.mxu0 0.0
    %2103 = vmatprep.subr.mxu0 0.0
    %2104 = vmatpush1.xpose.msra.mxu0 0.0
    %2105 = vmatprep.subr.mxu0 0.0
    %2106 = vmatpush1.xpose.msra.mxu0 0.0
    %2107 = vmatprep.subr.mxu0 0.0
    %2108 = vmatpush1.xpose.msra.mxu0 0.0
    %2109 = vmatprep.subr.mxu0 0.0
    %2110 = vmatpush1.xpose.msra.mxu0 0.0
    %2111 = vmatprep.subr.mxu0 0.0
    %2112 = vmatpush1.xpose.msra.mxu0 0.0
    %2113 = vmatprep.subr.mxu0 0.0
    %2114 = vmatpush1.xpose.msra.mxu0 0.0
    %2115 = vmatprep.subr.mxu0 0.0
    %2116 = vmatpush1.xpose.msra.mxu0 0.0
    %2117 = vmatprep.subr.mxu0 0.0
    %2118 = vmatpush1.xpose.msra.mxu0 0.0
    %2119 = vmatprep.subr.mxu0 0.0
    %2120 = vmatpush1.xpose.msra.mxu0 0.0
    %2121 = vmatprep.subr.mxu0 0.0
    %2122 = vmatpush1.xpose.msra.mxu0 0.0
    %2123 = vmatprep.subr.mxu0 0.0
    %2124 = vmatpush1.xpose.msra.mxu0 0.0
    %2125 = vmatprep.subr.mxu0 0.0
    %2126 = vmatpush1.xpose.msra.mxu0 0.0
    %2127 = vmatprep.subr.mxu0 0.0
    %2128 = vmatpush1.xpose.msra.mxu0 0.0
    %2129 = vmatprep.subr.mxu0 0.0
    %2130 = vmatpush1.xpose.msra.mxu0 0.0
    %2131 = vmatprep.subr.mxu0 0.0
    %2132 = vmatpush1.xpose.msra.mxu0 0.0
    %2133 = vmatprep.subr.mxu0 0.0
    %2134 = vmatpush1.xpose.msra.mxu0 0.0
    %2135 = vmatprep.subr.mxu0 0.0
    %2136 = vmatpush1.xpose.msra.mxu0 0.0
    %2137 = vmatprep.subr.mxu0 0.0
    %2138 = vmatpush1.xpose.msra.mxu0 0.0
    %2139 = vmatprep.subr.mxu0 0.0
    %2140 = vmatpush1.xpose.msra.mxu0 0.0
    %2141 = vmatprep.mubr.f32.mxu0 0.0
    %v2142 = vand.u32 %v1723, 4294901760
    %2143 = vmatmul.mubr.f32.gmra.mrb[0].mxu0 %v2142
    %v2144 = vpop.f32.mrb[0].mxu0
    %v2145 = vadd.f32 %v2060, %v2144
    %v2146 = vpop.f32.mrb[0].mxu0
    %2147 = vmatprep.mubr.f32.mxu0 0.0
    %v2148 = vand.u32 %v1725, 4294901760
    %2149 = vmatmul.mubr.f32.gmra.mrb[0].mxu0 %v2148
    %v2150 = vpop.f32.mrb[0].mxu0
    %v2151 = vadd.f32 %v2068, %v2150
    %v2152 = vpop.f32.mrb[0].mxu0
    %2153 = vdwg.mxu0
    %2154 = vmatprep.subr.mxu0 0.0
    %v2155 = vand.u32 %v1727, 4294901760
    %2156 = vmatpush1.xpose.msra.mxu0 %v2155
    %2157 = vmatprep.subr.mxu0 0.0
    %v2158 = vand.u32 %v1729, 4294901760
    %2159 = vmatpush1.xpose.msra.mxu0 %v2158
    %2160 = vmatprep.subr.mxu0 0.0
    %2161 = vmatpush1.xpose.msra.mxu0 0.0
    %2162 = vmatprep.subr.mxu0 0.0
    %2163 = vmatpush1.xpose.msra.mxu0 0.0
    %2164 = vmatprep.subr.mxu0 0.0
    %2165 = vmatpush1.xpose.msra.mxu0 0.0
    %2166 = vmatprep.subr.mxu0 0.0
    %2167 = vmatpush1.xpose.msra.mxu0 0.0
    %2168 = vmatprep.subr.mxu0 0.0
    %2169 = vmatpush1.xpose.msra.mxu0 0.0
    %2170 = vmatprep.subr.mxu0 0.0
    %2171 = vmatpush1.xpose.msra.mxu0 0.0
    %2172 = vmatprep.subr.mxu0 0.0
    %2173 = vmatpush1.xpose.msra.mxu0 0.0
    %2174 = vmatprep.subr.mxu0 0.0
    %2175 = vmatpush1.xpose.msra.mxu0 0.0
    %2176 = vmatprep.subr.mxu0 0.0
    %2177 = vmatpush1.xpose.msra.mxu0 0.0
    %2178 = vmatprep.subr.mxu0 0.0
    %2179 = vmatpush1.xpose.msra.mxu0 0.0
    %2180 = vmatprep.subr.mxu0 0.0
    %2181 = vmatpush1.xpose.msra.mxu0 0.0
    %2182 = vmatprep.subr.mxu0 0.0
    %2183 = vmatpush1.xpose.msra.mxu0 0.0
    %2184 = vmatprep.subr.mxu0 0.0
    %2185 = vmatpush1.xpose.msra.mxu0 0.0
    %2186 = vmatprep.subr.mxu0 0.0
    %2187 = vmatpush1.xpose.msra.mxu0 0.0
    %2188 = vmatprep.subr.mxu0 0.0
    %2189 = vmatpush1.xpose.msra.mxu0 0.0
    %2190 = vmatprep.subr.mxu0 0.0
    %2191 = vmatpush1.xpose.msra.mxu0 0.0
    %2192 = vmatprep.subr.mxu0 0.0
    %2193 = vmatpush1.xpose.msra.mxu0 0.0
    %2194 = vmatprep.subr.mxu0 0.0
    %2195 = vmatpush1.xpose.msra.mxu0 0.0
    %2196 = vmatprep.subr.mxu0 0.0
    %2197 = vmatpush1.xpose.msra.mxu0 0.0
    %2198 = vmatprep.subr.mxu0 0.0
    %2199 = vmatpush1.xpose.msra.mxu0 0.0
    %2200 = vmatprep.subr.mxu0 0.0
    %2201 = vmatpush1.xpose.msra.mxu0 0.0
    %2202 = vmatprep.subr.mxu0 0.0
    %2203 = vmatpush1.xpose.msra.mxu0 0.0
    %2204 = vmatprep.subr.mxu0 0.0
    %2205 = vmatpush1.xpose.msra.mxu0 0.0
    %2206 = vmatprep.subr.mxu0 0.0
    %2207 = vmatpush1.xpose.msra.mxu0 0.0
    %2208 = vmatprep.subr.mxu0 0.0
    %2209 = vmatpush1.xpose.msra.mxu0 0.0
    %2210 = vmatprep.subr.mxu0 0.0
    %2211 = vmatpush1.xpose.msra.mxu0 0.0
    %2212 = vmatprep.subr.mxu0 0.0
    %2213 = vmatpush1.xpose.msra.mxu0 0.0
    %2214 = vmatprep.subr.mxu0 0.0
    %2215 = vmatpush1.xpose.msra.mxu0 0.0
    %2216 = vmatprep.subr.mxu0 0.0
    %2217 = vmatpush1.xpose.msra.mxu0 0.0
    %2218 = vmatprep.subr.mxu0 0.0
    %2219 = vmatpush1.xpose.msra.mxu0 0.0
    %2220 = vmatprep.mubr.f32.mxu0 0.0
    %v2221 = vand.u32 %v1723, 4294901760
    %2222 = vmatmul.mubr.f32.gmra.mrb[0].mxu0 %v2221
    %v2223 = vpop.f32.mrb[0].mxu0
    %v2224 = vadd.f32 %v2145, %v2223
    %v2225 = vpop.f32.mrb[0].mxu0
    %2226 = vmatprep.mubr.f32.mxu0 0.0
    %v2227 = vand.u32 %v1725, 4294901760
    %2228 = vmatmul.mubr.f32.gmra.mrb[0].mxu0 %v2227
    %v2229 = vpop.f32.mrb[0].mxu0
    %v2230 = vadd.f32 %v2151, %v2229
    %v2231 = vpop.f32.mrb[0].mxu0
    %2232 = vdwg.mxu0
    %v2233 = vmul.f32 %v2224, 0.25
    %v2234 = vmul.f32 %v2230, 0.25
    %v2235 = vadd.f32 %v2233, %v72
    %v2236 = vadd.f32 %v2234, %v73
    %v2237 = vsel %vm664, %v2235, -inf
    %2238 = vmax.xlane.f32.xlu0 %v2237
    %v2239 = vpop.xlane.xlu0 %2238
    %v2240 = vsel %vm664, %v2236, -inf
    %2241 = vmax.xlane.f32.xlu0 %v2240
    %v2242 = vpop.xlane.xlu0 %2241
    %v2243 = vsub.f32 %v2235, %v2239
    %v2244 = vsub.f32 %v2236, %v2242
    %v2245 = vmul.f32 %v2243, 1.442695
    %v2246 = vpow.pop %v2245
    %v2247 = vmul.f32 %v2244, 1.442695
    %v2248 = vpow.pop %v2247
    %v2249 = vsel %vm664, %v2246, 0.0
    %2250 = vadd.xlane.f32.xlu0 %v2249
    %v2251 = vpop.xlane.xlu0 %2250
    %v2252 = vsel %vm664, %v2248, 0.0
    %2253 = vadd.xlane.f32.xlu0 %v2252
    %v2254 = vpop.xlane.xlu0 %2253
    %v2255 = vrcp.pop %v2251
    %v2256 = vrcp.pop %v2254
    %v2257 = vmul.f32 %v2246, %v2255
    %v2258 = vmul.f32 %v2248, %v2256
    %2259 = vrot.lane.b32.xlu0 %v645, 48
    %v2260 = vpop.permute.xlu0 %2259
    %2261 = vrot.lane.b32.xlu0 %v651, 48
    %v2262 = vpop.permute.xlu0 %2261
    %v2266 = vsel %vm664, %v2257, 0
    %v2269 = vsel %vm664, %v2258, 0
    %2271 = vmatprep.subr.mxu0 0.0
    %v2272 = vand.u32 %v2260, 4294901760
    %2273 = vmatpush1.msra.mxu0 %v2272
    %2274 = vmatprep.subr.mxu0 0.0
    %v2275 = vand.u32 %v2262, 4294901760
    %2276 = vmatpush1.msra.mxu0 %v2275
    %2277 = vmatprep.subr.mxu0 0.0
    %2278 = vmatpush1.msra.mxu0 0.0
    %2279 = vmatprep.subr.mxu0 0.0
    %2280 = vmatpush1.msra.mxu0 0.0
    %2281 = vmatprep.subr.mxu0 0.0
    %2282 = vmatpush1.msra.mxu0 0.0
    %2283 = vmatprep.subr.mxu0 0.0
    %2284 = vmatpush1.msra.mxu0 0.0
    %2285 = vmatprep.subr.mxu0 0.0
    %2286 = vmatpush1.msra.mxu0 0.0
    %2287 = vmatprep.subr.mxu0 0.0
    %2288 = vmatpush1.msra.mxu0 0.0
    %2289 = vmatprep.subr.mxu0 0.0
    %2290 = vmatpush1.msra.mxu0 0.0
    %2291 = vmatprep.subr.mxu0 0.0
    %2292 = vmatpush1.msra.mxu0 0.0
    %2293 = vmatprep.subr.mxu0 0.0
    %2294 = vmatpush1.msra.mxu0 0.0
    %2295 = vmatprep.subr.mxu0 0.0
    %2296 = vmatpush1.msra.mxu0 0.0
    %2297 = vmatprep.subr.mxu0 0.0
    %2298 = vmatpush1.msra.mxu0 0.0
    %2299 = vmatprep.subr.mxu0 0.0
    %2300 = vmatpush1.msra.mxu0 0.0
    %2301 = vmatprep.subr.mxu0 0.0
    %2302 = vmatpush1.msra.mxu0 0.0
    %2303 = vmatprep.subr.mxu0 0.0
    %2304 = vmatpush1.msra.mxu0 0.0
    %2305 = vmatprep.subr.mxu0 0.0
    %2306 = vmatpush1.msra.mxu0 0.0
    %2307 = vmatprep.subr.mxu0 0.0
    %2308 = vmatpush1.msra.mxu0 0.0
    %2309 = vmatprep.subr.mxu0 0.0
    %2310 = vmatpush1.msra.mxu0 0.0
    %2311 = vmatprep.subr.mxu0 0.0
    %2312 = vmatpush1.msra.mxu0 0.0
    %2313 = vmatprep.subr.mxu0 0.0
    %2314 = vmatpush1.msra.mxu0 0.0
    %2315 = vmatprep.subr.mxu0 0.0
    %2316 = vmatpush1.msra.mxu0 0.0
    %2317 = vmatprep.subr.mxu0 0.0
    %2318 = vmatpush1.msra.mxu0 0.0
    %2319 = vmatprep.subr.mxu0 0.0
    %2320 = vmatpush1.msra.mxu0 0.0
    %2321 = vmatprep.subr.mxu0 0.0
    %2322 = vmatpush1.msra.mxu0 0.0
    %2323 = vmatprep.subr.mxu0 0.0
    %2324 = vmatpush1.msra.mxu0 0.0
    %2325 = vmatprep.subr.mxu0 0.0
    %2326 = vmatpush1.msra.mxu0 0.0
    %2327 = vmatprep.subr.mxu0 0.0
    %2328 = vmatpush1.msra.mxu0 0.0
    %2329 = vmatprep.subr.mxu0 0.0
    %2330 = vmatpush1.msra.mxu0 0.0
    %2331 = vmatprep.subr.mxu0 0.0
    %2332 = vmatpush1.msra.mxu0 0.0
    %2333 = vmatprep.subr.mxu0 0.0
    %2334 = vmatpush1.msra.mxu0 0.0
    %2335 = vmatprep.subr.mxu0 0.0
    %2336 = vmatpush1.msra.mxu0 0.0
    %2337 = vmatprep.mubr.f32.mxu0 0.0
    %v2338 = vand.u32 %v2266, 4294901760
    %v2339 = vsub.f32 %v2266, %v2338
    %v2340 = vand.u32 %v2339, 4294901760
    %v2341 = vsub.f32 %v2339, %v2340
    %v2342 = vand.u32 %v2341, 4294901760
    %2343 = vmatmul.mubr.f32.gmra.mrb[0].mxu0 %v2342
    %v2344 = vpop.f32.mrb[0].mxu0
    %v2345 = vadd.f32 0.0, %v2344
    %v2346 = vpop.f32.mrb[0].mxu0
    %2347 = vmatprep.mubr.f32.mxu0 0.0
    %v2348 = vand.u32 %v2269, 4294901760
    %v2349 = vsub.f32 %v2269, %v2348
    %v2350 = vand.u32 %v2349, 4294901760
    %v2351 = vsub.f32 %v2349, %v2350
    %v2352 = vand.u32 %v2351, 4294901760
    %2353 = vmatmul.mubr.f32.gmra.mrb[0].mxu0 %v2352
    %v2354 = vpop.f32.mrb[0].mxu0
    %v2355 = vadd.f32 0.0, %v2354
    %v2356 = vpop.f32.mrb[0].mxu0
    %2357 = vdwg.mxu0
    %2358 = vmatprep.subr.mxu0 0.0
    %v2359 = vand.u32 %v2260, 4294901760
    %v2360 = vsub.f32 %v2260, %v2359
    %v2361 = vand.u32 %v2360, 4294901760
    %v2362 = vsub.f32 %v2360, %v2361
    %v2363 = vand.u32 %v2362, 4294901760
    %2364 = vmatpush1.msra.mxu0 %v2363
    %2365 = vmatprep.subr.mxu0 0.0
    %v2366 = vand.u32 %v2262, 4294901760
    %v2367 = vsub.f32 %v2262, %v2366
    %v2368 = vand.u32 %v2367, 4294901760
    %v2369 = vsub.f32 %v2367, %v2368
    %v2370 = vand.u32 %v2369, 4294901760
    %2371 = vmatpush1.msra.mxu0 %v2370
    %2372 = vmatprep.subr.mxu0 0.0
    %2373 = vmatpush1.msra.mxu0 0.0
    %2374 = vmatprep.subr.mxu0 0.0
    %2375 = vmatpush1.msra.mxu0 0.0
    %2376 = vmatprep.subr.mxu0 0.0
    %2377 = vmatpush1.msra.mxu0 0.0
    %2378 = vmatprep.subr.mxu0 0.0
    %2379 = vmatpush1.msra.mxu0 0.0
    %2380 = vmatprep.subr.mxu0 0.0
    %2381 = vmatpush1.msra.mxu0 0.0
    %2382 = vmatprep.subr.mxu0 0.0
    %2383 = vmatpush1.msra.mxu0 0.0
    %2384 = vmatprep.subr.mxu0 0.0
    %2385 = vmatpush1.msra.mxu0 0.0
    %2386 = vmatprep.subr.mxu0 0.0
    %2387 = vmatpush1.msra.mxu0 0.0
    %2388 = vmatprep.subr.mxu0 0.0
    %2389 = vmatpush1.msra.mxu0 0.0
    %2390 = vmatprep.subr.mxu0 0.0
    %2391 = vmatpush1.msra.mxu0 0.0
    %2392 = vmatprep.subr.mxu0 0.0
    %2393 = vmatpush1.msra.mxu0 0.0
    %2394 = vmatprep.subr.mxu0 0.0
    %2395 = vmatpush1.msra.mxu0 0.0
    %2396 = vmatprep.subr.mxu0 0.0
    %2397 = vmatpush1.msra.mxu0 0.0
    %2398 = vmatprep.subr.mxu0 0.0
    %2399 = vmatpush1.msra.mxu0 0.0
    %2400 = vmatprep.subr.mxu0 0.0
    %2401 = vmatpush1.msra.mxu0 0.0
    %2402 = vmatprep.subr.mxu0 0.0
    %2403 = vmatpush1.msra.mxu0 0.0
    %2404 = vmatprep.subr.mxu0 0.0
    %2405 = vmatpush1.msra.mxu0 0.0
    %2406 = vmatprep.subr.mxu0 0.0
    %2407 = vmatpush1.msra.mxu0 0.0
    %2408 = vmatprep.subr.mxu0 0.0
    %2409 = vmatpush1.msra.mxu0 0.0
    %2410 = vmatprep.subr.mxu0 0.0
    %2411 = vmatpush1.msra.mxu0 0.0
    %2412 = vmatprep.subr.mxu0 0.0
    %2413 = vmatpush1.msra.mxu0 0.0
    %2414 = vmatprep.subr.mxu0 0.0
    %2415 = vmatpush1.msra.mxu0 0.0
    %2416 = vmatprep.subr.mxu0 0.0
    %2417 = vmatpush1.msra.mxu0 0.0
    %2418 = vmatprep.subr.mxu0 0.0
    %2419 = vmatpush1.msra.mxu0 0.0
    %2420 = vmatprep.subr.mxu0 0.0
    %2421 = vmatpush1.msra.mxu0 0.0
    %2422 = vmatprep.subr.mxu0 0.0
    %2423 = vmatpush1.msra.mxu0 0.0
    %2424 = vmatprep.subr.mxu0 0.0
    %2425 = vmatpush1.msra.mxu0 0.0
    %2426 = vmatprep.subr.mxu0 0.0
    %2427 = vmatpush1.msra.mxu0 0.0
    %2428 = vmatprep.subr.mxu0 0.0
    %2429 = vmatpush1.msra.mxu0 0.0
    %2430 = vmatprep.subr.mxu0 0.0
    %2431 = vmatpush1.msra.mxu0 0.0
    %2432 = vmatprep.mubr.f32.mxu0 0.0
    %v2433 = vand.u32 %v2266, 4294901760
    %2434 = vmatmul.mubr.f32.gmra.mrb[0].mxu0 %v2433
    %v2435 = vpop.f32.mrb[0].mxu0
    %v2436 = vadd.f32 %v2345, %v2435
    %v2437 = vpop.f32.mrb[0].mxu0
    %2438 = vmatprep.mubr.f32.mxu0 0.0
    %v2439 = vand.u32 %v2269, 4294901760
    %2440 = vmatmul.mubr.f32.gmra.mrb[0].mxu0 %v2439
    %v2441 = vpop.f32.mrb[0].mxu0
    %v2442 = vadd.f32 %v2355, %v2441
    %v2443 = vpop.f32.mrb[0].mxu0
    %2444 = vdwg.mxu0
    %2445 = vmatprep.subr.mxu0 0.0
    %v2446 = vand.u32 %v2260, 4294901760
    %v2447 = vsub.f32 %v2260, %v2446
    %2448 = vmatpush1.msra.mxu0 %v2447
    %2449 = vmatprep.subr.mxu0 0.0
    %v2450 = vand.u32 %v2262, 4294901760
    %v2451 = vsub.f32 %v2262, %v2450
    %2452 = vmatpush1.msra.mxu0 %v2451
    %2453 = vmatprep.subr.mxu0 0.0
    %2454 = vmatpush1.msra.mxu0 0.0
    %2455 = vmatprep.subr.mxu0 0.0
    %2456 = vmatpush1.msra.mxu0 0.0
    %2457 = vmatprep.subr.mxu0 0.0
    %2458 = vmatpush1.msra.mxu0 0.0
    %2459 = vmatprep.subr.mxu0 0.0
    %2460 = vmatpush1.msra.mxu0 0.0
    %2461 = vmatprep.subr.mxu0 0.0
    %2462 = vmatpush1.msra.mxu0 0.0
    %2463 = vmatprep.subr.mxu0 0.0
    %2464 = vmatpush1.msra.mxu0 0.0
    %2465 = vmatprep.subr.mxu0 0.0
    %2466 = vmatpush1.msra.mxu0 0.0
    %2467 = vmatprep.subr.mxu0 0.0
    %2468 = vmatpush1.msra.mxu0 0.0
    %2469 = vmatprep.subr.mxu0 0.0
    %2470 = vmatpush1.msra.mxu0 0.0
    %2471 = vmatprep.subr.mxu0 0.0
    %2472 = vmatpush1.msra.mxu0 0.0
    %2473 = vmatprep.subr.mxu0 0.0
    %2474 = vmatpush1.msra.mxu0 0.0
    %2475 = vmatprep.subr.mxu0 0.0
    %2476 = vmatpush1.msra.mxu0 0.0
    %2477 = vmatprep.subr.mxu0 0.0
    %2478 = vmatpush1.msra.mxu0 0.0
    %2479 = vmatprep.subr.mxu0 0.0
    %2480 = vmatpush1.msra.mxu0 0.0
    %2481 = vmatprep.subr.mxu0 0.0
    %2482 = vmatpush1.msra.mxu0 0.0
    %2483 = vmatprep.subr.mxu0 0.0
    %2484 = vmatpush1.msra.mxu0 0.0
    %2485 = vmatprep.subr.mxu0 0.0
    %2486 = vmatpush1.msra.mxu0 0.0
    %2487 = vmatprep.subr.mxu0 0.0
    %2488 = vmatpush1.msra.mxu0 0.0
    %2489 = vmatprep.subr.mxu0 0.0
    %2490 = vmatpush1.msra.mxu0 0.0
    %2491 = vmatprep.subr.mxu0 0.0
    %2492 = vmatpush1.msra.mxu0 0.0
    %2493 = vmatprep.subr.mxu0 0.0
    %2494 = vmatpush1.msra.mxu0 0.0
    %2495 = vmatprep.subr.mxu0 0.0
    %2496 = vmatpush1.msra.mxu0 0.0
    %2497 = vmatprep.subr.mxu0 0.0
    %2498 = vmatpush1.msra.mxu0 0.0
    %2499 = vmatprep.subr.mxu0 0.0
    %2500 = vmatpush1.msra.mxu0 0.0
    %2501 = vmatprep.subr.mxu0 0.0
    %2502 = vmatpush1.msra.mxu0 0.0
    %2503 = vmatprep.subr.mxu0 0.0
    %2504 = vmatpush1.msra.mxu0 0.0
    %2505 = vmatprep.subr.mxu0 0.0
    %2506 = vmatpush1.msra.mxu0 0.0
    %2507 = vmatprep.subr.mxu0 0.0
    %2508 = vmatpush1.msra.mxu0 0.0
    %2509 = vmatprep.subr.mxu0 0.0
    %2510 = vmatpush1.msra.mxu0 0.0
    %2511 = vmatprep.subr.mxu0 0.0
    %2512 = vmatpush1.msra.mxu0 0.0
    %2513 = vmatprep.mubr.f32.mxu0 0.0
    %v2514 = vand.u32 %v2266, 4294901760
    %v2515 = vsub.f32 %v2266, %v2514
    %2516 = vmatmul.mubr.f32.gmra.mrb[0].mxu0 %v2515
    %v2517 = vpop.f32.mrb[0].mxu0
    %v2518 = vadd.f32 %v2436, %v2517
    %v2519 = vpop.f32.mrb[0].mxu0
    %2520 = vmatprep.mubr.f32.mxu0 0.0
    %v2521 = vand.u32 %v2269, 4294901760
    %v2522 = vsub.f32 %v2269, %v2521
    %2523 = vmatmul.mubr.f32.gmra.mrb[0].mxu0 %v2522
    %v2524 = vpop.f32.mrb[0].mxu0
    %v2525 = vadd.f32 %v2442, %v2524
    %v2526 = vpop.f32.mrb[0].mxu0
    %2527 = vdwg.mxu0
    %2528 = vmatprep.subr.mxu0 0.0
    %v2529 = vand.u32 %v2260, 4294901760
    %2530 = vmatpush1.msra.mxu0 %v2529
    %2531 = vmatprep.subr.mxu0 0.0
    %v2532 = vand.u32 %v2262, 4294901760
    %2533 = vmatpush1.msra.mxu0 %v2532
    %2534 = vmatprep.subr.mxu0 0.0
    %2535 = vmatpush1.msra.mxu0 0.0
    %2536 = vmatprep.subr.mxu0 0.0
    %2537 = vmatpush1.msra.mxu0 0.0
    %2538 = vmatprep.subr.mxu0 0.0
    %2539 = vmatpush1.msra.mxu0 0.0
    %2540 = vmatprep.subr.mxu0 0.0
    %2541 = vmatpush1.msra.mxu0 0.0
    %2542 = vmatprep.subr.mxu0 0.0
    %2543 = vmatpush1.msra.mxu0 0.0
    %2544 = vmatprep.subr.mxu0 0.0
    %2545 = vmatpush1.msra.mxu0 0.0
    %2546 = vmatprep.subr.mxu0 0.0
    %2547 = vmatpush1.msra.mxu0 0.0
    %2548 = vmatprep.subr.mxu0 0.0
    %2549 = vmatpush1.msra.mxu0 0.0
    %2550 = vmatprep.subr.mxu0 0.0
    %2551 = vmatpush1.msra.mxu0 0.0
    %2552 = vmatprep.subr.mxu0 0.0
    %2553 = vmatpush1.msra.mxu0 0.0
    %2554 = vmatprep.subr.mxu0 0.0
    %2555 = vmatpush1.msra.mxu0 0.0
    %2556 = vmatprep.subr.mxu0 0.0
    %2557 = vmatpush1.msra.mxu0 0.0
    %2558 = vmatprep.subr.mxu0 0.0
    %2559 = vmatpush1.msra.mxu0 0.0
    %2560 = vmatprep.subr.mxu0 0.0
    %2561 = vmatpush1.msra.mxu0 0.0
    %2562 = vmatprep.subr.mxu0 0.0
    %2563 = vmatpush1.msra.mxu0 0.0
    %2564 = vmatprep.subr.mxu0 0.0
    %2565 = vmatpush1.msra.mxu0 0.0
    %2566 = vmatprep.subr.mxu0 0.0
    %2567 = vmatpush1.msra.mxu0 0.0
    %2568 = vmatprep.subr.mxu0 0.0
    %2569 = vmatpush1.msra.mxu0 0.0
    %2570 = vmatprep.subr.mxu0 0.0
    %2571 = vmatpush1.msra.mxu0 0.0
    %2572 = vmatprep.subr.mxu0 0.0
    %2573 = vmatpush1.msra.mxu0 0.0
    %2574 = vmatprep.subr.mxu0 0.0
    %2575 = vmatpush1.msra.mxu0 0.0
    %2576 = vmatprep.subr.mxu0 0.0
    %2577 = vmatpush1.msra.mxu0 0.0
    %2578 = vmatprep.subr.mxu0 0.0
    %2579 = vmatpush1.msra.mxu0 0.0
    %2580 = vmatprep.subr.mxu0 0.0
    %2581 = vmatpush1.msra.mxu0 0.0
    %2582 = vmatprep.subr.mxu0 0.0
    %2583 = vmatpush1.msra.mxu0 0.0
    %2584 = vmatprep.subr.mxu0 0.0
    %2585 = vmatpush1.msra.mxu0 0.0
    %2586 = vmatprep.subr.mxu0 0.0
    %2587 = vmatpush1.msra.mxu0 0.0
    %2588 = vmatprep.subr.mxu0 0.0
    %2589 = vmatpush1.msra.mxu0 0.0
    %2590 = vmatprep.subr.mxu0 0.0
    %2591 = vmatpush1.msra.mxu0 0.0
    %2592 = vmatprep.subr.mxu0 0.0
    %2593 = vmatpush1.msra.mxu0 0.0
    %2594 = vmatprep.mubr.f32.mxu0 0.0
    %v2595 = vand.u32 %v2266, 4294901760
    %v2596 = vsub.f32 %v2266, %v2595
    %v2597 = vand.u32 %v2596, 4294901760
    %2598 = vmatmul.mubr.f32.gmra.mrb[0].mxu0 %v2597
    %v2599 = vpop.f32.mrb[0].mxu0
    %v2600 = vadd.f32 %v2518, %v2599
    %v2601 = vpop.f32.mrb[0].mxu0
    %2602 = vmatprep.mubr.f32.mxu0 0.0
    %v2603 = vand.u32 %v2269, 4294901760
    %v2604 = vsub.f32 %v2269, %v2603
    %v2605 = vand.u32 %v2604, 4294901760
    %2606 = vmatmul.mubr.f32.gmra.mrb[0].mxu0 %v2605
    %v2607 = vpop.f32.mrb[0].mxu0
    %v2608 = vadd.f32 %v2525, %v2607
    %v2609 = vpop.f32.mrb[0].mxu0
    %2610 = vdwg.mxu0
    %2611 = vmatprep.subr.mxu0 0.0
    %v2612 = vand.u32 %v2260, 4294901760
    %v2613 = vsub.f32 %v2260, %v2612
    %v2614 = vand.u32 %v2613, 4294901760
    %2615 = vmatpush1.msra.mxu0 %v2614
    %2616 = vmatprep.subr.mxu0 0.0
    %v2617 = vand.u32 %v2262, 4294901760
    %v2618 = vsub.f32 %v2262, %v2617
    %v2619 = vand.u32 %v2618, 4294901760
    %2620 = vmatpush1.msra.mxu0 %v2619
    %2621 = vmatprep.subr.mxu0 0.0
    %2622 = vmatpush1.msra.mxu0 0.0
    %2623 = vmatprep.subr.mxu0 0.0
    %2624 = vmatpush1.msra.mxu0 0.0
    %2625 = vmatprep.subr.mxu0 0.0
    %2626 = vmatpush1.msra.mxu0 0.0
    %2627 = vmatprep.subr.mxu0 0.0
    %2628 = vmatpush1.msra.mxu0 0.0
    %2629 = vmatprep.subr.mxu0 0.0
    %2630 = vmatpush1.msra.mxu0 0.0
    %2631 = vmatprep.subr.mxu0 0.0
    %2632 = vmatpush1.msra.mxu0 0.0
    %2633 = vmatprep.subr.mxu0 0.0
    %2634 = vmatpush1.msra.mxu0 0.0
    %2635 = vmatprep.subr.mxu0 0.0
    %2636 = vmatpush1.msra.mxu0 0.0
    %2637 = vmatprep.subr.mxu0 0.0
    %2638 = vmatpush1.msra.mxu0 0.0
    %2639 = vmatprep.subr.mxu0 0.0
    %2640 = vmatpush1.msra.mxu0 0.0
    %2641 = vmatprep.subr.mxu0 0.0
    %2642 = vmatpush1.msra.mxu0 0.0
    %2643 = vmatprep.subr.mxu0 0.0
    %2644 = vmatpush1.msra.mxu0 0.0
    %2645 = vmatprep.subr.mxu0 0.0
    %2646 = vmatpush1.msra.mxu0 0.0
    %2647 = vmatprep.subr.mxu0 0.0
    %2648 = vmatpush1.msra.mxu0 0.0
    %2649 = vmatprep.subr.mxu0 0.0
    %2650 = vmatpush1.msra.mxu0 0.0
    %2651 = vmatprep.subr.mxu0 0.0
    %2652 = vmatpush1.msra.mxu0 0.0
    %2653 = vmatprep.subr.mxu0 0.0
    %2654 = vmatpush1.msra.mxu0 0.0
    %2655 = vmatprep.subr.mxu0 0.0
    %2656 = vmatpush1.msra.mxu0 0.0
    %2657 = vmatprep.subr.mxu0 0.0
    %2658 = vmatpush1.msra.mxu0 0.0
    %2659 = vmatprep.subr.mxu0 0.0
    %2660 = vmatpush1.msra.mxu0 0.0
    %2661 = vmatprep.subr.mxu0 0.0
    %2662 = vmatpush1.msra.mxu0 0.0
    %2663 = vmatprep.subr.mxu0 0.0
    %2664 = vmatpush1.msra.mxu0 0.0
    %2665 = vmatprep.subr.mxu0 0.0
    %2666 = vmatpush1.msra.mxu0 0.0
    %2667 = vmatprep.subr.mxu0 0.0
    %2668 = vmatpush1.msra.mxu0 0.0
    %2669 = vmatprep.subr.mxu0 0.0
    %2670 = vmatpush1.msra.mxu0 0.0
    %2671 = vmatprep.subr.mxu0 0.0
    %2672 = vmatpush1.msra.mxu0 0.0
    %2673 = vmatprep.subr.mxu0 0.0
    %2674 = vmatpush1.msra.mxu0 0.0
    %2675 = vmatprep.subr.mxu0 0.0
    %2676 = vmatpush1.msra.mxu0 0.0
    %2677 = vmatprep.subr.mxu0 0.0
    %2678 = vmatpush1.msra.mxu0 0.0
    %2679 = vmatprep.subr.mxu0 0.0
    %2680 = vmatpush1.msra.mxu0 0.0
    %2681 = vmatprep.mubr.f32.mxu0 0.0
    %v2682 = vand.u32 %v2266, 4294901760
    %2683 = vmatmul.mubr.f32.gmra.mrb[0].mxu0 %v2682
    %v2684 = vpop.f32.mrb[0].mxu0
    %v2685 = vadd.f32 %v2600, %v2684
    %v2686 = vpop.f32.mrb[0].mxu0
    %2687 = vmatprep.mubr.f32.mxu0 0.0
    %v2688 = vand.u32 %v2269, 4294901760
    %2689 = vmatmul.mubr.f32.gmra.mrb[0].mxu0 %v2688
    %v2690 = vpop.f32.mrb[0].mxu0
    %v2691 = vadd.f32 %v2608, %v2690
    %v2692 = vpop.f32.mrb[0].mxu0
    %2693 = vdwg.mxu0
    %2694 = vmatprep.subr.mxu0 0.0
    %v2695 = vand.u32 %v2260, 4294901760
    %2696 = vmatpush1.msra.mxu0 %v2695
    %2697 = vmatprep.subr.mxu0 0.0
    %v2698 = vand.u32 %v2262, 4294901760
    %2699 = vmatpush1.msra.mxu0 %v2698
    %2700 = vmatprep.subr.mxu0 0.0
    %2701 = vmatpush1.msra.mxu0 0.0
    %2702 = vmatprep.subr.mxu0 0.0
    %2703 = vmatpush1.msra.mxu0 0.0
    %2704 = vmatprep.subr.mxu0 0.0
    %2705 = vmatpush1.msra.mxu0 0.0
    %2706 = vmatprep.subr.mxu0 0.0
    %2707 = vmatpush1.msra.mxu0 0.0
    %2708 = vmatprep.subr.mxu0 0.0
    %2709 = vmatpush1.msra.mxu0 0.0
    %2710 = vmatprep.subr.mxu0 0.0
    %2711 = vmatpush1.msra.mxu0 0.0
    %2712 = vmatprep.subr.mxu0 0.0
    %2713 = vmatpush1.msra.mxu0 0.0
    %2714 = vmatprep.subr.mxu0 0.0
    %2715 = vmatpush1.msra.mxu0 0.0
    %2716 = vmatprep.subr.mxu0 0.0
    %2717 = vmatpush1.msra.mxu0 0.0
    %2718 = vmatprep.subr.mxu0 0.0
    %2719 = vmatpush1.msra.mxu0 0.0
    %2720 = vmatprep.subr.mxu0 0.0
    %2721 = vmatpush1.msra.mxu0 0.0
    %2722 = vmatprep.subr.mxu0 0.0
    %2723 = vmatpush1.msra.mxu0 0.0
    %2724 = vmatprep.subr.mxu0 0.0
    %2725 = vmatpush1.msra.mxu0 0.0
    %2726 = vmatprep.subr.mxu0 0.0
    %2727 = vmatpush1.msra.mxu0 0.0
    %2728 = vmatprep.subr.mxu0 0.0
    %2729 = vmatpush1.msra.mxu0 0.0
    %2730 = vmatprep.subr.mxu0 0.0
    %2731 = vmatpush1.msra.mxu0 0.0
    %2732 = vmatprep.subr.mxu0 0.0
    %2733 = vmatpush1.msra.mxu0 0.0
    %2734 = vmatprep.subr.mxu0 0.0
    %2735 = vmatpush1.msra.mxu0 0.0
    %2736 = vmatprep.subr.mxu0 0.0
    %2737 = vmatpush1.msra.mxu0 0.0
    %2738 = vmatprep.subr.mxu0 0.0
    %2739 = vmatpush1.msra.mxu0 0.0
    %2740 = vmatprep.subr.mxu0 0.0
    %2741 = vmatpush1.msra.mxu0 0.0
    %2742 = vmatprep.subr.mxu0 0.0
    %2743 = vmatpush1.msra.mxu0 0.0
    %2744 = vmatprep.subr.mxu0 0.0
    %2745 = vmatpush1.msra.mxu0 0.0
    %2746 = vmatprep.subr.mxu0 0.0
    %2747 = vmatpush1.msra.mxu0 0.0
    %2748 = vmatprep.subr.mxu0 0.0
    %2749 = vmatpush1.msra.mxu0 0.0
    %2750 = vmatprep.subr.mxu0 0.0
    %2751 = vmatpush1.msra.mxu0 0.0
    %2752 = vmatprep.subr.mxu0 0.0
    %2753 = vmatpush1.msra.mxu0 0.0
    %2754 = vmatprep.subr.mxu0 0.0
    %2755 = vmatpush1.msra.mxu0 0.0
    %2756 = vmatprep.subr.mxu0 0.0
    %2757 = vmatpush1.msra.mxu0 0.0
    %2758 = vmatprep.subr.mxu0 0.0
    %2759 = vmatpush1.msra.mxu0 0.0
    %2760 = vmatprep.mubr.f32.mxu0 0.0
    %v2761 = vand.u32 %v2266, 4294901760
    %2762 = vmatmul.mubr.f32.gmra.mrb[0].mxu0 %v2761
    %v2763 = vpop.f32.mrb[0].mxu0
    %v2764 = vadd.f32 %v2685, %v2763
    %v2765 = vpop.f32.mrb[0].mxu0
    %2766 = vmatprep.mubr.f32.mxu0 0.0
    %v2767 = vand.u32 %v2269, 4294901760
    %2768 = vmatmul.mubr.f32.gmra.mrb[0].mxu0 %v2767
    %v2769 = vpop.f32.mrb[0].mxu0
    %v2770 = vadd.f32 %v2691, %v2769
    %v2771 = vpop.f32.mrb[0].mxu0
    %2772 = vdwg.mxu0
    %v2774 = vsel %vm664, %v2764, 0
    %v2777 = vsel %vm664, %v2770, 0
    %2779 = vmatprep.subr.mxu0 0.0
    %v2780 = vand.u32 %v656, 4294901760
    %2781 = vmatpush1.msra.mxu0 %v2780
    %2782 = vmatprep.subr.mxu0 0.0
    %v2783 = vand.u32 %v657, 4294901760
    %2784 = vmatpush1.msra.mxu0 %v2783
    %2785 = vmatprep.subr.mxu0 0.0
    %2786 = vmatpush1.msra.mxu0 0.0
    %2787 = vmatprep.subr.mxu0 0.0
    %2788 = vmatpush1.msra.mxu0 0.0
    %2789 = vmatprep.subr.mxu0 0.0
    %2790 = vmatpush1.msra.mxu0 0.0
    %2791 = vmatprep.subr.mxu0 0.0
    %2792 = vmatpush1.msra.mxu0 0.0
    %2793 = vmatprep.subr.mxu0 0.0
    %2794 = vmatpush1.msra.mxu0 0.0
    %2795 = vmatprep.subr.mxu0 0.0
    %2796 = vmatpush1.msra.mxu0 0.0
    %2797 = vmatprep.subr.mxu0 0.0
    %2798 = vmatpush1.msra.mxu0 0.0
    %2799 = vmatprep.subr.mxu0 0.0
    %2800 = vmatpush1.msra.mxu0 0.0
    %2801 = vmatprep.subr.mxu0 0.0
    %2802 = vmatpush1.msra.mxu0 0.0
    %2803 = vmatprep.subr.mxu0 0.0
    %2804 = vmatpush1.msra.mxu0 0.0
    %2805 = vmatprep.subr.mxu0 0.0
    %2806 = vmatpush1.msra.mxu0 0.0
    %2807 = vmatprep.subr.mxu0 0.0
    %2808 = vmatpush1.msra.mxu0 0.0
    %2809 = vmatprep.subr.mxu0 0.0
    %2810 = vmatpush1.msra.mxu0 0.0
    %2811 = vmatprep.subr.mxu0 0.0
    %2812 = vmatpush1.msra.mxu0 0.0
    %2813 = vmatprep.subr.mxu0 0.0
    %2814 = vmatpush1.msra.mxu0 0.0
    %2815 = vmatprep.subr.mxu0 0.0
    %2816 = vmatpush1.msra.mxu0 0.0
    %2817 = vmatprep.subr.mxu0 0.0
    %2818 = vmatpush1.msra.mxu0 0.0
    %2819 = vmatprep.subr.mxu0 0.0
    %2820 = vmatpush1.msra.mxu0 0.0
    %2821 = vmatprep.subr.mxu0 0.0
    %2822 = vmatpush1.msra.mxu0 0.0
    %2823 = vmatprep.subr.mxu0 0.0
    %2824 = vmatpush1.msra.mxu0 0.0
    %2825 = vmatprep.subr.mxu0 0.0
    %2826 = vmatpush1.msra.mxu0 0.0
    %2827 = vmatprep.subr.mxu0 0.0
    %2828 = vmatpush1.msra.mxu0 0.0
    %2829 = vmatprep.subr.mxu0 0.0
    %2830 = vmatpush1.msra.mxu0 0.0
    %2831 = vmatprep.subr.mxu0 0.0
    %2832 = vmatpush1.msra.mxu0 0.0
    %2833 = vmatprep.subr.mxu0 0.0
    %2834 = vmatpush1.msra.mxu0 0.0
    %2835 = vmatprep.subr.mxu0 0.0
    %2836 = vmatpush1.msra.mxu0 0.0
    %2837 = vmatprep.subr.mxu0 0.0
    %2838 = vmatpush1.msra.mxu0 0.0
    %2839 = vmatprep.subr.mxu0 0.0
    %2840 = vmatpush1.msra.mxu0 0.0
    %2841 = vmatprep.subr.mxu0 0.0
    %2842 = vmatpush1.msra.mxu0 0.0
    %2843 = vmatprep.subr.mxu0 0.0
    %2844 = vmatpush1.msra.mxu0 0.0
    %2845 = vmatprep.mubr.f32.mxu0 0.0
    %v2846 = vand.u32 %v2774, 4294901760
    %v2847 = vsub.f32 %v2774, %v2846
    %v2848 = vand.u32 %v2847, 4294901760
    %v2849 = vsub.f32 %v2847, %v2848
    %v2850 = vand.u32 %v2849, 4294901760
    %2851 = vmatmul.mubr.f32.gmra.mrb[0].mxu0 %v2850
    %v2852 = vpop.f32.mrb[0].mxu0
    %v2853 = vadd.f32 0.0, %v2852
    %v2854 = vpop.f32.mrb[0].mxu0
    %2855 = vmatprep.mubr.f32.mxu0 0.0
    %v2856 = vand.u32 %v2777, 4294901760
    %v2857 = vsub.f32 %v2777, %v2856
    %v2858 = vand.u32 %v2857, 4294901760
    %v2859 = vsub.f32 %v2857, %v2858
    %v2860 = vand.u32 %v2859, 4294901760
    %2861 = vmatmul.mubr.f32.gmra.mrb[0].mxu0 %v2860
    %v2862 = vpop.f32.mrb[0].mxu0
    %v2863 = vadd.f32 0.0, %v2862
    %v2864 = vpop.f32.mrb[0].mxu0
    %2865 = vdwg.mxu0
    %2866 = vmatprep.subr.mxu0 0.0
    %v2867 = vand.u32 %v656, 4294901760
    %v2868 = vsub.f32 %v656, %v2867
    %v2869 = vand.u32 %v2868, 4294901760
    %v2870 = vsub.f32 %v2868, %v2869
    %v2871 = vand.u32 %v2870, 4294901760
    %2872 = vmatpush1.msra.mxu0 %v2871
    %2873 = vmatprep.subr.mxu0 0.0
    %v2874 = vand.u32 %v657, 4294901760
    %v2875 = vsub.f32 %v657, %v2874
    %v2876 = vand.u32 %v2875, 4294901760
    %v2877 = vsub.f32 %v2875, %v2876
    %v2878 = vand.u32 %v2877, 4294901760
    %2879 = vmatpush1.msra.mxu0 %v2878
    %2880 = vmatprep.subr.mxu0 0.0
    %2881 = vmatpush1.msra.mxu0 0.0
    %2882 = vmatprep.subr.mxu0 0.0
    %2883 = vmatpush1.msra.mxu0 0.0
    %2884 = vmatprep.subr.mxu0 0.0
    %2885 = vmatpush1.msra.mxu0 0.0
    %2886 = vmatprep.subr.mxu0 0.0
    %2887 = vmatpush1.msra.mxu0 0.0
    %2888 = vmatprep.subr.mxu0 0.0
    %2889 = vmatpush1.msra.mxu0 0.0
    %2890 = vmatprep.subr.mxu0 0.0
    %2891 = vmatpush1.msra.mxu0 0.0
    %2892 = vmatprep.subr.mxu0 0.0
    %2893 = vmatpush1.msra.mxu0 0.0
    %2894 = vmatprep.subr.mxu0 0.0
    %2895 = vmatpush1.msra.mxu0 0.0
    %2896 = vmatprep.subr.mxu0 0.0
    %2897 = vmatpush1.msra.mxu0 0.0
    %2898 = vmatprep.subr.mxu0 0.0
    %2899 = vmatpush1.msra.mxu0 0.0
    %2900 = vmatprep.subr.mxu0 0.0
    %2901 = vmatpush1.msra.mxu0 0.0
    %2902 = vmatprep.subr.mxu0 0.0
    %2903 = vmatpush1.msra.mxu0 0.0
    %2904 = vmatprep.subr.mxu0 0.0
    %2905 = vmatpush1.msra.mxu0 0.0
    %2906 = vmatprep.subr.mxu0 0.0
    %2907 = vmatpush1.msra.mxu0 0.0
    %2908 = vmatprep.subr.mxu0 0.0
    %2909 = vmatpush1.msra.mxu0 0.0
    %2910 = vmatprep.subr.mxu0 0.0
    %2911 = vmatpush1.msra.mxu0 0.0
    %2912 = vmatprep.subr.mxu0 0.0
    %2913 = vmatpush1.msra.mxu0 0.0
    %2914 = vmatprep.subr.mxu0 0.0
    %2915 = vmatpush1.msra.mxu0 0.0
    %2916 = vmatprep.subr.mxu0 0.0
    %2917 = vmatpush1.msra.mxu0 0.0
    %2918 = vmatprep.subr.mxu0 0.0
    %2919 = vmatpush1.msra.mxu0 0.0
    %2920 = vmatprep.subr.mxu0 0.0
    %2921 = vmatpush1.msra.mxu0 0.0
    %2922 = vmatprep.subr.mxu0 0.0
    %2923 = vmatpush1.msra.mxu0 0.0
    %2924 = vmatprep.subr.mxu0 0.0
    %2925 = vmatpush1.msra.mxu0 0.0
    %2926 = vmatprep.subr.mxu0 0.0
    %2927 = vmatpush1.msra.mxu0 0.0
    %2928 = vmatprep.subr.mxu0 0.0
    %2929 = vmatpush1.msra.mxu0 0.0
    %2930 = vmatprep.subr.mxu0 0.0
    %2931 = vmatpush1.msra.mxu0 0.0
    %2932 = vmatprep.subr.mxu0 0.0
    %2933 = vmatpush1.msra.mxu0 0.0
    %2934 = vmatprep.subr.mxu0 0.0
    %2935 = vmatpush1.msra.mxu0 0.0
    %2936 = vmatprep.subr.mxu0 0.0
    %2937 = vmatpush1.msra.mxu0 0.0
    %2938 = vmatprep.subr.mxu0 0.0
    %2939 = vmatpush1.msra.mxu0 0.0
    %2940 = vmatprep.mubr.f32.mxu0 0.0
    %v2941 = vand.u32 %v2774, 4294901760
    %2942 = vmatmul.mubr.f32.gmra.mrb[0].mxu0 %v2941
    %v2943 = vpop.f32.mrb[0].mxu0
    %v2944 = vadd.f32 %v2853, %v2943
    %v2945 = vpop.f32.mrb[0].mxu0
    %2946 = vmatprep.mubr.f32.mxu0 0.0
    %v2947 = vand.u32 %v2777, 4294901760
    %2948 = vmatmul.mubr.f32.gmra.mrb[0].mxu0 %v2947
    %v2949 = vpop.f32.mrb[0].mxu0
    %v2950 = vadd.f32 %v2863, %v2949
    %v2951 = vpop.f32.mrb[0].mxu0
    %2952 = vdwg.mxu0
    %2953 = vmatprep.subr.mxu0 0.0
    %v2954 = vand.u32 %v656, 4294901760
    %v2955 = vsub.f32 %v656, %v2954
    %2956 = vmatpush1.msra.mxu0 %v2955
    %2957 = vmatprep.subr.mxu0 0.0
    %v2958 = vand.u32 %v657, 4294901760
    %v2959 = vsub.f32 %v657, %v2958
    %2960 = vmatpush1.msra.mxu0 %v2959
    %2961 = vmatprep.subr.mxu0 0.0
    %2962 = vmatpush1.msra.mxu0 0.0
    %2963 = vmatprep.subr.mxu0 0.0
    %2964 = vmatpush1.msra.mxu0 0.0
    %2965 = vmatprep.subr.mxu0 0.0
    %2966 = vmatpush1.msra.mxu0 0.0
    %2967 = vmatprep.subr.mxu0 0.0
    %2968 = vmatpush1.msra.mxu0 0.0
    %2969 = vmatprep.subr.mxu0 0.0
    %2970 = vmatpush1.msra.mxu0 0.0
    %2971 = vmatprep.subr.mxu0 0.0
    %2972 = vmatpush1.msra.mxu0 0.0
    %2973 = vmatprep.subr.mxu0 0.0
    %2974 = vmatpush1.msra.mxu0 0.0
    %2975 = vmatprep.subr.mxu0 0.0
    %2976 = vmatpush1.msra.mxu0 0.0
    %2977 = vmatprep.subr.mxu0 0.0
    %2978 = vmatpush1.msra.mxu0 0.0
    %2979 = vmatprep.subr.mxu0 0.0
    %2980 = vmatpush1.msra.mxu0 0.0
    %2981 = vmatprep.subr.mxu0 0.0
    %2982 = vmatpush1.msra.mxu0 0.0
    %2983 = vmatprep.subr.mxu0 0.0
    %2984 = vmatpush1.msra.mxu0 0.0
    %2985 = vmatprep.subr.mxu0 0.0
    %2986 = vmatpush1.msra.mxu0 0.0
    %2987 = vmatprep.subr.mxu0 0.0
    %2988 = vmatpush1.msra.mxu0 0.0
    %2989 = vmatprep.subr.mxu0 0.0
    %2990 = vmatpush1.msra.mxu0 0.0
    %2991 = vmatprep.subr.mxu0 0.0
    %2992 = vmatpush1.msra.mxu0 0.0
    %2993 = vmatprep.subr.mxu0 0.0
    %2994 = vmatpush1.msra.mxu0 0.0
    %2995 = vmatprep.subr.mxu0 0.0
    %2996 = vmatpush1.msra.mxu0 0.0
    %2997 = vmatprep.subr.mxu0 0.0
    %2998 = vmatpush1.msra.mxu0 0.0
    %2999 = vmatprep.subr.mxu0 0.0
    %3000 = vmatpush1.msra.mxu0 0.0
    %3001 = vmatprep.subr.mxu0 0.0
    %3002 = vmatpush1.msra.mxu0 0.0
    %3003 = vmatprep.subr.mxu0 0.0
    %3004 = vmatpush1.msra.mxu0 0.0
    %3005 = vmatprep.subr.mxu0 0.0
    %3006 = vmatpush1.msra.mxu0 0.0
    %3007 = vmatprep.subr.mxu0 0.0
    %3008 = vmatpush1.msra.mxu0 0.0
    %3009 = vmatprep.subr.mxu0 0.0
    %3010 = vmatpush1.msra.mxu0 0.0
    %3011 = vmatprep.subr.mxu0 0.0
    %3012 = vmatpush1.msra.mxu0 0.0
    %3013 = vmatprep.subr.mxu0 0.0
    %3014 = vmatpush1.msra.mxu0 0.0
    %3015 = vmatprep.subr.mxu0 0.0
    %3016 = vmatpush1.msra.mxu0 0.0
    %3017 = vmatprep.subr.mxu0 0.0
    %3018 = vmatpush1.msra.mxu0 0.0
    %3019 = vmatprep.subr.mxu0 0.0
    %3020 = vmatpush1.msra.mxu0 0.0
    %3021 = vmatprep.mubr.f32.mxu0 0.0
    %v3022 = vand.u32 %v2774, 4294901760
    %v3023 = vsub.f32 %v2774, %v3022
    %3024 = vmatmul.mubr.f32.gmra.mrb[0].mxu0 %v3023
    %v3025 = vpop.f32.mrb[0].mxu0
    %v3026 = vadd.f32 %v2944, %v3025
    %v3027 = vpop.f32.mrb[0].mxu0
    %3028 = vmatprep.mubr.f32.mxu0 0.0
    %v3029 = vand.u32 %v2777, 4294901760
    %v3030 = vsub.f32 %v2777, %v3029
    %3031 = vmatmul.mubr.f32.gmra.mrb[0].mxu0 %v3030
    %v3032 = vpop.f32.mrb[0].mxu0
    %v3033 = vadd.f32 %v2950, %v3032
    %v3034 = vpop.f32.mrb[0].mxu0
    %3035 = vdwg.mxu0
    %3036 = vmatprep.subr.mxu0 0.0
    %v3037 = vand.u32 %v656, 4294901760
    %3038 = vmatpush1.msra.mxu0 %v3037
    %3039 = vmatprep.subr.mxu0 0.0
    %v3040 = vand.u32 %v657, 4294901760
    %3041 = vmatpush1.msra.mxu0 %v3040
    %3042 = vmatprep.subr.mxu0 0.0
    %3043 = vmatpush1.msra.mxu0 0.0
    %3044 = vmatprep.subr.mxu0 0.0
    %3045 = vmatpush1.msra.mxu0 0.0
    %3046 = vmatprep.subr.mxu0 0.0
    %3047 = vmatpush1.msra.mxu0 0.0
    %3048 = vmatprep.subr.mxu0 0.0
    %3049 = vmatpush1.msra.mxu0 0.0
    %3050 = vmatprep.subr.mxu0 0.0
    %3051 = vmatpush1.msra.mxu0 0.0
    %3052 = vmatprep.subr.mxu0 0.0
    %3053 = vmatpush1.msra.mxu0 0.0
    %3054 = vmatprep.subr.mxu0 0.0
    %3055 = vmatpush1.msra.mxu0 0.0
    %3056 = vmatprep.subr.mxu0 0.0
    %3057 = vmatpush1.msra.mxu0 0.0
    %3058 = vmatprep.subr.mxu0 0.0
    %3059 = vmatpush1.msra.mxu0 0.0
    %3060 = vmatprep.subr.mxu0 0.0
    %3061 = vmatpush1.msra.mxu0 0.0
    %3062 = vmatprep.subr.mxu0 0.0
    %3063 = vmatpush1.msra.mxu0 0.0
    %3064 = vmatprep.subr.mxu0 0.0
    %3065 = vmatpush1.msra.mxu0 0.0
    %3066 = vmatprep.subr.mxu0 0.0
    %3067 = vmatpush1.msra.mxu0 0.0
    %3068 = vmatprep.subr.mxu0 0.0
    %3069 = vmatpush1.msra.mxu0 0.0
    %3070 = vmatprep.subr.mxu0 0.0
    %3071 = vmatpush1.msra.mxu0 0.0
    %3072 = vmatprep.subr.mxu0 0.0
    %3073 = vmatpush1.msra.mxu0 0.0
    %3074 = vmatprep.subr.mxu0 0.0
    %3075 = vmatpush1.msra.mxu0 0.0
    %3076 = vmatprep.subr.mxu0 0.0
    %3077 = vmatpush1.msra.mxu0 0.0
    %3078 = vmatprep.subr.mxu0 0.0
    %3079 = vmatpush1.msra.mxu0 0.0
    %3080 = vmatprep.subr.mxu0 0.0
    %3081 = vmatpush1.msra.mxu0 0.0
    %3082 = vmatprep.subr.mxu0 0.0
    %3083 = vmatpush1.msra.mxu0 0.0
    %3084 = vmatprep.subr.mxu0 0.0
    %3085 = vmatpush1.msra.mxu0 0.0
    %3086 = vmatprep.subr.mxu0 0.0
    %3087 = vmatpush1.msra.mxu0 0.0
    %3088 = vmatprep.subr.mxu0 0.0
    %3089 = vmatpush1.msra.mxu0 0.0
    %3090 = vmatprep.subr.mxu0 0.0
    %3091 = vmatpush1.msra.mxu0 0.0
    %3092 = vmatprep.subr.mxu0 0.0
    %3093 = vmatpush1.msra.mxu0 0.0
    %3094 = vmatprep.subr.mxu0 0.0
    %3095 = vmatpush1.msra.mxu0 0.0
    %3096 = vmatprep.subr.mxu0 0.0
    %3097 = vmatpush1.msra.mxu0 0.0
    %3098 = vmatprep.subr.mxu0 0.0
    %3099 = vmatpush1.msra.mxu0 0.0
    %3100 = vmatprep.subr.mxu0 0.0
    %3101 = vmatpush1.msra.mxu0 0.0
    %3102 = vmatprep.mubr.f32.mxu0 0.0
    %v3103 = vand.u32 %v2774, 4294901760
    %v3104 = vsub.f32 %v2774, %v3103
    %v3105 = vand.u32 %v3104, 4294901760
    %3106 = vmatmul.mubr.f32.gmra.mrb[0].mxu0 %v3105
    %v3107 = vpop.f32.mrb[0].mxu0
    %v3108 = vadd.f32 %v3026, %v3107
    %v3109 = vpop.f32.mrb[0].mxu0
    %3110 = vmatprep.mubr.f32.mxu0 0.0
    %v3111 = vand.u32 %v2777, 4294901760
    %v3112 = vsub.f32 %v2777, %v3111
    %v3113 = vand.u32 %v3112, 4294901760
    %3114 = vmatmul.mubr.f32.gmra.mrb[0].mxu0 %v3113
    %v3115 = vpop.f32.mrb[0].mxu0
    %v3116 = vadd.f32 %v3033, %v3115
    %v3117 = vpop.f32.mrb[0].mxu0
    %3118 = vdwg.mxu0
    %3119 = vmatprep.subr.mxu0 0.0
    %v3120 = vand.u32 %v656, 4294901760
    %v3121 = vsub.f32 %v656, %v3120
    %v3122 = vand.u32 %v3121, 4294901760
    %3123 = vmatpush1.msra.mxu0 %v3122
    %3124 = vmatprep.subr.mxu0 0.0
    %v3125 = vand.u32 %v657, 4294901760
    %v3126 = vsub.f32 %v657, %v3125
    %v3127 = vand.u32 %v3126, 4294901760
    %3128 = vmatpush1.msra.mxu0 %v3127
    %3129 = vmatprep.subr.mxu0 0.0
    %3130 = vmatpush1.msra.mxu0 0.0
    %3131 = vmatprep.subr.mxu0 0.0
    %3132 = vmatpush1.msra.mxu0 0.0
    %3133 = vmatprep.subr.mxu0 0.0
    %3134 = vmatpush1.msra.mxu0 0.0
    %3135 = vmatprep.subr.mxu0 0.0
    %3136 = vmatpush1.msra.mxu0 0.0
    %3137 = vmatprep.subr.mxu0 0.0
    %3138 = vmatpush1.msra.mxu0 0.0
    %3139 = vmatprep.subr.mxu0 0.0
    %3140 = vmatpush1.msra.mxu0 0.0
    %3141 = vmatprep.subr.mxu0 0.0
    %3142 = vmatpush1.msra.mxu0 0.0
    %3143 = vmatprep.subr.mxu0 0.0
    %3144 = vmatpush1.msra.mxu0 0.0
    %3145 = vmatprep.subr.mxu0 0.0
    %3146 = vmatpush1.msra.mxu0 0.0
    %3147 = vmatprep.subr.mxu0 0.0
    %3148 = vmatpush1.msra.mxu0 0.0
    %3149 = vmatprep.subr.mxu0 0.0
    %3150 = vmatpush1.msra.mxu0 0.0
    %3151 = vmatprep.subr.mxu0 0.0
    %3152 = vmatpush1.msra.mxu0 0.0
    %3153 = vmatprep.subr.mxu0 0.0
    %3154 = vmatpush1.msra.mxu0 0.0
    %3155 = vmatprep.subr.mxu0 0.0
    %3156 = vmatpush1.msra.mxu0 0.0
    %3157 = vmatprep.subr.mxu0 0.0
    %3158 = vmatpush1.msra.mxu0 0.0
    %3159 = vmatprep.subr.mxu0 0.0
    %3160 = vmatpush1.msra.mxu0 0.0
    %3161 = vmatprep.subr.mxu0 0.0
    %3162 = vmatpush1.msra.mxu0 0.0
    %3163 = vmatprep.subr.mxu0 0.0
    %3164 = vmatpush1.msra.mxu0 0.0
    %3165 = vmatprep.subr.mxu0 0.0
    %3166 = vmatpush1.msra.mxu0 0.0
    %3167 = vmatprep.subr.mxu0 0.0
    %3168 = vmatpush1.msra.mxu0 0.0
    %3169 = vmatprep.subr.mxu0 0.0
    %3170 = vmatpush1.msra.mxu0 0.0
    %3171 = vmatprep.subr.mxu0 0.0
    %3172 = vmatpush1.msra.mxu0 0.0
    %3173 = vmatprep.subr.mxu0 0.0
    %3174 = vmatpush1.msra.mxu0 0.0
    %3175 = vmatprep.subr.mxu0 0.0
    %3176 = vmatpush1.msra.mxu0 0.0
    %3177 = vmatprep.subr.mxu0 0.0
    %3178 = vmatpush1.msra.mxu0 0.0
    %3179 = vmatprep.subr.mxu0 0.0
    %3180 = vmatpush1.msra.mxu0 0.0
    %3181 = vmatprep.subr.mxu0 0.0
    %3182 = vmatpush1.msra.mxu0 0.0
    %3183 = vmatprep.subr.mxu0 0.0
    %3184 = vmatpush1.msra.mxu0 0.0
    %3185 = vmatprep.subr.mxu0 0.0
    %3186 = vmatpush1.msra.mxu0 0.0
    %3187 = vmatprep.subr.mxu0 0.0
    %3188 = vmatpush1.msra.mxu0 0.0
    %3189 = vmatprep.mubr.f32.mxu0 0.0
    %v3190 = vand.u32 %v2774, 4294901760
    %3191 = vmatmul.mubr.f32.gmra.mrb[0].mxu0 %v3190
    %v3192 = vpop.f32.mrb[0].mxu0
    %v3193 = vadd.f32 %v3108, %v3192
    %v3194 = vpop.f32.mrb[0].mxu0
    %3195 = vmatprep.mubr.f32.mxu0 0.0
    %v3196 = vand.u32 %v2777, 4294901760
    %3197 = vmatmul.mubr.f32.gmra.mrb[0].mxu0 %v3196
    %v3198 = vpop.f32.mrb[0].mxu0
    %v3199 = vadd.f32 %v3116, %v3198
    %v3200 = vpop.f32.mrb[0].mxu0
    %3201 = vdwg.mxu0
    %3202 = vmatprep.subr.mxu0 0.0
    %v3203 = vand.u32 %v656, 4294901760
    %3204 = vmatpush1.msra.mxu0 %v3203
    %3205 = vmatprep.subr.mxu0 0.0
    %v3206 = vand.u32 %v657, 4294901760
    %3207 = vmatpush1.msra.mxu0 %v3206
    %3208 = vmatprep.subr.mxu0 0.0
    %3209 = vmatpush1.msra.mxu0 0.0
    %3210 = vmatprep.subr.mxu0 0.0
    %3211 = vmatpush1.msra.mxu0 0.0
    %3212 = vmatprep.subr.mxu0 0.0
    %3213 = vmatpush1.msra.mxu0 0.0
    %3214 = vmatprep.subr.mxu0 0.0
    %3215 = vmatpush1.msra.mxu0 0.0
    %3216 = vmatprep.subr.mxu0 0.0
    %3217 = vmatpush1.msra.mxu0 0.0
    %3218 = vmatprep.subr.mxu0 0.0
    %3219 = vmatpush1.msra.mxu0 0.0
    %3220 = vmatprep.subr.mxu0 0.0
    %3221 = vmatpush1.msra.mxu0 0.0
    %3222 = vmatprep.subr.mxu0 0.0
    %3223 = vmatpush1.msra.mxu0 0.0
    %3224 = vmatprep.subr.mxu0 0.0
    %3225 = vmatpush1.msra.mxu0 0.0
    %3226 = vmatprep.subr.mxu0 0.0
    %3227 = vmatpush1.msra.mxu0 0.0
    %3228 = vmatprep.subr.mxu0 0.0
    %3229 = vmatpush1.msra.mxu0 0.0
    %3230 = vmatprep.subr.mxu0 0.0
    %3231 = vmatpush1.msra.mxu0 0.0
    %3232 = vmatprep.subr.mxu0 0.0
    %3233 = vmatpush1.msra.mxu0 0.0
    %3234 = vmatprep.subr.mxu0 0.0
    %3235 = vmatpush1.msra.mxu0 0.0
    %3236 = vmatprep.subr.mxu0 0.0
    %3237 = vmatpush1.msra.mxu0 0.0
    %3238 = vmatprep.subr.mxu0 0.0
    %3239 = vmatpush1.msra.mxu0 0.0
    %3240 = vmatprep.subr.mxu0 0.0
    %3241 = vmatpush1.msra.mxu0 0.0
    %3242 = vmatprep.subr.mxu0 0.0
    %3243 = vmatpush1.msra.mxu0 0.0
    %3244 = vmatprep.subr.mxu0 0.0
    %3245 = vmatpush1.msra.mxu0 0.0
    %3246 = vmatprep.subr.mxu0 0.0
    %3247 = vmatpush1.msra.mxu0 0.0
    %3248 = vmatprep.subr.mxu0 0.0
    %3249 = vmatpush1.msra.mxu0 0.0
    %3250 = vmatprep.subr.mxu0 0.0
    %3251 = vmatpush1.msra.mxu0 0.0
    %3252 = vmatprep.subr.mxu0 0.0
    %3253 = vmatpush1.msra.mxu0 0.0
    %3254 = vmatprep.subr.mxu0 0.0
    %3255 = vmatpush1.msra.mxu0 0.0
    %3256 = vmatprep.subr.mxu0 0.0
    %3257 = vmatpush1.msra.mxu0 0.0
    %3258 = vmatprep.subr.mxu0 0.0
    %3259 = vmatpush1.msra.mxu0 0.0
    %3260 = vmatprep.subr.mxu0 0.0
    %3261 = vmatpush1.msra.mxu0 0.0
    %3262 = vmatprep.subr.mxu0 0.0
    %3263 = vmatpush1.msra.mxu0 0.0
    %3264 = vmatprep.subr.mxu0 0.0
    %3265 = vmatpush1.msra.mxu0 0.0
    %3266 = vmatprep.subr.mxu0 0.0
    %3267 = vmatpush1.msra.mxu0 0.0
    %3268 = vmatprep.mubr.f32.mxu0 0.0
    %v3269 = vand.u32 %v2774, 4294901760
    %3270 = vmatmul.mubr.f32.gmra.mrb[0].mxu0 %v3269
    %v3271 = vpop.f32.mrb[0].mxu0
    %v3272 = vadd.f32 %v3193, %v3271
    %v3273 = vpop.f32.mrb[0].mxu0
    %3274 = vmatprep.mubr.f32.mxu0 0.0
    %v3275 = vand.u32 %v2777, 4294901760
    %3276 = vmatmul.mubr.f32.gmra.mrb[0].mxu0 %v3275
    %v3277 = vpop.f32.mrb[0].mxu0
    %v3278 = vadd.f32 %v3199, %v3277
    %v3279 = vpop.f32.mrb[0].mxu0
    %3280 = vdwg.mxu0
    %v3282 = vsel %vm664, %v1706, 0
    %v3285 = vsel %vm664, %v1712, 0
    %3287 = vmatprep.subr.mxu0 0.0
    %v3288 = vand.u32 %v654, 4294901760
    %3289 = vmatpush1.msra.mxu0 %v3288
    %3290 = vmatprep.subr.mxu0 0.0
    %v3291 = vand.u32 %v655, 4294901760
    %3292 = vmatpush1.msra.mxu0 %v3291
    %3293 = vmatprep.subr.mxu0 0.0
    %3294 = vmatpush1.msra.mxu0 0.0
    %3295 = vmatprep.subr.mxu0 0.0
    %3296 = vmatpush1.msra.mxu0 0.0
    %3297 = vmatprep.subr.mxu0 0.0
    %3298 = vmatpush1.msra.mxu0 0.0
    %3299 = vmatprep.subr.mxu0 0.0
    %3300 = vmatpush1.msra.mxu0 0.0
    %3301 = vmatprep.subr.mxu0 0.0
    %3302 = vmatpush1.msra.mxu0 0.0
    %3303 = vmatprep.subr.mxu0 0.0
    %3304 = vmatpush1.msra.mxu0 0.0
    %3305 = vmatprep.subr.mxu0 0.0
    %3306 = vmatpush1.msra.mxu0 0.0
    %3307 = vmatprep.subr.mxu0 0.0
    %3308 = vmatpush1.msra.mxu0 0.0
    %3309 = vmatprep.subr.mxu0 0.0
    %3310 = vmatpush1.msra.mxu0 0.0
    %3311 = vmatprep.subr.mxu0 0.0
    %3312 = vmatpush1.msra.mxu0 0.0
    %3313 = vmatprep.subr.mxu0 0.0
    %3314 = vmatpush1.msra.mxu0 0.0
    %3315 = vmatprep.subr.mxu0 0.0
    %3316 = vmatpush1.msra.mxu0 0.0
    %3317 = vmatprep.subr.mxu0 0.0
    %3318 = vmatpush1.msra.mxu0 0.0
    %3319 = vmatprep.subr.mxu0 0.0
    %3320 = vmatpush1.msra.mxu0 0.0
    %3321 = vmatprep.subr.mxu0 0.0
    %3322 = vmatpush1.msra.mxu0 0.0
    %3323 = vmatprep.subr.mxu0 0.0
    %3324 = vmatpush1.msra.mxu0 0.0
    %3325 = vmatprep.subr.mxu0 0.0
    %3326 = vmatpush1.msra.mxu0 0.0
    %3327 = vmatprep.subr.mxu0 0.0
    %3328 = vmatpush1.msra.mxu0 0.0
    %3329 = vmatprep.subr.mxu0 0.0
    %3330 = vmatpush1.msra.mxu0 0.0
    %3331 = vmatprep.subr.mxu0 0.0
    %3332 = vmatpush1.msra.mxu0 0.0
    %3333 = vmatprep.subr.mxu0 0.0
    %3334 = vmatpush1.msra.mxu0 0.0
    %3335 = vmatprep.subr.mxu0 0.0
    %3336 = vmatpush1.msra.mxu0 0.0
    %3337 = vmatprep.subr.mxu0 0.0
    %3338 = vmatpush1.msra.mxu0 0.0
    %3339 = vmatprep.subr.mxu0 0.0
    %3340 = vmatpush1.msra.mxu0 0.0
    %3341 = vmatprep.subr.mxu0 0.0
    %3342 = vmatpush1.msra.mxu0 0.0
    %3343 = vmatprep.subr.mxu0 0.0
    %3344 = vmatpush1.msra.mxu0 0.0
    %3345 = vmatprep.subr.mxu0 0.0
    %3346 = vmatpush1.msra.mxu0 0.0
    %3347 = vmatprep.subr.mxu0 0.0
    %3348 = vmatpush1.msra.mxu0 0.0
    %3349 = vmatprep.subr.mxu0 0.0
    %3350 = vmatpush1.msra.mxu0 0.0
    %3351 = vmatprep.subr.mxu0 0.0
    %3352 = vmatpush1.msra.mxu0 0.0
    %3353 = vmatprep.mubr.f32.mxu0 0.0
    %v3354 = vand.u32 %v3282, 4294901760
    %v3355 = vsub.f32 %v3282, %v3354
    %v3356 = vand.u32 %v3355, 4294901760
    %v3357 = vsub.f32 %v3355, %v3356
    %v3358 = vand.u32 %v3357, 4294901760
    %3359 = vmatmul.mubr.f32.gmra.mrb[0].mxu0 %v3358
    %v3360 = vpop.f32.mrb[0].mxu0
    %v3361 = vadd.f32 %v3272, %v3360
    %v3362 = vpop.f32.mrb[0].mxu0
    %3363 = vmatprep.mubr.f32.mxu0 0.0
    %v3364 = vand.u32 %v3285, 4294901760
    %v3365 = vsub.f32 %v3285, %v3364
    %v3366 = vand.u32 %v3365, 4294901760
    %v3367 = vsub.f32 %v3365, %v3366
    %v3368 = vand.u32 %v3367, 4294901760
    %3369 = vmatmul.mubr.f32.gmra.mrb[0].mxu0 %v3368
    %v3370 = vpop.f32.mrb[0].mxu0
    %v3371 = vadd.f32 %v3278, %v3370
    %v3372 = vpop.f32.mrb[0].mxu0
    %3373 = vdwg.mxu0
    %3374 = vmatprep.subr.mxu0 0.0
    %v3375 = vand.u32 %v654, 4294901760
    %v3376 = vsub.f32 %v654, %v3375
    %v3377 = vand.u32 %v3376, 4294901760
    %v3378 = vsub.f32 %v3376, %v3377
    %v3379 = vand.u32 %v3378, 4294901760
    %3380 = vmatpush1.msra.mxu0 %v3379
    %3381 = vmatprep.subr.mxu0 0.0
    %v3382 = vand.u32 %v655, 4294901760
    %v3383 = vsub.f32 %v655, %v3382
    %v3384 = vand.u32 %v3383, 4294901760
    %v3385 = vsub.f32 %v3383, %v3384
    %v3386 = vand.u32 %v3385, 4294901760
    %3387 = vmatpush1.msra.mxu0 %v3386
    %3388 = vmatprep.subr.mxu0 0.0
    %3389 = vmatpush1.msra.mxu0 0.0
    %3390 = vmatprep.subr.mxu0 0.0
    %3391 = vmatpush1.msra.mxu0 0.0
    %3392 = vmatprep.subr.mxu0 0.0
    %3393 = vmatpush1.msra.mxu0 0.0
    %3394 = vmatprep.subr.mxu0 0.0
    %3395 = vmatpush1.msra.mxu0 0.0
    %3396 = vmatprep.subr.mxu0 0.0
    %3397 = vmatpush1.msra.mxu0 0.0
    %3398 = vmatprep.subr.mxu0 0.0
    %3399 = vmatpush1.msra.mxu0 0.0
    %3400 = vmatprep.subr.mxu0 0.0
    %3401 = vmatpush1.msra.mxu0 0.0
    %3402 = vmatprep.subr.mxu0 0.0
    %3403 = vmatpush1.msra.mxu0 0.0
    %3404 = vmatprep.subr.mxu0 0.0
    %3405 = vmatpush1.msra.mxu0 0.0
    %3406 = vmatprep.subr.mxu0 0.0
    %3407 = vmatpush1.msra.mxu0 0.0
    %3408 = vmatprep.subr.mxu0 0.0
    %3409 = vmatpush1.msra.mxu0 0.0
    %3410 = vmatprep.subr.mxu0 0.0
    %3411 = vmatpush1.msra.mxu0 0.0
    %3412 = vmatprep.subr.mxu0 0.0
    %3413 = vmatpush1.msra.mxu0 0.0
    %3414 = vmatprep.subr.mxu0 0.0
    %3415 = vmatpush1.msra.mxu0 0.0
    %3416 = vmatprep.subr.mxu0 0.0
    %3417 = vmatpush1.msra.mxu0 0.0
    %3418 = vmatprep.subr.mxu0 0.0
    %3419 = vmatpush1.msra.mxu0 0.0
    %3420 = vmatprep.subr.mxu0 0.0
    %3421 = vmatpush1.msra.mxu0 0.0
    %3422 = vmatprep.subr.mxu0 0.0
    %3423 = vmatpush1.msra.mxu0 0.0
    %3424 = vmatprep.subr.mxu0 0.0
    %3425 = vmatpush1.msra.mxu0 0.0
    %3426 = vmatprep.subr.mxu0 0.0
    %3427 = vmatpush1.msra.mxu0 0.0
    %3428 = vmatprep.subr.mxu0 0.0
    %3429 = vmatpush1.msra.mxu0 0.0
    %3430 = vmatprep.subr.mxu0 0.0
    %3431 = vmatpush1.msra.mxu0 0.0
    %3432 = vmatprep.subr.mxu0 0.0
    %3433 = vmatpush1.msra.mxu0 0.0
    %3434 = vmatprep.subr.mxu0 0.0
    %3435 = vmatpush1.msra.mxu0 0.0
    %3436 = vmatprep.subr.mxu0 0.0
    %3437 = vmatpush1.msra.mxu0 0.0
    %3438 = vmatprep.subr.mxu0 0.0
    %3439 = vmatpush1.msra.mxu0 0.0
    %3440 = vmatprep.subr.mxu0 0.0
    %3441 = vmatpush1.msra.mxu0 0.0
    %3442 = vmatprep.subr.mxu0 0.0
    %3443 = vmatpush1.msra.mxu0 0.0
    %3444 = vmatprep.subr.mxu0 0.0
    %3445 = vmatpush1.msra.mxu0 0.0
    %3446 = vmatprep.subr.mxu0 0.0
    %3447 = vmatpush1.msra.mxu0 0.0
    %3448 = vmatprep.mubr.f32.mxu0 0.0
    %v3449 = vand.u32 %v3282, 4294901760
    %3450 = vmatmul.mubr.f32.gmra.mrb[0].mxu0 %v3449
    %v3451 = vpop.f32.mrb[0].mxu0
    %v3452 = vadd.f32 %v3361, %v3451
    %v3453 = vpop.f32.mrb[0].mxu0
    %3454 = vmatprep.mubr.f32.mxu0 0.0
    %v3455 = vand.u32 %v3285, 4294901760
    %3456 = vmatmul.mubr.f32.gmra.mrb[0].mxu0 %v3455
    %v3457 = vpop.f32.mrb[0].mxu0
    %v3458 = vadd.f32 %v3371, %v3457
    %v3459 = vpop.f32.mrb[0].mxu0
    %3460 = vdwg.mxu0
    %3461 = vmatprep.subr.mxu0 0.0
    %v3462 = vand.u32 %v654, 4294901760
    %v3463 = vsub.f32 %v654, %v3462
    %3464 = vmatpush1.msra.mxu0 %v3463
    %3465 = vmatprep.subr.mxu0 0.0
    %v3466 = vand.u32 %v655, 4294901760
    %v3467 = vsub.f32 %v655, %v3466
    %3468 = vmatpush1.msra.mxu0 %v3467
    %3469 = vmatprep.subr.mxu0 0.0
    %3470 = vmatpush1.msra.mxu0 0.0
    %3471 = vmatprep.subr.mxu0 0.0
    %3472 = vmatpush1.msra.mxu0 0.0
    %3473 = vmatprep.subr.mxu0 0.0
    %3474 = vmatpush1.msra.mxu0 0.0
    %3475 = vmatprep.subr.mxu0 0.0
    %3476 = vmatpush1.msra.mxu0 0.0
    %3477 = vmatprep.subr.mxu0 0.0
    %3478 = vmatpush1.msra.mxu0 0.0
    %3479 = vmatprep.subr.mxu0 0.0
    %3480 = vmatpush1.msra.mxu0 0.0
    %3481 = vmatprep.subr.mxu0 0.0
    %3482 = vmatpush1.msra.mxu0 0.0
    %3483 = vmatprep.subr.mxu0 0.0
    %3484 = vmatpush1.msra.mxu0 0.0
    %3485 = vmatprep.subr.mxu0 0.0
    %3486 = vmatpush1.msra.mxu0 0.0
    %3487 = vmatprep.subr.mxu0 0.0
    %3488 = vmatpush1.msra.mxu0 0.0
    %3489 = vmatprep.subr.mxu0 0.0
    %3490 = vmatpush1.msra.mxu0 0.0
    %3491 = vmatprep.subr.mxu0 0.0
    %3492 = vmatpush1.msra.mxu0 0.0
    %3493 = vmatprep.subr.mxu0 0.0
    %3494 = vmatpush1.msra.mxu0 0.0
    %3495 = vmatprep.subr.mxu0 0.0
    %3496 = vmatpush1.msra.mxu0 0.0
    %3497 = vmatprep.subr.mxu0 0.0
    %3498 = vmatpush1.msra.mxu0 0.0
    %3499 = vmatprep.subr.mxu0 0.0
    %3500 = vmatpush1.msra.mxu0 0.0
    %3501 = vmatprep.subr.mxu0 0.0
    %3502 = vmatpush1.msra.mxu0 0.0
    %3503 = vmatprep.subr.mxu0 0.0
    %3504 = vmatpush1.msra.mxu0 0.0
    %3505 = vmatprep.subr.mxu0 0.0
    %3506 = vmatpush1.msra.mxu0 0.0
    %3507 = vmatprep.subr.mxu0 0.0
    %3508 = vmatpush1.msra.mxu0 0.0
    %3509 = vmatprep.subr.mxu0 0.0
    %3510 = vmatpush1.msra.mxu0 0.0
    %3511 = vmatprep.subr.mxu0 0.0
    %3512 = vmatpush1.msra.mxu0 0.0
    %3513 = vmatprep.subr.mxu0 0.0
    %3514 = vmatpush1.msra.mxu0 0.0
    %3515 = vmatprep.subr.mxu0 0.0
    %3516 = vmatpush1.msra.mxu0 0.0
    %3517 = vmatprep.subr.mxu0 0.0
    %3518 = vmatpush1.msra.mxu0 0.0
    %3519 = vmatprep.subr.mxu0 0.0
    %3520 = vmatpush1.msra.mxu0 0.0
    %3521 = vmatprep.subr.mxu0 0.0
    %3522 = vmatpush1.msra.mxu0 0.0
    %3523 = vmatprep.subr.mxu0 0.0
    %3524 = vmatpush1.msra.mxu0 0.0
    %3525 = vmatprep.subr.mxu0 0.0
    %3526 = vmatpush1.msra.mxu0 0.0
    %3527 = vmatprep.subr.mxu0 0.0
    %3528 = vmatpush1.msra.mxu0 0.0
    %3529 = vmatprep.mubr.f32.mxu0 0.0
    %v3530 = vand.u32 %v3282, 4294901760
    %v3531 = vsub.f32 %v3282, %v3530
    %3532 = vmatmul.mubr.f32.gmra.mrb[0].mxu0 %v3531
    %v3533 = vpop.f32.mrb[0].mxu0
    %v3534 = vadd.f32 %v3452, %v3533
    %v3535 = vpop.f32.mrb[0].mxu0
    %3536 = vmatprep.mubr.f32.mxu0 0.0
    %v3537 = vand.u32 %v3285, 4294901760
    %v3538 = vsub.f32 %v3285, %v3537
    %3539 = vmatmul.mubr.f32.gmra.mrb[0].mxu0 %v3538
    %v3540 = vpop.f32.mrb[0].mxu0
    %v3541 = vadd.f32 %v3458, %v3540
    %v3542 = vpop.f32.mrb[0].mxu0
    %3543 = vdwg.mxu0
    %3544 = vmatprep.subr.mxu0 0.0
    %v3545 = vand.u32 %v654, 4294901760
    %3546 = vmatpush1.msra.mxu0 %v3545
    %3547 = vmatprep.subr.mxu0 0.0
    %v3548 = vand.u32 %v655, 4294901760
    %3549 = vmatpush1.msra.mxu0 %v3548
    %3550 = vmatprep.subr.mxu0 0.0
    %3551 = vmatpush1.msra.mxu0 0.0
    %3552 = vmatprep.subr.mxu0 0.0
    %3553 = vmatpush1.msra.mxu0 0.0
    %3554 = vmatprep.subr.mxu0 0.0
    %3555 = vmatpush1.msra.mxu0 0.0
    %3556 = vmatprep.subr.mxu0 0.0
    %3557 = vmatpush1.msra.mxu0 0.0
    %3558 = vmatprep.subr.mxu0 0.0
    %3559 = vmatpush1.msra.mxu0 0.0
    %3560 = vmatprep.subr.mxu0 0.0
    %3561 = vmatpush1.msra.mxu0 0.0
    %3562 = vmatprep.subr.mxu0 0.0
    %3563 = vmatpush1.msra.mxu0 0.0
    %3564 = vmatprep.subr.mxu0 0.0
    %3565 = vmatpush1.msra.mxu0 0.0
    %3566 = vmatprep.subr.mxu0 0.0
    %3567 = vmatpush1.msra.mxu0 0.0
    %3568 = vmatprep.subr.mxu0 0.0
    %3569 = vmatpush1.msra.mxu0 0.0
    %3570 = vmatprep.subr.mxu0 0.0
    %3571 = vmatpush1.msra.mxu0 0.0
    %3572 = vmatprep.subr.mxu0 0.0
    %3573 = vmatpush1.msra.mxu0 0.0
    %3574 = vmatprep.subr.mxu0 0.0
    %3575 = vmatpush1.msra.mxu0 0.0
    %3576 = vmatprep.subr.mxu0 0.0
    %3577 = vmatpush1.msra.mxu0 0.0
    %3578 = vmatprep.subr.mxu0 0.0
    %3579 = vmatpush1.msra.mxu0 0.0
    %3580 = vmatprep.subr.mxu0 0.0
    %3581 = vmatpush1.msra.mxu0 0.0
    %3582 = vmatprep.subr.mxu0 0.0
    %3583 = vmatpush1.msra.mxu0 0.0
    %3584 = vmatprep.subr.mxu0 0.0
    %3585 = vmatpush1.msra.mxu0 0.0
    %3586 = vmatprep.subr.mxu0 0.0
    %3587 = vmatpush1.msra.mxu0 0.0
    %3588 = vmatprep.subr.mxu0 0.0
    %3589 = vmatpush1.msra.mxu0 0.0
    %3590 = vmatprep.subr.mxu0 0.0
    %3591 = vmatpush1.msra.mxu0 0.0
    %3592 = vmatprep.subr.mxu0 0.0
    %3593 = vmatpush1.msra.mxu0 0.0
    %3594 = vmatprep.subr.mxu0 0.0
    %3595 = vmatpush1.msra.mxu0 0.0
    %3596 = vmatprep.subr.mxu0 0.0
    %3597 = vmatpush1.msra.mxu0 0.0
    %3598 = vmatprep.subr.mxu0 0.0
    %3599 = vmatpush1.msra.mxu0 0.0
    %3600 = vmatprep.subr.mxu0 0.0
    %3601 = vmatpush1.msra.mxu0 0.0
    %3602 = vmatprep.subr.mxu0 0.0
    %3603 = vmatpush1.msra.mxu0 0.0
    %3604 = vmatprep.subr.mxu0 0.0
    %3605 = vmatpush1.msra.mxu0 0.0
    %3606 = vmatprep.subr.mxu0 0.0
    %3607 = vmatpush1.msra.mxu0 0.0
    %3608 = vmatprep.subr.mxu0 0.0
    %3609 = vmatpush1.msra.mxu0 0.0
    %3610 = vmatprep.mubr.f32.mxu0 0.0
    %v3611 = vand.u32 %v3282, 4294901760
    %v3612 = vsub.f32 %v3282, %v3611
    %v3613 = vand.u32 %v3612, 4294901760
    %3614 = vmatmul.mubr.f32.gmra.mrb[0].mxu0 %v3613
    %v3615 = vpop.f32.mrb[0].mxu0
    %v3616 = vadd.f32 %v3534, %v3615
    %v3617 = vpop.f32.mrb[0].mxu0
    %3618 = vmatprep.mubr.f32.mxu0 0.0
    %v3619 = vand.u32 %v3285, 4294901760
    %v3620 = vsub.f32 %v3285, %v3619
    %v3621 = vand.u32 %v3620, 4294901760
    %3622 = vmatmul.mubr.f32.gmra.mrb[0].mxu0 %v3621
    %v3623 = vpop.f32.mrb[0].mxu0
    %v3624 = vadd.f32 %v3541, %v3623
    %v3625 = vpop.f32.mrb[0].mxu0
    %3626 = vdwg.mxu0
    %3627 = vmatprep.subr.mxu0 0.0
    %v3628 = vand.u32 %v654, 4294901760
    %v3629 = vsub.f32 %v654, %v3628
    %v3630 = vand.u32 %v3629, 4294901760
    %3631 = vmatpush1.msra.mxu0 %v3630
    %3632 = vmatprep.subr.mxu0 0.0
    %v3633 = vand.u32 %v655, 4294901760
    %v3634 = vsub.f32 %v655, %v3633
    %v3635 = vand.u32 %v3634, 4294901760
    %3636 = vmatpush1.msra.mxu0 %v3635
    %3637 = vmatprep.subr.mxu0 0.0
    %3638 = vmatpush1.msra.mxu0 0.0
    %3639 = vmatprep.subr.mxu0 0.0
    %3640 = vmatpush1.msra.mxu0 0.0
    %3641 = vmatprep.subr.mxu0 0.0
    %3642 = vmatpush1.msra.mxu0 0.0
    %3643 = vmatprep.subr.mxu0 0.0
    %3644 = vmatpush1.msra.mxu0 0.0
    %3645 = vmatprep.subr.mxu0 0.0
    %3646 = vmatpush1.msra.mxu0 0.0
    %3647 = vmatprep.subr.mxu0 0.0
    %3648 = vmatpush1.msra.mxu0 0.0
    %3649 = vmatprep.subr.mxu0 0.0
    %3650 = vmatpush1.msra.mxu0 0.0
    %3651 = vmatprep.subr.mxu0 0.0
    %3652 = vmatpush1.msra.mxu0 0.0
    %3653 = vmatprep.subr.mxu0 0.0
    %3654 = vmatpush1.msra.mxu0 0.0
    %3655 = vmatprep.subr.mxu0 0.0
    %3656 = vmatpush1.msra.mxu0 0.0
    %3657 = vmatprep.subr.mxu0 0.0
    %3658 = vmatpush1.msra.mxu0 0.0
    %3659 = vmatprep.subr.mxu0 0.0
    %3660 = vmatpush1.msra.mxu0 0.0
    %3661 = vmatprep.subr.mxu0 0.0
    %3662 = vmatpush1.msra.mxu0 0.0
    %3663 = vmatprep.subr.mxu0 0.0
    %3664 = vmatpush1.msra.mxu0 0.0
    %3665 = vmatprep.subr.mxu0 0.0
    %3666 = vmatpush1.msra.mxu0 0.0
    %3667 = vmatprep.subr.mxu0 0.0
    %3668 = vmatpush1.msra.mxu0 0.0
    %3669 = vmatprep.subr.mxu0 0.0
    %3670 = vmatpush1.msra.mxu0 0.0
    %3671 = vmatprep.subr.mxu0 0.0
    %3672 = vmatpush1.msra.mxu0 0.0
    %3673 = vmatprep.subr.mxu0 0.0
    %3674 = vmatpush1.msra.mxu0 0.0
    %3675 = vmatprep.subr.mxu0 0.0
    %3676 = vmatpush1.msra.mxu0 0.0
    %3677 = vmatprep.subr.mxu0 0.0
    %3678 = vmatpush1.msra.mxu0 0.0
    %3679 = vmatprep.subr.mxu0 0.0
    %3680 = vmatpush1.msra.mxu0 0.0
    %3681 = vmatprep.subr.mxu0 0.0
    %3682 = vmatpush1.msra.mxu0 0.0
    %3683 = vmatprep.subr.mxu0 0.0
    %3684 = vmatpush1.msra.mxu0 0.0
    %3685 = vmatprep.subr.mxu0 0.0
    %3686 = vmatpush1.msra.mxu0 0.0
    %3687 = vmatprep.subr.mxu0 0.0
    %3688 = vmatpush1.msra.mxu0 0.0
    %3689 = vmatprep.subr.mxu0 0.0
    %3690 = vmatpush1.msra.mxu0 0.0
    %3691 = vmatprep.subr.mxu0 0.0
    %3692 = vmatpush1.msra.mxu0 0.0
    %3693 = vmatprep.subr.mxu0 0.0
    %3694 = vmatpush1.msra.mxu0 0.0
    %3695 = vmatprep.subr.mxu0 0.0
    %3696 = vmatpush1.msra.mxu0 0.0
    %3697 = vmatprep.mubr.f32.mxu0 0.0
    %v3698 = vand.u32 %v3282, 4294901760
    %3699 = vmatmul.mubr.f32.gmra.mrb[0].mxu0 %v3698
    %v3700 = vpop.f32.mrb[0].mxu0
    %v3701 = vadd.f32 %v3616, %v3700
    %v3702 = vpop.f32.mrb[0].mxu0
    %3703 = vmatprep.mubr.f32.mxu0 0.0
    %v3704 = vand.u32 %v3285, 4294901760
    %3705 = vmatmul.mubr.f32.gmra.mrb[0].mxu0 %v3704
    %v3706 = vpop.f32.mrb[0].mxu0
    %v3707 = vadd.f32 %v3624, %v3706
    %v3708 = vpop.f32.mrb[0].mxu0
    %3709 = vdwg.mxu0
    %3710 = vmatprep.subr.mxu0 0.0
    %v3711 = vand.u32 %v654, 4294901760
    %3712 = vmatpush1.msra.mxu0 %v3711
    %3713 = vmatprep.subr.mxu0 0.0
    %v3714 = vand.u32 %v655, 4294901760
    %3715 = vmatpush1.msra.mxu0 %v3714
    %3716 = vmatprep.subr.mxu0 0.0
    %3717 = vmatpush1.msra.mxu0 0.0
    %3718 = vmatprep.subr.mxu0 0.0
    %3719 = vmatpush1.msra.mxu0 0.0
    %3720 = vmatprep.subr.mxu0 0.0
    %3721 = vmatpush1.msra.mxu0 0.0
    %3722 = vmatprep.subr.mxu0 0.0
    %3723 = vmatpush1.msra.mxu0 0.0
    %3724 = vmatprep.subr.mxu0 0.0
    %3725 = vmatpush1.msra.mxu0 0.0
    %3726 = vmatprep.subr.mxu0 0.0
    %3727 = vmatpush1.msra.mxu0 0.0
    %3728 = vmatprep.subr.mxu0 0.0
    %3729 = vmatpush1.msra.mxu0 0.0
    %3730 = vmatprep.subr.mxu0 0.0
    %3731 = vmatpush1.msra.mxu0 0.0
    %3732 = vmatprep.subr.mxu0 0.0
    %3733 = vmatpush1.msra.mxu0 0.0
    %3734 = vmatprep.subr.mxu0 0.0
    %3735 = vmatpush1.msra.mxu0 0.0
    %3736 = vmatprep.subr.mxu0 0.0
    %3737 = vmatpush1.msra.mxu0 0.0
    %3738 = vmatprep.subr.mxu0 0.0
    %3739 = vmatpush1.msra.mxu0 0.0
    %3740 = vmatprep.subr.mxu0 0.0
    %3741 = vmatpush1.msra.mxu0 0.0
    %3742 = vmatprep.subr.mxu0 0.0
    %3743 = vmatpush1.msra.mxu0 0.0
    %3744 = vmatprep.subr.mxu0 0.0
    %3745 = vmatpush1.msra.mxu0 0.0
    %3746 = vmatprep.subr.mxu0 0.0
    %3747 = vmatpush1.msra.mxu0 0.0
    %3748 = vmatprep.subr.mxu0 0.0
    %3749 = vmatpush1.msra.mxu0 0.0
    %3750 = vmatprep.subr.mxu0 0.0
    %3751 = vmatpush1.msra.mxu0 0.0
    %3752 = vmatprep.subr.mxu0 0.0
    %3753 = vmatpush1.msra.mxu0 0.0
    %3754 = vmatprep.subr.mxu0 0.0
    %3755 = vmatpush1.msra.mxu0 0.0
    %3756 = vmatprep.subr.mxu0 0.0
    %3757 = vmatpush1.msra.mxu0 0.0
    %3758 = vmatprep.subr.mxu0 0.0
    %3759 = vmatpush1.msra.mxu0 0.0
    %3760 = vmatprep.subr.mxu0 0.0
    %3761 = vmatpush1.msra.mxu0 0.0
    %3762 = vmatprep.subr.mxu0 0.0
    %3763 = vmatpush1.msra.mxu0 0.0
    %3764 = vmatprep.subr.mxu0 0.0
    %3765 = vmatpush1.msra.mxu0 0.0
    %3766 = vmatprep.subr.mxu0 0.0
    %3767 = vmatpush1.msra.mxu0 0.0
    %3768 = vmatprep.subr.mxu0 0.0
    %3769 = vmatpush1.msra.mxu0 0.0
    %3770 = vmatprep.subr.mxu0 0.0
    %3771 = vmatpush1.msra.mxu0 0.0
    %3772 = vmatprep.subr.mxu0 0.0
    %3773 = vmatpush1.msra.mxu0 0.0
    %3774 = vmatprep.subr.mxu0 0.0
    %3775 = vmatpush1.msra.mxu0 0.0
    %3776 = vmatprep.mubr.f32.mxu0 0.0
    %v3777 = vand.u32 %v3282, 4294901760
    %3778 = vmatmul.mubr.f32.gmra.mrb[0].mxu0 %v3777
    %v3779 = vpop.f32.mrb[0].mxu0
    %v3780 = vadd.f32 %v3701, %v3779
    %v3781 = vpop.f32.mrb[0].mxu0
    %3782 = vmatprep.mubr.f32.mxu0 0.0
    %v3783 = vand.u32 %v3285, 4294901760
    %3784 = vmatmul.mubr.f32.gmra.mrb[0].mxu0 %v3783
    %v3785 = vpop.f32.mrb[0].mxu0
    %v3786 = vadd.f32 %v3707, %v3785
    %v3787 = vpop.f32.mrb[0].mxu0
    %3788 = vdwg.mxu0
    %v3789 = vlaneseq
    %v3790 = vshrl.u32 %v3789, 7
    %v3791 = vsub.s32 2, %v3790
    %v3792 = vrot.slane %v74, %v3791
    %v3793 = vadd.f32 %v3780, %v3792
    %v3794 = vadd.f32 %v3786, %v3792
    %v3795 = vadd.f32 %v3793, %v114
    %v3796 = vadd.f32 %v3794, %v115
    %v3797 = vsel %vm76, %v3795, 0.0
    %3798 = vadd.xlane.f32.xlu0 %v3797
    %v3799 = vpop.xlane.xlu0 %3798
    %v3800 = vsel %vm76, %v3796, 0.0
    %3801 = vadd.xlane.f32.xlu0 %v3800
    %v3802 = vpop.xlane.xlu0 %3801
    %v3803 = vmul.f32 %v3799, %v83
    %v3804 = vmul.f32 %v3802, %v83
    %v3805 = vsub.f32 %v3795, %v3803
    %v3806 = vsub.f32 %v3796, %v3804
    %v3807 = vmul.f32 %v3805, %v3805
    %v3808 = vmul.f32 %v3806, %v3806
    %v3809 = vsel %vm76, %v3807, 0.0
    %3810 = vadd.xlane.f32.xlu0 %v3809
    %v3811 = vpop.xlane.xlu0 %3810
    %v3812 = vsel %vm76, %v3808, 0.0
    %3813 = vadd.xlane.f32.xlu0 %v3812
    %v3814 = vpop.xlane.xlu0 %3813
    %v3815 = vmul.f32 %v3811, %v83
    %v3816 = vmul.f32 %v3814, %v83
    %v3817 = vadd.f32 %v3815, 1e-05
    %v3818 = vadd.f32 %v3816, 1e-05
    %v3819 = vrsqrt.pop %v3817
    %v3820 = vrsqrt.pop %v3818
    %v3821 = vmul.f32 %v3805, %v3819
    %v3822 = vmul.f32 %v3806, %v3820
    %v3823 = vlaneseq
    %v3824 = vshrl.u32 %v3823, 7
    %v3825 = vsub.s32 3, %v3824
    %v3826 = vrot.slane %v74, %v3825
    %v3827 = vmul.f32 %v3821, %v3826
    %v3828 = vmul.f32 %v3822, %v3826
    %v3829 = vlaneseq
    %v3830 = vshrl.u32 %v3829, 7
    %v3831 = vsub.s32 4, %v3830
    %v3832 = vrot.slane %v74, %v3831
    %v3833 = vadd.f32 %v3827, %v3832
    %v3834 = vadd.f32 %v3828, %v3832
    %v3835 = vld [vmem:[%s3] sm:$0xff]
    %v3836 = vld [vmem:[%s3 + $0x8] sm:$0xff]
    %v3837 = vld [vmem:[%s3 + $0x10] sm:$0xff]
    %v3838 = vld [vmem:[%s3 + $0x18] sm:$0xff]
    %v3839 = vld [vmem:[%s3 + $0x20] sm:$0xff]
    %v3840 = vld [vmem:[%s3 + $0x28] sm:$0xff]
    %v3841 = vld [vmem:[%s3 + $0x30] sm:$0xff]
    %v3842 = vld [vmem:[%s3 + $0x38] sm:$0xff]
    %v3843 = vlaneseq
    %v3844 = vshrl.u32 %v3843, 7
    %v3845 = vsub.s32 5, %v3844
    %v3846 = vrot.slane %v74, %v3845
    %v3847 = vlaneseq
    %v3848 = vshrl.u32 %v3847, 7
    %v3849 = vsub.s32 5, %v3848
    %v3850 = vrot.slane %v75, %v3849
    %v3852 = vsel %vm76, %v3833, 0
    %v3855 = vsel %vm76, %v3834, 0
    %v3857 = vand.u32 %v3836, 4294901760
    %3858 = vmatprep.subr.mxu0 %v3857
    %v3859 = vand.u32 %v3835, 4294901760
    %3860 = vmatpush1.msra.mxu0 %v3859
    %v3861 = vand.u32 %v3838, 4294901760
    %3862 = vmatprep.subr.mxu0 %v3861
    %v3863 = vand.u32 %v3837, 4294901760
    %3864 = vmatpush1.msra.mxu0 %v3863
    %v3865 = vand.u32 %v3840, 4294901760
    %3866 = vmatprep.subr.mxu0 %v3865
    %v3867 = vand.u32 %v3839, 4294901760
    %3868 = vmatpush1.msra.mxu0 %v3867
    %v3869 = vand.u32 %v3842, 4294901760
    %3870 = vmatprep.subr.mxu0 %v3869
    %v3871 = vand.u32 %v3841, 4294901760
    %3872 = vmatpush1.msra.mxu0 %v3871
    %3873 = vmatprep.subr.mxu0 0.0
    %3874 = vmatpush1.msra.mxu0 0.0
    %3875 = vmatprep.subr.mxu0 0.0
    %3876 = vmatpush1.msra.mxu0 0.0
    %3877 = vmatprep.subr.mxu0 0.0
    %3878 = vmatpush1.msra.mxu0 0.0
    %3879 = vmatprep.subr.mxu0 0.0
    %3880 = vmatpush1.msra.mxu0 0.0
    %3881 = vmatprep.subr.mxu0 0.0
    %3882 = vmatpush1.msra.mxu0 0.0
    %3883 = vmatprep.subr.mxu0 0.0
    %3884 = vmatpush1.msra.mxu0 0.0
    %3885 = vmatprep.subr.mxu0 0.0
    %3886 = vmatpush1.msra.mxu0 0.0
    %3887 = vmatprep.subr.mxu0 0.0
    %3888 = vmatpush1.msra.mxu0 0.0
    %3889 = vmatprep.subr.mxu0 0.0
    %3890 = vmatpush1.msra.mxu0 0.0
    %3891 = vmatprep.subr.mxu0 0.0
    %3892 = vmatpush1.msra.mxu0 0.0
    %3893 = vmatprep.subr.mxu0 0.0
    %3894 = vmatpush1.msra.mxu0 0.0
    %3895 = vmatprep.subr.mxu0 0.0
    %3896 = vmatpush1.msra.mxu0 0.0
    %3897 = vmatprep.subr.mxu0 0.0
    %3898 = vmatpush1.msra.mxu0 0.0
    %3899 = vmatprep.subr.mxu0 0.0
    %3900 = vmatpush1.msra.mxu0 0.0
    %3901 = vmatprep.subr.mxu0 0.0
    %3902 = vmatpush1.msra.mxu0 0.0
    %3903 = vmatprep.subr.mxu0 0.0
    %3904 = vmatpush1.msra.mxu0 0.0
    %3905 = vmatprep.subr.mxu0 0.0
    %3906 = vmatpush1.msra.mxu0 0.0
    %3907 = vmatprep.subr.mxu0 0.0
    %3908 = vmatpush1.msra.mxu0 0.0
    %3909 = vmatprep.subr.mxu0 0.0
    %3910 = vmatpush1.msra.mxu0 0.0
    %3911 = vmatprep.subr.mxu0 0.0
    %3912 = vmatpush1.msra.mxu0 0.0
    %3913 = vmatprep.subr.mxu0 0.0
    %3914 = vmatpush1.msra.mxu0 0.0
    %3915 = vmatprep.subr.mxu0 0.0
    %3916 = vmatpush1.msra.mxu0 0.0
    %3917 = vmatprep.subr.mxu0 0.0
    %3918 = vmatpush1.msra.mxu0 0.0
    %3919 = vmatprep.subr.mxu0 0.0
    %3920 = vmatpush1.msra.mxu0 0.0
    %3921 = vmatprep.subr.mxu0 0.0
    %3922 = vmatpush1.msra.mxu0 0.0
    %3923 = vmatprep.subr.mxu0 0.0
    %3924 = vmatpush1.msra.mxu0 0.0
    %3925 = vmatprep.subr.mxu0 0.0
    %3926 = vmatpush1.msra.mxu0 0.0
    %3927 = vmatprep.subr.mxu0 0.0
    %3928 = vmatpush1.msra.mxu0 0.0
    %3929 = vmatprep.mubr.f32.mxu0 0.0
    %v3930 = vand.u32 %v3852, 4294901760
    %v3931 = vsub.f32 %v3852, %v3930
    %v3932 = vand.u32 %v3931, 4294901760
    %v3933 = vsub.f32 %v3931, %v3932
    %v3934 = vand.u32 %v3933, 4294901760
    %3935 = vmatmul.mubr.f32.gmra.mrb[0].mxu0 %v3934
    %v3936 = vpop.f32.mrb[0].mxu0
    %v3937 = vadd.f32 %v3846, %v3936
    %v3938 = vpop.f32.mrb[0].mxu0
    %v3939 = vadd.f32 %v3850, %v3938
    %3940 = vmatprep.mubr.f32.mxu0 0.0
    %v3941 = vand.u32 %v3855, 4294901760
    %v3942 = vsub.f32 %v3855, %v3941
    %v3943 = vand.u32 %v3942, 4294901760
    %v3944 = vsub.f32 %v3942, %v3943
    %v3945 = vand.u32 %v3944, 4294901760
    %3946 = vmatmul.mubr.f32.gmra.mrb[0].mxu0 %v3945
    %v3947 = vpop.f32.mrb[0].mxu0
    %v3948 = vadd.f32 %v3846, %v3947
    %v3949 = vpop.f32.mrb[0].mxu0
    %v3950 = vadd.f32 %v3850, %v3949
    %3951 = vdwg.mxu0
    %v3952 = vand.u32 %v3836, 4294901760
    %v3953 = vsub.f32 %v3836, %v3952
    %v3954 = vand.u32 %v3953, 4294901760
    %v3955 = vsub.f32 %v3953, %v3954
    %v3956 = vand.u32 %v3955, 4294901760
    %3957 = vmatprep.subr.mxu0 %v3956
    %v3958 = vand.u32 %v3835, 4294901760
    %v3959 = vsub.f32 %v3835, %v3958
    %v3960 = vand.u32 %v3959, 4294901760
    %v3961 = vsub.f32 %v3959, %v3960
    %v3962 = vand.u32 %v3961, 4294901760
    %3963 = vmatpush1.msra.mxu0 %v3962
    %v3964 = vand.u32 %v3838, 4294901760
    %v3965 = vsub.f32 %v3838, %v3964
    %v3966 = vand.u32 %v3965, 4294901760
    %v3967 = vsub.f32 %v3965, %v3966
    %v3968 = vand.u32 %v3967, 4294901760
    %3969 = vmatprep.subr.mxu0 %v3968
    %v3970 = vand.u32 %v3837, 4294901760
    %v3971 = vsub.f32 %v3837, %v3970
    %v3972 = vand.u32 %v3971, 4294901760
    %v3973 = vsub.f32 %v3971, %v3972
    %v3974 = vand.u32 %v3973, 4294901760
    %3975 = vmatpush1.msra.mxu0 %v3974
    %v3976 = vand.u32 %v3840, 4294901760
    %v3977 = vsub.f32 %v3840, %v3976
    %v3978 = vand.u32 %v3977, 4294901760
    %v3979 = vsub.f32 %v3977, %v3978
    %v3980 = vand.u32 %v3979, 4294901760
    %3981 = vmatprep.subr.mxu0 %v3980
    %v3982 = vand.u32 %v3839, 4294901760
    %v3983 = vsub.f32 %v3839, %v3982
    %v3984 = vand.u32 %v3983, 4294901760
    %v3985 = vsub.f32 %v3983, %v3984
    %v3986 = vand.u32 %v3985, 4294901760
    %3987 = vmatpush1.msra.mxu0 %v3986
    %v3988 = vand.u32 %v3842, 4294901760
    %v3989 = vsub.f32 %v3842, %v3988
    %v3990 = vand.u32 %v3989, 4294901760
    %v3991 = vsub.f32 %v3989, %v3990
    %v3992 = vand.u32 %v3991, 4294901760
    %3993 = vmatprep.subr.mxu0 %v3992
    %v3994 = vand.u32 %v3841, 4294901760
    %v3995 = vsub.f32 %v3841, %v3994
    %v3996 = vand.u32 %v3995, 4294901760
    %v3997 = vsub.f32 %v3995, %v3996
    %v3998 = vand.u32 %v3997, 4294901760
    %3999 = vmatpush1.msra.mxu0 %v3998
    %4000 = vmatprep.subr.mxu0 0.0
    %4001 = vmatpush1.msra.mxu0 0.0
    %4002 = vmatprep.subr.mxu0 0.0
    %4003 = vmatpush1.msra.mxu0 0.0
    %4004 = vmatprep.subr.mxu0 0.0
    %4005 = vmatpush1.msra.mxu0 0.0
    %4006 = vmatprep.subr.mxu0 0.0
    %4007 = vmatpush1.msra.mxu0 0.0
    %4008 = vmatprep.subr.mxu0 0.0
    %4009 = vmatpush1.msra.mxu0 0.0
    %4010 = vmatprep.subr.mxu0 0.0
    %4011 = vmatpush1.msra.mxu0 0.0
    %4012 = vmatprep.subr.mxu0 0.0
    %4013 = vmatpush1.msra.mxu0 0.0
    %4014 = vmatprep.subr.mxu0 0.0
    %4015 = vmatpush1.msra.mxu0 0.0
    %4016 = vmatprep.subr.mxu0 0.0
    %4017 = vmatpush1.msra.mxu0 0.0
    %4018 = vmatprep.subr.mxu0 0.0
    %4019 = vmatpush1.msra.mxu0 0.0
    %4020 = vmatprep.subr.mxu0 0.0
    %4021 = vmatpush1.msra.mxu0 0.0
    %4022 = vmatprep.subr.mxu0 0.0
    %4023 = vmatpush1.msra.mxu0 0.0
    %4024 = vmatprep.subr.mxu0 0.0
    %4025 = vmatpush1.msra.mxu0 0.0
    %4026 = vmatprep.subr.mxu0 0.0
    %4027 = vmatpush1.msra.mxu0 0.0
    %4028 = vmatprep.subr.mxu0 0.0
    %4029 = vmatpush1.msra.mxu0 0.0
    %4030 = vmatprep.subr.mxu0 0.0
    %4031 = vmatpush1.msra.mxu0 0.0
    %4032 = vmatprep.subr.mxu0 0.0
    %4033 = vmatpush1.msra.mxu0 0.0
    %4034 = vmatprep.subr.mxu0 0.0
    %4035 = vmatpush1.msra.mxu0 0.0
    %4036 = vmatprep.subr.mxu0 0.0
    %4037 = vmatpush1.msra.mxu0 0.0
    %4038 = vmatprep.subr.mxu0 0.0
    %4039 = vmatpush1.msra.mxu0 0.0
    %4040 = vmatprep.subr.mxu0 0.0
    %4041 = vmatpush1.msra.mxu0 0.0
    %4042 = vmatprep.subr.mxu0 0.0
    %4043 = vmatpush1.msra.mxu0 0.0
    %4044 = vmatprep.subr.mxu0 0.0
    %4045 = vmatpush1.msra.mxu0 0.0
    %4046 = vmatprep.subr.mxu0 0.0
    %4047 = vmatpush1.msra.mxu0 0.0
    %4048 = vmatprep.subr.mxu0 0.0
    %4049 = vmatpush1.msra.mxu0 0.0
    %4050 = vmatprep.subr.mxu0 0.0
    %4051 = vmatpush1.msra.mxu0 0.0
    %4052 = vmatprep.subr.mxu0 0.0
    %4053 = vmatpush1.msra.mxu0 0.0
    %4054 = vmatprep.subr.mxu0 0.0
    %4055 = vmatpush1.msra.mxu0 0.0
    %4056 = vmatprep.mubr.f32.mxu0 0.0
    %v4057 = vand.u32 %v3852, 4294901760
    %4058 = vmatmul.mubr.f32.gmra.mrb[0].mxu0 %v4057
    %v4059 = vpop.f32.mrb[0].mxu0
    %v4060 = vadd.f32 %v3937, %v4059
    %v4061 = vpop.f32.mrb[0].mxu0
    %v4062 = vadd.f32 %v3939, %v4061
    %4063 = vmatprep.mubr.f32.mxu0 0.0
    %v4064 = vand.u32 %v3855, 4294901760
    %4065 = vmatmul.mubr.f32.gmra.mrb[0].mxu0 %v4064
    %v4066 = vpop.f32.mrb[0].mxu0
    %v4067 = vadd.f32 %v3948, %v4066
    %v4068 = vpop.f32.mrb[0].mxu0
    %v4069 = vadd.f32 %v3950, %v4068
    %4070 = vdwg.mxu0
    %v4071 = vand.u32 %v3836, 4294901760
    %v4072 = vsub.f32 %v3836, %v4071
    %4073 = vmatprep.subr.mxu0 %v4072
    %v4074 = vand.u32 %v3835, 4294901760
    %v4075 = vsub.f32 %v3835, %v4074
    %4076 = vmatpush1.msra.mxu0 %v4075
    %v4077 = vand.u32 %v3838, 4294901760
    %v4078 = vsub.f32 %v3838, %v4077
    %4079 = vmatprep.subr.mxu0 %v4078
    %v4080 = vand.u32 %v3837, 4294901760
    %v4081 = vsub.f32 %v3837, %v4080
    %4082 = vmatpush1.msra.mxu0 %v4081
    %v4083 = vand.u32 %v3840, 4294901760
    %v4084 = vsub.f32 %v3840, %v4083
    %4085 = vmatprep.subr.mxu0 %v4084
    %v4086 = vand.u32 %v3839, 4294901760
    %v4087 = vsub.f32 %v3839, %v4086
    %4088 = vmatpush1.msra.mxu0 %v4087
    %v4089 = vand.u32 %v3842, 4294901760
    %v4090 = vsub.f32 %v3842, %v4089
    %4091 = vmatprep.subr.mxu0 %v4090
    %v4092 = vand.u32 %v3841, 4294901760
    %v4093 = vsub.f32 %v3841, %v4092
    %4094 = vmatpush1.msra.mxu0 %v4093
    %4095 = vmatprep.subr.mxu0 0.0
    %4096 = vmatpush1.msra.mxu0 0.0
    %4097 = vmatprep.subr.mxu0 0.0
    %4098 = vmatpush1.msra.mxu0 0.0
    %4099 = vmatprep.subr.mxu0 0.0
    %4100 = vmatpush1.msra.mxu0 0.0
    %4101 = vmatprep.subr.mxu0 0.0
    %4102 = vmatpush1.msra.mxu0 0.0
    %4103 = vmatprep.subr.mxu0 0.0
    %4104 = vmatpush1.msra.mxu0 0.0
    %4105 = vmatprep.subr.mxu0 0.0
    %4106 = vmatpush1.msra.mxu0 0.0
    %4107 = vmatprep.subr.mxu0 0.0
    %4108 = vmatpush1.msra.mxu0 0.0
    %4109 = vmatprep.subr.mxu0 0.0
    %4110 = vmatpush1.msra.mxu0 0.0
    %4111 = vmatprep.subr.mxu0 0.0
    %4112 = vmatpush1.msra.mxu0 0.0
    %4113 = vmatprep.subr.mxu0 0.0
    %4114 = vmatpush1.msra.mxu0 0.0
    %4115 = vmatprep.subr.mxu0 0.0
    %4116 = vmatpush1.msra.mxu0 0.0
    %4117 = vmatprep.subr.mxu0 0.0
    %4118 = vmatpush1.msra.mxu0 0.0
    %4119 = vmatprep.subr.mxu0 0.0
    %4120 = vmatpush1.msra.mxu0 0.0
    %4121 = vmatprep.subr.mxu0 0.0
    %4122 = vmatpush1.msra.mxu0 0.0
    %4123 = vmatprep.subr.mxu0 0.0
    %4124 = vmatpush1.msra.mxu0 0.0
    %4125 = vmatprep.subr.mxu0 0.0
    %4126 = vmatpush1.msra.mxu0 0.0
    %4127 = vmatprep.subr.mxu0 0.0
    %4128 = vmatpush1.msra.mxu0 0.0
    %4129 = vmatprep.subr.mxu0 0.0
    %4130 = vmatpush1.msra.mxu0 0.0
    %4131 = vmatprep.subr.mxu0 0.0
    %4132 = vmatpush1.msra.mxu0 0.0
    %4133 = vmatprep.subr.mxu0 0.0
    %4134 = vmatpush1.msra.mxu0 0.0
    %4135 = vmatprep.subr.mxu0 0.0
    %4136 = vmatpush1.msra.mxu0 0.0
    %4137 = vmatprep.subr.mxu0 0.0
    %4138 = vmatpush1.msra.mxu0 0.0
    %4139 = vmatprep.subr.mxu0 0.0
    %4140 = vmatpush1.msra.mxu0 0.0
    %4141 = vmatprep.subr.mxu0 0.0
    %4142 = vmatpush1.msra.mxu0 0.0
    %4143 = vmatprep.subr.mxu0 0.0
    %4144 = vmatpush1.msra.mxu0 0.0
    %4145 = vmatprep.subr.mxu0 0.0
    %4146 = vmatpush1.msra.mxu0 0.0
    %4147 = vmatprep.subr.mxu0 0.0
    %4148 = vmatpush1.msra.mxu0 0.0
    %4149 = vmatprep.subr.mxu0 0.0
    %4150 = vmatpush1.msra.mxu0 0.0
    %4151 = vmatprep.mubr.f32.mxu0 0.0
    %v4152 = vand.u32 %v3852, 4294901760
    %v4153 = vsub.f32 %v3852, %v4152
    %4154 = vmatmul.mubr.f32.gmra.mrb[0].mxu0 %v4153
    %v4155 = vpop.f32.mrb[0].mxu0
    %v4156 = vadd.f32 %v4060, %v4155
    %v4157 = vpop.f32.mrb[0].mxu0
    %v4158 = vadd.f32 %v4062, %v4157
    %4159 = vmatprep.mubr.f32.mxu0 0.0
    %v4160 = vand.u32 %v3855, 4294901760
    %v4161 = vsub.f32 %v3855, %v4160
    %4162 = vmatmul.mubr.f32.gmra.mrb[0].mxu0 %v4161
    %v4163 = vpop.f32.mrb[0].mxu0
    %v4164 = vadd.f32 %v4067, %v4163
    %v4165 = vpop.f32.mrb[0].mxu0
    %v4166 = vadd.f32 %v4069, %v4165
    %4167 = vdwg.mxu0
    %v4168 = vand.u32 %v3836, 4294901760
    %4169 = vmatprep.subr.mxu0 %v4168
    %v4170 = vand.u32 %v3835, 4294901760
    %4171 = vmatpush1.msra.mxu0 %v4170
    %v4172 = vand.u32 %v3838, 4294901760
    %4173 = vmatprep.subr.mxu0 %v4172
    %v4174 = vand.u32 %v3837, 4294901760
    %4175 = vmatpush1.msra.mxu0 %v4174
    %v4176 = vand.u32 %v3840, 4294901760
    %4177 = vmatprep.subr.mxu0 %v4176
    %v4178 = vand.u32 %v3839, 4294901760
    %4179 = vmatpush1.msra.mxu0 %v4178
    %v4180 = vand.u32 %v3842, 4294901760
    %4181 = vmatprep.subr.mxu0 %v4180
    %v4182 = vand.u32 %v3841, 4294901760
    %4183 = vmatpush1.msra.mxu0 %v4182
    %4184 = vmatprep.subr.mxu0 0.0
    %4185 = vmatpush1.msra.mxu0 0.0
    %4186 = vmatprep.subr.mxu0 0.0
    %4187 = vmatpush1.msra.mxu0 0.0
    %4188 = vmatprep.subr.mxu0 0.0
    %4189 = vmatpush1.msra.mxu0 0.0
    %4190 = vmatprep.subr.mxu0 0.0
    %4191 = vmatpush1.msra.mxu0 0.0
    %4192 = vmatprep.subr.mxu0 0.0
    %4193 = vmatpush1.msra.mxu0 0.0
    %4194 = vmatprep.subr.mxu0 0.0
    %4195 = vmatpush1.msra.mxu0 0.0
    %4196 = vmatprep.subr.mxu0 0.0
    %4197 = vmatpush1.msra.mxu0 0.0
    %4198 = vmatprep.subr.mxu0 0.0
    %4199 = vmatpush1.msra.mxu0 0.0
    %4200 = vmatprep.subr.mxu0 0.0
    %4201 = vmatpush1.msra.mxu0 0.0
    %4202 = vmatprep.subr.mxu0 0.0
    %4203 = vmatpush1.msra.mxu0 0.0
    %4204 = vmatprep.subr.mxu0 0.0
    %4205 = vmatpush1.msra.mxu0 0.0
    %4206 = vmatprep.subr.mxu0 0.0
    %4207 = vmatpush1.msra.mxu0 0.0
    %4208 = vmatprep.subr.mxu0 0.0
    %4209 = vmatpush1.msra.mxu0 0.0
    %4210 = vmatprep.subr.mxu0 0.0
    %4211 = vmatpush1.msra.mxu0 0.0
    %4212 = vmatprep.subr.mxu0 0.0
    %4213 = vmatpush1.msra.mxu0 0.0
    %4214 = vmatprep.subr.mxu0 0.0
    %4215 = vmatpush1.msra.mxu0 0.0
    %4216 = vmatprep.subr.mxu0 0.0
    %4217 = vmatpush1.msra.mxu0 0.0
    %4218 = vmatprep.subr.mxu0 0.0
    %4219 = vmatpush1.msra.mxu0 0.0
    %4220 = vmatprep.subr.mxu0 0.0
    %4221 = vmatpush1.msra.mxu0 0.0
    %4222 = vmatprep.subr.mxu0 0.0
    %4223 = vmatpush1.msra.mxu0 0.0
    %4224 = vmatprep.subr.mxu0 0.0
    %4225 = vmatpush1.msra.mxu0 0.0
    %4226 = vmatprep.subr.mxu0 0.0
    %4227 = vmatpush1.msra.mxu0 0.0
    %4228 = vmatprep.subr.mxu0 0.0
    %4229 = vmatpush1.msra.mxu0 0.0
    %4230 = vmatprep.subr.mxu0 0.0
    %4231 = vmatpush1.msra.mxu0 0.0
    %4232 = vmatprep.subr.mxu0 0.0
    %4233 = vmatpush1.msra.mxu0 0.0
    %4234 = vmatprep.subr.mxu0 0.0
    %4235 = vmatpush1.msra.mxu0 0.0
    %4236 = vmatprep.subr.mxu0 0.0
    %4237 = vmatpush1.msra.mxu0 0.0
    %4238 = vmatprep.subr.mxu0 0.0
    %4239 = vmatpush1.msra.mxu0 0.0
    %4240 = vmatprep.mubr.f32.mxu0 0.0
    %v4241 = vand.u32 %v3852, 4294901760
    %v4242 = vsub.f32 %v3852, %v4241
    %v4243 = vand.u32 %v4242, 4294901760
    %4244 = vmatmul.mubr.f32.gmra.mrb[0].mxu0 %v4243
    %v4245 = vpop.f32.mrb[0].mxu0
    %v4246 = vadd.f32 %v4156, %v4245
    %v4247 = vpop.f32.mrb[0].mxu0
    %v4248 = vadd.f32 %v4158, %v4247
    %4249 = vmatprep.mubr.f32.mxu0 0.0
    %v4250 = vand.u32 %v3855, 4294901760
    %v4251 = vsub.f32 %v3855, %v4250
    %v4252 = vand.u32 %v4251, 4294901760
    %4253 = vmatmul.mubr.f32.gmra.mrb[0].mxu0 %v4252
    %v4254 = vpop.f32.mrb[0].mxu0
    %v4255 = vadd.f32 %v4164, %v4254
    %v4256 = vpop.f32.mrb[0].mxu0
    %v4257 = vadd.f32 %v4166, %v4256
    %4258 = vdwg.mxu0
    %v4259 = vand.u32 %v3836, 4294901760
    %v4260 = vsub.f32 %v3836, %v4259
    %v4261 = vand.u32 %v4260, 4294901760
    %4262 = vmatprep.subr.mxu0 %v4261
    %v4263 = vand.u32 %v3835, 4294901760
    %v4264 = vsub.f32 %v3835, %v4263
    %v4265 = vand.u32 %v4264, 4294901760
    %4266 = vmatpush1.msra.mxu0 %v4265
    %v4267 = vand.u32 %v3838, 4294901760
    %v4268 = vsub.f32 %v3838, %v4267
    %v4269 = vand.u32 %v4268, 4294901760
    %4270 = vmatprep.subr.mxu0 %v4269
    %v4271 = vand.u32 %v3837, 4294901760
    %v4272 = vsub.f32 %v3837, %v4271
    %v4273 = vand.u32 %v4272, 4294901760
    %4274 = vmatpush1.msra.mxu0 %v4273
    %v4275 = vand.u32 %v3840, 4294901760
    %v4276 = vsub.f32 %v3840, %v4275
    %v4277 = vand.u32 %v4276, 4294901760
    %4278 = vmatprep.subr.mxu0 %v4277
    %v4279 = vand.u32 %v3839, 4294901760
    %v4280 = vsub.f32 %v3839, %v4279
    %v4281 = vand.u32 %v4280, 4294901760
    %4282 = vmatpush1.msra.mxu0 %v4281
    %v4283 = vand.u32 %v3842, 4294901760
    %v4284 = vsub.f32 %v3842, %v4283
    %v4285 = vand.u32 %v4284, 4294901760
    %4286 = vmatprep.subr.mxu0 %v4285
    %v4287 = vand.u32 %v3841, 4294901760
    %v4288 = vsub.f32 %v3841, %v4287
    %v4289 = vand.u32 %v4288, 4294901760
    %4290 = vmatpush1.msra.mxu0 %v4289
    %4291 = vmatprep.subr.mxu0 0.0
    %4292 = vmatpush1.msra.mxu0 0.0
    %4293 = vmatprep.subr.mxu0 0.0
    %4294 = vmatpush1.msra.mxu0 0.0
    %4295 = vmatprep.subr.mxu0 0.0
    %4296 = vmatpush1.msra.mxu0 0.0
    %4297 = vmatprep.subr.mxu0 0.0
    %4298 = vmatpush1.msra.mxu0 0.0
    %4299 = vmatprep.subr.mxu0 0.0
    %4300 = vmatpush1.msra.mxu0 0.0
    %4301 = vmatprep.subr.mxu0 0.0
    %4302 = vmatpush1.msra.mxu0 0.0
    %4303 = vmatprep.subr.mxu0 0.0
    %4304 = vmatpush1.msra.mxu0 0.0
    %4305 = vmatprep.subr.mxu0 0.0
    %4306 = vmatpush1.msra.mxu0 0.0
    %4307 = vmatprep.subr.mxu0 0.0
    %4308 = vmatpush1.msra.mxu0 0.0
    %4309 = vmatprep.subr.mxu0 0.0
    %4310 = vmatpush1.msra.mxu0 0.0
    %4311 = vmatprep.subr.mxu0 0.0
    %4312 = vmatpush1.msra.mxu0 0.0
    %4313 = vmatprep.subr.mxu0 0.0
    %4314 = vmatpush1.msra.mxu0 0.0
    %4315 = vmatprep.subr.mxu0 0.0
    %4316 = vmatpush1.msra.mxu0 0.0
    %4317 = vmatprep.subr.mxu0 0.0
    %4318 = vmatpush1.msra.mxu0 0.0
    %4319 = vmatprep.subr.mxu0 0.0
    %4320 = vmatpush1.msra.mxu0 0.0
    %4321 = vmatprep.subr.mxu0 0.0
    %4322 = vmatpush1.msra.mxu0 0.0
    %4323 = vmatprep.subr.mxu0 0.0
    %4324 = vmatpush1.msra.mxu0 0.0
    %4325 = vmatprep.subr.mxu0 0.0
    %4326 = vmatpush1.msra.mxu0 0.0
    %4327 = vmatprep.subr.mxu0 0.0
    %4328 = vmatpush1.msra.mxu0 0.0
    %4329 = vmatprep.subr.mxu0 0.0
    %4330 = vmatpush1.msra.mxu0 0.0
    %4331 = vmatprep.subr.mxu0 0.0
    %4332 = vmatpush1.msra.mxu0 0.0
    %4333 = vmatprep.subr.mxu0 0.0
    %4334 = vmatpush1.msra.mxu0 0.0
    %4335 = vmatprep.subr.mxu0 0.0
    %4336 = vmatpush1.msra.mxu0 0.0
    %4337 = vmatprep.subr.mxu0 0.0
    %4338 = vmatpush1.msra.mxu0 0.0
    %4339 = vmatprep.subr.mxu0 0.0
    %4340 = vmatpush1.msra.mxu0 0.0
    %4341 = vmatprep.subr.mxu0 0.0
    %4342 = vmatpush1.msra.mxu0 0.0
    %4343 = vmatprep.subr.mxu0 0.0
    %4344 = vmatpush1.msra.mxu0 0.0
    %4345 = vmatprep.subr.mxu0 0.0
    %4346 = vmatpush1.msra.mxu0 0.0
    %4347 = vmatprep.mubr.f32.mxu0 0.0
    %v4348 = vand.u32 %v3852, 4294901760
    %4349 = vmatmul.mubr.f32.gmra.mrb[0].mxu0 %v4348
    %v4350 = vpop.f32.mrb[0].mxu0
    %v4351 = vadd.f32 %v4246, %v4350
    %v4352 = vpop.f32.mrb[0].mxu0
    %v4353 = vadd.f32 %v4248, %v4352
    %4354 = vmatprep.mubr.f32.mxu0 0.0
    %v4355 = vand.u32 %v3855, 4294901760
    %4356 = vmatmul.mubr.f32.gmra.mrb[0].mxu0 %v4355
    %v4357 = vpop.f32.mrb[0].mxu0
    %v4358 = vadd.f32 %v4255, %v4357
    %v4359 = vpop.f32.mrb[0].mxu0
    %v4360 = vadd.f32 %v4257, %v4359
    %4361 = vdwg.mxu0
    %v4362 = vand.u32 %v3836, 4294901760
    %4363 = vmatprep.subr.mxu0 %v4362
    %v4364 = vand.u32 %v3835, 4294901760
    %4365 = vmatpush1.msra.mxu0 %v4364
    %v4366 = vand.u32 %v3838, 4294901760
    %4367 = vmatprep.subr.mxu0 %v4366
    %v4368 = vand.u32 %v3837, 4294901760
    %4369 = vmatpush1.msra.mxu0 %v4368
    %v4370 = vand.u32 %v3840, 4294901760
    %4371 = vmatprep.subr.mxu0 %v4370
    %v4372 = vand.u32 %v3839, 4294901760
    %4373 = vmatpush1.msra.mxu0 %v4372
    %v4374 = vand.u32 %v3842, 4294901760
    %4375 = vmatprep.subr.mxu0 %v4374
    %v4376 = vand.u32 %v3841, 4294901760
    %4377 = vmatpush1.msra.mxu0 %v4376
    %4378 = vmatprep.subr.mxu0 0.0
    %4379 = vmatpush1.msra.mxu0 0.0
    %4380 = vmatprep.subr.mxu0 0.0
    %4381 = vmatpush1.msra.mxu0 0.0
    %4382 = vmatprep.subr.mxu0 0.0
    %4383 = vmatpush1.msra.mxu0 0.0
    %4384 = vmatprep.subr.mxu0 0.0
    %4385 = vmatpush1.msra.mxu0 0.0
    %4386 = vmatprep.subr.mxu0 0.0
    %4387 = vmatpush1.msra.mxu0 0.0
    %4388 = vmatprep.subr.mxu0 0.0
    %4389 = vmatpush1.msra.mxu0 0.0
    %4390 = vmatprep.subr.mxu0 0.0
    %4391 = vmatpush1.msra.mxu0 0.0
    %4392 = vmatprep.subr.mxu0 0.0
    %4393 = vmatpush1.msra.mxu0 0.0
    %4394 = vmatprep.subr.mxu0 0.0
    %4395 = vmatpush1.msra.mxu0 0.0
    %4396 = vmatprep.subr.mxu0 0.0
    %4397 = vmatpush1.msra.mxu0 0.0
    %4398 = vmatprep.subr.mxu0 0.0
    %4399 = vmatpush1.msra.mxu0 0.0
    %4400 = vmatprep.subr.mxu0 0.0
    %4401 = vmatpush1.msra.mxu0 0.0
    %4402 = vmatprep.subr.mxu0 0.0
    %4403 = vmatpush1.msra.mxu0 0.0
    %4404 = vmatprep.subr.mxu0 0.0
    %4405 = vmatpush1.msra.mxu0 0.0
    %4406 = vmatprep.subr.mxu0 0.0
    %4407 = vmatpush1.msra.mxu0 0.0
    %4408 = vmatprep.subr.mxu0 0.0
    %4409 = vmatpush1.msra.mxu0 0.0
    %4410 = vmatprep.subr.mxu0 0.0
    %4411 = vmatpush1.msra.mxu0 0.0
    %4412 = vmatprep.subr.mxu0 0.0
    %4413 = vmatpush1.msra.mxu0 0.0
    %4414 = vmatprep.subr.mxu0 0.0
    %4415 = vmatpush1.msra.mxu0 0.0
    %4416 = vmatprep.subr.mxu0 0.0
    %4417 = vmatpush1.msra.mxu0 0.0
    %4418 = vmatprep.subr.mxu0 0.0
    %4419 = vmatpush1.msra.mxu0 0.0
    %4420 = vmatprep.subr.mxu0 0.0
    %4421 = vmatpush1.msra.mxu0 0.0
    %4422 = vmatprep.subr.mxu0 0.0
    %4423 = vmatpush1.msra.mxu0 0.0
    %4424 = vmatprep.subr.mxu0 0.0
    %4425 = vmatpush1.msra.mxu0 0.0
    %4426 = vmatprep.subr.mxu0 0.0
    %4427 = vmatpush1.msra.mxu0 0.0
    %4428 = vmatprep.subr.mxu0 0.0
    %4429 = vmatpush1.msra.mxu0 0.0
    %4430 = vmatprep.subr.mxu0 0.0
    %4431 = vmatpush1.msra.mxu0 0.0
    %4432 = vmatprep.subr.mxu0 0.0
    %4433 = vmatpush1.msra.mxu0 0.0
    %4434 = vmatprep.mubr.f32.mxu0 0.0
    %v4435 = vand.u32 %v3852, 4294901760
    %4436 = vmatmul.mubr.f32.gmra.mrb[0].mxu0 %v4435
    %v4437 = vpop.f32.mrb[0].mxu0
    %v4438 = vadd.f32 %v4351, %v4437
    %v4439 = vpop.f32.mrb[0].mxu0
    %v4440 = vadd.f32 %v4353, %v4439
    %4441 = vmatprep.mubr.f32.mxu0 0.0
    %v4442 = vand.u32 %v3855, 4294901760
    %4443 = vmatmul.mubr.f32.gmra.mrb[0].mxu0 %v4442
    %v4444 = vpop.f32.mrb[0].mxu0
    %v4445 = vadd.f32 %v4358, %v4444
    %v4446 = vpop.f32.mrb[0].mxu0
    %v4447 = vadd.f32 %v4360, %v4446
    %4448 = vdwg.mxu0
    %v4449 = vmul.f32 %v4440, %v4440
    %v4450 = vmul.f32 %v4447, %v4447
    %v4451 = vmul.f32 %v4440, %v4449
    %v4452 = vmul.f32 %v4447, %v4450
    %v4453 = vmul.f32 %v4451, 0.044715
    %v4454 = vmul.f32 %v4452, 0.044715
    %v4455 = vadd.f32 %v4440, %v4453
    %v4456 = vadd.f32 %v4447, %v4454
    %v4457 = vmul.f32 %v4455, 0.7978846
    %v4458 = vmul.f32 %v4456, 0.7978846
    %v4459 = vtanh.pop %v4457
    %v4460 = vtanh.pop %v4458
    %v4461 = vadd.f32 %v4459, 1.0
    %v4462 = vadd.f32 %v4460, 1.0
    %v4463 = vmul.f32 %v4461, 0.5
    %v4464 = vmul.f32 %v4462, 0.5
    %v4465 = vmul.f32 %v4440, %v4463
    %v4466 = vmul.f32 %v4447, %v4464
    %v4467 = vmul.f32 %v4438, %v4465
    %v4468 = vmul.f32 %v4445, %v4466
    %v4469 = vld [vmem:[%s4] sm:$0xff]
    %v4470 = vld [vmem:[%s4 + $0x8] sm:$0xff]
    %v4471 = vld [vmem:[%s4 + $0x10] sm:$0xff]
    %v4472 = vld [vmem:[%s4 + $0x18] sm:$0xff]
    %v4473 = vld [vmem:[%s4 + $0x20] sm:$0xff]
    %v4474 = vld [vmem:[%s4 + $0x28] sm:$0xff]
    %v4475 = vld [vmem:[%s4 + $0x30] sm:$0xff]
    %v4476 = vld [vmem:[%s4 + $0x38] sm:$0xff]
    %v4477 = vld [vmem:[%s4 + $0x40] sm:$0xff]
    %v4478 = vld [vmem:[%s4 + $0x48] sm:$0xff]
    %v4479 = vld [vmem:[%s4 + $0x50] sm:$0xff]
    %v4480 = vld [vmem:[%s4 + $0x58] sm:$0xff]
    %v4481 = vld [vmem:[%s4 + $0x60] sm:$0xff]
    %v4482 = vld [vmem:[%s4 + $0x68] sm:$0xff]
    %v4483 = vld [vmem:[%s4 + $0x70] sm:$0xff]
    %v4484 = vld [vmem:[%s4 + $0x78] sm:$0xff]
    %v4485 = vlaneseq
    %v4486 = vshrl.u32 %v4485, 7
    %v4487 = vsub.s32 6, %v4486
    %v4488 = vrot.slane %v74, %v4487
    %4489 = vmatprep.subr.mxu0 0.0
    %v4490 = vand.u32 %v4469, 4294901760
    %4491 = vmatpush1.msra.mxu0 %v4490
    %4492 = vmatprep.subr.mxu0 0.0
    %v4493 = vand.u32 %v4470, 4294901760
    %4494 = vmatpush1.msra.mxu0 %v4493
    %4495 = vmatprep.subr.mxu0 0.0
    %v4496 = vand.u32 %v4471, 4294901760
    %4497 = vmatpush1.msra.mxu0 %v4496
    %4498 = vmatprep.subr.mxu0 0.0
    %v4499 = vand.u32 %v4472, 4294901760
    %4500 = vmatpush1.msra.mxu0 %v4499
    %4501 = vmatprep.subr.mxu0 0.0
    %v4502 = vand.u32 %v4473, 4294901760
    %4503 = vmatpush1.msra.mxu0 %v4502
    %4504 = vmatprep.subr.mxu0 0.0
    %v4505 = vand.u32 %v4474, 4294901760
    %4506 = vmatpush1.msra.mxu0 %v4505
    %4507 = vmatprep.subr.mxu0 0.0
    %v4508 = vand.u32 %v4475, 4294901760
    %4509 = vmatpush1.msra.mxu0 %v4508
    %4510 = vmatprep.subr.mxu0 0.0
    %v4511 = vand.u32 %v4476, 4294901760
    %4512 = vmatpush1.msra.mxu0 %v4511
    %4513 = vmatprep.subr.mxu0 0.0
    %v4514 = vand.u32 %v4477, 4294901760
    %4515 = vmatpush1.msra.mxu0 %v4514
    %4516 = vmatprep.subr.mxu0 0.0
    %v4517 = vand.u32 %v4478, 4294901760
    %4518 = vmatpush1.msra.mxu0 %v4517
    %4519 = vmatprep.subr.mxu0 0.0
    %v4520 = vand.u32 %v4479, 4294901760
    %4521 = vmatpush1.msra.mxu0 %v4520
    %4522 = vmatprep.subr.mxu0 0.0
    %v4523 = vand.u32 %v4480, 4294901760
    %4524 = vmatpush1.msra.mxu0 %v4523
    %4525 = vmatprep.subr.mxu0 0.0
    %v4526 = vand.u32 %v4481, 4294901760
    %4527 = vmatpush1.msra.mxu0 %v4526
    %4528 = vmatprep.subr.mxu0 0.0
    %v4529 = vand.u32 %v4482, 4294901760
    %4530 = vmatpush1.msra.mxu0 %v4529
    %4531 = vmatprep.subr.mxu0 0.0
    %v4532 = vand.u32 %v4483, 4294901760
    %4533 = vmatpush1.msra.mxu0 %v4532
    %4534 = vmatprep.subr.mxu0 0.0
    %v4535 = vand.u32 %v4484, 4294901760
    %4536 = vmatpush1.msra.mxu0 %v4535
    %4537 = vmatprep.subr.mxu0 0.0
    %4538 = vmatpush1.msra.mxu0 0.0
    %4539 = vmatprep.subr.mxu0 0.0
    %4540 = vmatpush1.msra.mxu0 0.0
    %4541 = vmatprep.subr.mxu0 0.0
    %4542 = vmatpush1.msra.mxu0 0.0
    %4543 = vmatprep.subr.mxu0 0.0
    %4544 = vmatpush1.msra.mxu0 0.0
    %4545 = vmatprep.subr.mxu0 0.0
    %4546 = vmatpush1.msra.mxu0 0.0
    %4547 = vmatprep.subr.mxu0 0.0
    %4548 = vmatpush1.msra.mxu0 0.0
    %4549 = vmatprep.subr.mxu0 0.0
    %4550 = vmatpush1.msra.mxu0 0.0
    %4551 = vmatprep.subr.mxu0 0.0
    %4552 = vmatpush1.msra.mxu0 0.0
    %4553 = vmatprep.subr.mxu0 0.0
    %4554 = vmatpush1.msra.mxu0 0.0
    %4555 = vmatprep.subr.mxu0 0.0
    %4556 = vmatpush1.msra.mxu0 0.0
    %4557 = vmatprep.subr.mxu0 0.0
    %4558 = vmatpush1.msra.mxu0 0.0
    %4559 = vmatprep.subr.mxu0 0.0
    %4560 = vmatpush1.msra.mxu0 0.0
    %4561 = vmatprep.subr.mxu0 0.0
    %4562 = vmatpush1.msra.mxu0 0.0
    %4563 = vmatprep.subr.mxu0 0.0
    %4564 = vmatpush1.msra.mxu0 0.0
    %4565 = vmatprep.subr.mxu0 0.0
    %4566 = vmatpush1.msra.mxu0 0.0
    %4567 = vmatprep.subr.mxu0 0.0
    %4568 = vmatpush1.msra.mxu0 0.0
    %4569 = vmatprep.mubr.f32.mxu0 0.0
    %v4570 = vand.u32 %v4467, 4294901760
    %v4571 = vsub.f32 %v4467, %v4570
    %v4572 = vand.u32 %v4571, 4294901760
    %v4573 = vsub.f32 %v4571, %v4572
    %v4574 = vand.u32 %v4573, 4294901760
    %4575 = vmatmul.mubr.f32.gmra.mrb[0].mxu0 %v4574
    %v4576 = vpop.f32.mrb[0].mxu0
    %v4577 = vadd.f32 %v4488, %v4576
    %v4578 = vpop.f32.mrb[0].mxu0
    %4579 = vmatprep.mubr.f32.mxu0 0.0
    %v4580 = vand.u32 %v4468, 4294901760
    %v4581 = vsub.f32 %v4468, %v4580
    %v4582 = vand.u32 %v4581, 4294901760
    %v4583 = vsub.f32 %v4581, %v4582
    %v4584 = vand.u32 %v4583, 4294901760
    %4585 = vmatmul.mubr.f32.gmra.mrb[0].mxu0 %v4584
    %v4586 = vpop.f32.mrb[0].mxu0
    %v4587 = vadd.f32 %v4488, %v4586
    %v4588 = vpop.f32.mrb[0].mxu0
    %4589 = vdwg.mxu0
    %4590 = vmatprep.subr.mxu0 0.0
    %v4591 = vand.u32 %v4469, 4294901760
    %v4592 = vsub.f32 %v4469, %v4591
    %v4593 = vand.u32 %v4592, 4294901760
    %v4594 = vsub.f32 %v4592, %v4593
    %v4595 = vand.u32 %v4594, 4294901760
    %4596 = vmatpush1.msra.mxu0 %v4595
    %4597 = vmatprep.subr.mxu0 0.0
    %v4598 = vand.u32 %v4470, 4294901760
    %v4599 = vsub.f32 %v4470, %v4598
    %v4600 = vand.u32 %v4599, 4294901760
    %v4601 = vsub.f32 %v4599, %v4600
    %v4602 = vand.u32 %v4601, 4294901760
    %4603 = vmatpush1.msra.mxu0 %v4602
    %4604 = vmatprep.subr.mxu0 0.0
    %v4605 = vand.u32 %v4471, 4294901760
    %v4606 = vsub.f32 %v4471, %v4605
    %v4607 = vand.u32 %v4606, 4294901760
    %v4608 = vsub.f32 %v4606, %v4607
    %v4609 = vand.u32 %v4608, 4294901760
    %4610 = vmatpush1.msra.mxu0 %v4609
    %4611 = vmatprep.subr.mxu0 0.0
    %v4612 = vand.u32 %v4472, 4294901760
    %v4613 = vsub.f32 %v4472, %v4612
    %v4614 = vand.u32 %v4613, 4294901760
    %v4615 = vsub.f32 %v4613, %v4614
    %v4616 = vand.u32 %v4615, 4294901760
    %4617 = vmatpush1.msra.mxu0 %v4616
    %4618 = vmatprep.subr.mxu0 0.0
    %v4619 = vand.u32 %v4473, 4294901760
    %v4620 = vsub.f32 %v4473, %v4619
    %v4621 = vand.u32 %v4620, 4294901760
    %v4622 = vsub.f32 %v4620, %v4621
    %v4623 = vand.u32 %v4622, 4294901760
    %4624 = vmatpush1.msra.mxu0 %v4623
    %4625 = vmatprep.subr.mxu0 0.0
    %v4626 = vand.u32 %v4474, 4294901760
    %v4627 = vsub.f32 %v4474, %v4626
    %v4628 = vand.u32 %v4627, 4294901760
    %v4629 = vsub.f32 %v4627, %v4628
    %v4630 = vand.u32 %v4629, 4294901760
    %4631 = vmatpush1.msra.mxu0 %v4630
    %4632 = vmatprep.subr.mxu0 0.0
    %v4633 = vand.u32 %v4475, 4294901760
    %v4634 = vsub.f32 %v4475, %v4633
    %v4635 = vand.u32 %v4634, 4294901760
    %v4636 = vsub.f32 %v4634, %v4635
    %v4637 = vand.u32 %v4636, 4294901760
    %4638 = vmatpush1.msra.mxu0 %v4637
    %4639 = vmatprep.subr.mxu0 0.0
    %v4640 = vand.u32 %v4476, 4294901760
    %v4641 = vsub.f32 %v4476, %v4640
    %v4642 = vand.u32 %v4641, 4294901760
    %v4643 = vsub.f32 %v4641, %v4642
    %v4644 = vand.u32 %v4643, 4294901760
    %4645 = vmatpush1.msra.mxu0 %v4644
    %4646 = vmatprep.subr.mxu0 0.0
    %v4647 = vand.u32 %v4477, 4294901760
    %v4648 = vsub.f32 %v4477, %v4647
    %v4649 = vand.u32 %v4648, 4294901760
    %v4650 = vsub.f32 %v4648, %v4649
    %v4651 = vand.u32 %v4650, 4294901760
    %4652 = vmatpush1.msra.mxu0 %v4651
    %4653 = vmatprep.subr.mxu0 0.0
    %v4654 = vand.u32 %v4478, 4294901760
    %v4655 = vsub.f32 %v4478, %v4654
    %v4656 = vand.u32 %v4655, 4294901760
    %v4657 = vsub.f32 %v4655, %v4656
    %v4658 = vand.u32 %v4657, 4294901760
    %4659 = vmatpush1.msra.mxu0 %v4658
    %4660 = vmatprep.subr.mxu0 0.0
    %v4661 = vand.u32 %v4479, 4294901760
    %v4662 = vsub.f32 %v4479, %v4661
    %v4663 = vand.u32 %v4662, 4294901760
    %v4664 = vsub.f32 %v4662, %v4663
    %v4665 = vand.u32 %v4664, 4294901760
    %4666 = vmatpush1.msra.mxu0 %v4665
    %4667 = vmatprep.subr.mxu0 0.0
    %v4668 = vand.u32 %v4480, 4294901760
    %v4669 = vsub.f32 %v4480, %v4668
    %v4670 = vand.u32 %v4669, 4294901760
    %v4671 = vsub.f32 %v4669, %v4670
    %v4672 = vand.u32 %v4671, 4294901760
    %4673 = vmatpush1.msra.mxu0 %v4672
    %4674 = vmatprep.subr.mxu0 0.0
    %v4675 = vand.u32 %v4481, 4294901760
    %v4676 = vsub.f32 %v4481, %v4675
    %v4677 = vand.u32 %v4676, 4294901760
    %v4678 = vsub.f32 %v4676, %v4677
    %v4679 = vand.u32 %v4678, 4294901760
    %4680 = vmatpush1.msra.mxu0 %v4679
    %4681 = vmatprep.subr.mxu0 0.0
    %v4682 = vand.u32 %v4482, 4294901760
    %v4683 = vsub.f32 %v4482, %v4682
    %v4684 = vand.u32 %v4683, 4294901760
    %v4685 = vsub.f32 %v4683, %v4684
    %v4686 = vand.u32 %v4685, 4294901760
    %4687 = vmatpush1.msra.mxu0 %v4686
    %4688 = vmatprep.subr.mxu0 0.0
    %v4689 = vand.u32 %v4483, 4294901760
    %v4690 = vsub.f32 %v4483, %v4689
    %v4691 = vand.u32 %v4690, 4294901760
    %v4692 = vsub.f32 %v4690, %v4691
    %v4693 = vand.u32 %v4692, 4294901760
    %4694 = vmatpush1.msra.mxu0 %v4693
    %4695 = vmatprep.subr.mxu0 0.0
    %v4696 = vand.u32 %v4484, 4294901760
    %v4697 = vsub.f32 %v4484, %v4696
    %v4698 = vand.u32 %v4697, 4294901760
    %v4699 = vsub.f32 %v4697, %v4698
    %v4700 = vand.u32 %v4699, 4294901760
    %4701 = vmatpush1.msra.mxu0 %v4700
    %4702 = vmatprep.subr.mxu0 0.0
    %4703 = vmatpush1.msra.mxu0 0.0
    %4704 = vmatprep.subr.mxu0 0.0
    %4705 = vmatpush1.msra.mxu0 0.0
    %4706 = vmatprep.subr.mxu0 0.0
    %4707 = vmatpush1.msra.mxu0 0.0
    %4708 = vmatprep.subr.mxu0 0.0
    %4709 = vmatpush1.msra.mxu0 0.0
    %4710 = vmatprep.subr.mxu0 0.0
    %4711 = vmatpush1.msra.mxu0 0.0
    %4712 = vmatprep.subr.mxu0 0.0
    %4713 = vmatpush1.msra.mxu0 0.0
    %4714 = vmatprep.subr.mxu0 0.0
    %4715 = vmatpush1.msra.mxu0 0.0
    %4716 = vmatprep.subr.mxu0 0.0
    %4717 = vmatpush1.msra.mxu0 0.0
    %4718 = vmatprep.subr.mxu0 0.0
    %4719 = vmatpush1.msra.mxu0 0.0
    %4720 = vmatprep.subr.mxu0 0.0
    %4721 = vmatpush1.msra.mxu0 0.0
    %4722 = vmatprep.subr.mxu0 0.0
    %4723 = vmatpush1.msra.mxu0 0.0
    %4724 = vmatprep.subr.mxu0 0.0
    %4725 = vmatpush1.msra.mxu0 0.0
    %4726 = vmatprep.subr.mxu0 0.0
    %4727 = vmatpush1.msra.mxu0 0.0
    %4728 = vmatprep.subr.mxu0 0.0
    %4729 = vmatpush1.msra.mxu0 0.0
    %4730 = vmatprep.subr.mxu0 0.0
    %4731 = vmatpush1.msra.mxu0 0.0
    %4732 = vmatprep.subr.mxu0 0.0
    %4733 = vmatpush1.msra.mxu0 0.0
    %4734 = vmatprep.mubr.f32.mxu0 0.0
    %v4735 = vand.u32 %v4467, 4294901760
    %4736 = vmatmul.mubr.f32.gmra.mrb[0].mxu0 %v4735
    %v4737 = vpop.f32.mrb[0].mxu0
    %v4738 = vadd.f32 %v4577, %v4737
    %v4739 = vpop.f32.mrb[0].mxu0
    %4740 = vmatprep.mubr.f32.mxu0 0.0
    %v4741 = vand.u32 %v4468, 4294901760
    %4742 = vmatmul.mubr.f32.gmra.mrb[0].mxu0 %v4741
    %v4743 = vpop.f32.mrb[0].mxu0
    %v4744 = vadd.f32 %v4587, %v4743
    %v4745 = vpop.f32.mrb[0].mxu0
    %4746 = vdwg.mxu0
    %4747 = vmatprep.subr.mxu0 0.0
    %v4748 = vand.u32 %v4469, 4294901760
    %v4749 = vsub.f32 %v4469, %v4748
    %4750 = vmatpush1.msra.mxu0 %v4749
    %4751 = vmatprep.subr.mxu0 0.0
    %v4752 = vand.u32 %v4470, 4294901760
    %v4753 = vsub.f32 %v4470, %v4752
    %4754 = vmatpush1.msra.mxu0 %v4753
    %4755 = vmatprep.subr.mxu0 0.0
    %v4756 = vand.u32 %v4471, 4294901760
    %v4757 = vsub.f32 %v4471, %v4756
    %4758 = vmatpush1.msra.mxu0 %v4757
    %4759 = vmatprep.subr.mxu0 0.0
    %v4760 = vand.u32 %v4472, 4294901760
    %v4761 = vsub.f32 %v4472, %v4760
    %4762 = vmatpush1.msra.mxu0 %v4761
    %4763 = vmatprep.subr.mxu0 0.0
    %v4764 = vand.u32 %v4473, 4294901760
    %v4765 = vsub.f32 %v4473, %v4764
    %4766 = vmatpush1.msra.mxu0 %v4765
    %4767 = vmatprep.subr.mxu0 0.0
    %v4768 = vand.u32 %v4474, 4294901760
    %v4769 = vsub.f32 %v4474, %v4768
    %4770 = vmatpush1.msra.mxu0 %v4769
    %4771 = vmatprep.subr.mxu0 0.0
    %v4772 = vand.u32 %v4475, 4294901760
    %v4773 = vsub.f32 %v4475, %v4772
    %4774 = vmatpush1.msra.mxu0 %v4773
    %4775 = vmatprep.subr.mxu0 0.0
    %v4776 = vand.u32 %v4476, 4294901760
    %v4777 = vsub.f32 %v4476, %v4776
    %4778 = vmatpush1.msra.mxu0 %v4777
    %4779 = vmatprep.subr.mxu0 0.0
    %v4780 = vand.u32 %v4477, 4294901760
    %v4781 = vsub.f32 %v4477, %v4780
    %4782 = vmatpush1.msra.mxu0 %v4781
    %4783 = vmatprep.subr.mxu0 0.0
    %v4784 = vand.u32 %v4478, 4294901760
    %v4785 = vsub.f32 %v4478, %v4784
    %4786 = vmatpush1.msra.mxu0 %v4785
    %4787 = vmatprep.subr.mxu0 0.0
    %v4788 = vand.u32 %v4479, 4294901760
    %v4789 = vsub.f32 %v4479, %v4788
    %4790 = vmatpush1.msra.mxu0 %v4789
    %4791 = vmatprep.subr.mxu0 0.0
    %v4792 = vand.u32 %v4480, 4294901760
    %v4793 = vsub.f32 %v4480, %v4792
    %4794 = vmatpush1.msra.mxu0 %v4793
    %4795 = vmatprep.subr.mxu0 0.0
    %v4796 = vand.u32 %v4481, 4294901760
    %v4797 = vsub.f32 %v4481, %v4796
    %4798 = vmatpush1.msra.mxu0 %v4797
    %4799 = vmatprep.subr.mxu0 0.0
    %v4800 = vand.u32 %v4482, 4294901760
    %v4801 = vsub.f32 %v4482, %v4800
    %4802 = vmatpush1.msra.mxu0 %v4801
    %4803 = vmatprep.subr.mxu0 0.0
    %v4804 = vand.u32 %v4483, 4294901760
    %v4805 = vsub.f32 %v4483, %v4804
    %4806 = vmatpush1.msra.mxu0 %v4805
    %4807 = vmatprep.subr.mxu0 0.0
    %v4808 = vand.u32 %v4484, 4294901760
    %v4809 = vsub.f32 %v4484, %v4808
    %4810 = vmatpush1.msra.mxu0 %v4809
    %4811 = vmatprep.subr.mxu0 0.0
    %4812 = vmatpush1.msra.mxu0 0.0
    %4813 = vmatprep.subr.mxu0 0.0
    %4814 = vmatpush1.msra.mxu0 0.0
    %4815 = vmatprep.subr.mxu0 0.0
    %4816 = vmatpush1.msra.mxu0 0.0
    %4817 = vmatprep.subr.mxu0 0.0
    %4818 = vmatpush1.msra.mxu0 0.0
    %4819 = vmatprep.subr.mxu0 0.0
    %4820 = vmatpush1.msra.mxu0 0.0
    %4821 = vmatprep.subr.mxu0 0.0
    %4822 = vmatpush1.msra.mxu0 0.0
    %4823 = vmatprep.subr.mxu0 0.0
    %4824 = vmatpush1.msra.mxu0 0.0
    %4825 = vmatprep.subr.mxu0 0.0
    %4826 = vmatpush1.msra.mxu0 0.0
    %4827 = vmatprep.subr.mxu0 0.0
    %4828 = vmatpush1.msra.mxu0 0.0
    %4829 = vmatprep.subr.mxu0 0.0
    %4830 = vmatpush1.msra.mxu0 0.0
    %4831 = vmatprep.subr.mxu0 0.0
    %4832 = vmatpush1.msra.mxu0 0.0
    %4833 = vmatprep.subr.mxu0 0.0
    %4834 = vmatpush1.msra.mxu0 0.0
    %4835 = vmatprep.subr.mxu0 0.0
    %4836 = vmatpush1.msra.mxu0 0.0
    %4837 = vmatprep.subr.mxu0 0.0
    %4838 = vmatpush1.msra.mxu0 0.0
    %4839 = vmatprep.subr.mxu0 0.0
    %4840 = vmatpush1.msra.mxu0 0.0
    %4841 = vmatprep.subr.mxu0 0.0
    %4842 = vmatpush1.msra.mxu0 0.0
    %4843 = vmatprep.mubr.f32.mxu0 0.0
    %v4844 = vand.u32 %v4467, 4294901760
    %v4845 = vsub.f32 %v4467, %v4844
    %4846 = vmatmul.mubr.f32.gmra.mrb[0].mxu0 %v4845
    %v4847 = vpop.f32.mrb[0].mxu0
    %v4848 = vadd.f32 %v4738, %v4847
    %v4849 = vpop.f32.mrb[0].mxu0
    %4850 = vmatprep.mubr.f32.mxu0 0.0
    %v4851 = vand.u32 %v4468, 4294901760
    %v4852 = vsub.f32 %v4468, %v4851
    %4853 = vmatmul.mubr.f32.gmra.mrb[0].mxu0 %v4852
    %v4854 = vpop.f32.mrb[0].mxu0
    %v4855 = vadd.f32 %v4744, %v4854
    %v4856 = vpop.f32.mrb[0].mxu0
    %4857 = vdwg.mxu0
    %4858 = vmatprep.subr.mxu0 0.0
    %v4859 = vand.u32 %v4469, 4294901760
    %4860 = vmatpush1.msra.mxu0 %v4859
    %4861 = vmatprep.subr.mxu0 0.0
    %v4862 = vand.u32 %v4470, 4294901760
    %4863 = vmatpush1.msra.mxu0 %v4862
    %4864 = vmatprep.subr.mxu0 0.0
    %v4865 = vand.u32 %v4471, 4294901760
    %4866 = vmatpush1.msra.mxu0 %v4865
    %4867 = vmatprep.subr.mxu0 0.0
    %v4868 = vand.u32 %v4472, 4294901760
    %4869 = vmatpush1.msra.mxu0 %v4868
    %4870 = vmatprep.subr.mxu0 0.0
    %v4871 = vand.u32 %v4473, 4294901760
    %4872 = vmatpush1.msra.mxu0 %v4871
    %4873 = vmatprep.subr.mxu0 0.0
    %v4874 = vand.u32 %v4474, 4294901760
    %4875 = vmatpush1.msra.mxu0 %v4874
    %4876 = vmatprep.subr.mxu0 0.0
    %v4877 = vand.u32 %v4475, 4294901760
    %4878 = vmatpush1.msra.mxu0 %v4877
    %4879 = vmatprep.subr.mxu0 0.0
    %v4880 = vand.u32 %v4476, 4294901760
    %4881 = vmatpush1.msra.mxu0 %v4880
    %4882 = vmatprep.subr.mxu0 0.0
    %v4883 = vand.u32 %v4477, 4294901760
    %4884 = vmatpush1.msra.mxu0 %v4883
    %4885 = vmatprep.subr.mxu0 0.0
    %v4886 = vand.u32 %v4478, 4294901760
    %4887 = vmatpush1.msra.mxu0 %v4886
    %4888 = vmatprep.subr.mxu0 0.0
    %v4889 = vand.u32 %v4479, 4294901760
    %4890 = vmatpush1.msra.mxu0 %v4889
    %4891 = vmatprep.subr.mxu0 0.0
    %v4892 = vand.u32 %v4480, 4294901760
    %4893 = vmatpush1.msra.mxu0 %v4892
    %4894 = vmatprep.subr.mxu0 0.0
    %v4895 = vand.u32 %v4481, 4294901760
    %4896 = vmatpush1.msra.mxu0 %v4895
    %4897 = vmatprep.subr.mxu0 0.0
    %v4898 = vand.u32 %v4482, 4294901760
    %4899 = vmatpush1.msra.mxu0 %v4898
    %4900 = vmatprep.subr.mxu0 0.0
    %v4901 = vand.u32 %v4483, 4294901760
    %4902 = vmatpush1.msra.mxu0 %v4901
    %4903 = vmatprep.subr.mxu0 0.0
    %v4904 = vand.u32 %v4484, 4294901760
    %4905 = vmatpush1.msra.mxu0 %v4904
    %4906 = vmatprep.subr.mxu0 0.0
    %4907 = vmatpush1.msra.mxu0 0.0
    %4908 = vmatprep.subr.mxu0 0.0
    %4909 = vmatpush1.msra.mxu0 0.0
    %4910 = vmatprep.subr.mxu0 0.0
    %4911 = vmatpush1.msra.mxu0 0.0
    %4912 = vmatprep.subr.mxu0 0.0
    %4913 = vmatpush1.msra.mxu0 0.0
    %4914 = vmatprep.subr.mxu0 0.0
    %4915 = vmatpush1.msra.mxu0 0.0
    %4916 = vmatprep.subr.mxu0 0.0
    %4917 = vmatpush1.msra.mxu0 0.0
    %4918 = vmatprep.subr.mxu0 0.0
    %4919 = vmatpush1.msra.mxu0 0.0
    %4920 = vmatprep.subr.mxu0 0.0
    %4921 = vmatpush1.msra.mxu0 0.0
    %4922 = vmatprep.subr.mxu0 0.0
    %4923 = vmatpush1.msra.mxu0 0.0
    %4924 = vmatprep.subr.mxu0 0.0
    %4925 = vmatpush1.msra.mxu0 0.0
    %4926 = vmatprep.subr.mxu0 0.0
    %4927 = vmatpush1.msra.mxu0 0.0
    %4928 = vmatprep.subr.mxu0 0.0
    %4929 = vmatpush1.msra.mxu0 0.0
    %4930 = vmatprep.subr.mxu0 0.0
    %4931 = vmatpush1.msra.mxu0 0.0
    %4932 = vmatprep.subr.mxu0 0.0
    %4933 = vmatpush1.msra.mxu0 0.0
    %4934 = vmatprep.subr.mxu0 0.0
    %4935 = vmatpush1.msra.mxu0 0.0
    %4936 = vmatprep.subr.mxu0 0.0
    %4937 = vmatpush1.msra.mxu0 0.0
    %4938 = vmatprep.mubr.f32.mxu0 0.0
    %v4939 = vand.u32 %v4467, 4294901760
    %v4940 = vsub.f32 %v4467, %v4939
    %v4941 = vand.u32 %v4940, 4294901760
    %4942 = vmatmul.mubr.f32.gmra.mrb[0].mxu0 %v4941
    %v4943 = vpop.f32.mrb[0].mxu0
    %v4944 = vadd.f32 %v4848, %v4943
    %v4945 = vpop.f32.mrb[0].mxu0
    %4946 = vmatprep.mubr.f32.mxu0 0.0
    %v4947 = vand.u32 %v4468, 4294901760
    %v4948 = vsub.f32 %v4468, %v4947
    %v4949 = vand.u32 %v4948, 4294901760
    %4950 = vmatmul.mubr.f32.gmra.mrb[0].mxu0 %v4949
    %v4951 = vpop.f32.mrb[0].mxu0
    %v4952 = vadd.f32 %v4855, %v4951
    %v4953 = vpop.f32.mrb[0].mxu0
    %4954 = vdwg.mxu0
    %4955 = vmatprep.subr.mxu0 0.0
    %v4956 = vand.u32 %v4469, 4294901760
    %v4957 = vsub.f32 %v4469, %v4956
    %v4958 = vand.u32 %v4957, 4294901760
    %4959 = vmatpush1.msra.mxu0 %v4958
    %4960 = vmatprep.subr.mxu0 0.0
    %v4961 = vand.u32 %v4470, 4294901760
    %v4962 = vsub.f32 %v4470, %v4961
    %v4963 = vand.u32 %v4962, 4294901760
    %4964 = vmatpush1.msra.mxu0 %v4963
    %4965 = vmatprep.subr.mxu0 0.0
    %v4966 = vand.u32 %v4471, 4294901760
    %v4967 = vsub.f32 %v4471, %v4966
    %v4968 = vand.u32 %v4967, 4294901760
    %4969 = vmatpush1.msra.mxu0 %v4968
    %4970 = vmatprep.subr.mxu0 0.0
    %v4971 = vand.u32 %v4472, 4294901760
    %v4972 = vsub.f32 %v4472, %v4971
    %v4973 = vand.u32 %v4972, 4294901760
    %4974 = vmatpush1.msra.mxu0 %v4973
    %4975 = vmatprep.subr.mxu0 0.0
    %v4976 = vand.u32 %v4473, 4294901760
    %v4977 = vsub.f32 %v4473, %v4976
    %v4978 = vand.u32 %v4977, 4294901760
    %4979 = vmatpush1.msra.mxu0 %v4978
    %4980 = vmatprep.subr.mxu0 0.0
    %v4981 = vand.u32 %v4474, 4294901760
    %v4982 = vsub.f32 %v4474, %v4981
    %v4983 = vand.u32 %v4982, 4294901760
    %4984 = vmatpush1.msra.mxu0 %v4983
    %4985 = vmatprep.subr.mxu0 0.0
    %v4986 = vand.u32 %v4475, 4294901760
    %v4987 = vsub.f32 %v4475, %v4986
    %v4988 = vand.u32 %v4987, 4294901760
    %4989 = vmatpush1.msra.mxu0 %v4988
    %4990 = vmatprep.subr.mxu0 0.0
    %v4991 = vand.u32 %v4476, 4294901760
    %v4992 = vsub.f32 %v4476, %v4991
    %v4993 = vand.u32 %v4992, 4294901760
    %4994 = vmatpush1.msra.mxu0 %v4993
    %4995 = vmatprep.subr.mxu0 0.0
    %v4996 = vand.u32 %v4477, 4294901760
    %v4997 = vsub.f32 %v4477, %v4996
    %v4998 = vand.u32 %v4997, 4294901760
    %4999 = vmatpush1.msra.mxu0 %v4998
    %5000 = vmatprep.subr.mxu0 0.0
    %v5001 = vand.u32 %v4478, 4294901760
    %v5002 = vsub.f32 %v4478, %v5001
    %v5003 = vand.u32 %v5002, 4294901760
    %5004 = vmatpush1.msra.mxu0 %v5003
    %5005 = vmatprep.subr.mxu0 0.0
    %v5006 = vand.u32 %v4479, 4294901760
    %v5007 = vsub.f32 %v4479, %v5006
    %v5008 = vand.u32 %v5007, 4294901760
    %5009 = vmatpush1.msra.mxu0 %v5008
    %5010 = vmatprep.subr.mxu0 0.0
    %v5011 = vand.u32 %v4480, 4294901760
    %v5012 = vsub.f32 %v4480, %v5011
    %v5013 = vand.u32 %v5012, 4294901760
    %5014 = vmatpush1.msra.mxu0 %v5013
    %5015 = vmatprep.subr.mxu0 0.0
    %v5016 = vand.u32 %v4481, 4294901760
    %v5017 = vsub.f32 %v4481, %v5016
    %v5018 = vand.u32 %v5017, 4294901760
    %5019 = vmatpush1.msra.mxu0 %v5018
    %5020 = vmatprep.subr.mxu0 0.0
    %v5021 = vand.u32 %v4482, 4294901760
    %v5022 = vsub.f32 %v4482, %v5021
    %v5023 = vand.u32 %v5022, 4294901760
    %5024 = vmatpush1.msra.mxu0 %v5023
    %5025 = vmatprep.subr.mxu0 0.0
    %v5026 = vand.u32 %v4483, 4294901760
    %v5027 = vsub.f32 %v4483, %v5026
    %v5028 = vand.u32 %v5027, 4294901760
    %5029 = vmatpush1.msra.mxu0 %v5028
    %5030 = vmatprep.subr.mxu0 0.0
    %v5031 = vand.u32 %v4484, 4294901760
    %v5032 = vsub.f32 %v4484, %v5031
    %v5033 = vand.u32 %v5032, 4294901760
    %5034 = vmatpush1.msra.mxu0 %v5033
    %5035 = vmatprep.subr.mxu0 0.0
    %5036 = vmatpush1.msra.mxu0 0.0
    %5037 = vmatprep.subr.mxu0 0.0
    %5038 = vmatpush1.msra.mxu0 0.0
    %5039 = vmatprep.subr.mxu0 0.0
    %5040 = vmatpush1.msra.mxu0 0.0
    %5041 = vmatprep.subr.mxu0 0.0
    %5042 = vmatpush1.msra.mxu0 0.0
    %5043 = vmatprep.subr.mxu0 0.0
    %5044 = vmatpush1.msra.mxu0 0.0
    %5045 = vmatprep.subr.mxu0 0.0
    %5046 = vmatpush1.msra.mxu0 0.0
    %5047 = vmatprep.subr.mxu0 0.0
    %5048 = vmatpush1.msra.mxu0 0.0
    %5049 = vmatprep.subr.mxu0 0.0
    %5050 = vmatpush1.msra.mxu0 0.0
    %5051 = vmatprep.subr.mxu0 0.0
    %5052 = vmatpush1.msra.mxu0 0.0
    %5053 = vmatprep.subr.mxu0 0.0
    %5054 = vmatpush1.msra.mxu0 0.0
    %5055 = vmatprep.subr.mxu0 0.0
    %5056 = vmatpush1.msra.mxu0 0.0
    %5057 = vmatprep.subr.mxu0 0.0
    %5058 = vmatpush1.msra.mxu0 0.0
    %5059 = vmatprep.subr.mxu0 0.0
    %5060 = vmatpush1.msra.mxu0 0.0
    %5061 = vmatprep.subr.mxu0 0.0
    %5062 = vmatpush1.msra.mxu0 0.0
    %5063 = vmatprep.subr.mxu0 0.0
    %5064 = vmatpush1.msra.mxu0 0.0
    %5065 = vmatprep.subr.mxu0 0.0
    %5066 = vmatpush1.msra.mxu0 0.0
    %5067 = vmatprep.mubr.f32.mxu0 0.0
    %v5068 = vand.u32 %v4467, 4294901760
    %5069 = vmatmul.mubr.f32.gmra.mrb[0].mxu0 %v5068
    %v5070 = vpop.f32.mrb[0].mxu0
    %v5071 = vadd.f32 %v4944, %v5070
    %v5072 = vpop.f32.mrb[0].mxu0
    %5073 = vmatprep.mubr.f32.mxu0 0.0
    %v5074 = vand.u32 %v4468, 4294901760
    %5075 = vmatmul.mubr.f32.gmra.mrb[0].mxu0 %v5074
    %v5076 = vpop.f32.mrb[0].mxu0
    %v5077 = vadd.f32 %v4952, %v5076
    %v5078 = vpop.f32.mrb[0].mxu0
    %5079 = vdwg.mxu0
    %5080 = vmatprep.subr.mxu0 0.0
    %v5081 = vand.u32 %v4469, 4294901760
    %5082 = vmatpush1.msra.mxu0 %v5081
    %5083 = vmatprep.subr.mxu0 0.0
    %v5084 = vand.u32 %v4470, 4294901760
    %5085 = vmatpush1.msra.mxu0 %v5084
    %5086 = vmatprep.subr.mxu0 0.0
    %v5087 = vand.u32 %v4471, 4294901760
    %5088 = vmatpush1.msra.mxu0 %v5087
    %5089 = vmatprep.subr.mxu0 0.0
    %v5090 = vand.u32 %v4472, 4294901760
    %5091 = vmatpush1.msra.mxu0 %v5090
    %5092 = vmatprep.subr.mxu0 0.0
    %v5093 = vand.u32 %v4473, 4294901760
    %5094 = vmatpush1.msra.mxu0 %v5093
    %5095 = vmatprep.subr.mxu0 0.0
    %v5096 = vand.u32 %v4474, 4294901760
    %5097 = vmatpush1.msra.mxu0 %v5096
    %5098 = vmatprep.subr.mxu0 0.0
    %v5099 = vand.u32 %v4475, 4294901760
    %5100 = vmatpush1.msra.mxu0 %v5099
    %5101 = vmatprep.subr.mxu0 0.0
    %v5102 = vand.u32 %v4476, 4294901760
    %5103 = vmatpush1.msra.mxu0 %v5102
    %5104 = vmatprep.subr.mxu0 0.0
    %v5105 = vand.u32 %v4477, 4294901760
    %5106 = vmatpush1.msra.mxu0 %v5105
    %5107 = vmatprep.subr.mxu0 0.0
    %v5108 = vand.u32 %v4478, 4294901760
    %5109 = vmatpush1.msra.mxu0 %v5108
    %5110 = vmatprep.subr.mxu0 0.0
    %v5111 = vand.u32 %v4479, 4294901760
    %5112 = vmatpush1.msra.mxu0 %v5111
    %5113 = vmatprep.subr.mxu0 0.0
    %v5114 = vand.u32 %v4480, 4294901760
    %5115 = vmatpush1.msra.mxu0 %v5114
    %5116 = vmatprep.subr.mxu0 0.0
    %v5117 = vand.u32 %v4481, 4294901760
    %5118 = vmatpush1.msra.mxu0 %v5117
    %5119 = vmatprep.subr.mxu0 0.0
    %v5120 = vand.u32 %v4482, 4294901760
    %5121 = vmatpush1.msra.mxu0 %v5120
    %5122 = vmatprep.subr.mxu0 0.0
    %v5123 = vand.u32 %v4483, 4294901760
    %5124 = vmatpush1.msra.mxu0 %v5123
    %5125 = vmatprep.subr.mxu0 0.0
    %v5126 = vand.u32 %v4484, 4294901760
    %5127 = vmatpush1.msra.mxu0 %v5126
    %5128 = vmatprep.subr.mxu0 0.0
    %5129 = vmatpush1.msra.mxu0 0.0
    %5130 = vmatprep.subr.mxu0 0.0
    %5131 = vmatpush1.msra.mxu0 0.0
    %5132 = vmatprep.subr.mxu0 0.0
    %5133 = vmatpush1.msra.mxu0 0.0
    %5134 = vmatprep.subr.mxu0 0.0
    %5135 = vmatpush1.msra.mxu0 0.0
    %5136 = vmatprep.subr.mxu0 0.0
    %5137 = vmatpush1.msra.mxu0 0.0
    %5138 = vmatprep.subr.mxu0 0.0
    %5139 = vmatpush1.msra.mxu0 0.0
    %5140 = vmatprep.subr.mxu0 0.0
    %5141 = vmatpush1.msra.mxu0 0.0
    %5142 = vmatprep.subr.mxu0 0.0
    %5143 = vmatpush1.msra.mxu0 0.0
    %5144 = vmatprep.subr.mxu0 0.0
    %5145 = vmatpush1.msra.mxu0 0.0
    %5146 = vmatprep.subr.mxu0 0.0
    %5147 = vmatpush1.msra.mxu0 0.0
    %5148 = vmatprep.subr.mxu0 0.0
    %5149 = vmatpush1.msra.mxu0 0.0
    %5150 = vmatprep.subr.mxu0 0.0
    %5151 = vmatpush1.msra.mxu0 0.0
    %5152 = vmatprep.subr.mxu0 0.0
    %5153 = vmatpush1.msra.mxu0 0.0
    %5154 = vmatprep.subr.mxu0 0.0
    %5155 = vmatpush1.msra.mxu0 0.0
    %5156 = vmatprep.subr.mxu0 0.0
    %5157 = vmatpush1.msra.mxu0 0.0
    %5158 = vmatprep.subr.mxu0 0.0
    %5159 = vmatpush1.msra.mxu0 0.0
    %5160 = vmatprep.mubr.f32.mxu0 0.0
    %v5161 = vand.u32 %v4467, 4294901760
    %5162 = vmatmul.mubr.f32.gmra.mrb[0].mxu0 %v5161
    %v5163 = vpop.f32.mrb[0].mxu0
    %v5164 = vadd.f32 %v5071, %v5163
    %v5165 = vpop.f32.mrb[0].mxu0
    %5166 = vmatprep.mubr.f32.mxu0 0.0
    %v5167 = vand.u32 %v4468, 4294901760
    %5168 = vmatmul.mubr.f32.gmra.mrb[0].mxu0 %v5167
    %v5169 = vpop.f32.mrb[0].mxu0
    %v5170 = vadd.f32 %v5077, %v5169
    %v5171 = vpop.f32.mrb[0].mxu0
    %5172 = vdwg.mxu0
    %v5173 = vadd.f32 %v5164, %v3833
    %v5174 = vadd.f32 %v5170, %v3834
    %s5175 = scalar_lea.vmem [#allocation4], 16
    %v5176 = vld [vmem:[%s5175] sm:$0xff]
    %v5177 = vld [vmem:[%s5175 + $0x8] sm:$0xff]
    %v5178 = vsel %vm76, %v5173, 0.0
    %5179 = vadd.xlane.f32.xlu0 %v5178
    %v5180 = vpop.xlane.xlu0 %5179
    %v5181 = vsel %vm76, %v5174, 0.0
    %5182 = vadd.xlane.f32.xlu0 %v5181
    %v5183 = vpop.xlane.xlu0 %5182
    %v5184 = vmul.f32 %v5180, %v83
    %v5185 = vmul.f32 %v5183, %v83
    %v5186 = vsub.f32 %v5173, %v5184
    %v5187 = vsub.f32 %v5174, %v5185
    %v5188 = vmul.f32 %v5186, %v5186
    %v5189 = vmul.f32 %v5187, %v5187
    %v5190 = vsel %vm76, %v5188, 0.0
    %5191 = vadd.xlane.f32.xlu0 %v5190
    %v5192 = vpop.xlane.xlu0 %5191
    %v5193 = vsel %vm76, %v5189, 0.0
    %5194 = vadd.xlane.f32.xlu0 %v5193
    %v5195 = vpop.xlane.xlu0 %5194
    %v5196 = vmul.f32 %v5192, %v83
    %v5197 = vmul.f32 %v5195, %v83
    %v5198 = vadd.f32 %v5196, 1e-05
    %v5199 = vadd.f32 %v5197, 1e-05
    %v5200 = vrsqrt.pop %v5198
    %v5201 = vrsqrt.pop %v5199
    %v5202 = vmul.f32 %v5186, %v5200
    %v5203 = vmul.f32 %v5187, %v5201
    %v5204 = vlaneseq
    %v5205 = vshrl.u32 %v5204, 7
    %v5206 = vsub.s32 0, %v5205
    %v5207 = vrot.slane %v5176, %v5206
    %v5208 = vmul.f32 %v5202, %v5207
    %v5209 = vmul.f32 %v5203, %v5207
    %v5210 = vlaneseq
    %v5211 = vshrl.u32 %v5210, 7
    %v5212 = vsub.s32 1, %v5211
    %v5213 = vrot.slane %v5176, %v5212
    %v5214 = vadd.f32 %v5208, %v5213
    %v5215 = vadd.f32 %v5209, %v5213
    %s5216 = scalar_lea.vmem %s1, 32
    %v5217 = vld [vmem:[%s5216] sm:$0xff]
    %v5218 = vld [vmem:[%s5216 + $0x8] sm:$0xff]
    %v5219 = vld [vmem:[%s5216 + $0x10] sm:$0xff]
    %v5220 = vld [vmem:[%s5216 + $0x18] sm:$0xff]
    %v5222 = vsel %vm76, %v5214, 0
    %v5225 = vsel %vm76, %v5215, 0
    %5227 = vmatprep.subr.mxu0 0.0
    %v5228 = vand.u32 %v5217, 4294901760
    %5229 = vmatpush1.msra.mxu0 %v5228
    %5230 = vmatprep.subr.mxu0 0.0
    %v5231 = vand.u32 %v5218, 4294901760
    %5232 = vmatpush1.msra.mxu0 %v5231
    %5233 = vmatprep.subr.mxu0 0.0
    %v5234 = vand.u32 %v5219, 4294901760
    %5235 = vmatpush1.msra.mxu0 %v5234
    %5236 = vmatprep.subr.mxu0 0.0
    %v5237 = vand.u32 %v5220, 4294901760
    %5238 = vmatpush1.msra.mxu0 %v5237
    %5239 = vmatprep.subr.mxu0 0.0
    %5240 = vmatpush1.msra.mxu0 0.0
    %5241 = vmatprep.subr.mxu0 0.0
    %5242 = vmatpush1.msra.mxu0 0.0
    %5243 = vmatprep.subr.mxu0 0.0
    %5244 = vmatpush1.msra.mxu0 0.0
    %5245 = vmatprep.subr.mxu0 0.0
    %5246 = vmatpush1.msra.mxu0 0.0
    %5247 = vmatprep.subr.mxu0 0.0
    %5248 = vmatpush1.msra.mxu0 0.0
    %5249 = vmatprep.subr.mxu0 0.0
    %5250 = vmatpush1.msra.mxu0 0.0
    %5251 = vmatprep.subr.mxu0 0.0
    %5252 = vmatpush1.msra.mxu0 0.0
    %5253 = vmatprep.subr.mxu0 0.0
    %5254 = vmatpush1.msra.mxu0 0.0
    %5255 = vmatprep.subr.mxu0 0.0
    %5256 = vmatpush1.msra.mxu0 0.0
    %5257 = vmatprep.subr.mxu0 0.0
    %5258 = vmatpush1.msra.mxu0 0.0
    %5259 = vmatprep.subr.mxu0 0.0
    %5260 = vmatpush1.msra.mxu0 0.0
    %5261 = vmatprep.subr.mxu0 0.0
    %5262 = vmatpush1.msra.mxu0 0.0
    %5263 = vmatprep.subr.mxu0 0.0
    %5264 = vmatpush1.msra.mxu0 0.0
    %5265 = vmatprep.subr.mxu0 0.0
    %5266 = vmatpush1.msra.mxu0 0.0
    %5267 = vmatprep.subr.mxu0 0.0
    %5268 = vmatpush1.msra.mxu0 0.0
    %5269 = vmatprep.subr.mxu0 0.0
    %5270 = vmatpush1.msra.mxu0 0.0
    %5271 = vmatprep.subr.mxu0 0.0
    %5272 = vmatpush1.msra.mxu0 0.0
    %5273 = vmatprep.subr.mxu0 0.0
    %5274 = vmatpush1.msra.mxu0 0.0
    %5275 = vmatprep.subr.mxu0 0.0
    %5276 = vmatpush1.msra.mxu0 0.0
    %5277 = vmatprep.subr.mxu0 0.0
    %5278 = vmatpush1.msra.mxu0 0.0
    %5279 = vmatprep.subr.mxu0 0.0
    %5280 = vmatpush1.msra.mxu0 0.0
    %5281 = vmatprep.subr.mxu0 0.0
    %5282 = vmatpush1.msra.mxu0 0.0
    %5283 = vmatprep.subr.mxu0 0.0
    %5284 = vmatpush1.msra.mxu0 0.0
    %5285 = vmatprep.subr.mxu0 0.0
    %5286 = vmatpush1.msra.mxu0 0.0
    %5287 = vmatprep.subr.mxu0 0.0
    %5288 = vmatpush1.msra.mxu0 0.0
    %5289 = vmatprep.subr.mxu0 0.0
    %5290 = vmatpush1.msra.mxu0 0.0
    %5291 = vmatprep.subr.mxu0 0.0
    %5292 = vmatpush1.msra.mxu0 0.0
    %5293 = vmatprep.subr.mxu0 0.0
    %5294 = vmatpush1.msra.mxu0 0.0
    %5295 = vmatprep.mubr.f32.mxu0 0.0
    %v5296 = vand.u32 %v5222, 4294901760
    %v5297 = vsub.f32 %v5222, %v5296
    %v5298 = vand.u32 %v5297, 4294901760
    %v5299 = vsub.f32 %v5297, %v5298
    %v5300 = vand.u32 %v5299, 4294901760
    %5301 = vmatmul.mubr.f32.gmra.mrb[0].mxu0 %v5300
    %v5302 = vpop.f32.mrb[0].mxu0
    %v5303 = vadd.f32 0.0, %v5302
    %v5304 = vpop.f32.mrb[0].mxu0
    %5305 = vmatprep.mubr.f32.mxu0 0.0
    %v5306 = vand.u32 %v5225, 4294901760
    %v5307 = vsub.f32 %v5225, %v5306
    %v5308 = vand.u32 %v5307, 4294901760
    %v5309 = vsub.f32 %v5307, %v5308
    %v5310 = vand.u32 %v5309, 4294901760
    %5311 = vmatmul.mubr.f32.gmra.mrb[0].mxu0 %v5310
    %v5312 = vpop.f32.mrb[0].mxu0
    %v5313 = vadd.f32 0.0, %v5312
    %v5314 = vpop.f32.mrb[0].mxu0
    %5315 = vdwg.mxu0
    %5316 = vmatprep.subr.mxu0 0.0
    %v5317 = vand.u32 %v5217, 4294901760
    %v5318 = vsub.f32 %v5217, %v5317
    %v5319 = vand.u32 %v5318, 4294901760
    %v5320 = vsub.f32 %v5318, %v5319
    %v5321 = vand.u32 %v5320, 4294901760
    %5322 = vmatpush1.msra.mxu0 %v5321
    %5323 = vmatprep.subr.mxu0 0.0
    %v5324 = vand.u32 %v5218, 4294901760
    %v5325 = vsub.f32 %v5218, %v5324
    %v5326 = vand.u32 %v5325, 4294901760
    %v5327 = vsub.f32 %v5325, %v5326
    %v5328 = vand.u32 %v5327, 4294901760
    %5329 = vmatpush1.msra.mxu0 %v5328
    %5330 = vmatprep.subr.mxu0 0.0
    %v5331 = vand.u32 %v5219, 4294901760
    %v5332 = vsub.f32 %v5219, %v5331
    %v5333 = vand.u32 %v5332, 4294901760
    %v5334 = vsub.f32 %v5332, %v5333
    %v5335 = vand.u32 %v5334, 4294901760
    %5336 = vmatpush1.msra.mxu0 %v5335
    %5337 = vmatprep.subr.mxu0 0.0
    %v5338 = vand.u32 %v5220, 4294901760
    %v5339 = vsub.f32 %v5220, %v5338
    %v5340 = vand.u32 %v5339, 4294901760
    %v5341 = vsub.f32 %v5339, %v5340
    %v5342 = vand.u32 %v5341, 4294901760
    %5343 = vmatpush1.msra.mxu0 %v5342
    %5344 = vmatprep.subr.mxu0 0.0
    %5345 = vmatpush1.msra.mxu0 0.0
    %5346 = vmatprep.subr.mxu0 0.0
    %5347 = vmatpush1.msra.mxu0 0.0
    %5348 = vmatprep.subr.mxu0 0.0
    %5349 = vmatpush1.msra.mxu0 0.0
    %5350 = vmatprep.subr.mxu0 0.0
    %5351 = vmatpush1.msra.mxu0 0.0
    %5352 = vmatprep.subr.mxu0 0.0
    %5353 = vmatpush1.msra.mxu0 0.0
    %5354 = vmatprep.subr.mxu0 0.0
    %5355 = vmatpush1.msra.mxu0 0.0
    %5356 = vmatprep.subr.mxu0 0.0
    %5357 = vmatpush1.msra.mxu0 0.0
    %5358 = vmatprep.subr.mxu0 0.0
    %5359 = vmatpush1.msra.mxu0 0.0
    %5360 = vmatprep.subr.mxu0 0.0
    %5361 = vmatpush1.msra.mxu0 0.0
    %5362 = vmatprep.subr.mxu0 0.0
    %5363 = vmatpush1.msra.mxu0 0.0
    %5364 = vmatprep.subr.mxu0 0.0
    %5365 = vmatpush1.msra.mxu0 0.0
    %5366 = vmatprep.subr.mxu0 0.0
    %5367 = vmatpush1.msra.mxu0 0.0
    %5368 = vmatprep.subr.mxu0 0.0
    %5369 = vmatpush1.msra.mxu0 0.0
    %5370 = vmatprep.subr.mxu0 0.0
    %5371 = vmatpush1.msra.mxu0 0.0
    %5372 = vmatprep.subr.mxu0 0.0
    %5373 = vmatpush1.msra.mxu0 0.0
    %5374 = vmatprep.subr.mxu0 0.0
    %5375 = vmatpush1.msra.mxu0 0.0
    %5376 = vmatprep.subr.mxu0 0.0
    %5377 = vmatpush1.msra.mxu0 0.0
    %5378 = vmatprep.subr.mxu0 0.0
    %5379 = vmatpush1.msra.mxu0 0.0
    %5380 = vmatprep.subr.mxu0 0.0
    %5381 = vmatpush1.msra.mxu0 0.0
    %5382 = vmatprep.subr.mxu0 0.0
    %5383 = vmatpush1.msra.mxu0 0.0
    %5384 = vmatprep.subr.mxu0 0.0
    %5385 = vmatpush1.msra.mxu0 0.0
    %5386 = vmatprep.subr.mxu0 0.0
    %5387 = vmatpush1.msra.mxu0 0.0
    %5388 = vmatprep.subr.mxu0 0.0
    %5389 = vmatpush1.msra.mxu0 0.0
    %5390 = vmatprep.subr.mxu0 0.0
    %5391 = vmatpush1.msra.mxu0 0.0
    %5392 = vmatprep.subr.mxu0 0.0
    %5393 = vmatpush1.msra.mxu0 0.0
    %5394 = vmatprep.subr.mxu0 0.0
    %5395 = vmatpush1.msra.mxu0 0.0
    %5396 = vmatprep.subr.mxu0 0.0
    %5397 = vmatpush1.msra.mxu0 0.0
    %5398 = vmatprep.subr.mxu0 0.0
    %5399 = vmatpush1.msra.mxu0 0.0
    %5400 = vmatprep.mubr.f32.mxu0 0.0
    %v5401 = vand.u32 %v5222, 4294901760
    %5402 = vmatmul.mubr.f32.gmra.mrb[0].mxu0 %v5401
    %v5403 = vpop.f32.mrb[0].mxu0
    %v5404 = vadd.f32 %v5303, %v5403
    %v5405 = vpop.f32.mrb[0].mxu0
    %5406 = vmatprep.mubr.f32.mxu0 0.0
    %v5407 = vand.u32 %v5225, 4294901760
    %5408 = vmatmul.mubr.f32.gmra.mrb[0].mxu0 %v5407
    %v5409 = vpop.f32.mrb[0].mxu0
    %v5410 = vadd.f32 %v5313, %v5409
    %v5411 = vpop.f32.mrb[0].mxu0
    %5412 = vdwg.mxu0
    %5413 = vmatprep.subr.mxu0 0.0
    %v5414 = vand.u32 %v5217, 4294901760
    %v5415 = vsub.f32 %v5217, %v5414
    %5416 = vmatpush1.msra.mxu0 %v5415
    %5417 = vmatprep.subr.mxu0 0.0
    %v5418 = vand.u32 %v5218, 4294901760
    %v5419 = vsub.f32 %v5218, %v5418
    %5420 = vmatpush1.msra.mxu0 %v5419
    %5421 = vmatprep.subr.mxu0 0.0
    %v5422 = vand.u32 %v5219, 4294901760
    %v5423 = vsub.f32 %v5219, %v5422
    %5424 = vmatpush1.msra.mxu0 %v5423
    %5425 = vmatprep.subr.mxu0 0.0
    %v5426 = vand.u32 %v5220, 4294901760
    %v5427 = vsub.f32 %v5220, %v5426
    %5428 = vmatpush1.msra.mxu0 %v5427
    %5429 = vmatprep.subr.mxu0 0.0
    %5430 = vmatpush1.msra.mxu0 0.0
    %5431 = vmatprep.subr.mxu0 0.0
    %5432 = vmatpush1.msra.mxu0 0.0
    %5433 = vmatprep.subr.mxu0 0.0
    %5434 = vmatpush1.msra.mxu0 0.0
    %5435 = vmatprep.subr.mxu0 0.0
    %5436 = vmatpush1.msra.mxu0 0.0
    %5437 = vmatprep.subr.mxu0 0.0
    %5438 = vmatpush1.msra.mxu0 0.0
    %5439 = vmatprep.subr.mxu0 0.0
    %5440 = vmatpush1.msra.mxu0 0.0
    %5441 = vmatprep.subr.mxu0 0.0
    %5442 = vmatpush1.msra.mxu0 0.0
    %5443 = vmatprep.subr.mxu0 0.0
    %5444 = vmatpush1.msra.mxu0 0.0
    %5445 = vmatprep.subr.mxu0 0.0
    %5446 = vmatpush1.msra.mxu0 0.0
    %5447 = vmatprep.subr.mxu0 0.0
    %5448 = vmatpush1.msra.mxu0 0.0
    %5449 = vmatprep.subr.mxu0 0.0
    %5450 = vmatpush1.msra.mxu0 0.0
    %5451 = vmatprep.subr.mxu0 0.0
    %5452 = vmatpush1.msra.mxu0 0.0
    %5453 = vmatprep.subr.mxu0 0.0
    %5454 = vmatpush1.msra.mxu0 0.0
    %5455 = vmatprep.subr.mxu0 0.0
    %5456 = vmatpush1.msra.mxu0 0.0
    %5457 = vmatprep.subr.mxu0 0.0
    %5458 = vmatpush1.msra.mxu0 0.0
    %5459 = vmatprep.subr.mxu0 0.0
    %5460 = vmatpush1.msra.mxu0 0.0
    %5461 = vmatprep.subr.mxu0 0.0
    %5462 = vmatpush1.msra.mxu0 0.0
    %5463 = vmatprep.subr.mxu0 0.0
    %5464 = vmatpush1.msra.mxu0 0.0
    %5465 = vmatprep.subr.mxu0 0.0
    %5466 = vmatpush1.msra.mxu0 0.0
    %5467 = vmatprep.subr.mxu0 0.0
    %5468 = vmatpush1.msra.mxu0 0.0
    %5469 = vmatprep.subr.mxu0 0.0
    %5470 = vmatpush1.msra.mxu0 0.0
    %5471 = vmatprep.subr.mxu0 0.0
    %5472 = vmatpush1.msra.mxu0 0.0
    %5473 = vmatprep.subr.mxu0 0.0
    %5474 = vmatpush1.msra.mxu0 0.0
    %5475 = vmatprep.subr.mxu0 0.0
    %5476 = vmatpush1.msra.mxu0 0.0
    %5477 = vmatprep.subr.mxu0 0.0
    %5478 = vmatpush1.msra.mxu0 0.0
    %5479 = vmatprep.subr.mxu0 0.0
    %5480 = vmatpush1.msra.mxu0 0.0
    %5481 = vmatprep.subr.mxu0 0.0
    %5482 = vmatpush1.msra.mxu0 0.0
    %5483 = vmatprep.subr.mxu0 0.0
    %5484 = vmatpush1.msra.mxu0 0.0
    %5485 = vmatprep.mubr.f32.mxu0 0.0
    %v5486 = vand.u32 %v5222, 4294901760
    %v5487 = vsub.f32 %v5222, %v5486
    %5488 = vmatmul.mubr.f32.gmra.mrb[0].mxu0 %v5487
    %v5489 = vpop.f32.mrb[0].mxu0
    %v5490 = vadd.f32 %v5404, %v5489
    %v5491 = vpop.f32.mrb[0].mxu0
    %5492 = vmatprep.mubr.f32.mxu0 0.0
    %v5493 = vand.u32 %v5225, 4294901760
    %v5494 = vsub.f32 %v5225, %v5493
    %5495 = vmatmul.mubr.f32.gmra.mrb[0].mxu0 %v5494
    %v5496 = vpop.f32.mrb[0].mxu0
    %v5497 = vadd.f32 %v5410, %v5496
    %v5498 = vpop.f32.mrb[0].mxu0
    %5499 = vdwg.mxu0
    %5500 = vmatprep.subr.mxu0 0.0
    %v5501 = vand.u32 %v5217, 4294901760
    %5502 = vmatpush1.msra.mxu0 %v5501
    %5503 = vmatprep.subr.mxu0 0.0
    %v5504 = vand.u32 %v5218, 4294901760
    %5505 = vmatpush1.msra.mxu0 %v5504
    %5506 = vmatprep.subr.mxu0 0.0
    %v5507 = vand.u32 %v5219, 4294901760
    %5508 = vmatpush1.msra.mxu0 %v5507
    %5509 = vmatprep.subr.mxu0 0.0
    %v5510 = vand.u32 %v5220, 4294901760
    %5511 = vmatpush1.msra.mxu0 %v5510
    %5512 = vmatprep.subr.mxu0 0.0
    %5513 = vmatpush1.msra.mxu0 0.0
    %5514 = vmatprep.subr.mxu0 0.0
    %5515 = vmatpush1.msra.mxu0 0.0
    %5516 = vmatprep.subr.mxu0 0.0
    %5517 = vmatpush1.msra.mxu0 0.0
    %5518 = vmatprep.subr.mxu0 0.0
    %5519 = vmatpush1.msra.mxu0 0.0
    %5520 = vmatprep.subr.mxu0 0.0
    %5521 = vmatpush1.msra.mxu0 0.0
    %5522 = vmatprep.subr.mxu0 0.0
    %5523 = vmatpush1.msra.mxu0 0.0
    %5524 = vmatprep.subr.mxu0 0.0
    %5525 = vmatpush1.msra.mxu0 0.0
    %5526 = vmatprep.subr.mxu0 0.0
    %5527 = vmatpush1.msra.mxu0 0.0
    %5528 = vmatprep.subr.mxu0 0.0
    %5529 = vmatpush1.msra.mxu0 0.0
    %5530 = vmatprep.subr.mxu0 0.0
    %5531 = vmatpush1.msra.mxu0 0.0
    %5532 = vmatprep.subr.mxu0 0.0
    %5533 = vmatpush1.msra.mxu0 0.0
    %5534 = vmatprep.subr.mxu0 0.0
    %5535 = vmatpush1.msra.mxu0 0.0
    %5536 = vmatprep.subr.mxu0 0.0
    %5537 = vmatpush1.msra.mxu0 0.0
    %5538 = vmatprep.subr.mxu0 0.0
    %5539 = vmatpush1.msra.mxu0 0.0
    %5540 = vmatprep.subr.mxu0 0.0
    %5541 = vmatpush1.msra.mxu0 0.0
    %5542 = vmatprep.subr.mxu0 0.0
    %5543 = vmatpush1.msra.mxu0 0.0
    %5544 = vmatprep.subr.mxu0 0.0
    %5545 = vmatpush1.msra.mxu0 0.0
    %5546 = vmatprep.subr.mxu0 0.0
    %5547 = vmatpush1.msra.mxu0 0.0
    %5548 = vmatprep.subr.mxu0 0.0
    %5549 = vmatpush1.msra.mxu0 0.0
    %5550 = vmatprep.subr.mxu0 0.0
    %5551 = vmatpush1.msra.mxu0 0.0
    %5552 = vmatprep.subr.mxu0 0.0
    %5553 = vmatpush1.msra.mxu0 0.0
    %5554 = vmatprep.subr.mxu0 0.0
    %5555 = vmatpush1.msra.mxu0 0.0
    %5556 = vmatprep.subr.mxu0 0.0
    %5557 = vmatpush1.msra.mxu0 0.0
    %5558 = vmatprep.subr.mxu0 0.0
    %5559 = vmatpush1.msra.mxu0 0.0
    %5560 = vmatprep.subr.mxu0 0.0
    %5561 = vmatpush1.msra.mxu0 0.0
    %5562 = vmatprep.subr.mxu0 0.0
    %5563 = vmatpush1.msra.mxu0 0.0
    %5564 = vmatprep.subr.mxu0 0.0
    %5565 = vmatpush1.msra.mxu0 0.0
    %5566 = vmatprep.subr.mxu0 0.0
    %5567 = vmatpush1.msra.mxu0 0.0
    %5568 = vmatprep.mubr.f32.mxu0 0.0
    %v5569 = vand.u32 %v5222, 4294901760
    %v5570 = vsub.f32 %v5222, %v5569
    %v5571 = vand.u32 %v5570, 4294901760
    %5572 = vmatmul.mubr.f32.gmra.mrb[0].mxu0 %v5571
    %v5573 = vpop.f32.mrb[0].mxu0
    %v5574 = vadd.f32 %v5490, %v5573
    %v5575 = vpop.f32.mrb[0].mxu0
    %5576 = vmatprep.mubr.f32.mxu0 0.0
    %v5577 = vand.u32 %v5225, 4294901760
    %v5578 = vsub.f32 %v5225, %v5577
    %v5579 = vand.u32 %v5578, 4294901760
    %5580 = vmatmul.mubr.f32.gmra.mrb[0].mxu0 %v5579
    %v5581 = vpop.f32.mrb[0].mxu0
    %v5582 = vadd.f32 %v5497, %v5581
    %v5583 = vpop.f32.mrb[0].mxu0
    %5584 = vdwg.mxu0
    %5585 = vmatprep.subr.mxu0 0.0
    %v5586 = vand.u32 %v5217, 4294901760
    %v5587 = vsub.f32 %v5217, %v5586
    %v5588 = vand.u32 %v5587, 4294901760
    %5589 = vmatpush1.msra.mxu0 %v5588
    %5590 = vmatprep.subr.mxu0 0.0
    %v5591 = vand.u32 %v5218, 4294901760
    %v5592 = vsub.f32 %v5218, %v5591
    %v5593 = vand.u32 %v5592, 4294901760
    %5594 = vmatpush1.msra.mxu0 %v5593
    %5595 = vmatprep.subr.mxu0 0.0
    %v5596 = vand.u32 %v5219, 4294901760
    %v5597 = vsub.f32 %v5219, %v5596
    %v5598 = vand.u32 %v5597, 4294901760
    %5599 = vmatpush1.msra.mxu0 %v5598
    %5600 = vmatprep.subr.mxu0 0.0
    %v5601 = vand.u32 %v5220, 4294901760
    %v5602 = vsub.f32 %v5220, %v5601
    %v5603 = vand.u32 %v5602, 4294901760
    %5604 = vmatpush1.msra.mxu0 %v5603
    %5605 = vmatprep.subr.mxu0 0.0
    %5606 = vmatpush1.msra.mxu0 0.0
    %5607 = vmatprep.subr.mxu0 0.0
    %5608 = vmatpush1.msra.mxu0 0.0
    %5609 = vmatprep.subr.mxu0 0.0
    %5610 = vmatpush1.msra.mxu0 0.0
    %5611 = vmatprep.subr.mxu0 0.0
    %5612 = vmatpush1.msra.mxu0 0.0
    %5613 = vmatprep.subr.mxu0 0.0
    %5614 = vmatpush1.msra.mxu0 0.0
    %5615 = vmatprep.subr.mxu0 0.0
    %5616 = vmatpush1.msra.mxu0 0.0
    %5617 = vmatprep.subr.mxu0 0.0
    %5618 = vmatpush1.msra.mxu0 0.0
    %5619 = vmatprep.subr.mxu0 0.0
    %5620 = vmatpush1.msra.mxu0 0.0
    %5621 = vmatprep.subr.mxu0 0.0
    %5622 = vmatpush1.msra.mxu0 0.0
    %5623 = vmatprep.subr.mxu0 0.0
    %5624 = vmatpush1.msra.mxu0 0.0
    %5625 = vmatprep.subr.mxu0 0.0
    %5626 = vmatpush1.msra.mxu0 0.0
    %5627 = vmatprep.subr.mxu0 0.0
    %5628 = vmatpush1.msra.mxu0 0.0
    %5629 = vmatprep.subr.mxu0 0.0
    %5630 = vmatpush1.msra.mxu0 0.0
    %5631 = vmatprep.subr.mxu0 0.0
    %5632 = vmatpush1.msra.mxu0 0.0
    %5633 = vmatprep.subr.mxu0 0.0
    %5634 = vmatpush1.msra.mxu0 0.0
    %5635 = vmatprep.subr.mxu0 0.0
    %5636 = vmatpush1.msra.mxu0 0.0
    %5637 = vmatprep.subr.mxu0 0.0
    %5638 = vmatpush1.msra.mxu0 0.0
    %5639 = vmatprep.subr.mxu0 0.0
    %5640 = vmatpush1.msra.mxu0 0.0
    %5641 = vmatprep.subr.mxu0 0.0
    %5642 = vmatpush1.msra.mxu0 0.0
    %5643 = vmatprep.subr.mxu0 0.0
    %5644 = vmatpush1.msra.mxu0 0.0
    %5645 = vmatprep.subr.mxu0 0.0
    %5646 = vmatpush1.msra.mxu0 0.0
    %5647 = vmatprep.subr.mxu0 0.0
    %5648 = vmatpush1.msra.mxu0 0.0
    %5649 = vmatprep.subr.mxu0 0.0
    %5650 = vmatpush1.msra.mxu0 0.0
    %5651 = vmatprep.subr.mxu0 0.0
    %5652 = vmatpush1.msra.mxu0 0.0
    %5653 = vmatprep.subr.mxu0 0.0
    %5654 = vmatpush1.msra.mxu0 0.0
    %5655 = vmatprep.subr.mxu0 0.0
    %5656 = vmatpush1.msra.mxu0 0.0
    %5657 = vmatprep.subr.mxu0 0.0
    %5658 = vmatpush1.msra.mxu0 0.0
    %5659 = vmatprep.subr.mxu0 0.0
    %5660 = vmatpush1.msra.mxu0 0.0
    %5661 = vmatprep.mubr.f32.mxu0 0.0
    %v5662 = vand.u32 %v5222, 4294901760
    %5663 = vmatmul.mubr.f32.gmra.mrb[0].mxu0 %v5662
    %v5664 = vpop.f32.mrb[0].mxu0
    %v5665 = vadd.f32 %v5574, %v5664
    %v5666 = vpop.f32.mrb[0].mxu0
    %5667 = vmatprep.mubr.f32.mxu0 0.0
    %v5668 = vand.u32 %v5225, 4294901760
    %5669 = vmatmul.mubr.f32.gmra.mrb[0].mxu0 %v5668
    %v5670 = vpop.f32.mrb[0].mxu0
    %v5671 = vadd.f32 %v5582, %v5670
    %v5672 = vpop.f32.mrb[0].mxu0
    %5673 = vdwg.mxu0
    %5674 = vmatprep.subr.mxu0 0.0
    %v5675 = vand.u32 %v5217, 4294901760
    %5676 = vmatpush1.msra.mxu0 %v5675
    %5677 = vmatprep.subr.mxu0 0.0
    %v5678 = vand.u32 %v5218, 4294901760
    %5679 = vmatpush1.msra.mxu0 %v5678
    %5680 = vmatprep.subr.mxu0 0.0
    %v5681 = vand.u32 %v5219, 4294901760
    %5682 = vmatpush1.msra.mxu0 %v5681
    %5683 = vmatprep.subr.mxu0 0.0
    %v5684 = vand.u32 %v5220, 4294901760
    %5685 = vmatpush1.msra.mxu0 %v5684
    %5686 = vmatprep.subr.mxu0 0.0
    %5687 = vmatpush1.msra.mxu0 0.0
    %5688 = vmatprep.subr.mxu0 0.0
    %5689 = vmatpush1.msra.mxu0 0.0
    %5690 = vmatprep.subr.mxu0 0.0
    %5691 = vmatpush1.msra.mxu0 0.0
    %5692 = vmatprep.subr.mxu0 0.0
    %5693 = vmatpush1.msra.mxu0 0.0
    %5694 = vmatprep.subr.mxu0 0.0
    %5695 = vmatpush1.msra.mxu0 0.0
    %5696 = vmatprep.subr.mxu0 0.0
    %5697 = vmatpush1.msra.mxu0 0.0
    %5698 = vmatprep.subr.mxu0 0.0
    %5699 = vmatpush1.msra.mxu0 0.0
    %5700 = vmatprep.subr.mxu0 0.0
    %5701 = vmatpush1.msra.mxu0 0.0
    %5702 = vmatprep.subr.mxu0 0.0
    %5703 = vmatpush1.msra.mxu0 0.0
    %5704 = vmatprep.subr.mxu0 0.0
    %5705 = vmatpush1.msra.mxu0 0.0
    %5706 = vmatprep.subr.mxu0 0.0
    %5707 = vmatpush1.msra.mxu0 0.0
    %5708 = vmatprep.subr.mxu0 0.0
    %5709 = vmatpush1.msra.mxu0 0.0
    %5710 = vmatprep.subr.mxu0 0.0
    %5711 = vmatpush1.msra.mxu0 0.0
    %5712 = vmatprep.subr.mxu0 0.0
    %5713 = vmatpush1.msra.mxu0 0.0
    %5714 = vmatprep.subr.mxu0 0.0
    %5715 = vmatpush1.msra.mxu0 0.0
    %5716 = vmatprep.subr.mxu0 0.0
    %5717 = vmatpush1.msra.mxu0 0.0
    %5718 = vmatprep.subr.mxu0 0.0
    %5719 = vmatpush1.msra.mxu0 0.0
    %5720 = vmatprep.subr.mxu0 0.0
    %5721 = vmatpush1.msra.mxu0 0.0
    %5722 = vmatprep.subr.mxu0 0.0
    %5723 = vmatpush1.msra.mxu0 0.0
    %5724 = vmatprep.subr.mxu0 0.0
    %5725 = vmatpush1.msra.mxu0 0.0
    %5726 = vmatprep.subr.mxu0 0.0
    %5727 = vmatpush1.msra.mxu0 0.0
    %5728 = vmatprep.subr.mxu0 0.0
    %5729 = vmatpush1.msra.mxu0 0.0
    %5730 = vmatprep.subr.mxu0 0.0
    %5731 = vmatpush1.msra.mxu0 0.0
    %5732 = vmatprep.subr.mxu0 0.0
    %5733 = vmatpush1.msra.mxu0 0.0
    %5734 = vmatprep.subr.mxu0 0.0
    %5735 = vmatpush1.msra.mxu0 0.0
    %5736 = vmatprep.subr.mxu0 0.0
    %5737 = vmatpush1.msra.mxu0 0.0
    %5738 = vmatprep.subr.mxu0 0.0
    %5739 = vmatpush1.msra.mxu0 0.0
    %5740 = vmatprep.subr.mxu0 0.0
    %5741 = vmatpush1.msra.mxu0 0.0
    %5742 = vmatprep.mubr.f32.mxu0 0.0
    %v5743 = vand.u32 %v5222, 4294901760
    %5744 = vmatmul.mubr.f32.gmra.mrb[0].mxu0 %v5743
    %v5745 = vpop.f32.mrb[0].mxu0
    %v5746 = vadd.f32 %v5665, %v5745
    %v5747 = vpop.f32.mrb[0].mxu0
    %5748 = vmatprep.mubr.f32.mxu0 0.0
    %v5749 = vand.u32 %v5225, 4294901760
    %5750 = vmatmul.mubr.f32.gmra.mrb[0].mxu0 %v5749
    %v5751 = vpop.f32.mrb[0].mxu0
    %v5752 = vadd.f32 %v5671, %v5751
    %v5753 = vpop.f32.mrb[0].mxu0
    %5754 = vdwg.mxu0
    %s5755 = scalar_lea.vmem [#allocation2], 32
    %v5756 = vld [vmem:[%s5755] sm:$0xff]
    %v5757 = vld [vmem:[%s5755 + $0x8] sm:$0xff]
    %v5758 = vld [vmem:[%s5755 + $0x10] sm:$0xff]
    %v5759 = vld [vmem:[%s5755 + $0x18] sm:$0xff]
    %5762 = vrot.lane.b32.xlu0 %v5746, 96
    %v5763 = vpop.permute.xlu0 %5762
    %5764 = vrot.lane.b32.xlu0 %v5752, 96
    %v5765 = vpop.permute.xlu0 %5764
    %v5766 = vsel %vm664, %v5746, 0
    %v5768 = vsel %vm664, %v5752, 0
    %v5770 = vsel %vm664, %v5763, 0
    %v5772 = vsel %vm664, %v5765, 0
    %5774 = vmatprep.subr.mxu0 0.0
    %v5775 = vand.u32 %v5770, 4294901760
    %5776 = vmatpush1.xpose.msra.mxu0 %v5775
    %5777 = vmatprep.subr.mxu0 0.0
    %v5778 = vand.u32 %v5772, 4294901760
    %5779 = vmatpush1.xpose.msra.mxu0 %v5778
    %5780 = vmatprep.subr.mxu0 0.0
    %5781 = vmatpush1.xpose.msra.mxu0 0.0
    %5782 = vmatprep.subr.mxu0 0.0
    %5783 = vmatpush1.xpose.msra.mxu0 0.0
    %5784 = vmatprep.subr.mxu0 0.0
    %5785 = vmatpush1.xpose.msra.mxu0 0.0
    %5786 = vmatprep.subr.mxu0 0.0
    %5787 = vmatpush1.xpose.msra.mxu0 0.0
    %5788 = vmatprep.subr.mxu0 0.0
    %5789 = vmatpush1.xpose.msra.mxu0 0.0
    %5790 = vmatprep.subr.mxu0 0.0
    %5791 = vmatpush1.xpose.msra.mxu0 0.0
    %5792 = vmatprep.subr.mxu0 0.0
    %5793 = vmatpush1.xpose.msra.mxu0 0.0
    %5794 = vmatprep.subr.mxu0 0.0
    %5795 = vmatpush1.xpose.msra.mxu0 0.0
    %5796 = vmatprep.subr.mxu0 0.0
    %5797 = vmatpush1.xpose.msra.mxu0 0.0
    %5798 = vmatprep.subr.mxu0 0.0
    %5799 = vmatpush1.xpose.msra.mxu0 0.0
    %5800 = vmatprep.subr.mxu0 0.0
    %5801 = vmatpush1.xpose.msra.mxu0 0.0
    %5802 = vmatprep.subr.mxu0 0.0
    %5803 = vmatpush1.xpose.msra.mxu0 0.0
    %5804 = vmatprep.subr.mxu0 0.0
    %5805 = vmatpush1.xpose.msra.mxu0 0.0
    %5806 = vmatprep.subr.mxu0 0.0
    %5807 = vmatpush1.xpose.msra.mxu0 0.0
    %5808 = vmatprep.subr.mxu0 0.0
    %5809 = vmatpush1.xpose.msra.mxu0 0.0
    %5810 = vmatprep.subr.mxu0 0.0
    %5811 = vmatpush1.xpose.msra.mxu0 0.0
    %5812 = vmatprep.subr.mxu0 0.0
    %5813 = vmatpush1.xpose.msra.mxu0 0.0
    %5814 = vmatprep.subr.mxu0 0.0
    %5815 = vmatpush1.xpose.msra.mxu0 0.0
    %5816 = vmatprep.subr.mxu0 0.0
    %5817 = vmatpush1.xpose.msra.mxu0 0.0
    %5818 = vmatprep.subr.mxu0 0.0
    %5819 = vmatpush1.xpose.msra.mxu0 0.0
    %5820 = vmatprep.subr.mxu0 0.0
    %5821 = vmatpush1.xpose.msra.mxu0 0.0
    %5822 = vmatprep.subr.mxu0 0.0
    %5823 = vmatpush1.xpose.msra.mxu0 0.0
    %5824 = vmatprep.subr.mxu0 0.0
    %5825 = vmatpush1.xpose.msra.mxu0 0.0
    %5826 = vmatprep.subr.mxu0 0.0
    %5827 = vmatpush1.xpose.msra.mxu0 0.0
    %5828 = vmatprep.subr.mxu0 0.0
    %5829 = vmatpush1.xpose.msra.mxu0 0.0
    %5830 = vmatprep.subr.mxu0 0.0
    %5831 = vmatpush1.xpose.msra.mxu0 0.0
    %5832 = vmatprep.subr.mxu0 0.0
    %5833 = vmatpush1.xpose.msra.mxu0 0.0
    %5834 = vmatprep.subr.mxu0 0.0
    %5835 = vmatpush1.xpose.msra.mxu0 0.0
    %5836 = vmatprep.subr.mxu0 0.0
    %5837 = vmatpush1.xpose.msra.mxu0 0.0
    %5838 = vmatprep.subr.mxu0 0.0
    %5839 = vmatpush1.xpose.msra.mxu0 0.0
    %5840 = vmatprep.mubr.f32.mxu0 0.0
    %v5841 = vand.u32 %v5766, 4294901760
    %v5842 = vsub.f32 %v5766, %v5841
    %v5843 = vand.u32 %v5842, 4294901760
    %v5844 = vsub.f32 %v5842, %v5843
    %v5845 = vand.u32 %v5844, 4294901760
    %5846 = vmatmul.mubr.f32.gmra.mrb[0].mxu0 %v5845
    %v5847 = vpop.f32.mrb[0].mxu0
    %v5848 = vadd.f32 0.0, %v5847
    %v5849 = vpop.f32.mrb[0].mxu0
    %5850 = vmatprep.mubr.f32.mxu0 0.0
    %v5851 = vand.u32 %v5768, 4294901760
    %v5852 = vsub.f32 %v5768, %v5851
    %v5853 = vand.u32 %v5852, 4294901760
    %v5854 = vsub.f32 %v5852, %v5853
    %v5855 = vand.u32 %v5854, 4294901760
    %5856 = vmatmul.mubr.f32.gmra.mrb[0].mxu0 %v5855
    %v5857 = vpop.f32.mrb[0].mxu0
    %v5858 = vadd.f32 0.0, %v5857
    %v5859 = vpop.f32.mrb[0].mxu0
    %5860 = vdwg.mxu0
    %5861 = vmatprep.subr.mxu0 0.0
    %v5862 = vand.u32 %v5770, 4294901760
    %v5863 = vsub.f32 %v5770, %v5862
    %v5864 = vand.u32 %v5863, 4294901760
    %v5865 = vsub.f32 %v5863, %v5864
    %v5866 = vand.u32 %v5865, 4294901760
    %5867 = vmatpush1.xpose.msra.mxu0 %v5866
    %5868 = vmatprep.subr.mxu0 0.0
    %v5869 = vand.u32 %v5772, 4294901760
    %v5870 = vsub.f32 %v5772, %v5869
    %v5871 = vand.u32 %v5870, 4294901760
    %v5872 = vsub.f32 %v5870, %v5871
    %v5873 = vand.u32 %v5872, 4294901760
    %5874 = vmatpush1.xpose.msra.mxu0 %v5873
    %5875 = vmatprep.subr.mxu0 0.0
    %5876 = vmatpush1.xpose.msra.mxu0 0.0
    %5877 = vmatprep.subr.mxu0 0.0
    %5878 = vmatpush1.xpose.msra.mxu0 0.0
    %5879 = vmatprep.subr.mxu0 0.0
    %5880 = vmatpush1.xpose.msra.mxu0 0.0
    %5881 = vmatprep.subr.mxu0 0.0
    %5882 = vmatpush1.xpose.msra.mxu0 0.0
    %5883 = vmatprep.subr.mxu0 0.0
    %5884 = vmatpush1.xpose.msra.mxu0 0.0
    %5885 = vmatprep.subr.mxu0 0.0
    %5886 = vmatpush1.xpose.msra.mxu0 0.0
    %5887 = vmatprep.subr.mxu0 0.0
    %5888 = vmatpush1.xpose.msra.mxu0 0.0
    %5889 = vmatprep.subr.mxu0 0.0
    %5890 = vmatpush1.xpose.msra.mxu0 0.0
    %5891 = vmatprep.subr.mxu0 0.0
    %5892 = vmatpush1.xpose.msra.mxu0 0.0
    %5893 = vmatprep.subr.mxu0 0.0
    %5894 = vmatpush1.xpose.msra.mxu0 0.0
    %5895 = vmatprep.subr.mxu0 0.0
    %5896 = vmatpush1.xpose.msra.mxu0 0.0
    %5897 = vmatprep.subr.mxu0 0.0
    %5898 = vmatpush1.xpose.msra.mxu0 0.0
    %5899 = vmatprep.subr.mxu0 0.0
    %5900 = vmatpush1.xpose.msra.mxu0 0.0
    %5901 = vmatprep.subr.mxu0 0.0
    %5902 = vmatpush1.xpose.msra.mxu0 0.0
    %5903 = vmatprep.subr.mxu0 0.0
    %5904 = vmatpush1.xpose.msra.mxu0 0.0
    %5905 = vmatprep.subr.mxu0 0.0
    %5906 = vmatpush1.xpose.msra.mxu0 0.0
    %5907 = vmatprep.subr.mxu0 0.0
    %5908 = vmatpush1.xpose.msra.mxu0 0.0
    %5909 = vmatprep.subr.mxu0 0.0
    %5910 = vmatpush1.xpose.msra.mxu0 0.0
    %5911 = vmatprep.subr.mxu0 0.0
    %5912 = vmatpush1.xpose.msra.mxu0 0.0
    %5913 = vmatprep.subr.mxu0 0.0
    %5914 = vmatpush1.xpose.msra.mxu0 0.0
    %5915 = vmatprep.subr.mxu0 0.0
    %5916 = vmatpush1.xpose.msra.mxu0 0.0
    %5917 = vmatprep.subr.mxu0 0.0
    %5918 = vmatpush1.xpose.msra.mxu0 0.0
    %5919 = vmatprep.subr.mxu0 0.0
    %5920 = vmatpush1.xpose.msra.mxu0 0.0
    %5921 = vmatprep.subr.mxu0 0.0
    %5922 = vmatpush1.xpose.msra.mxu0 0.0
    %5923 = vmatprep.subr.mxu0 0.0
    %5924 = vmatpush1.xpose.msra.mxu0 0.0
    %5925 = vmatprep.subr.mxu0 0.0
    %5926 = vmatpush1.xpose.msra.mxu0 0.0
    %5927 = vmatprep.subr.mxu0 0.0
    %5928 = vmatpush1.xpose.msra.mxu0 0.0
    %5929 = vmatprep.subr.mxu0 0.0
    %5930 = vmatpush1.xpose.msra.mxu0 0.0
    %5931 = vmatprep.subr.mxu0 0.0
    %5932 = vmatpush1.xpose.msra.mxu0 0.0
    %5933 = vmatprep.subr.mxu0 0.0
    %5934 = vmatpush1.xpose.msra.mxu0 0.0
    %5935 = vmatprep.mubr.f32.mxu0 0.0
    %v5936 = vand.u32 %v5766, 4294901760
    %5937 = vmatmul.mubr.f32.gmra.mrb[0].mxu0 %v5936
    %v5938 = vpop.f32.mrb[0].mxu0
    %v5939 = vadd.f32 %v5848, %v5938
    %v5940 = vpop.f32.mrb[0].mxu0
    %5941 = vmatprep.mubr.f32.mxu0 0.0
    %v5942 = vand.u32 %v5768, 4294901760
    %5943 = vmatmul.mubr.f32.gmra.mrb[0].mxu0 %v5942
    %v5944 = vpop.f32.mrb[0].mxu0
    %v5945 = vadd.f32 %v5858, %v5944
    %v5946 = vpop.f32.mrb[0].mxu0
    %5947 = vdwg.mxu0
    %5948 = vmatprep.subr.mxu0 0.0
    %v5949 = vand.u32 %v5770, 4294901760
    %v5950 = vsub.f32 %v5770, %v5949
    %5951 = vmatpush1.xpose.msra.mxu0 %v5950
    %5952 = vmatprep.subr.mxu0 0.0
    %v5953 = vand.u32 %v5772, 4294901760
    %v5954 = vsub.f32 %v5772, %v5953
    %5955 = vmatpush1.xpose.msra.mxu0 %v5954
    %5956 = vmatprep.subr.mxu0 0.0
    %5957 = vmatpush1.xpose.msra.mxu0 0.0
    %5958 = vmatprep.subr.mxu0 0.0
    %5959 = vmatpush1.xpose.msra.mxu0 0.0
    %5960 = vmatprep.subr.mxu0 0.0
    %5961 = vmatpush1.xpose.msra.mxu0 0.0
    %5962 = vmatprep.subr.mxu0 0.0
    %5963 = vmatpush1.xpose.msra.mxu0 0.0
    %5964 = vmatprep.subr.mxu0 0.0
    %5965 = vmatpush1.xpose.msra.mxu0 0.0
    %5966 = vmatprep.subr.mxu0 0.0
    %5967 = vmatpush1.xpose.msra.mxu0 0.0
    %5968 = vmatprep.subr.mxu0 0.0
    %5969 = vmatpush1.xpose.msra.mxu0 0.0
    %5970 = vmatprep.subr.mxu0 0.0
    %5971 = vmatpush1.xpose.msra.mxu0 0.0
    %5972 = vmatprep.subr.mxu0 0.0
    %5973 = vmatpush1.xpose.msra.mxu0 0.0
    %5974 = vmatprep.subr.mxu0 0.0
    %5975 = vmatpush1.xpose.msra.mxu0 0.0
    %5976 = vmatprep.subr.mxu0 0.0
    %5977 = vmatpush1.xpose.msra.mxu0 0.0
    %5978 = vmatprep.subr.mxu0 0.0
    %5979 = vmatpush1.xpose.msra.mxu0 0.0
    %5980 = vmatprep.subr.mxu0 0.0
    %5981 = vmatpush1.xpose.msra.mxu0 0.0
    %5982 = vmatprep.subr.mxu0 0.0
    %5983 = vmatpush1.xpose.msra.mxu0 0.0
    %5984 = vmatprep.subr.mxu0 0.0
    %5985 = vmatpush1.xpose.msra.mxu0 0.0
    %5986 = vmatprep.subr.mxu0 0.0
    %5987 = vmatpush1.xpose.msra.mxu0 0.0
    %5988 = vmatprep.subr.mxu0 0.0
    %5989 = vmatpush1.xpose.msra.mxu0 0.0
    %5990 = vmatprep.subr.mxu0 0.0
    %5991 = vmatpush1.xpose.msra.mxu0 0.0
    %5992 = vmatprep.subr.mxu0 0.0
    %5993 = vmatpush1.xpose.msra.mxu0 0.0
    %5994 = vmatprep.subr.mxu0 0.0
    %5995 = vmatpush1.xpose.msra.mxu0 0.0
    %5996 = vmatprep.subr.mxu0 0.0
    %5997 = vmatpush1.xpose.msra.mxu0 0.0
    %5998 = vmatprep.subr.mxu0 0.0
    %5999 = vmatpush1.xpose.msra.mxu0 0.0
    %6000 = vmatprep.subr.mxu0 0.0
    %6001 = vmatpush1.xpose.msra.mxu0 0.0
    %6002 = vmatprep.subr.mxu0 0.0
    %6003 = vmatpush1.xpose.msra.mxu0 0.0
    %6004 = vmatprep.subr.mxu0 0.0
    %6005 = vmatpush1.xpose.msra.mxu0 0.0
    %6006 = vmatprep.subr.mxu0 0.0
    %6007 = vmatpush1.xpose.msra.mxu0 0.0
    %6008 = vmatprep.subr.mxu0 0.0
    %6009 = vmatpush1.xpose.msra.mxu0 0.0
    %6010 = vmatprep.subr.mxu0 0.0
    %6011 = vmatpush1.xpose.msra.mxu0 0.0
    %6012 = vmatprep.subr.mxu0 0.0
    %6013 = vmatpush1.xpose.msra.mxu0 0.0
    %6014 = vmatprep.subr.mxu0 0.0
    %6015 = vmatpush1.xpose.msra.mxu0 0.0
    %6016 = vmatprep.mubr.f32.mxu0 0.0
    %v6017 = vand.u32 %v5766, 4294901760
    %v6018 = vsub.f32 %v5766, %v6017
    %6019 = vmatmul.mubr.f32.gmra.mrb[0].mxu0 %v6018
    %v6020 = vpop.f32.mrb[0].mxu0
    %v6021 = vadd.f32 %v5939, %v6020
    %v6022 = vpop.f32.mrb[0].mxu0
    %6023 = vmatprep.mubr.f32.mxu0 0.0
    %v6024 = vand.u32 %v5768, 4294901760
    %v6025 = vsub.f32 %v5768, %v6024
    %6026 = vmatmul.mubr.f32.gmra.mrb[0].mxu0 %v6025
    %v6027 = vpop.f32.mrb[0].mxu0
    %v6028 = vadd.f32 %v5945, %v6027
    %v6029 = vpop.f32.mrb[0].mxu0
    %6030 = vdwg.mxu0
    %6031 = vmatprep.subr.mxu0 0.0
    %v6032 = vand.u32 %v5770, 4294901760
    %6033 = vmatpush1.xpose.msra.mxu0 %v6032
    %6034 = vmatprep.subr.mxu0 0.0
    %v6035 = vand.u32 %v5772, 4294901760
    %6036 = vmatpush1.xpose.msra.mxu0 %v6035
    %6037 = vmatprep.subr.mxu0 0.0
    %6038 = vmatpush1.xpose.msra.mxu0 0.0
    %6039 = vmatprep.subr.mxu0 0.0
    %6040 = vmatpush1.xpose.msra.mxu0 0.0
    %6041 = vmatprep.subr.mxu0 0.0
    %6042 = vmatpush1.xpose.msra.mxu0 0.0
    %6043 = vmatprep.subr.mxu0 0.0
    %6044 = vmatpush1.xpose.msra.mxu0 0.0
    %6045 = vmatprep.subr.mxu0 0.0
    %6046 = vmatpush1.xpose.msra.mxu0 0.0
    %6047 = vmatprep.subr.mxu0 0.0
    %6048 = vmatpush1.xpose.msra.mxu0 0.0
    %6049 = vmatprep.subr.mxu0 0.0
    %6050 = vmatpush1.xpose.msra.mxu0 0.0
    %6051 = vmatprep.subr.mxu0 0.0
    %6052 = vmatpush1.xpose.msra.mxu0 0.0
    %6053 = vmatprep.subr.mxu0 0.0
    %6054 = vmatpush1.xpose.msra.mxu0 0.0
    %6055 = vmatprep.subr.mxu0 0.0
    %6056 = vmatpush1.xpose.msra.mxu0 0.0
    %6057 = vmatprep.subr.mxu0 0.0
    %6058 = vmatpush1.xpose.msra.mxu0 0.0
    %6059 = vmatprep.subr.mxu0 0.0
    %6060 = vmatpush1.xpose.msra.mxu0 0.0
    %6061 = vmatprep.subr.mxu0 0.0
    %6062 = vmatpush1.xpose.msra.mxu0 0.0
    %6063 = vmatprep.subr.mxu0 0.0
    %6064 = vmatpush1.xpose.msra.mxu0 0.0
    %6065 = vmatprep.subr.mxu0 0.0
    %6066 = vmatpush1.xpose.msra.mxu0 0.0
    %6067 = vmatprep.subr.mxu0 0.0
    %6068 = vmatpush1.xpose.msra.mxu0 0.0
    %6069 = vmatprep.subr.mxu0 0.0
    %6070 = vmatpush1.xpose.msra.mxu0 0.0
    %6071 = vmatprep.subr.mxu0 0.0
    %6072 = vmatpush1.xpose.msra.mxu0 0.0
    %6073 = vmatprep.subr.mxu0 0.0
    %6074 = vmatpush1.xpose.msra.mxu0 0.0
    %6075 = vmatprep.subr.mxu0 0.0
    %6076 = vmatpush1.xpose.msra.mxu0 0.0
    %6077 = vmatprep.subr.mxu0 0.0
    %6078 = vmatpush1.xpose.msra.mxu0 0.0
    %6079 = vmatprep.subr.mxu0 0.0
    %6080 = vmatpush1.xpose.msra.mxu0 0.0
    %6081 = vmatprep.subr.mxu0 0.0
    %6082 = vmatpush1.xpose.msra.mxu0 0.0
    %6083 = vmatprep.subr.mxu0 0.0
    %6084 = vmatpush1.xpose.msra.mxu0 0.0
    %6085 = vmatprep.subr.mxu0 0.0
    %6086 = vmatpush1.xpose.msra.mxu0 0.0
    %6087 = vmatprep.subr.mxu0 0.0
    %6088 = vmatpush1.xpose.msra.mxu0 0.0
    %6089 = vmatprep.subr.mxu0 0.0
    %6090 = vmatpush1.xpose.msra.mxu0 0.0
    %6091 = vmatprep.subr.mxu0 0.0
    %6092 = vmatpush1.xpose.msra.mxu0 0.0
    %6093 = vmatprep.subr.mxu0 0.0
    %6094 = vmatpush1.xpose.msra.mxu0 0.0
    %6095 = vmatprep.subr.mxu0 0.0
    %6096 = vmatpush1.xpose.msra.mxu0 0.0
    %6097 = vmatprep.mubr.f32.mxu0 0.0
    %v6098 = vand.u32 %v5766, 4294901760
    %v6099 = vsub.f32 %v5766, %v6098
    %v6100 = vand.u32 %v6099, 4294901760
    %6101 = vmatmul.mubr.f32.gmra.mrb[0].mxu0 %v6100
    %v6102 = vpop.f32.mrb[0].mxu0
    %v6103 = vadd.f32 %v6021, %v6102
    %v6104 = vpop.f32.mrb[0].mxu0
    %6105 = vmatprep.mubr.f32.mxu0 0.0
    %v6106 = vand.u32 %v5768, 4294901760
    %v6107 = vsub.f32 %v5768, %v6106
    %v6108 = vand.u32 %v6107, 4294901760
    %6109 = vmatmul.mubr.f32.gmra.mrb[0].mxu0 %v6108
    %v6110 = vpop.f32.mrb[0].mxu0
    %v6111 = vadd.f32 %v6028, %v6110
    %v6112 = vpop.f32.mrb[0].mxu0
    %6113 = vdwg.mxu0
    %6114 = vmatprep.subr.mxu0 0.0
    %v6115 = vand.u32 %v5770, 4294901760
    %v6116 = vsub.f32 %v5770, %v6115
    %v6117 = vand.u32 %v6116, 4294901760
    %6118 = vmatpush1.xpose.msra.mxu0 %v6117
    %6119 = vmatprep.subr.mxu0 0.0
    %v6120 = vand.u32 %v5772, 4294901760
    %v6121 = vsub.f32 %v5772, %v6120
    %v6122 = vand.u32 %v6121, 4294901760
    %6123 = vmatpush1.xpose.msra.mxu0 %v6122
    %6124 = vmatprep.subr.mxu0 0.0
    %6125 = vmatpush1.xpose.msra.mxu0 0.0
    %6126 = vmatprep.subr.mxu0 0.0
    %6127 = vmatpush1.xpose.msra.mxu0 0.0
    %6128 = vmatprep.subr.mxu0 0.0
    %6129 = vmatpush1.xpose.msra.mxu0 0.0
    %6130 = vmatprep.subr.mxu0 0.0
    %6131 = vmatpush1.xpose.msra.mxu0 0.0
    %6132 = vmatprep.subr.mxu0 0.0
    %6133 = vmatpush1.xpose.msra.mxu0 0.0
    %6134 = vmatprep.subr.mxu0 0.0
    %6135 = vmatpush1.xpose.msra.mxu0 0.0
    %6136 = vmatprep.subr.mxu0 0.0
    %6137 = vmatpush1.xpose.msra.mxu0 0.0
    %6138 = vmatprep.subr.mxu0 0.0
    %6139 = vmatpush1.xpose.msra.mxu0 0.0
    %6140 = vmatprep.subr.mxu0 0.0
    %6141 = vmatpush1.xpose.msra.mxu0 0.0
    %6142 = vmatprep.subr.mxu0 0.0
    %6143 = vmatpush1.xpose.msra.mxu0 0.0
    %6144 = vmatprep.subr.mxu0 0.0
    %6145 = vmatpush1.xpose.msra.mxu0 0.0
    %6146 = vmatprep.subr.mxu0 0.0
    %6147 = vmatpush1.xpose.msra.mxu0 0.0
    %6148 = vmatprep.subr.mxu0 0.0
    %6149 = vmatpush1.xpose.msra.mxu0 0.0
    %6150 = vmatprep.subr.mxu0 0.0
    %6151 = vmatpush1.xpose.msra.mxu0 0.0
    %6152 = vmatprep.subr.mxu0 0.0
    %6153 = vmatpush1.xpose.msra.mxu0 0.0
    %6154 = vmatprep.subr.mxu0 0.0
    %6155 = vmatpush1.xpose.msra.mxu0 0.0
    %6156 = vmatprep.subr.mxu0 0.0
    %6157 = vmatpush1.xpose.msra.mxu0 0.0
    %6158 = vmatprep.subr.mxu0 0.0
    %6159 = vmatpush1.xpose.msra.mxu0 0.0
    %6160 = vmatprep.subr.mxu0 0.0
    %6161 = vmatpush1.xpose.msra.mxu0 0.0
    %6162 = vmatprep.subr.mxu0 0.0
    %6163 = vmatpush1.xpose.msra.mxu0 0.0
    %6164 = vmatprep.subr.mxu0 0.0
    %6165 = vmatpush1.xpose.msra.mxu0 0.0
    %6166 = vmatprep.subr.mxu0 0.0
    %6167 = vmatpush1.xpose.msra.mxu0 0.0
    %6168 = vmatprep.subr.mxu0 0.0
    %6169 = vmatpush1.xpose.msra.mxu0 0.0
    %6170 = vmatprep.subr.mxu0 0.0
    %6171 = vmatpush1.xpose.msra.mxu0 0.0
    %6172 = vmatprep.subr.mxu0 0.0
    %6173 = vmatpush1.xpose.msra.mxu0 0.0
    %6174 = vmatprep.subr.mxu0 0.0
    %6175 = vmatpush1.xpose.msra.mxu0 0.0
    %6176 = vmatprep.subr.mxu0 0.0
    %6177 = vmatpush1.xpose.msra.mxu0 0.0
    %6178 = vmatprep.subr.mxu0 0.0
    %6179 = vmatpush1.xpose.msra.mxu0 0.0
    %6180 = vmatprep.subr.mxu0 0.0
    %6181 = vmatpush1.xpose.msra.mxu0 0.0
    %6182 = vmatprep.subr.mxu0 0.0
    %6183 = vmatpush1.xpose.msra.mxu0 0.0
    %6184 = vmatprep.mubr.f32.mxu0 0.0
    %v6185 = vand.u32 %v5766, 4294901760
    %6186 = vmatmul.mubr.f32.gmra.mrb[0].mxu0 %v6185
    %v6187 = vpop.f32.mrb[0].mxu0
    %v6188 = vadd.f32 %v6103, %v6187
    %v6189 = vpop.f32.mrb[0].mxu0
    %6190 = vmatprep.mubr.f32.mxu0 0.0
    %v6191 = vand.u32 %v5768, 4294901760
    %6192 = vmatmul.mubr.f32.gmra.mrb[0].mxu0 %v6191
    %v6193 = vpop.f32.mrb[0].mxu0
    %v6194 = vadd.f32 %v6111, %v6193
    %v6195 = vpop.f32.mrb[0].mxu0
    %6196 = vdwg.mxu0
    %6197 = vmatprep.subr.mxu0 0.0
    %v6198 = vand.u32 %v5770, 4294901760
    %6199 = vmatpush1.xpose.msra.mxu0 %v6198
    %6200 = vmatprep.subr.mxu0 0.0
    %v6201 = vand.u32 %v5772, 4294901760
    %6202 = vmatpush1.xpose.msra.mxu0 %v6201
    %6203 = vmatprep.subr.mxu0 0.0
    %6204 = vmatpush1.xpose.msra.mxu0 0.0
    %6205 = vmatprep.subr.mxu0 0.0
    %6206 = vmatpush1.xpose.msra.mxu0 0.0
    %6207 = vmatprep.subr.mxu0 0.0
    %6208 = vmatpush1.xpose.msra.mxu0 0.0
    %6209 = vmatprep.subr.mxu0 0.0
    %6210 = vmatpush1.xpose.msra.mxu0 0.0
    %6211 = vmatprep.subr.mxu0 0.0
    %6212 = vmatpush1.xpose.msra.mxu0 0.0
    %6213 = vmatprep.subr.mxu0 0.0
    %6214 = vmatpush1.xpose.msra.mxu0 0.0
    %6215 = vmatprep.subr.mxu0 0.0
    %6216 = vmatpush1.xpose.msra.mxu0 0.0
    %6217 = vmatprep.subr.mxu0 0.0
    %6218 = vmatpush1.xpose.msra.mxu0 0.0
    %6219 = vmatprep.subr.mxu0 0.0
    %6220 = vmatpush1.xpose.msra.mxu0 0.0
    %6221 = vmatprep.subr.mxu0 0.0
    %6222 = vmatpush1.xpose.msra.mxu0 0.0
    %6223 = vmatprep.subr.mxu0 0.0
    %6224 = vmatpush1.xpose.msra.mxu0 0.0
    %6225 = vmatprep.subr.mxu0 0.0
    %6226 = vmatpush1.xpose.msra.mxu0 0.0
    %6227 = vmatprep.subr.mxu0 0.0
    %6228 = vmatpush1.xpose.msra.mxu0 0.0
    %6229 = vmatprep.subr.mxu0 0.0
    %6230 = vmatpush1.xpose.msra.mxu0 0.0
    %6231 = vmatprep.subr.mxu0 0.0
    %6232 = vmatpush1.xpose.msra.mxu0 0.0
    %6233 = vmatprep.subr.mxu0 0.0
    %6234 = vmatpush1.xpose.msra.mxu0 0.0
    %6235 = vmatprep.subr.mxu0 0.0
    %6236 = vmatpush1.xpose.msra.mxu0 0.0
    %6237 = vmatprep.subr.mxu0 0.0
    %6238 = vmatpush1.xpose.msra.mxu0 0.0
    %6239 = vmatprep.subr.mxu0 0.0
    %6240 = vmatpush1.xpose.msra.mxu0 0.0
    %6241 = vmatprep.subr.mxu0 0.0
    %6242 = vmatpush1.xpose.msra.mxu0 0.0
    %6243 = vmatprep.subr.mxu0 0.0
    %6244 = vmatpush1.xpose.msra.mxu0 0.0
    %6245 = vmatprep.subr.mxu0 0.0
    %6246 = vmatpush1.xpose.msra.mxu0 0.0
    %6247 = vmatprep.subr.mxu0 0.0
    %6248 = vmatpush1.xpose.msra.mxu0 0.0
    %6249 = vmatprep.subr.mxu0 0.0
    %6250 = vmatpush1.xpose.msra.mxu0 0.0
    %6251 = vmatprep.subr.mxu0 0.0
    %6252 = vmatpush1.xpose.msra.mxu0 0.0
    %6253 = vmatprep.subr.mxu0 0.0
    %6254 = vmatpush1.xpose.msra.mxu0 0.0
    %6255 = vmatprep.subr.mxu0 0.0
    %6256 = vmatpush1.xpose.msra.mxu0 0.0
    %6257 = vmatprep.subr.mxu0 0.0
    %6258 = vmatpush1.xpose.msra.mxu0 0.0
    %6259 = vmatprep.subr.mxu0 0.0
    %6260 = vmatpush1.xpose.msra.mxu0 0.0
    %6261 = vmatprep.subr.mxu0 0.0
    %6262 = vmatpush1.xpose.msra.mxu0 0.0
    %6263 = vmatprep.mubr.f32.mxu0 0.0
    %v6264 = vand.u32 %v5766, 4294901760
    %6265 = vmatmul.mubr.f32.gmra.mrb[0].mxu0 %v6264
    %v6266 = vpop.f32.mrb[0].mxu0
    %v6267 = vadd.f32 %v6188, %v6266
    %v6268 = vpop.f32.mrb[0].mxu0
    %6269 = vmatprep.mubr.f32.mxu0 0.0
    %v6270 = vand.u32 %v5768, 4294901760
    %6271 = vmatmul.mubr.f32.gmra.mrb[0].mxu0 %v6270
    %v6272 = vpop.f32.mrb[0].mxu0
    %v6273 = vadd.f32 %v6194, %v6272
    %v6274 = vpop.f32.mrb[0].mxu0
    %6275 = vdwg.mxu0
    %v6276 = vmul.f32 %v6267, 0.25
    %v6277 = vmul.f32 %v6273, 0.25
    %v6278 = vadd.f32 %v6276, %v72
    %v6279 = vadd.f32 %v6277, %v73
    %v6280 = vsel %vm664, %v6278, -inf
    %6281 = vmax.xlane.f32.xlu0 %v6280
    %v6282 = vpop.xlane.xlu0 %6281
    %v6283 = vsel %vm664, %v6279, -inf
    %6284 = vmax.xlane.f32.xlu0 %v6283
    %v6285 = vpop.xlane.xlu0 %6284
    %v6286 = vsub.f32 %v6278, %v6282
    %v6287 = vsub.f32 %v6279, %v6285
    %v6288 = vmul.f32 %v6286, 1.442695
    %v6289 = vpow.pop %v6288
    %v6290 = vmul.f32 %v6287, 1.442695
    %v6291 = vpow.pop %v6290
    %v6292 = vsel %vm664, %v6289, 0.0
    %6293 = vadd.xlane.f32.xlu0 %v6292
    %v6294 = vpop.xlane.xlu0 %6293
    %v6295 = vsel %vm664, %v6291, 0.0
    %6296 = vadd.xlane.f32.xlu0 %v6295
    %v6297 = vpop.xlane.xlu0 %6296
    %v6298 = vrcp.pop %v6294
    %v6299 = vrcp.pop %v6297
    %v6300 = vmul.f32 %v6289, %v6298
    %v6301 = vmul.f32 %v6291, %v6299
    %6302 = vrot.lane.b32.xlu0 %v5746, 64
    %v6303 = vpop.permute.xlu0 %6302
    %6304 = vrot.lane.b32.xlu0 %v5752, 64
    %v6305 = vpop.permute.xlu0 %6304
    %v6309 = vsel %vm664, %v6300, 0
    %v6312 = vsel %vm664, %v6301, 0
    %6314 = vmatprep.subr.mxu0 0.0
    %v6315 = vand.u32 %v6303, 4294901760
    %6316 = vmatpush1.msra.mxu0 %v6315
    %6317 = vmatprep.subr.mxu0 0.0
    %v6318 = vand.u32 %v6305, 4294901760
    %6319 = vmatpush1.msra.mxu0 %v6318
    %6320 = vmatprep.subr.mxu0 0.0
    %6321 = vmatpush1.msra.mxu0 0.0
    %6322 = vmatprep.subr.mxu0 0.0
    %6323 = vmatpush1.msra.mxu0 0.0
    %6324 = vmatprep.subr.mxu0 0.0
    %6325 = vmatpush1.msra.mxu0 0.0
    %6326 = vmatprep.subr.mxu0 0.0
    %6327 = vmatpush1.msra.mxu0 0.0
    %6328 = vmatprep.subr.mxu0 0.0
    %6329 = vmatpush1.msra.mxu0 0.0
    %6330 = vmatprep.subr.mxu0 0.0
    %6331 = vmatpush1.msra.mxu0 0.0
    %6332 = vmatprep.subr.mxu0 0.0
    %6333 = vmatpush1.msra.mxu0 0.0
    %6334 = vmatprep.subr.mxu0 0.0
    %6335 = vmatpush1.msra.mxu0 0.0
    %6336 = vmatprep.subr.mxu0 0.0
    %6337 = vmatpush1.msra.mxu0 0.0
    %6338 = vmatprep.subr.mxu0 0.0
    %6339 = vmatpush1.msra.mxu0 0.0
    %6340 = vmatprep.subr.mxu0 0.0
    %6341 = vmatpush1.msra.mxu0 0.0
    %6342 = vmatprep.subr.mxu0 0.0
    %6343 = vmatpush1.msra.mxu0 0.0
    %6344 = vmatprep.subr.mxu0 0.0
    %6345 = vmatpush1.msra.mxu0 0.0
    %6346 = vmatprep.subr.mxu0 0.0
    %6347 = vmatpush1.msra.mxu0 0.0
    %6348 = vmatprep.subr.mxu0 0.0
    %6349 = vmatpush1.msra.mxu0 0.0
    %6350 = vmatprep.subr.mxu0 0.0
    %6351 = vmatpush1.msra.mxu0 0.0
    %6352 = vmatprep.subr.mxu0 0.0
    %6353 = vmatpush1.msra.mxu0 0.0
    %6354 = vmatprep.subr.mxu0 0.0
    %6355 = vmatpush1.msra.mxu0 0.0
    %6356 = vmatprep.subr.mxu0 0.0
    %6357 = vmatpush1.msra.mxu0 0.0
    %6358 = vmatprep.subr.mxu0 0.0
    %6359 = vmatpush1.msra.mxu0 0.0
    %6360 = vmatprep.subr.mxu0 0.0
    %6361 = vmatpush1.msra.mxu0 0.0
    %6362 = vmatprep.subr.mxu0 0.0
    %6363 = vmatpush1.msra.mxu0 0.0
    %6364 = vmatprep.subr.mxu0 0.0
    %6365 = vmatpush1.msra.mxu0 0.0
    %6366 = vmatprep.subr.mxu0 0.0
    %6367 = vmatpush1.msra.mxu0 0.0
    %6368 = vmatprep.subr.mxu0 0.0
    %6369 = vmatpush1.msra.mxu0 0.0
    %6370 = vmatprep.subr.mxu0 0.0
    %6371 = vmatpush1.msra.mxu0 0.0
    %6372 = vmatprep.subr.mxu0 0.0
    %6373 = vmatpush1.msra.mxu0 0.0
    %6374 = vmatprep.subr.mxu0 0.0
    %6375 = vmatpush1.msra.mxu0 0.0
    %6376 = vmatprep.subr.mxu0 0.0
    %6377 = vmatpush1.msra.mxu0 0.0
    %6378 = vmatprep.subr.mxu0 0.0
    %6379 = vmatpush1.msra.mxu0 0.0
    %6380 = vmatprep.mubr.f32.mxu0 0.0
    %v6381 = vand.u32 %v6309, 4294901760
    %v6382 = vsub.f32 %v6309, %v6381
    %v6383 = vand.u32 %v6382, 4294901760
    %v6384 = vsub.f32 %v6382, %v6383
    %v6385 = vand.u32 %v6384, 4294901760
    %6386 = vmatmul.mubr.f32.gmra.mrb[0].mxu0 %v6385
    %v6387 = vpop.f32.mrb[0].mxu0
    %v6388 = vadd.f32 0.0, %v6387
    %v6389 = vpop.f32.mrb[0].mxu0
    %6390 = vmatprep.mubr.f32.mxu0 0.0
    %v6391 = vand.u32 %v6312, 4294901760
    %v6392 = vsub.f32 %v6312, %v6391
    %v6393 = vand.u32 %v6392, 4294901760
    %v6394 = vsub.f32 %v6392, %v6393
    %v6395 = vand.u32 %v6394, 4294901760
    %6396 = vmatmul.mubr.f32.gmra.mrb[0].mxu0 %v6395
    %v6397 = vpop.f32.mrb[0].mxu0
    %v6398 = vadd.f32 0.0, %v6397
    %v6399 = vpop.f32.mrb[0].mxu0
    %6400 = vdwg.mxu0
    %6401 = vmatprep.subr.mxu0 0.0
    %v6402 = vand.u32 %v6303, 4294901760
    %v6403 = vsub.f32 %v6303, %v6402
    %v6404 = vand.u32 %v6403, 4294901760
    %v6405 = vsub.f32 %v6403, %v6404
    %v6406 = vand.u32 %v6405, 4294901760
    %6407 = vmatpush1.msra.mxu0 %v6406
    %6408 = vmatprep.subr.mxu0 0.0
    %v6409 = vand.u32 %v6305, 4294901760
    %v6410 = vsub.f32 %v6305, %v6409
    %v6411 = vand.u32 %v6410, 4294901760
    %v6412 = vsub.f32 %v6410, %v6411
    %v6413 = vand.u32 %v6412, 4294901760
    %6414 = vmatpush1.msra.mxu0 %v6413
    %6415 = vmatprep.subr.mxu0 0.0
    %6416 = vmatpush1.msra.mxu0 0.0
    %6417 = vmatprep.subr.mxu0 0.0
    %6418 = vmatpush1.msra.mxu0 0.0
    %6419 = vmatprep.subr.mxu0 0.0
    %6420 = vmatpush1.msra.mxu0 0.0
    %6421 = vmatprep.subr.mxu0 0.0
    %6422 = vmatpush1.msra.mxu0 0.0
    %6423 = vmatprep.subr.mxu0 0.0
    %6424 = vmatpush1.msra.mxu0 0.0
    %6425 = vmatprep.subr.mxu0 0.0
    %6426 = vmatpush1.msra.mxu0 0.0
    %6427 = vmatprep.subr.mxu0 0.0
    %6428 = vmatpush1.msra.mxu0 0.0
    %6429 = vmatprep.subr.mxu0 0.0
    %6430 = vmatpush1.msra.mxu0 0.0
    %6431 = vmatprep.subr.mxu0 0.0
    %6432 = vmatpush1.msra.mxu0 0.0
    %6433 = vmatprep.subr.mxu0 0.0
    %6434 = vmatpush1.msra.mxu0 0.0
    %6435 = vmatprep.subr.mxu0 0.0
    %6436 = vmatpush1.msra.mxu0 0.0
    %6437 = vmatprep.subr.mxu0 0.0
    %6438 = vmatpush1.msra.mxu0 0.0
    %6439 = vmatprep.subr.mxu0 0.0
    %6440 = vmatpush1.msra.mxu0 0.0
    %6441 = vmatprep.subr.mxu0 0.0
    %6442 = vmatpush1.msra.mxu0 0.0
    %6443 = vmatprep.subr.mxu0 0.0
    %6444 = vmatpush1.msra.mxu0 0.0
    %6445 = vmatprep.subr.mxu0 0.0
    %6446 = vmatpush1.msra.mxu0 0.0
    %6447 = vmatprep.subr.mxu0 0.0
    %6448 = vmatpush1.msra.mxu0 0.0
    %6449 = vmatprep.subr.mxu0 0.0
    %6450 = vmatpush1.msra.mxu0 0.0
    %6451 = vmatprep.subr.mxu0 0.0
    %6452 = vmatpush1.msra.mxu0 0.0
    %6453 = vmatprep.subr.mxu0 0.0
    %6454 = vmatpush1.msra.mxu0 0.0
    %6455 = vmatprep.subr.mxu0 0.0
    %6456 = vmatpush1.msra.mxu0 0.0
    %6457 = vmatprep.subr.mxu0 0.0
    %6458 = vmatpush1.msra.mxu0 0.0
    %6459 = vmatprep.subr.mxu0 0.0
    %6460 = vmatpush1.msra.mxu0 0.0
    %6461 = vmatprep.subr.mxu0 0.0
    %6462 = vmatpush1.msra.mxu0 0.0
    %6463 = vmatprep.subr.mxu0 0.0
    %6464 = vmatpush1.msra.mxu0 0.0
    %6465 = vmatprep.subr.mxu0 0.0
    %6466 = vmatpush1.msra.mxu0 0.0
    %6467 = vmatprep.subr.mxu0 0.0
    %6468 = vmatpush1.msra.mxu0 0.0
    %6469 = vmatprep.subr.mxu0 0.0
    %6470 = vmatpush1.msra.mxu0 0.0
    %6471 = vmatprep.subr.mxu0 0.0
    %6472 = vmatpush1.msra.mxu0 0.0
    %6473 = vmatprep.subr.mxu0 0.0
    %6474 = vmatpush1.msra.mxu0 0.0
    %6475 = vmatprep.mubr.f32.mxu0 0.0
    %v6476 = vand.u32 %v6309, 4294901760
    %6477 = vmatmul.mubr.f32.gmra.mrb[0].mxu0 %v6476
    %v6478 = vpop.f32.mrb[0].mxu0
    %v6479 = vadd.f32 %v6388, %v6478
    %v6480 = vpop.f32.mrb[0].mxu0
    %6481 = vmatprep.mubr.f32.mxu0 0.0
    %v6482 = vand.u32 %v6312, 4294901760
    %6483 = vmatmul.mubr.f32.gmra.mrb[0].mxu0 %v6482
    %v6484 = vpop.f32.mrb[0].mxu0
    %v6485 = vadd.f32 %v6398, %v6484
    %v6486 = vpop.f32.mrb[0].mxu0
    %6487 = vdwg.mxu0
    %6488 = vmatprep.subr.mxu0 0.0
    %v6489 = vand.u32 %v6303, 4294901760
    %v6490 = vsub.f32 %v6303, %v6489
    %6491 = vmatpush1.msra.mxu0 %v6490
    %6492 = vmatprep.subr.mxu0 0.0
    %v6493 = vand.u32 %v6305, 4294901760
    %v6494 = vsub.f32 %v6305, %v6493
    %6495 = vmatpush1.msra.mxu0 %v6494
    %6496 = vmatprep.subr.mxu0 0.0
    %6497 = vmatpush1.msra.mxu0 0.0
    %6498 = vmatprep.subr.mxu0 0.0
    %6499 = vmatpush1.msra.mxu0 0.0
    %6500 = vmatprep.subr.mxu0 0.0
    %6501 = vmatpush1.msra.mxu0 0.0
    %6502 = vmatprep.subr.mxu0 0.0
    %6503 = vmatpush1.msra.mxu0 0.0
    %6504 = vmatprep.subr.mxu0 0.0
    %6505 = vmatpush1.msra.mxu0 0.0
    %6506 = vmatprep.subr.mxu0 0.0
    %6507 = vmatpush1.msra.mxu0 0.0
    %6508 = vmatprep.subr.mxu0 0.0
    %6509 = vmatpush1.msra.mxu0 0.0
    %6510 = vmatprep.subr.mxu0 0.0
    %6511 = vmatpush1.msra.mxu0 0.0
    %6512 = vmatprep.subr.mxu0 0.0
    %6513 = vmatpush1.msra.mxu0 0.0
    %6514 = vmatprep.subr.mxu0 0.0
    %6515 = vmatpush1.msra.mxu0 0.0
    %6516 = vmatprep.subr.mxu0 0.0
    %6517 = vmatpush1.msra.mxu0 0.0
    %6518 = vmatprep.subr.mxu0 0.0
    %6519 = vmatpush1.msra.mxu0 0.0
    %6520 = vmatprep.subr.mxu0 0.0
    %6521 = vmatpush1.msra.mxu0 0.0
    %6522 = vmatprep.subr.mxu0 0.0
    %6523 = vmatpush1.msra.mxu0 0.0
    %6524 = vmatprep.subr.mxu0 0.0
    %6525 = vmatpush1.msra.mxu0 0.0
    %6526 = vmatprep.subr.mxu0 0.0
    %6527 = vmatpush1.msra.mxu0 0.0
    %6528 = vmatprep.subr.mxu0 0.0
    %6529 = vmatpush1.msra.mxu0 0.0
    %6530 = vmatprep.subr.mxu0 0.0
    %6531 = vmatpush1.msra.mxu0 0.0
    %6532 = vmatprep.subr.mxu0 0.0
    %6533 = vmatpush1.msra.mxu0 0.0
    %6534 = vmatprep.subr.mxu0 0.0
    %6535 = vmatpush1.msra.mxu0 0.0
    %6536 = vmatprep.subr.mxu0 0.0
    %6537 = vmatpush1.msra.mxu0 0.0
    %6538 = vmatprep.subr.mxu0 0.0
    %6539 = vmatpush1.msra.mxu0 0.0
    %6540 = vmatprep.subr.mxu0 0.0
    %6541 = vmatpush1.msra.mxu0 0.0
    %6542 = vmatprep.subr.mxu0 0.0
    %6543 = vmatpush1.msra.mxu0 0.0
    %6544 = vmatprep.subr.mxu0 0.0
    %6545 = vmatpush1.msra.mxu0 0.0
    %6546 = vmatprep.subr.mxu0 0.0
    %6547 = vmatpush1.msra.mxu0 0.0
    %6548 = vmatprep.subr.mxu0 0.0
    %6549 = vmatpush1.msra.mxu0 0.0
    %6550 = vmatprep.subr.mxu0 0.0
    %6551 = vmatpush1.msra.mxu0 0.0
    %6552 = vmatprep.subr.mxu0 0.0
    %6553 = vmatpush1.msra.mxu0 0.0
    %6554 = vmatprep.subr.mxu0 0.0
    %6555 = vmatpush1.msra.mxu0 0.0
    %6556 = vmatprep.mubr.f32.mxu0 0.0
    %v6557 = vand.u32 %v6309, 4294901760
    %v6558 = vsub.f32 %v6309, %v6557
    %6559 = vmatmul.mubr.f32.gmra.mrb[0].mxu0 %v6558
    %v6560 = vpop.f32.mrb[0].mxu0
    %v6561 = vadd.f32 %v6479, %v6560
    %v6562 = vpop.f32.mrb[0].mxu0
    %6563 = vmatprep.mubr.f32.mxu0 0.0
    %v6564 = vand.u32 %v6312, 4294901760
    %v6565 = vsub.f32 %v6312, %v6564
    %6566 = vmatmul.mubr.f32.gmra.mrb[0].mxu0 %v6565
    %v6567 = vpop.f32.mrb[0].mxu0
    %v6568 = vadd.f32 %v6485, %v6567
    %v6569 = vpop.f32.mrb[0].mxu0
    %6570 = vdwg.mxu0
    %6571 = vmatprep.subr.mxu0 0.0
    %v6572 = vand.u32 %v6303, 4294901760
    %6573 = vmatpush1.msra.mxu0 %v6572
    %6574 = vmatprep.subr.mxu0 0.0
    %v6575 = vand.u32 %v6305, 4294901760
    %6576 = vmatpush1.msra.mxu0 %v6575
    %6577 = vmatprep.subr.mxu0 0.0
    %6578 = vmatpush1.msra.mxu0 0.0
    %6579 = vmatprep.subr.mxu0 0.0
    %6580 = vmatpush1.msra.mxu0 0.0
    %6581 = vmatprep.subr.mxu0 0.0
    %6582 = vmatpush1.msra.mxu0 0.0
    %6583 = vmatprep.subr.mxu0 0.0
    %6584 = vmatpush1.msra.mxu0 0.0
    %6585 = vmatprep.subr.mxu0 0.0
    %6586 = vmatpush1.msra.mxu0 0.0
    %6587 = vmatprep.subr.mxu0 0.0
    %6588 = vmatpush1.msra.mxu0 0.0
    %6589 = vmatprep.subr.mxu0 0.0
    %6590 = vmatpush1.msra.mxu0 0.0
    %6591 = vmatprep.subr.mxu0 0.0
    %6592 = vmatpush1.msra.mxu0 0.0
    %6593 = vmatprep.subr.mxu0 0.0
    %6594 = vmatpush1.msra.mxu0 0.0
    %6595 = vmatprep.subr.mxu0 0.0
    %6596 = vmatpush1.msra.mxu0 0.0
    %6597 = vmatprep.subr.mxu0 0.0
    %6598 = vmatpush1.msra.mxu0 0.0
    %6599 = vmatprep.subr.mxu0 0.0
    %6600 = vmatpush1.msra.mxu0 0.0
    %6601 = vmatprep.subr.mxu0 0.0
    %6602 = vmatpush1.msra.mxu0 0.0
    %6603 = vmatprep.subr.mxu0 0.0
    %6604 = vmatpush1.msra.mxu0 0.0
    %6605 = vmatprep.subr.mxu0 0.0
    %6606 = vmatpush1.msra.mxu0 0.0
    %6607 = vmatprep.subr.mxu0 0.0
    %6608 = vmatpush1.msra.mxu0 0.0
    %6609 = vmatprep.subr.mxu0 0.0
    %6610 = vmatpush1.msra.mxu0 0.0
    %6611 = vmatprep.subr.mxu0 0.0
    %6612 = vmatpush1.msra.mxu0 0.0
    %6613 = vmatprep.subr.mxu0 0.0
    %6614 = vmatpush1.msra.mxu0 0.0
    %6615 = vmatprep.subr.mxu0 0.0
    %6616 = vmatpush1.msra.mxu0 0.0
    %6617 = vmatprep.subr.mxu0 0.0
    %6618 = vmatpush1.msra.mxu0 0.0
    %6619 = vmatprep.subr.mxu0 0.0
    %6620 = vmatpush1.msra.mxu0 0.0
    %6621 = vmatprep.subr.mxu0 0.0
    %6622 = vmatpush1.msra.mxu0 0.0
    %6623 = vmatprep.subr.mxu0 0.0
    %6624 = vmatpush1.msra.mxu0 0.0
    %6625 = vmatprep.subr.mxu0 0.0
    %6626 = vmatpush1.msra.mxu0 0.0
    %6627 = vmatprep.subr.mxu0 0.0
    %6628 = vmatpush1.msra.mxu0 0.0
    %6629 = vmatprep.subr.mxu0 0.0
    %6630 = vmatpush1.msra.mxu0 0.0
    %6631 = vmatprep.subr.mxu0 0.0
    %6632 = vmatpush1.msra.mxu0 0.0
    %6633 = vmatprep.subr.mxu0 0.0
    %6634 = vmatpush1.msra.mxu0 0.0
    %6635 = vmatprep.subr.mxu0 0.0
    %6636 = vmatpush1.msra.mxu0 0.0
    %6637 = vmatprep.mubr.f32.mxu0 0.0
    %v6638 = vand.u32 %v6309, 4294901760
    %v6639 = vsub.f32 %v6309, %v6638
    %v6640 = vand.u32 %v6639, 4294901760
    %6641 = vmatmul.mubr.f32.gmra.mrb[0].mxu0 %v6640
    %v6642 = vpop.f32.mrb[0].mxu0
    %v6643 = vadd.f32 %v6561, %v6642
    %v6644 = vpop.f32.mrb[0].mxu0
    %6645 = vmatprep.mubr.f32.mxu0 0.0
    %v6646 = vand.u32 %v6312, 4294901760
    %v6647 = vsub.f32 %v6312, %v6646
    %v6648 = vand.u32 %v6647, 4294901760
    %6649 = vmatmul.mubr.f32.gmra.mrb[0].mxu0 %v6648
    %v6650 = vpop.f32.mrb[0].mxu0
    %v6651 = vadd.f32 %v6568, %v6650
    %v6652 = vpop.f32.mrb[0].mxu0
    %6653 = vdwg.mxu0
    %6654 = vmatprep.subr.mxu0 0.0
    %v6655 = vand.u32 %v6303, 4294901760
    %v6656 = vsub.f32 %v6303, %v6655
    %v6657 = vand.u32 %v6656, 4294901760
    %6658 = vmatpush1.msra.mxu0 %v6657
    %6659 = vmatprep.subr.mxu0 0.0
    %v6660 = vand.u32 %v6305, 4294901760
    %v6661 = vsub.f32 %v6305, %v6660
    %v6662 = vand.u32 %v6661, 4294901760
    %6663 = vmatpush1.msra.mxu0 %v6662
    %6664 = vmatprep.subr.mxu0 0.0
    %6665 = vmatpush1.msra.mxu0 0.0
    %6666 = vmatprep.subr.mxu0 0.0
    %6667 = vmatpush1.msra.mxu0 0.0
    %6668 = vmatprep.subr.mxu0 0.0
    %6669 = vmatpush1.msra.mxu0 0.0
    %6670 = vmatprep.subr.mxu0 0.0
    %6671 = vmatpush1.msra.mxu0 0.0
    %6672 = vmatprep.subr.mxu0 0.0
    %6673 = vmatpush1.msra.mxu0 0.0
    %6674 = vmatprep.subr.mxu0 0.0
    %6675 = vmatpush1.msra.mxu0 0.0
    %6676 = vmatprep.subr.mxu0 0.0
    %6677 = vmatpush1.msra.mxu0 0.0
    %6678 = vmatprep.subr.mxu0 0.0
    %6679 = vmatpush1.msra.mxu0 0.0
    %6680 = vmatprep.subr.mxu0 0.0
    %6681 = vmatpush1.msra.mxu0 0.0
    %6682 = vmatprep.subr.mxu0 0.0
    %6683 = vmatpush1.msra.mxu0 0.0
    %6684 = vmatprep.subr.mxu0 0.0
    %6685 = vmatpush1.msra.mxu0 0.0
    %6686 = vmatprep.subr.mxu0 0.0
    %6687 = vmatpush1.msra.mxu0 0.0
    %6688 = vmatprep.subr.mxu0 0.0
    %6689 = vmatpush1.msra.mxu0 0.0
    %6690 = vmatprep.subr.mxu0 0.0
    %6691 = vmatpush1.msra.mxu0 0.0
    %6692 = vmatprep.subr.mxu0 0.0
    %6693 = vmatpush1.msra.mxu0 0.0
    %6694 = vmatprep.subr.mxu0 0.0
    %6695 = vmatpush1.msra.mxu0 0.0
    %6696 = vmatprep.subr.mxu0 0.0
    %6697 = vmatpush1.msra.mxu0 0.0
    %6698 = vmatprep.subr.mxu0 0.0
    %6699 = vmatpush1.msra.mxu0 0.0
    %6700 = vmatprep.subr.mxu0 0.0
    %6701 = vmatpush1.msra.mxu0 0.0
    %6702 = vmatprep.subr.mxu0 0.0
    %6703 = vmatpush1.msra.mxu0 0.0
    %6704 = vmatprep.subr.mxu0 0.0
    %6705 = vmatpush1.msra.mxu0 0.0
    %6706 = vmatprep.subr.mxu0 0.0
    %6707 = vmatpush1.msra.mxu0 0.0
    %6708 = vmatprep.subr.mxu0 0.0
    %6709 = vmatpush1.msra.mxu0 0.0
    %6710 = vmatprep.subr.mxu0 0.0
    %6711 = vmatpush1.msra.mxu0 0.0
    %6712 = vmatprep.subr.mxu0 0.0
    %6713 = vmatpush1.msra.mxu0 0.0
    %6714 = vmatprep.subr.mxu0 0.0
    %6715 = vmatpush1.msra.mxu0 0.0
    %6716 = vmatprep.subr.mxu0 0.0
    %6717 = vmatpush1.msra.mxu0 0.0
    %6718 = vmatprep.subr.mxu0 0.0
    %6719 = vmatpush1.msra.mxu0 0.0
    %6720 = vmatprep.subr.mxu0 0.0
    %6721 = vmatpush1.msra.mxu0 0.0
    %6722 = vmatprep.subr.mxu0 0.0
    %6723 = vmatpush1.msra.mxu0 0.0
    %6724 = vmatprep.mubr.f32.mxu0 0.0
    %v6725 = vand.u32 %v6309, 4294901760
    %6726 = vmatmul.mubr.f32.gmra.mrb[0].mxu0 %v6725
    %v6727 = vpop.f32.mrb[0].mxu0
    %v6728 = vadd.f32 %v6643, %v6727
    %v6729 = vpop.f32.mrb[0].mxu0
    %6730 = vmatprep.mubr.f32.mxu0 0.0
    %v6731 = vand.u32 %v6312, 4294901760
    %6732 = vmatmul.mubr.f32.gmra.mrb[0].mxu0 %v6731
    %v6733 = vpop.f32.mrb[0].mxu0
    %v6734 = vadd.f32 %v6651, %v6733
    %v6735 = vpop.f32.mrb[0].mxu0
    %6736 = vdwg.mxu0
    %6737 = vmatprep.subr.mxu0 0.0
    %v6738 = vand.u32 %v6303, 4294901760
    %6739 = vmatpush1.msra.mxu0 %v6738
    %6740 = vmatprep.subr.mxu0 0.0
    %v6741 = vand.u32 %v6305, 4294901760
    %6742 = vmatpush1.msra.mxu0 %v6741
    %6743 = vmatprep.subr.mxu0 0.0
    %6744 = vmatpush1.msra.mxu0 0.0
    %6745 = vmatprep.subr.mxu0 0.0
    %6746 = vmatpush1.msra.mxu0 0.0
    %6747 = vmatprep.subr.mxu0 0.0
    %6748 = vmatpush1.msra.mxu0 0.0
    %6749 = vmatprep.subr.mxu0 0.0
    %6750 = vmatpush1.msra.mxu0 0.0
    %6751 = vmatprep.subr.mxu0 0.0
    %6752 = vmatpush1.msra.mxu0 0.0
    %6753 = vmatprep.subr.mxu0 0.0
    %6754 = vmatpush1.msra.mxu0 0.0
    %6755 = vmatprep.subr.mxu0 0.0
    %6756 = vmatpush1.msra.mxu0 0.0
    %6757 = vmatprep.subr.mxu0 0.0
    %6758 = vmatpush1.msra.mxu0 0.0
    %6759 = vmatprep.subr.mxu0 0.0
    %6760 = vmatpush1.msra.mxu0 0.0
    %6761 = vmatprep.subr.mxu0 0.0
    %6762 = vmatpush1.msra.mxu0 0.0
    %6763 = vmatprep.subr.mxu0 0.0
    %6764 = vmatpush1.msra.mxu0 0.0
    %6765 = vmatprep.subr.mxu0 0.0
    %6766 = vmatpush1.msra.mxu0 0.0
    %6767 = vmatprep.subr.mxu0 0.0
    %6768 = vmatpush1.msra.mxu0 0.0
    %6769 = vmatprep.subr.mxu0 0.0
    %6770 = vmatpush1.msra.mxu0 0.0
    %6771 = vmatprep.subr.mxu0 0.0
    %6772 = vmatpush1.msra.mxu0 0.0
    %6773 = vmatprep.subr.mxu0 0.0
    %6774 = vmatpush1.msra.mxu0 0.0
    %6775 = vmatprep.subr.mxu0 0.0
    %6776 = vmatpush1.msra.mxu0 0.0
    %6777 = vmatprep.subr.mxu0 0.0
    %6778 = vmatpush1.msra.mxu0 0.0
    %6779 = vmatprep.subr.mxu0 0.0
    %6780 = vmatpush1.msra.mxu0 0.0
    %6781 = vmatprep.subr.mxu0 0.0
    %6782 = vmatpush1.msra.mxu0 0.0
    %6783 = vmatprep.subr.mxu0 0.0
    %6784 = vmatpush1.msra.mxu0 0.0
    %6785 = vmatprep.subr.mxu0 0.0
    %6786 = vmatpush1.msra.mxu0 0.0
    %6787 = vmatprep.subr.mxu0 0.0
    %6788 = vmatpush1.msra.mxu0 0.0
    %6789 = vmatprep.subr.mxu0 0.0
    %6790 = vmatpush1.msra.mxu0 0.0
    %6791 = vmatprep.subr.mxu0 0.0
    %6792 = vmatpush1.msra.mxu0 0.0
    %6793 = vmatprep.subr.mxu0 0.0
    %6794 = vmatpush1.msra.mxu0 0.0
    %6795 = vmatprep.subr.mxu0 0.0
    %6796 = vmatpush1.msra.mxu0 0.0
    %6797 = vmatprep.subr.mxu0 0.0
    %6798 = vmatpush1.msra.mxu0 0.0
    %6799 = vmatprep.subr.mxu0 0.0
    %6800 = vmatpush1.msra.mxu0 0.0
    %6801 = vmatprep.subr.mxu0 0.0
    %6802 = vmatpush1.msra.mxu0 0.0
    %6803 = vmatprep.mubr.f32.mxu0 0.0
    %v6804 = vand.u32 %v6309, 4294901760
    %6805 = vmatmul.mubr.f32.gmra.mrb[0].mxu0 %v6804
    %v6806 = vpop.f32.mrb[0].mxu0
    %v6807 = vadd.f32 %v6728, %v6806
    %v6808 = vpop.f32.mrb[0].mxu0
    %6809 = vmatprep.mubr.f32.mxu0 0.0
    %v6810 = vand.u32 %v6312, 4294901760
    %6811 = vmatmul.mubr.f32.gmra.mrb[0].mxu0 %v6810
    %v6812 = vpop.f32.mrb[0].mxu0
    %v6813 = vadd.f32 %v6734, %v6812
    %v6814 = vpop.f32.mrb[0].mxu0
    %6815 = vdwg.mxu0
    %6816 = vrot.lane.b32.xlu0 %v5746, 112
    %v6817 = vpop.permute.xlu0 %6816
    %6818 = vrot.lane.b32.xlu0 %v5752, 112
    %v6819 = vpop.permute.xlu0 %6818
    %6820 = vrot.lane.b32.xlu0 %v5746, 80
    %v6821 = vpop.permute.xlu0 %6820
    %6822 = vrot.lane.b32.xlu0 %v5752, 80
    %v6823 = vpop.permute.xlu0 %6822
    %v6824 = vsel %vm664, %v6817, 0
    %v6826 = vsel %vm664, %v6819, 0
    %v6828 = vsel %vm664, %v6821, 0
    %v6830 = vsel %vm664, %v6823, 0
    %6832 = vmatprep.subr.mxu0 0.0
    %v6833 = vand.u32 %v6828, 4294901760
    %6834 = vmatpush1.xpose.msra.mxu0 %v6833
    %6835 = vmatprep.subr.mxu0 0.0
    %v6836 = vand.u32 %v6830, 4294901760
    %6837 = vmatpush1.xpose.msra.mxu0 %v6836
    %6838 = vmatprep.subr.mxu0 0.0
    %6839 = vmatpush1.xpose.msra.mxu0 0.0
    %6840 = vmatprep.subr.mxu0 0.0
    %6841 = vmatpush1.xpose.msra.mxu0 0.0
    %6842 = vmatprep.subr.mxu0 0.0
    %6843 = vmatpush1.xpose.msra.mxu0 0.0
    %6844 = vmatprep.subr.mxu0 0.0
    %6845 = vmatpush1.xpose.msra.mxu0 0.0
    %6846 = vmatprep.subr.mxu0 0.0
    %6847 = vmatpush1.xpose.msra.mxu0 0.0
    %6848 = vmatprep.subr.mxu0 0.0
    %6849 = vmatpush1.xpose.msra.mxu0 0.0
    %6850 = vmatprep.subr.mxu0 0.0
    %6851 = vmatpush1.xpose.msra.mxu0 0.0
    %6852 = vmatprep.subr.mxu0 0.0
    %6853 = vmatpush1.xpose.msra.mxu0 0.0
    %6854 = vmatprep.subr.mxu0 0.0
    %6855 = vmatpush1.xpose.msra.mxu0 0.0
    %6856 = vmatprep.subr.mxu0 0.0
    %6857 = vmatpush1.xpose.msra.mxu0 0.0
    %6858 = vmatprep.subr.mxu0 0.0
    %6859 = vmatpush1.xpose.msra.mxu0 0.0
    %6860 = vmatprep.subr.mxu0 0.0
    %6861 = vmatpush1.xpose.msra.mxu0 0.0
    %6862 = vmatprep.subr.mxu0 0.0
    %6863 = vmatpush1.xpose.msra.mxu0 0.0
    %6864 = vmatprep.subr.mxu0 0.0
    %6865 = vmatpush1.xpose.msra.mxu0 0.0
    %6866 = vmatprep.subr.mxu0 0.0
    %6867 = vmatpush1.xpose.msra.mxu0 0.0
    %6868 = vmatprep.subr.mxu0 0.0
    %6869 = vmatpush1.xpose.msra.mxu0 0.0
    %6870 = vmatprep.subr.mxu0 0.0
    %6871 = vmatpush1.xpose.msra.mxu0 0.0
    %6872 = vmatprep.subr.mxu0 0.0
    %6873 = vmatpush1.xpose.msra.mxu0 0.0
    %6874 = vmatprep.subr.mxu0 0.0
    %6875 = vmatpush1.xpose.msra.mxu0 0.0
    %6876 = vmatprep.subr.mxu0 0.0
    %6877 = vmatpush1.xpose.msra.mxu0 0.0
    %6878 = vmatprep.subr.mxu0 0.0
    %6879 = vmatpush1.xpose.msra.mxu0 0.0
    %6880 = vmatprep.subr.mxu0 0.0
    %6881 = vmatpush1.xpose.msra.mxu0 0.0
    %6882 = vmatprep.subr.mxu0 0.0
    %6883 = vmatpush1.xpose.msra.mxu0 0.0
    %6884 = vmatprep.subr.mxu0 0.0
    %6885 = vmatpush1.xpose.msra.mxu0 0.0
    %6886 = vmatprep.subr.mxu0 0.0
    %6887 = vmatpush1.xpose.msra.mxu0 0.0
    %6888 = vmatprep.subr.mxu0 0.0
    %6889 = vmatpush1.xpose.msra.mxu0 0.0
    %6890 = vmatprep.subr.mxu0 0.0
    %6891 = vmatpush1.xpose.msra.mxu0 0.0
    %6892 = vmatprep.subr.mxu0 0.0
    %6893 = vmatpush1.xpose.msra.mxu0 0.0
    %6894 = vmatprep.subr.mxu0 0.0
    %6895 = vmatpush1.xpose.msra.mxu0 0.0
    %6896 = vmatprep.subr.mxu0 0.0
    %6897 = vmatpush1.xpose.msra.mxu0 0.0
    %6898 = vmatprep.mubr.f32.mxu0 0.0
    %v6899 = vand.u32 %v6824, 4294901760
    %v6900 = vsub.f32 %v6824, %v6899
    %v6901 = vand.u32 %v6900, 4294901760
    %v6902 = vsub.f32 %v6900, %v6901
    %v6903 = vand.u32 %v6902, 4294901760
    %6904 = vmatmul.mubr.f32.gmra.mrb[0].mxu0 %v6903
    %v6905 = vpop.f32.mrb[0].mxu0
    %v6906 = vadd.f32 0.0, %v6905
    %v6907 = vpop.f32.mrb[0].mxu0
    %6908 = vmatprep.mubr.f32.mxu0 0.0
    %v6909 = vand.u32 %v6826, 4294901760
    %v6910 = vsub.f32 %v6826, %v6909
    %v6911 = vand.u32 %v6910, 4294901760
    %v6912 = vsub.f32 %v6910, %v6911
    %v6913 = vand.u32 %v6912, 4294901760
    %6914 = vmatmul.mubr.f32.gmra.mrb[0].mxu0 %v6913
    %v6915 = vpop.f32.mrb[0].mxu0
    %v6916 = vadd.f32 0.0, %v6915
    %v6917 = vpop.f32.mrb[0].mxu0
    %6918 = vdwg.mxu0
    %6919 = vmatprep.subr.mxu0 0.0
    %v6920 = vand.u32 %v6828, 4294901760
    %v6921 = vsub.f32 %v6828, %v6920
    %v6922 = vand.u32 %v6921, 4294901760
    %v6923 = vsub.f32 %v6921, %v6922
    %v6924 = vand.u32 %v6923, 4294901760
    %6925 = vmatpush1.xpose.msra.mxu0 %v6924
    %6926 = vmatprep.subr.mxu0 0.0
    %v6927 = vand.u32 %v6830, 4294901760
    %v6928 = vsub.f32 %v6830, %v6927
    %v6929 = vand.u32 %v6928, 4294901760
    %v6930 = vsub.f32 %v6928, %v6929
    %v6931 = vand.u32 %v6930, 4294901760
    %6932 = vmatpush1.xpose.msra.mxu0 %v6931
    %6933 = vmatprep.subr.mxu0 0.0
    %6934 = vmatpush1.xpose.msra.mxu0 0.0
    %6935 = vmatprep.subr.mxu0 0.0
    %6936 = vmatpush1.xpose.msra.mxu0 0.0
    %6937 = vmatprep.subr.mxu0 0.0
    %6938 = vmatpush1.xpose.msra.mxu0 0.0
    %6939 = vmatprep.subr.mxu0 0.0
    %6940 = vmatpush1.xpose.msra.mxu0 0.0
    %6941 = vmatprep.subr.mxu0 0.0
    %6942 = vmatpush1.xpose.msra.mxu0 0.0
    %6943 = vmatprep.subr.mxu0 0.0
    %6944 = vmatpush1.xpose.msra.mxu0 0.0
    %6945 = vmatprep.subr.mxu0 0.0
    %6946 = vmatpush1.xpose.msra.mxu0 0.0
    %6947 = vmatprep.subr.mxu0 0.0
    %6948 = vmatpush1.xpose.msra.mxu0 0.0
    %6949 = vmatprep.subr.mxu0 0.0
    %6950 = vmatpush1.xpose.msra.mxu0 0.0
    %6951 = vmatprep.subr.mxu0 0.0
    %6952 = vmatpush1.xpose.msra.mxu0 0.0
    %6953 = vmatprep.subr.mxu0 0.0
    %6954 = vmatpush1.xpose.msra.mxu0 0.0
    %6955 = vmatprep.subr.mxu0 0.0
    %6956 = vmatpush1.xpose.msra.mxu0 0.0
    %6957 = vmatprep.subr.mxu0 0.0
    %6958 = vmatpush1.xpose.msra.mxu0 0.0
    %6959 = vmatprep.subr.mxu0 0.0
    %6960 = vmatpush1.xpose.msra.mxu0 0.0
    %6961 = vmatprep.subr.mxu0 0.0
    %6962 = vmatpush1.xpose.msra.mxu0 0.0
    %6963 = vmatprep.subr.mxu0 0.0
    %6964 = vmatpush1.xpose.msra.mxu0 0.0
    %6965 = vmatprep.subr.mxu0 0.0
    %6966 = vmatpush1.xpose.msra.mxu0 0.0
    %6967 = vmatprep.subr.mxu0 0.0
    %6968 = vmatpush1.xpose.msra.mxu0 0.0
    %6969 = vmatprep.subr.mxu0 0.0
    %6970 = vmatpush1.xpose.msra.mxu0 0.0
    %6971 = vmatprep.subr.mxu0 0.0
    %6972 = vmatpush1.xpose.msra.mxu0 0.0
    %6973 = vmatprep.subr.mxu0 0.0
    %6974 = vmatpush1.xpose.msra.mxu0 0.0
    %6975 = vmatprep.subr.mxu0 0.0
    %6976 = vmatpush1.xpose.msra.mxu0 0.0
    %6977 = vmatprep.subr.mxu0 0.0
    %6978 = vmatpush1.xpose.msra.mxu0 0.0
    %6979 = vmatprep.subr.mxu0 0.0
    %6980 = vmatpush1.xpose.msra.mxu0 0.0
    %6981 = vmatprep.subr.mxu0 0.0
    %6982 = vmatpush1.xpose.msra.mxu0 0.0
    %6983 = vmatprep.subr.mxu0 0.0
    %6984 = vmatpush1.xpose.msra.mxu0 0.0
    %6985 = vmatprep.subr.mxu0 0.0
    %6986 = vmatpush1.xpose.msra.mxu0 0.0
    %6987 = vmatprep.subr.mxu0 0.0
    %6988 = vmatpush1.xpose.msra.mxu0 0.0
    %6989 = vmatprep.subr.mxu0 0.0
    %6990 = vmatpush1.xpose.msra.mxu0 0.0
    %6991 = vmatprep.subr.mxu0 0.0
    %6992 = vmatpush1.xpose.msra.mxu0 0.0
    %6993 = vmatprep.mubr.f32.mxu0 0.0
    %v6994 = vand.u32 %v6824, 4294901760
    %6995 = vmatmul.mubr.f32.gmra.mrb[0].mxu0 %v6994
    %v6996 = vpop.f32.mrb[0].mxu0
    %v6997 = vadd.f32 %v6906, %v6996
    %v6998 = vpop.f32.mrb[0].mxu0
    %6999 = vmatprep.mubr.f32.mxu0 0.0
    %v7000 = vand.u32 %v6826, 4294901760
    %7001 = vmatmul.mubr.f32.gmra.mrb[0].mxu0 %v7000
    %v7002 = vpop.f32.mrb[0].mxu0
    %v7003 = vadd.f32 %v6916, %v7002
    %v7004 = vpop.f32.mrb[0].mxu0
    %7005 = vdwg.mxu0
    %7006 = vmatprep.subr.mxu0 0.0
    %v7007 = vand.u32 %v6828, 4294901760
    %v7008 = vsub.f32 %v6828, %v7007
    %7009 = vmatpush1.xpose.msra.mxu0 %v7008
    %7010 = vmatprep.subr.mxu0 0.0
    %v7011 = vand.u32 %v6830, 4294901760
    %v7012 = vsub.f32 %v6830, %v7011
    %7013 = vmatpush1.xpose.msra.mxu0 %v7012
    %7014 = vmatprep.subr.mxu0 0.0
    %7015 = vmatpush1.xpose.msra.mxu0 0.0
    %7016 = vmatprep.subr.mxu0 0.0
    %7017 = vmatpush1.xpose.msra.mxu0 0.0
    %7018 = vmatprep.subr.mxu0 0.0
    %7019 = vmatpush1.xpose.msra.mxu0 0.0
    %7020 = vmatprep.subr.mxu0 0.0
    %7021 = vmatpush1.xpose.msra.mxu0 0.0
    %7022 = vmatprep.subr.mxu0 0.0
    %7023 = vmatpush1.xpose.msra.mxu0 0.0
    %7024 = vmatprep.subr.mxu0 0.0
    %7025 = vmatpush1.xpose.msra.mxu0 0.0
    %7026 = vmatprep.subr.mxu0 0.0
    %7027 = vmatpush1.xpose.msra.mxu0 0.0
    %7028 = vmatprep.subr.mxu0 0.0
    %7029 = vmatpush1.xpose.msra.mxu0 0.0
    %7030 = vmatprep.subr.mxu0 0.0
    %7031 = vmatpush1.xpose.msra.mxu0 0.0
    %7032 = vmatprep.subr.mxu0 0.0
    %7033 = vmatpush1.xpose.msra.mxu0 0.0
    %7034 = vmatprep.subr.mxu0 0.0
    %7035 = vmatpush1.xpose.msra.mxu0 0.0
    %7036 = vmatprep.subr.mxu0 0.0
    %7037 = vmatpush1.xpose.msra.mxu0 0.0
    %7038 = vmatprep.subr.mxu0 0.0
    %7039 = vmatpush1.xpose.msra.mxu0 0.0
    %7040 = vmatprep.subr.mxu0 0.0
    %7041 = vmatpush1.xpose.msra.mxu0 0.0
    %7042 = vmatprep.subr.mxu0 0.0
    %7043 = vmatpush1.xpose.msra.mxu0 0.0
    %7044 = vmatprep.subr.mxu0 0.0
    %7045 = vmatpush1.xpose.msra.mxu0 0.0
    %7046 = vmatprep.subr.mxu0 0.0
    %7047 = vmatpush1.xpose.msra.mxu0 0.0
    %7048 = vmatprep.subr.mxu0 0.0
    %7049 = vmatpush1.xpose.msra.mxu0 0.0
    %7050 = vmatprep.subr.mxu0 0.0
    %7051 = vmatpush1.xpose.msra.mxu0 0.0
    %7052 = vmatprep.subr.mxu0 0.0
    %7053 = vmatpush1.xpose.msra.mxu0 0.0
    %7054 = vmatprep.subr.mxu0 0.0
    %7055 = vmatpush1.xpose.msra.mxu0 0.0
    %7056 = vmatprep.subr.mxu0 0.0
    %7057 = vmatpush1.xpose.msra.mxu0 0.0
    %7058 = vmatprep.subr.mxu0 0.0
    %7059 = vmatpush1.xpose.msra.mxu0 0.0
    %7060 = vmatprep.subr.mxu0 0.0
    %7061 = vmatpush1.xpose.msra.mxu0 0.0
    %7062 = vmatprep.subr.mxu0 0.0
    %7063 = vmatpush1.xpose.msra.mxu0 0.0
    %7064 = vmatprep.subr.mxu0 0.0
    %7065 = vmatpush1.xpose.msra.mxu0 0.0
    %7066 = vmatprep.subr.mxu0 0.0
    %7067 = vmatpush1.xpose.msra.mxu0 0.0
    %7068 = vmatprep.subr.mxu0 0.0
    %7069 = vmatpush1.xpose.msra.mxu0 0.0
    %7070 = vmatprep.subr.mxu0 0.0
    %7071 = vmatpush1.xpose.msra.mxu0 0.0
    %7072 = vmatprep.subr.mxu0 0.0
    %7073 = vmatpush1.xpose.msra.mxu0 0.0
    %7074 = vmatprep.mubr.f32.mxu0 0.0
    %v7075 = vand.u32 %v6824, 4294901760
    %v7076 = vsub.f32 %v6824, %v7075
    %7077 = vmatmul.mubr.f32.gmra.mrb[0].mxu0 %v7076
    %v7078 = vpop.f32.mrb[0].mxu0
    %v7079 = vadd.f32 %v6997, %v7078
    %v7080 = vpop.f32.mrb[0].mxu0
    %7081 = vmatprep.mubr.f32.mxu0 0.0
    %v7082 = vand.u32 %v6826, 4294901760
    %v7083 = vsub.f32 %v6826, %v7082
    %7084 = vmatmul.mubr.f32.gmra.mrb[0].mxu0 %v7083
    %v7085 = vpop.f32.mrb[0].mxu0
    %v7086 = vadd.f32 %v7003, %v7085
    %v7087 = vpop.f32.mrb[0].mxu0
    %7088 = vdwg.mxu0
    %7089 = vmatprep.subr.mxu0 0.0
    %v7090 = vand.u32 %v6828, 4294901760
    %7091 = vmatpush1.xpose.msra.mxu0 %v7090
    %7092 = vmatprep.subr.mxu0 0.0
    %v7093 = vand.u32 %v6830, 4294901760
    %7094 = vmatpush1.xpose.msra.mxu0 %v7093
    %7095 = vmatprep.subr.mxu0 0.0
    %7096 = vmatpush1.xpose.msra.mxu0 0.0
    %7097 = vmatprep.subr.mxu0 0.0
    %7098 = vmatpush1.xpose.msra.mxu0 0.0
    %7099 = vmatprep.subr.mxu0 0.0
    %7100 = vmatpush1.xpose.msra.mxu0 0.0
    %7101 = vmatprep.subr.mxu0 0.0
    %7102 = vmatpush1.xpose.msra.mxu0 0.0
    %7103 = vmatprep.subr.mxu0 0.0
    %7104 = vmatpush1.xpose.msra.mxu0 0.0
    %7105 = vmatprep.subr.mxu0 0.0
    %7106 = vmatpush1.xpose.msra.mxu0 0.0
    %7107 = vmatprep.subr.mxu0 0.0
    %7108 = vmatpush1.xpose.msra.mxu0 0.0
    %7109 = vmatprep.subr.mxu0 0.0
    %7110 = vmatpush1.xpose.msra.mxu0 0.0
    %7111 = vmatprep.subr.mxu0 0.0
    %7112 = vmatpush1.xpose.msra.mxu0 0.0
    %7113 = vmatprep.subr.mxu0 0.0
    %7114 = vmatpush1.xpose.msra.mxu0 0.0
    %7115 = vmatprep.subr.mxu0 0.0
    %7116 = vmatpush1.xpose.msra.mxu0 0.0
    %7117 = vmatprep.subr.mxu0 0.0
    %7118 = vmatpush1.xpose.msra.mxu0 0.0
    %7119 = vmatprep.subr.mxu0 0.0
    %7120 = vmatpush1.xpose.msra.mxu0 0.0
    %7121 = vmatprep.subr.mxu0 0.0
    %7122 = vmatpush1.xpose.msra.mxu0 0.0
    %7123 = vmatprep.subr.mxu0 0.0
    %7124 = vmatpush1.xpose.msra.mxu0 0.0
    %7125 = vmatprep.subr.mxu0 0.0
    %7126 = vmatpush1.xpose.msra.mxu0 0.0
    %7127 = vmatprep.subr.mxu0 0.0
    %7128 = vmatpush1.xpose.msra.mxu0 0.0
    %7129 = vmatprep.subr.mxu0 0.0
    %7130 = vmatpush1.xpose.msra.mxu0 0.0
    %7131 = vmatprep.subr.mxu0 0.0
    %7132 = vmatpush1.xpose.msra.mxu0 0.0
    %7133 = vmatprep.subr.mxu0 0.0
    %7134 = vmatpush1.xpose.msra.mxu0 0.0
    %7135 = vmatprep.subr.mxu0 0.0
    %7136 = vmatpush1.xpose.msra.mxu0 0.0
    %7137 = vmatprep.subr.mxu0 0.0
    %7138 = vmatpush1.xpose.msra.mxu0 0.0
    %7139 = vmatprep.subr.mxu0 0.0
    %7140 = vmatpush1.xpose.msra.mxu0 0.0
    %7141 = vmatprep.subr.mxu0 0.0
    %7142 = vmatpush1.xpose.msra.mxu0 0.0
    %7143 = vmatprep.subr.mxu0 0.0
    %7144 = vmatpush1.xpose.msra.mxu0 0.0
    %7145 = vmatprep.subr.mxu0 0.0
    %7146 = vmatpush1.xpose.msra.mxu0 0.0
    %7147 = vmatprep.subr.mxu0 0.0
    %7148 = vmatpush1.xpose.msra.mxu0 0.0
    %7149 = vmatprep.subr.mxu0 0.0
    %7150 = vmatpush1.xpose.msra.mxu0 0.0
    %7151 = vmatprep.subr.mxu0 0.0
    %7152 = vmatpush1.xpose.msra.mxu0 0.0
    %7153 = vmatprep.subr.mxu0 0.0
    %7154 = vmatpush1.xpose.msra.mxu0 0.0
    %7155 = vmatprep.mubr.f32.mxu0 0.0
    %v7156 = vand.u32 %v6824, 4294901760
    %v7157 = vsub.f32 %v6824, %v7156
    %v7158 = vand.u32 %v7157, 4294901760
    %7159 = vmatmul.mubr.f32.gmra.mrb[0].mxu0 %v7158
    %v7160 = vpop.f32.mrb[0].mxu0
    %v7161 = vadd.f32 %v7079, %v7160
    %v7162 = vpop.f32.mrb[0].mxu0
    %7163 = vmatprep.mubr.f32.mxu0 0.0
    %v7164 = vand.u32 %v6826, 4294901760
    %v7165 = vsub.f32 %v6826, %v7164
    %v7166 = vand.u32 %v7165, 4294901760
    %7167 = vmatmul.mubr.f32.gmra.mrb[0].mxu0 %v7166
    %v7168 = vpop.f32.mrb[0].mxu0
    %v7169 = vadd.f32 %v7086, %v7168
    %v7170 = vpop.f32.mrb[0].mxu0
    %7171 = vdwg.mxu0
    %7172 = vmatprep.subr.mxu0 0.0
    %v7173 = vand.u32 %v6828, 4294901760
    %v7174 = vsub.f32 %v6828, %v7173
    %v7175 = vand.u32 %v7174, 4294901760
    %7176 = vmatpush1.xpose.msra.mxu0 %v7175
    %7177 = vmatprep.subr.mxu0 0.0
    %v7178 = vand.u32 %v6830, 4294901760
    %v7179 = vsub.f32 %v6830, %v7178
    %v7180 = vand.u32 %v7179, 4294901760
    %7181 = vmatpush1.xpose.msra.mxu0 %v7180
    %7182 = vmatprep.subr.mxu0 0.0
    %7183 = vmatpush1.xpose.msra.mxu0 0.0
    %7184 = vmatprep.subr.mxu0 0.0
    %7185 = vmatpush1.xpose.msra.mxu0 0.0
    %7186 = vmatprep.subr.mxu0 0.0
    %7187 = vmatpush1.xpose.msra.mxu0 0.0
    %7188 = vmatprep.subr.mxu0 0.0
    %7189 = vmatpush1.xpose.msra.mxu0 0.0
    %7190 = vmatprep.subr.mxu0 0.0
    %7191 = vmatpush1.xpose.msra.mxu0 0.0
    %7192 = vmatprep.subr.mxu0 0.0
    %7193 = vmatpush1.xpose.msra.mxu0 0.0
    %7194 = vmatprep.subr.mxu0 0.0
    %7195 = vmatpush1.xpose.msra.mxu0 0.0
    %7196 = vmatprep.subr.mxu0 0.0
    %7197 = vmatpush1.xpose.msra.mxu0 0.0
    %7198 = vmatprep.subr.mxu0 0.0
    %7199 = vmatpush1.xpose.msra.mxu0 0.0
    %7200 = vmatprep.subr.mxu0 0.0
    %7201 = vmatpush1.xpose.msra.mxu0 0.0
    %7202 = vmatprep.subr.mxu0 0.0
    %7203 = vmatpush1.xpose.msra.mxu0 0.0
    %7204 = vmatprep.subr.mxu0 0.0
    %7205 = vmatpush1.xpose.msra.mxu0 0.0
    %7206 = vmatprep.subr.mxu0 0.0
    %7207 = vmatpush1.xpose.msra.mxu0 0.0
    %7208 = vmatprep.subr.mxu0 0.0
    %7209 = vmatpush1.xpose.msra.mxu0 0.0
    %7210 = vmatprep.subr.mxu0 0.0
    %7211 = vmatpush1.xpose.msra.mxu0 0.0
    %7212 = vmatprep.subr.mxu0 0.0
    %7213 = vmatpush1.xpose.msra.mxu0 0.0
    %7214 = vmatprep.subr.mxu0 0.0
    %7215 = vmatpush1.xpose.msra.mxu0 0.0
    %7216 = vmatprep.subr.mxu0 0.0
    %7217 = vmatpush1.xpose.msra.mxu0 0.0
    %7218 = vmatprep.subr.mxu0 0.0
    %7219 = vmatpush1.xpose.msra.mxu0 0.0
    %7220 = vmatprep.subr.mxu0 0.0
    %7221 = vmatpush1.xpose.msra.mxu0 0.0
    %7222 = vmatprep.subr.mxu0 0.0
    %7223 = vmatpush1.xpose.msra.mxu0 0.0
    %7224 = vmatprep.subr.mxu0 0.0
    %7225 = vmatpush1.xpose.msra.mxu0 0.0
    %7226 = vmatprep.subr.mxu0 0.0
    %7227 = vmatpush1.xpose.msra.mxu0 0.0
    %7228 = vmatprep.subr.mxu0 0.0
    %7229 = vmatpush1.xpose.msra.mxu0 0.0
    %7230 = vmatprep.subr.mxu0 0.0
    %7231 = vmatpush1.xpose.msra.mxu0 0.0
    %7232 = vmatprep.subr.mxu0 0.0
    %7233 = vmatpush1.xpose.msra.mxu0 0.0
    %7234 = vmatprep.subr.mxu0 0.0
    %7235 = vmatpush1.xpose.msra.mxu0 0.0
    %7236 = vmatprep.subr.mxu0 0.0
    %7237 = vmatpush1.xpose.msra.mxu0 0.0
    %7238 = vmatprep.subr.mxu0 0.0
    %7239 = vmatpush1.xpose.msra.mxu0 0.0
    %7240 = vmatprep.subr.mxu0 0.0
    %7241 = vmatpush1.xpose.msra.mxu0 0.0
    %7242 = vmatprep.mubr.f32.mxu0 0.0
    %v7243 = vand.u32 %v6824, 4294901760
    %7244 = vmatmul.mubr.f32.gmra.mrb[0].mxu0 %v7243
    %v7245 = vpop.f32.mrb[0].mxu0
    %v7246 = vadd.f32 %v7161, %v7245
    %v7247 = vpop.f32.mrb[0].mxu0
    %7248 = vmatprep.mubr.f32.mxu0 0.0
    %v7249 = vand.u32 %v6826, 4294901760
    %7250 = vmatmul.mubr.f32.gmra.mrb[0].mxu0 %v7249
    %v7251 = vpop.f32.mrb[0].mxu0
    %v7252 = vadd.f32 %v7169, %v7251
    %v7253 = vpop.f32.mrb[0].mxu0
    %7254 = vdwg.mxu0
    %7255 = vmatprep.subr.mxu0 0.0
    %v7256 = vand.u32 %v6828, 4294901760
    %7257 = vmatpush1.xpose.msra.mxu0 %v7256
    %7258 = vmatprep.subr.mxu0 0.0
    %v7259 = vand.u32 %v6830, 4294901760
    %7260 = vmatpush1.xpose.msra.mxu0 %v7259
    %7261 = vmatprep.subr.mxu0 0.0
    %7262 = vmatpush1.xpose.msra.mxu0 0.0
    %7263 = vmatprep.subr.mxu0 0.0
    %7264 = vmatpush1.xpose.msra.mxu0 0.0
    %7265 = vmatprep.subr.mxu0 0.0
    %7266 = vmatpush1.xpose.msra.mxu0 0.0
    %7267 = vmatprep.subr.mxu0 0.0
    %7268 = vmatpush1.xpose.msra.mxu0 0.0
    %7269 = vmatprep.subr.mxu0 0.0
    %7270 = vmatpush1.xpose.msra.mxu0 0.0
    %7271 = vmatprep.subr.mxu0 0.0
    %7272 = vmatpush1.xpose.msra.mxu0 0.0
    %7273 = vmatprep.subr.mxu0 0.0
    %7274 = vmatpush1.xpose.msra.mxu0 0.0
    %7275 = vmatprep.subr.mxu0 0.0
    %7276 = vmatpush1.xpose.msra.mxu0 0.0
    %7277 = vmatprep.subr.mxu0 0.0
    %7278 = vmatpush1.xpose.msra.mxu0 0.0
    %7279 = vmatprep.subr.mxu0 0.0
    %7280 = vmatpush1.xpose.msra.mxu0 0.0
    %7281 = vmatprep.subr.mxu0 0.0
    %7282 = vmatpush1.xpose.msra.mxu0 0.0
    %7283 = vmatprep.subr.mxu0 0.0
    %7284 = vmatpush1.xpose.msra.mxu0 0.0
    %7285 = vmatprep.subr.mxu0 0.0
    %7286 = vmatpush1.xpose.msra.mxu0 0.0
    %7287 = vmatprep.subr.mxu0 0.0
    %7288 = vmatpush1.xpose.msra.mxu0 0.0
    %7289 = vmatprep.subr.mxu0 0.0
    %7290 = vmatpush1.xpose.msra.mxu0 0.0
    %7291 = vmatprep.subr.mxu0 0.0
    %7292 = vmatpush1.xpose.msra.mxu0 0.0
    %7293 = vmatprep.subr.mxu0 0.0
    %7294 = vmatpush1.xpose.msra.mxu0 0.0
    %7295 = vmatprep.subr.mxu0 0.0
    %7296 = vmatpush1.xpose.msra.mxu0 0.0
    %7297 = vmatprep.subr.mxu0 0.0
    %7298 = vmatpush1.xpose.msra.mxu0 0.0
    %7299 = vmatprep.subr.mxu0 0.0
    %7300 = vmatpush1.xpose.msra.mxu0 0.0
    %7301 = vmatprep.subr.mxu0 0.0
    %7302 = vmatpush1.xpose.msra.mxu0 0.0
    %7303 = vmatprep.subr.mxu0 0.0
    %7304 = vmatpush1.xpose.msra.mxu0 0.0
    %7305 = vmatprep.subr.mxu0 0.0
    %7306 = vmatpush1.xpose.msra.mxu0 0.0
    %7307 = vmatprep.subr.mxu0 0.0
    %7308 = vmatpush1.xpose.msra.mxu0 0.0
    %7309 = vmatprep.subr.mxu0 0.0
    %7310 = vmatpush1.xpose.msra.mxu0 0.0
    %7311 = vmatprep.subr.mxu0 0.0
    %7312 = vmatpush1.xpose.msra.mxu0 0.0
    %7313 = vmatprep.subr.mxu0 0.0
    %7314 = vmatpush1.xpose.msra.mxu0 0.0
    %7315 = vmatprep.subr.mxu0 0.0
    %7316 = vmatpush1.xpose.msra.mxu0 0.0
    %7317 = vmatprep.subr.mxu0 0.0
    %7318 = vmatpush1.xpose.msra.mxu0 0.0
    %7319 = vmatprep.subr.mxu0 0.0
    %7320 = vmatpush1.xpose.msra.mxu0 0.0
    %7321 = vmatprep.mubr.f32.mxu0 0.0
    %v7322 = vand.u32 %v6824, 4294901760
    %7323 = vmatmul.mubr.f32.gmra.mrb[0].mxu0 %v7322
    %v7324 = vpop.f32.mrb[0].mxu0
    %v7325 = vadd.f32 %v7246, %v7324
    %v7326 = vpop.f32.mrb[0].mxu0
    %7327 = vmatprep.mubr.f32.mxu0 0.0
    %v7328 = vand.u32 %v6826, 4294901760
    %7329 = vmatmul.mubr.f32.gmra.mrb[0].mxu0 %v7328
    %v7330 = vpop.f32.mrb[0].mxu0
    %v7331 = vadd.f32 %v7252, %v7330
    %v7332 = vpop.f32.mrb[0].mxu0
    %7333 = vdwg.mxu0
    %v7334 = vmul.f32 %v7325, 0.25
    %v7335 = vmul.f32 %v7331, 0.25
    %v7336 = vadd.f32 %v7334, %v72
    %v7337 = vadd.f32 %v7335, %v73
    %v7338 = vsel %vm664, %v7336, -inf
    %7339 = vmax.xlane.f32.xlu0 %v7338
    %v7340 = vpop.xlane.xlu0 %7339
    %v7341 = vsel %vm664, %v7337, -inf
    %7342 = vmax.xlane.f32.xlu0 %v7341
    %v7343 = vpop.xlane.xlu0 %7342
    %v7344 = vsub.f32 %v7336, %v7340
    %v7345 = vsub.f32 %v7337, %v7343
    %v7346 = vmul.f32 %v7344, 1.442695
    %v7347 = vpow.pop %v7346
    %v7348 = vmul.f32 %v7345, 1.442695
    %v7349 = vpow.pop %v7348
    %v7350 = vsel %vm664, %v7347, 0.0
    %7351 = vadd.xlane.f32.xlu0 %v7350
    %v7352 = vpop.xlane.xlu0 %7351
    %v7353 = vsel %vm664, %v7349, 0.0
    %7354 = vadd.xlane.f32.xlu0 %v7353
    %v7355 = vpop.xlane.xlu0 %7354
    %v7356 = vrcp.pop %v7352
    %v7357 = vrcp.pop %v7355
    %v7358 = vmul.f32 %v7347, %v7356
    %v7359 = vmul.f32 %v7349, %v7357
    %7360 = vrot.lane.b32.xlu0 %v5746, 48
    %v7361 = vpop.permute.xlu0 %7360
    %7362 = vrot.lane.b32.xlu0 %v5752, 48
    %v7363 = vpop.permute.xlu0 %7362
    %v7367 = vsel %vm664, %v7358, 0
    %v7370 = vsel %vm664, %v7359, 0
    %7372 = vmatprep.subr.mxu0 0.0
    %v7373 = vand.u32 %v7361, 4294901760
    %7374 = vmatpush1.msra.mxu0 %v7373
    %7375 = vmatprep.subr.mxu0 0.0
    %v7376 = vand.u32 %v7363, 4294901760
    %7377 = vmatpush1.msra.mxu0 %v7376
    %7378 = vmatprep.subr.mxu0 0.0
    %7379 = vmatpush1.msra.mxu0 0.0
    %7380 = vmatprep.subr.mxu0 0.0
    %7381 = vmatpush1.msra.mxu0 0.0
    %7382 = vmatprep.subr.mxu0 0.0
    %7383 = vmatpush1.msra.mxu0 0.0
    %7384 = vmatprep.subr.mxu0 0.0
    %7385 = vmatpush1.msra.mxu0 0.0
    %7386 = vmatprep.subr.mxu0 0.0
    %7387 = vmatpush1.msra.mxu0 0.0
    %7388 = vmatprep.subr.mxu0 0.0
    %7389 = vmatpush1.msra.mxu0 0.0
    %7390 = vmatprep.subr.mxu0 0.0
    %7391 = vmatpush1.msra.mxu0 0.0
    %7392 = vmatprep.subr.mxu0 0.0
    %7393 = vmatpush1.msra.mxu0 0.0
    %7394 = vmatprep.subr.mxu0 0.0
    %7395 = vmatpush1.msra.mxu0 0.0
    %7396 = vmatprep.subr.mxu0 0.0
    %7397 = vmatpush1.msra.mxu0 0.0
    %7398 = vmatprep.subr.mxu0 0.0
    %7399 = vmatpush1.msra.mxu0 0.0
    %7400 = vmatprep.subr.mxu0 0.0
    %7401 = vmatpush1.msra.mxu0 0.0
    %7402 = vmatprep.subr.mxu0 0.0
    %7403 = vmatpush1.msra.mxu0 0.0
    %7404 = vmatprep.subr.mxu0 0.0
    %7405 = vmatpush1.msra.mxu0 0.0
    %7406 = vmatprep.subr.mxu0 0.0
    %7407 = vmatpush1.msra.mxu0 0.0
    %7408 = vmatprep.subr.mxu0 0.0
    %7409 = vmatpush1.msra.mxu0 0.0
    %7410 = vmatprep.subr.mxu0 0.0
    %7411 = vmatpush1.msra.mxu0 0.0
    %7412 = vmatprep.subr.mxu0 0.0
    %7413 = vmatpush1.msra.mxu0 0.0
    %7414 = vmatprep.subr.mxu0 0.0
    %7415 = vmatpush1.msra.mxu0 0.0
    %7416 = vmatprep.subr.mxu0 0.0
    %7417 = vmatpush1.msra.mxu0 0.0
    %7418 = vmatprep.subr.mxu0 0.0
    %7419 = vmatpush1.msra.mxu0 0.0
    %7420 = vmatprep.subr.mxu0 0.0
    %7421 = vmatpush1.msra.mxu0 0.0
    %7422 = vmatprep.subr.mxu0 0.0
    %7423 = vmatpush1.msra.mxu0 0.0
    %7424 = vmatprep.subr.mxu0 0.0
    %7425 = vmatpush1.msra.mxu0 0.0
    %7426 = vmatprep.subr.mxu0 0.0
    %7427 = vmatpush1.msra.mxu0 0.0
    %7428 = vmatprep.subr.mxu0 0.0
    %7429 = vmatpush1.msra.mxu0 0.0
    %7430 = vmatprep.subr.mxu0 0.0
    %7431 = vmatpush1.msra.mxu0 0.0
    %7432 = vmatprep.subr.mxu0 0.0
    %7433 = vmatpush1.msra.mxu0 0.0
    %7434 = vmatprep.subr.mxu0 0.0
    %7435 = vmatpush1.msra.mxu0 0.0
    %7436 = vmatprep.subr.mxu0 0.0
    %7437 = vmatpush1.msra.mxu0 0.0
    %7438 = vmatprep.mubr.f32.mxu0 0.0
    %v7439 = vand.u32 %v7367, 4294901760
    %v7440 = vsub.f32 %v7367, %v7439
    %v7441 = vand.u32 %v7440, 4294901760
    %v7442 = vsub.f32 %v7440, %v7441
    %v7443 = vand.u32 %v7442, 4294901760
    %7444 = vmatmul.mubr.f32.gmra.mrb[0].mxu0 %v7443
    %v7445 = vpop.f32.mrb[0].mxu0
    %v7446 = vadd.f32 0.0, %v7445
    %v7447 = vpop.f32.mrb[0].mxu0
    %7448 = vmatprep.mubr.f32.mxu0 0.0
    %v7449 = vand.u32 %v7370, 4294901760
    %v7450 = vsub.f32 %v7370, %v7449
    %v7451 = vand.u32 %v7450, 4294901760
    %v7452 = vsub.f32 %v7450, %v7451
    %v7453 = vand.u32 %v7452, 4294901760
    %7454 = vmatmul.mubr.f32.gmra.mrb[0].mxu0 %v7453
    %v7455 = vpop.f32.mrb[0].mxu0
    %v7456 = vadd.f32 0.0, %v7455
    %v7457 = vpop.f32.mrb[0].mxu0
    %7458 = vdwg.mxu0
    %7459 = vmatprep.subr.mxu0 0.0
    %v7460 = vand.u32 %v7361, 4294901760
    %v7461 = vsub.f32 %v7361, %v7460
    %v7462 = vand.u32 %v7461, 4294901760
    %v7463 = vsub.f32 %v7461, %v7462
    %v7464 = vand.u32 %v7463, 4294901760
    %7465 = vmatpush1.msra.mxu0 %v7464
    %7466 = vmatprep.subr.mxu0 0.0
    %v7467 = vand.u32 %v7363, 4294901760
    %v7468 = vsub.f32 %v7363, %v7467
    %v7469 = vand.u32 %v7468, 4294901760
    %v7470 = vsub.f32 %v7468, %v7469
    %v7471 = vand.u32 %v7470, 4294901760
    %7472 = vmatpush1.msra.mxu0 %v7471
    %7473 = vmatprep.subr.mxu0 0.0
    %7474 = vmatpush1.msra.mxu0 0.0
    %7475 = vmatprep.subr.mxu0 0.0
    %7476 = vmatpush1.msra.mxu0 0.0
    %7477 = vmatprep.subr.mxu0 0.0
    %7478 = vmatpush1.msra.mxu0 0.0
    %7479 = vmatprep.subr.mxu0 0.0
    %7480 = vmatpush1.msra.mxu0 0.0
    %7481 = vmatprep.subr.mxu0 0.0
    %7482 = vmatpush1.msra.mxu0 0.0
    %7483 = vmatprep.subr.mxu0 0.0
    %7484 = vmatpush1.msra.mxu0 0.0
    %7485 = vmatprep.subr.mxu0 0.0
    %7486 = vmatpush1.msra.mxu0 0.0
    %7487 = vmatprep.subr.mxu0 0.0
    %7488 = vmatpush1.msra.mxu0 0.0
    %7489 = vmatprep.subr.mxu0 0.0
    %7490 = vmatpush1.msra.mxu0 0.0
    %7491 = vmatprep.subr.mxu0 0.0
    %7492 = vmatpush1.msra.mxu0 0.0
    %7493 = vmatprep.subr.mxu0 0.0
    %7494 = vmatpush1.msra.mxu0 0.0
    %7495 = vmatprep.subr.mxu0 0.0
    %7496 = vmatpush1.msra.mxu0 0.0
    %7497 = vmatprep.subr.mxu0 0.0
    %7498 = vmatpush1.msra.mxu0 0.0
    %7499 = vmatprep.subr.mxu0 0.0
    %7500 = vmatpush1.msra.mxu0 0.0
    %7501 = vmatprep.subr.mxu0 0.0
    %7502 = vmatpush1.msra.mxu0 0.0
    %7503 = vmatprep.subr.mxu0 0.0
    %7504 = vmatpush1.msra.mxu0 0.0
    %7505 = vmatprep.subr.mxu0 0.0
    %7506 = vmatpush1.msra.mxu0 0.0
    %7507 = vmatprep.subr.mxu0 0.0
    %7508 = vmatpush1.msra.mxu0 0.0
    %7509 = vmatprep.subr.mxu0 0.0
    %7510 = vmatpush1.msra.mxu0 0.0
    %7511 = vmatprep.subr.mxu0 0.0
    %7512 = vmatpush1.msra.mxu0 0.0
    %7513 = vmatprep.subr.mxu0 0.0
    %7514 = vmatpush1.msra.mxu0 0.0
    %7515 = vmatprep.subr.mxu0 0.0
    %7516 = vmatpush1.msra.mxu0 0.0
    %7517 = vmatprep.subr.mxu0 0.0
    %7518 = vmatpush1.msra.mxu0 0.0
    %7519 = vmatprep.subr.mxu0 0.0
    %7520 = vmatpush1.msra.mxu0 0.0
    %7521 = vmatprep.subr.mxu0 0.0
    %7522 = vmatpush1.msra.mxu0 0.0
    %7523 = vmatprep.subr.mxu0 0.0
    %7524 = vmatpush1.msra.mxu0 0.0
    %7525 = vmatprep.subr.mxu0 0.0
    %7526 = vmatpush1.msra.mxu0 0.0
    %7527 = vmatprep.subr.mxu0 0.0
    %7528 = vmatpush1.msra.mxu0 0.0
    %7529 = vmatprep.subr.mxu0 0.0
    %7530 = vmatpush1.msra.mxu0 0.0
    %7531 = vmatprep.subr.mxu0 0.0
    %7532 = vmatpush1.msra.mxu0 0.0
    %7533 = vmatprep.mubr.f32.mxu0 0.0
    %v7534 = vand.u32 %v7367, 4294901760
    %7535 = vmatmul.mubr.f32.gmra.mrb[0].mxu0 %v7534
    %v7536 = vpop.f32.mrb[0].mxu0
    %v7537 = vadd.f32 %v7446, %v7536
    %v7538 = vpop.f32.mrb[0].mxu0
    %7539 = vmatprep.mubr.f32.mxu0 0.0
    %v7540 = vand.u32 %v7370, 4294901760
    %7541 = vmatmul.mubr.f32.gmra.mrb[0].mxu0 %v7540
    %v7542 = vpop.f32.mrb[0].mxu0
    %v7543 = vadd.f32 %v7456, %v7542
    %v7544 = vpop.f32.mrb[0].mxu0
    %7545 = vdwg.mxu0
    %7546 = vmatprep.subr.mxu0 0.0
    %v7547 = vand.u32 %v7361, 4294901760
    %v7548 = vsub.f32 %v7361, %v7547
    %7549 = vmatpush1.msra.mxu0 %v7548
    %7550 = vmatprep.subr.mxu0 0.0
    %v7551 = vand.u32 %v7363, 4294901760
    %v7552 = vsub.f32 %v7363, %v7551
    %7553 = vmatpush1.msra.mxu0 %v7552
    %7554 = vmatprep.subr.mxu0 0.0
    %7555 = vmatpush1.msra.mxu0 0.0
    %7556 = vmatprep.subr.mxu0 0.0
    %7557 = vmatpush1.msra.mxu0 0.0
    %7558 = vmatprep.subr.mxu0 0.0
    %7559 = vmatpush1.msra.mxu0 0.0
    %7560 = vmatprep.subr.mxu0 0.0
    %7561 = vmatpush1.msra.mxu0 0.0
    %7562 = vmatprep.subr.mxu0 0.0
    %7563 = vmatpush1.msra.mxu0 0.0
    %7564 = vmatprep.subr.mxu0 0.0
    %7565 = vmatpush1.msra.mxu0 0.0
    %7566 = vmatprep.subr.mxu0 0.0
    %7567 = vmatpush1.msra.mxu0 0.0
    %7568 = vmatprep.subr.mxu0 0.0
    %7569 = vmatpush1.msra.mxu0 0.0
    %7570 = vmatprep.subr.mxu0 0.0
    %7571 = vmatpush1.msra.mxu0 0.0
    %7572 = vmatprep.subr.mxu0 0.0
    %7573 = vmatpush1.msra.mxu0 0.0
    %7574 = vmatprep.subr.mxu0 0.0
    %7575 = vmatpush1.msra.mxu0 0.0
    %7576 = vmatprep.subr.mxu0 0.0
    %7577 = vmatpush1.msra.mxu0 0.0
    %7578 = vmatprep.subr.mxu0 0.0
    %7579 = vmatpush1.msra.mxu0 0.0
    %7580 = vmatprep.subr.mxu0 0.0
    %7581 = vmatpush1.msra.mxu0 0.0
    %7582 = vmatprep.subr.mxu0 0.0
    %7583 = vmatpush1.msra.mxu0 0.0
    %7584 = vmatprep.subr.mxu0 0.0
    %7585 = vmatpush1.msra.mxu0 0.0
    %7586 = vmatprep.subr.mxu0 0.0
    %7587 = vmatpush1.msra.mxu0 0.0
    %7588 = vmatprep.subr.mxu0 0.0
    %7589 = vmatpush1.msra.mxu0 0.0
    %7590 = vmatprep.subr.mxu0 0.0
    %7591 = vmatpush1.msra.mxu0 0.0
    %7592 = vmatprep.subr.mxu0 0.0
    %7593 = vmatpush1.msra.mxu0 0.0
    %7594 = vmatprep.subr.mxu0 0.0
    %7595 = vmatpush1.msra.mxu0 0.0
    %7596 = vmatprep.subr.mxu0 0.0
    %7597 = vmatpush1.msra.mxu0 0.0
    %7598 = vmatprep.subr.mxu0 0.0
    %7599 = vmatpush1.msra.mxu0 0.0
    %7600 = vmatprep.subr.mxu0 0.0
    %7601 = vmatpush1.msra.mxu0 0.0
    %7602 = vmatprep.subr.mxu0 0.0
    %7603 = vmatpush1.msra.mxu0 0.0
    %7604 = vmatprep.subr.mxu0 0.0
    %7605 = vmatpush1.msra.mxu0 0.0
    %7606 = vmatprep.subr.mxu0 0.0
    %7607 = vmatpush1.msra.mxu0 0.0
    %7608 = vmatprep.subr.mxu0 0.0
    %7609 = vmatpush1.msra.mxu0 0.0
    %7610 = vmatprep.subr.mxu0 0.0
    %7611 = vmatpush1.msra.mxu0 0.0
    %7612 = vmatprep.subr.mxu0 0.0
    %7613 = vmatpush1.msra.mxu0 0.0
    %7614 = vmatprep.mubr.f32.mxu0 0.0
    %v7615 = vand.u32 %v7367, 4294901760
    %v7616 = vsub.f32 %v7367, %v7615
    %7617 = vmatmul.mubr.f32.gmra.mrb[0].mxu0 %v7616
    %v7618 = vpop.f32.mrb[0].mxu0
    %v7619 = vadd.f32 %v7537, %v7618
    %v7620 = vpop.f32.mrb[0].mxu0
    %7621 = vmatprep.mubr.f32.mxu0 0.0
    %v7622 = vand.u32 %v7370, 4294901760
    %v7623 = vsub.f32 %v7370, %v7622
    %7624 = vmatmul.mubr.f32.gmra.mrb[0].mxu0 %v7623
    %v7625 = vpop.f32.mrb[0].mxu0
    %v7626 = vadd.f32 %v7543, %v7625
    %v7627 = vpop.f32.mrb[0].mxu0
    %7628 = vdwg.mxu0
    %7629 = vmatprep.subr.mxu0 0.0
    %v7630 = vand.u32 %v7361, 4294901760
    %7631 = vmatpush1.msra.mxu0 %v7630
    %7632 = vmatprep.subr.mxu0 0.0
    %v7633 = vand.u32 %v7363, 4294901760
    %7634 = vmatpush1.msra.mxu0 %v7633
    %7635 = vmatprep.subr.mxu0 0.0
    %7636 = vmatpush1.msra.mxu0 0.0
    %7637 = vmatprep.subr.mxu0 0.0
    %7638 = vmatpush1.msra.mxu0 0.0
    %7639 = vmatprep.subr.mxu0 0.0
    %7640 = vmatpush1.msra.mxu0 0.0
    %7641 = vmatprep.subr.mxu0 0.0
    %7642 = vmatpush1.msra.mxu0 0.0
    %7643 = vmatprep.subr.mxu0 0.0
    %7644 = vmatpush1.msra.mxu0 0.0
    %7645 = vmatprep.subr.mxu0 0.0
    %7646 = vmatpush1.msra.mxu0 0.0
    %7647 = vmatprep.subr.mxu0 0.0
    %7648 = vmatpush1.msra.mxu0 0.0
    %7649 = vmatprep.subr.mxu0 0.0
    %7650 = vmatpush1.msra.mxu0 0.0
    %7651 = vmatprep.subr.mxu0 0.0
    %7652 = vmatpush1.msra.mxu0 0.0
    %7653 = vmatprep.subr.mxu0 0.0
    %7654 = vmatpush1.msra.mxu0 0.0
    %7655 = vmatprep.subr.mxu0 0.0
    %7656 = vmatpush1.msra.mxu0 0.0
    %7657 = vmatprep.subr.mxu0 0.0
    %7658 = vmatpush1.msra.mxu0 0.0
    %7659 = vmatprep.subr.mxu0 0.0
    %7660 = vmatpush1.msra.mxu0 0.0
    %7661 = vmatprep.subr.mxu0 0.0
    %7662 = vmatpush1.msra.mxu0 0.0
    %7663 = vmatprep.subr.mxu0 0.0
    %7664 = vmatpush1.msra.mxu0 0.0
    %7665 = vmatprep.subr.mxu0 0.0
    %7666 = vmatpush1.msra.mxu0 0.0
    %7667 = vmatprep.subr.mxu0 0.0
    %7668 = vmatpush1.msra.mxu0 0.0
    %7669 = vmatprep.subr.mxu0 0.0
    %7670 = vmatpush1.msra.mxu0 0.0
    %7671 = vmatprep.subr.mxu0 0.0
    %7672 = vmatpush1.msra.mxu0 0.0
    %7673 = vmatprep.subr.mxu0 0.0
    %7674 = vmatpush1.msra.mxu0 0.0
    %7675 = vmatprep.subr.mxu0 0.0
    %7676 = vmatpush1.msra.mxu0 0.0
    %7677 = vmatprep.subr.mxu0 0.0
    %7678 = vmatpush1.msra.mxu0 0.0
    %7679 = vmatprep.subr.mxu0 0.0
    %7680 = vmatpush1.msra.mxu0 0.0
    %7681 = vmatprep.subr.mxu0 0.0
    %7682 = vmatpush1.msra.mxu0 0.0
    %7683 = vmatprep.subr.mxu0 0.0
    %7684 = vmatpush1.msra.mxu0 0.0
    %7685 = vmatprep.subr.mxu0 0.0
    %7686 = vmatpush1.msra.mxu0 0.0
    %7687 = vmatprep.subr.mxu0 0.0
    %7688 = vmatpush1.msra.mxu0 0.0
    %7689 = vmatprep.subr.mxu0 0.0
    %7690 = vmatpush1.msra.mxu0 0.0
    %7691 = vmatprep.subr.mxu0 0.0
    %7692 = vmatpush1.msra.mxu0 0.0
    %7693 = vmatprep.subr.mxu0 0.0
    %7694 = vmatpush1.msra.mxu0 0.0
    %7695 = vmatprep.mubr.f32.mxu0 0.0
    %v7696 = vand.u32 %v7367, 4294901760
    %v7697 = vsub.f32 %v7367, %v7696
    %v7698 = vand.u32 %v7697, 4294901760
    %7699 = vmatmul.mubr.f32.gmra.mrb[0].mxu0 %v7698
    %v7700 = vpop.f32.mrb[0].mxu0
    %v7701 = vadd.f32 %v7619, %v7700
    %v7702 = vpop.f32.mrb[0].mxu0
    %7703 = vmatprep.mubr.f32.mxu0 0.0
    %v7704 = vand.u32 %v7370, 4294901760
    %v7705 = vsub.f32 %v7370, %v7704
    %v7706 = vand.u32 %v7705, 4294901760
    %7707 = vmatmul.mubr.f32.gmra.mrb[0].mxu0 %v7706
    %v7708 = vpop.f32.mrb[0].mxu0
    %v7709 = vadd.f32 %v7626, %v7708
    %v7710 = vpop.f32.mrb[0].mxu0
    %7711 = vdwg.mxu0
    %7712 = vmatprep.subr.mxu0 0.0
    %v7713 = vand.u32 %v7361, 4294901760
    %v7714 = vsub.f32 %v7361, %v7713
    %v7715 = vand.u32 %v7714, 4294901760
    %7716 = vmatpush1.msra.mxu0 %v7715
    %7717 = vmatprep.subr.mxu0 0.0
    %v7718 = vand.u32 %v7363, 4294901760
    %v7719 = vsub.f32 %v7363, %v7718
    %v7720 = vand.u32 %v7719, 4294901760
    %7721 = vmatpush1.msra.mxu0 %v7720
    %7722 = vmatprep.subr.mxu0 0.0
    %7723 = vmatpush1.msra.mxu0 0.0
    %7724 = vmatprep.subr.mxu0 0.0
    %7725 = vmatpush1.msra.mxu0 0.0
    %7726 = vmatprep.subr.mxu0 0.0
    %7727 = vmatpush1.msra.mxu0 0.0
    %7728 = vmatprep.subr.mxu0 0.0
    %7729 = vmatpush1.msra.mxu0 0.0
    %7730 = vmatprep.subr.mxu0 0.0
    %7731 = vmatpush1.msra.mxu0 0.0
    %7732 = vmatprep.subr.mxu0 0.0
    %7733 = vmatpush1.msra.mxu0 0.0
    %7734 = vmatprep.subr.mxu0 0.0
    %7735 = vmatpush1.msra.mxu0 0.0
    %7736 = vmatprep.subr.mxu0 0.0
    %7737 = vmatpush1.msra.mxu0 0.0
    %7738 = vmatprep.subr.mxu0 0.0
    %7739 = vmatpush1.msra.mxu0 0.0
    %7740 = vmatprep.subr.mxu0 0.0
    %7741 = vmatpush1.msra.mxu0 0.0
    %7742 = vmatprep.subr.mxu0 0.0
    %7743 = vmatpush1.msra.mxu0 0.0
    %7744 = vmatprep.subr.mxu0 0.0
    %7745 = vmatpush1.msra.mxu0 0.0
    %7746 = vmatprep.subr.mxu0 0.0
    %7747 = vmatpush1.msra.mxu0 0.0
    %7748 = vmatprep.subr.mxu0 0.0
    %7749 = vmatpush1.msra.mxu0 0.0
    %7750 = vmatprep.subr.mxu0 0.0
    %7751 = vmatpush1.msra.mxu0 0.0
    %7752 = vmatprep.subr.mxu0 0.0
    %7753 = vmatpush1.msra.mxu0 0.0
    %7754 = vmatprep.subr.mxu0 0.0
    %7755 = vmatpush1.msra.mxu0 0.0
    %7756 = vmatprep.subr.mxu0 0.0
    %7757 = vmatpush1.msra.mxu0 0.0
    %7758 = vmatprep.subr.mxu0 0.0
    %7759 = vmatpush1.msra.mxu0 0.0
    %7760 = vmatprep.subr.mxu0 0.0
    %7761 = vmatpush1.msra.mxu0 0.0
    %7762 = vmatprep.subr.mxu0 0.0
    %7763 = vmatpush1.msra.mxu0 0.0
    %7764 = vmatprep.subr.mxu0 0.0
    %7765 = vmatpush1.msra.mxu0 0.0
    %7766 = vmatprep.subr.mxu0 0.0
    %7767 = vmatpush1.msra.mxu0 0.0
    %7768 = vmatprep.subr.mxu0 0.0
    %7769 = vmatpush1.msra.mxu0 0.0
    %7770 = vmatprep.subr.mxu0 0.0
    %7771 = vmatpush1.msra.mxu0 0.0
    %7772 = vmatprep.subr.mxu0 0.0
    %7773 = vmatpush1.msra.mxu0 0.0
    %7774 = vmatprep.subr.mxu0 0.0
    %7775 = vmatpush1.msra.mxu0 0.0
    %7776 = vmatprep.subr.mxu0 0.0
    %7777 = vmatpush1.msra.mxu0 0.0
    %7778 = vmatprep.subr.mxu0 0.0
    %7779 = vmatpush1.msra.mxu0 0.0
    %7780 = vmatprep.subr.mxu0 0.0
    %7781 = vmatpush1.msra.mxu0 0.0
    %7782 = vmatprep.mubr.f32.mxu0 0.0
    %v7783 = vand.u32 %v7367, 4294901760
    %7784 = vmatmul.mubr.f32.gmra.mrb[0].mxu0 %v7783
    %v7785 = vpop.f32.mrb[0].mxu0
    %v7786 = vadd.f32 %v7701, %v7785
    %v7787 = vpop.f32.mrb[0].mxu0
    %7788 = vmatprep.mubr.f32.mxu0 0.0
    %v7789 = vand.u32 %v7370, 4294901760
    %7790 = vmatmul.mubr.f32.gmra.mrb[0].mxu0 %v7789
    %v7791 = vpop.f32.mrb[0].mxu0
    %v7792 = vadd.f32 %v7709, %v7791
    %v7793 = vpop.f32.mrb[0].mxu0
    %7794 = vdwg.mxu0
    %7795 = vmatprep.subr.mxu0 0.0
    %v7796 = vand.u32 %v7361, 4294901760
    %7797 = vmatpush1.msra.mxu0 %v7796
    %7798 = vmatprep.subr.mxu0 0.0
    %v7799 = vand.u32 %v7363, 4294901760
    %7800 = vmatpush1.msra.mxu0 %v7799
    %7801 = vmatprep.subr.mxu0 0.0
    %7802 = vmatpush1.msra.mxu0 0.0
    %7803 = vmatprep.subr.mxu0 0.0
    %7804 = vmatpush1.msra.mxu0 0.0
    %7805 = vmatprep.subr.mxu0 0.0
    %7806 = vmatpush1.msra.mxu0 0.0
    %7807 = vmatprep.subr.mxu0 0.0
    %7808 = vmatpush1.msra.mxu0 0.0
    %7809 = vmatprep.subr.mxu0 0.0
    %7810 = vmatpush1.msra.mxu0 0.0
    %7811 = vmatprep.subr.mxu0 0.0
    %7812 = vmatpush1.msra.mxu0 0.0
    %7813 = vmatprep.subr.mxu0 0.0
    %7814 = vmatpush1.msra.mxu0 0.0
    %7815 = vmatprep.subr.mxu0 0.0
    %7816 = vmatpush1.msra.mxu0 0.0
    %7817 = vmatprep.subr.mxu0 0.0
    %7818 = vmatpush1.msra.mxu0 0.0
    %7819 = vmatprep.subr.mxu0 0.0
    %7820 = vmatpush1.msra.mxu0 0.0
    %7821 = vmatprep.subr.mxu0 0.0
    %7822 = vmatpush1.msra.mxu0 0.0
    %7823 = vmatprep.subr.mxu0 0.0
    %7824 = vmatpush1.msra.mxu0 0.0
    %7825 = vmatprep.subr.mxu0 0.0
    %7826 = vmatpush1.msra.mxu0 0.0
    %7827 = vmatprep.subr.mxu0 0.0
    %7828 = vmatpush1.msra.mxu0 0.0
    %7829 = vmatprep.subr.mxu0 0.0
    %7830 = vmatpush1.msra.mxu0 0.0
    %7831 = vmatprep.subr.mxu0 0.0
    %7832 = vmatpush1.msra.mxu0 0.0
    %7833 = vmatprep.subr.mxu0 0.0
    %7834 = vmatpush1.msra.mxu0 0.0
    %7835 = vmatprep.subr.mxu0 0.0
    %7836 = vmatpush1.msra.mxu0 0.0
    %7837 = vmatprep.subr.mxu0 0.0
    %7838 = vmatpush1.msra.mxu0 0.0
    %7839 = vmatprep.subr.mxu0 0.0
    %7840 = vmatpush1.msra.mxu0 0.0
    %7841 = vmatprep.subr.mxu0 0.0
    %7842 = vmatpush1.msra.mxu0 0.0
    %7843 = vmatprep.subr.mxu0 0.0
    %7844 = vmatpush1.msra.mxu0 0.0
    %7845 = vmatprep.subr.mxu0 0.0
    %7846 = vmatpush1.msra.mxu0 0.0
    %7847 = vmatprep.subr.mxu0 0.0
    %7848 = vmatpush1.msra.mxu0 0.0
    %7849 = vmatprep.subr.mxu0 0.0
    %7850 = vmatpush1.msra.mxu0 0.0
    %7851 = vmatprep.subr.mxu0 0.0
    %7852 = vmatpush1.msra.mxu0 0.0
    %7853 = vmatprep.subr.mxu0 0.0
    %7854 = vmatpush1.msra.mxu0 0.0
    %7855 = vmatprep.subr.mxu0 0.0
    %7856 = vmatpush1.msra.mxu0 0.0
    %7857 = vmatprep.subr.mxu0 0.0
    %7858 = vmatpush1.msra.mxu0 0.0
    %7859 = vmatprep.subr.mxu0 0.0
    %7860 = vmatpush1.msra.mxu0 0.0
    %7861 = vmatprep.mubr.f32.mxu0 0.0
    %v7862 = vand.u32 %v7367, 4294901760
    %7863 = vmatmul.mubr.f32.gmra.mrb[0].mxu0 %v7862
    %v7864 = vpop.f32.mrb[0].mxu0
    %v7865 = vadd.f32 %v7786, %v7864
    %v7866 = vpop.f32.mrb[0].mxu0
    %7867 = vmatprep.mubr.f32.mxu0 0.0
    %v7868 = vand.u32 %v7370, 4294901760
    %7869 = vmatmul.mubr.f32.gmra.mrb[0].mxu0 %v7868
    %v7870 = vpop.f32.mrb[0].mxu0
    %v7871 = vadd.f32 %v7792, %v7870
    %v7872 = vpop.f32.mrb[0].mxu0
    %7873 = vdwg.mxu0
    %v7875 = vsel %vm664, %v7865, 0
    %v7878 = vsel %vm664, %v7871, 0
    %7880 = vmatprep.subr.mxu0 0.0
    %v7881 = vand.u32 %v5758, 4294901760
    %7882 = vmatpush1.msra.mxu0 %v7881
    %7883 = vmatprep.subr.mxu0 0.0
    %v7884 = vand.u32 %v5759, 4294901760
    %7885 = vmatpush1.msra.mxu0 %v7884
    %7886 = vmatprep.subr.mxu0 0.0
    %7887 = vmatpush1.msra.mxu0 0.0
    %7888 = vmatprep.subr.mxu0 0.0
    %7889 = vmatpush1.msra.mxu0 0.0
    %7890 = vmatprep.subr.mxu0 0.0
    %7891 = vmatpush1.msra.mxu0 0.0
    %7892 = vmatprep.subr.mxu0 0.0
    %7893 = vmatpush1.msra.mxu0 0.0
    %7894 = vmatprep.subr.mxu0 0.0
    %7895 = vmatpush1.msra.mxu0 0.0
    %7896 = vmatprep.subr.mxu0 0.0
    %7897 = vmatpush1.msra.mxu0 0.0
    %7898 = vmatprep.subr.mxu0 0.0
    %7899 = vmatpush1.msra.mxu0 0.0
    %7900 = vmatprep.subr.mxu0 0.0
    %7901 = vmatpush1.msra.mxu0 0.0
    %7902 = vmatprep.subr.mxu0 0.0
    %7903 = vmatpush1.msra.mxu0 0.0
    %7904 = vmatprep.subr.mxu0 0.0
    %7905 = vmatpush1.msra.mxu0 0.0
    %7906 = vmatprep.subr.mxu0 0.0
    %7907 = vmatpush1.msra.mxu0 0.0
    %7908 = vmatprep.subr.mxu0 0.0
    %7909 = vmatpush1.msra.mxu0 0.0
    %7910 = vmatprep.subr.mxu0 0.0
    %7911 = vmatpush1.msra.mxu0 0.0
    %7912 = vmatprep.subr.mxu0 0.0
    %7913 = vmatpush1.msra.mxu0 0.0
    %7914 = vmatprep.subr.mxu0 0.0
    %7915 = vmatpush1.msra.mxu0 0.0
    %7916 = vmatprep.subr.mxu0 0.0
    %7917 = vmatpush1.msra.mxu0 0.0
    %7918 = vmatprep.subr.mxu0 0.0
    %7919 = vmatpush1.msra.mxu0 0.0
    %7920 = vmatprep.subr.mxu0 0.0
    %7921 = vmatpush1.msra.mxu0 0.0
    %7922 = vmatprep.subr.mxu0 0.0
    %7923 = vmatpush1.msra.mxu0 0.0
    %7924 = vmatprep.subr.mxu0 0.0
    %7925 = vmatpush1.msra.mxu0 0.0
    %7926 = vmatprep.subr.mxu0 0.0
    %7927 = vmatpush1.msra.mxu0 0.0
    %7928 = vmatprep.subr.mxu0 0.0
    %7929 = vmatpush1.msra.mxu0 0.0
    %7930 = vmatprep.subr.mxu0 0.0
    %7931 = vmatpush1.msra.mxu0 0.0
    %7932 = vmatprep.subr.mxu0 0.0
    %7933 = vmatpush1.msra.mxu0 0.0
    %7934 = vmatprep.subr.mxu0 0.0
    %7935 = vmatpush1.msra.mxu0 0.0
    %7936 = vmatprep.subr.mxu0 0.0
    %7937 = vmatpush1.msra.mxu0 0.0
    %7938 = vmatprep.subr.mxu0 0.0
    %7939 = vmatpush1.msra.mxu0 0.0
    %7940 = vmatprep.subr.mxu0 0.0
    %7941 = vmatpush1.msra.mxu0 0.0
    %7942 = vmatprep.subr.mxu0 0.0
    %7943 = vmatpush1.msra.mxu0 0.0
    %7944 = vmatprep.subr.mxu0 0.0
    %7945 = vmatpush1.msra.mxu0 0.0
    %7946 = vmatprep.mubr.f32.mxu0 0.0
    %v7947 = vand.u32 %v7875, 4294901760
    %v7948 = vsub.f32 %v7875, %v7947
    %v7949 = vand.u32 %v7948, 4294901760
    %v7950 = vsub.f32 %v7948, %v7949
    %v7951 = vand.u32 %v7950, 4294901760
    %7952 = vmatmul.mubr.f32.gmra.mrb[0].mxu0 %v7951
    %v7953 = vpop.f32.mrb[0].mxu0
    %v7954 = vadd.f32 0.0, %v7953
    %v7955 = vpop.f32.mrb[0].mxu0
    %7956 = vmatprep.mubr.f32.mxu0 0.0
    %v7957 = vand.u32 %v7878, 4294901760
    %v7958 = vsub.f32 %v7878, %v7957
    %v7959 = vand.u32 %v7958, 4294901760
    %v7960 = vsub.f32 %v7958, %v7959
    %v7961 = vand.u32 %v7960, 4294901760
    %7962 = vmatmul.mubr.f32.gmra.mrb[0].mxu0 %v7961
    %v7963 = vpop.f32.mrb[0].mxu0
    %v7964 = vadd.f32 0.0, %v7963
    %v7965 = vpop.f32.mrb[0].mxu0
    %7966 = vdwg.mxu0
    %7967 = vmatprep.subr.mxu0 0.0
    %v7968 = vand.u32 %v5758, 4294901760
    %v7969 = vsub.f32 %v5758, %v7968
    %v7970 = vand.u32 %v7969, 4294901760
    %v7971 = vsub.f32 %v7969, %v7970
    %v7972 = vand.u32 %v7971, 4294901760
    %7973 = vmatpush1.msra.mxu0 %v7972
    %7974 = vmatprep.subr.mxu0 0.0
    %v7975 = vand.u32 %v5759, 4294901760
    %v7976 = vsub.f32 %v5759, %v7975
    %v7977 = vand.u32 %v7976, 4294901760
    %v7978 = vsub.f32 %v7976, %v7977
    %v7979 = vand.u32 %v7978, 4294901760
    %7980 = vmatpush1.msra.mxu0 %v7979
    %7981 = vmatprep.subr.mxu0 0.0
    %7982 = vmatpush1.msra.mxu0 0.0
    %7983 = vmatprep.subr.mxu0 0.0
    %7984 = vmatpush1.msra.mxu0 0.0
    %7985 = vmatprep.subr.mxu0 0.0
    %7986 = vmatpush1.msra.mxu0 0.0
    %7987 = vmatprep.subr.mxu0 0.0
    %7988 = vmatpush1.msra.mxu0 0.0
    %7989 = vmatprep.subr.mxu0 0.0
    %7990 = vmatpush1.msra.mxu0 0.0
    %7991 = vmatprep.subr.mxu0 0.0
    %7992 = vmatpush1.msra.mxu0 0.0
    %7993 = vmatprep.subr.mxu0 0.0
    %7994 = vmatpush1.msra.mxu0 0.0
    %7995 = vmatprep.subr.mxu0 0.0
    %7996 = vmatpush1.msra.mxu0 0.0
    %7997 = vmatprep.subr.mxu0 0.0
    %7998 = vmatpush1.msra.mxu0 0.0
    %7999 = vmatprep.subr.mxu0 0.0
    %8000 = vmatpush1.msra.mxu0 0.0
    %8001 = vmatprep.subr.mxu0 0.0
    %8002 = vmatpush1.msra.mxu0 0.0
    %8003 = vmatprep.subr.mxu0 0.0
    %8004 = vmatpush1.msra.mxu0 0.0
    %8005 = vmatprep.subr.mxu0 0.0
    %8006 = vmatpush1.msra.mxu0 0.0
    %8007 = vmatprep.subr.mxu0 0.0
    %8008 = vmatpush1.msra.mxu0 0.0
    %8009 = vmatprep.subr.mxu0 0.0
    %8010 = vmatpush1.msra.mxu0 0.0
    %8011 = vmatprep.subr.mxu0 0.0
    %8012 = vmatpush1.msra.mxu0 0.0
    %8013 = vmatprep.subr.mxu0 0.0
    %8014 = vmatpush1.msra.mxu0 0.0
    %8015 = vmatprep.subr.mxu0 0.0
    %8016 = vmatpush1.msra.mxu0 0.0
    %8017 = vmatprep.subr.mxu0 0.0
    %8018 = vmatpush1.msra.mxu0 0.0
    %8019 = vmatprep.subr.mxu0 0.0
    %8020 = vmatpush1.msra.mxu0 0.0
    %8021 = vmatprep.subr.mxu0 0.0
    %8022 = vmatpush1.msra.mxu0 0.0
    %8023 = vmatprep.subr.mxu0 0.0
    %8024 = vmatpush1.msra.mxu0 0.0
    %8025 = vmatprep.subr.mxu0 0.0
    %8026 = vmatpush1.msra.mxu0 0.0
    %8027 = vmatprep.subr.mxu0 0.0
    %8028 = vmatpush1.msra.mxu0 0.0
    %8029 = vmatprep.subr.mxu0 0.0
    %8030 = vmatpush1.msra.mxu0 0.0
    %8031 = vmatprep.subr.mxu0 0.0
    %8032 = vmatpush1.msra.mxu0 0.0
    %8033 = vmatprep.subr.mxu0 0.0
    %8034 = vmatpush1.msra.mxu0 0.0
    %8035 = vmatprep.subr.mxu0 0.0
    %8036 = vmatpush1.msra.mxu0 0.0
    %8037 = vmatprep.subr.mxu0 0.0
    %8038 = vmatpush1.msra.mxu0 0.0
    %8039 = vmatprep.subr.mxu0 0.0
    %8040 = vmatpush1.msra.mxu0 0.0
    %8041 = vmatprep.mubr.f32.mxu0 0.0
    %v8042 = vand.u32 %v7875, 4294901760
    %8043 = vmatmul.mubr.f32.gmra.mrb[0].mxu0 %v8042
    %v8044 = vpop.f32.mrb[0].mxu0
    %v8045 = vadd.f32 %v7954, %v8044
    %v8046 = vpop.f32.mrb[0].mxu0
    %8047 = vmatprep.mubr.f32.mxu0 0.0
    %v8048 = vand.u32 %v7878, 4294901760
    %8049 = vmatmul.mubr.f32.gmra.mrb[0].mxu0 %v8048
    %v8050 = vpop.f32.mrb[0].mxu0
    %v8051 = vadd.f32 %v7964, %v8050
    %v8052 = vpop.f32.mrb[0].mxu0
    %8053 = vdwg.mxu0
    %8054 = vmatprep.subr.mxu0 0.0
    %v8055 = vand.u32 %v5758, 4294901760
    %v8056 = vsub.f32 %v5758, %v8055
    %8057 = vmatpush1.msra.mxu0 %v8056
    %8058 = vmatprep.subr.mxu0 0.0
    %v8059 = vand.u32 %v5759, 4294901760
    %v8060 = vsub.f32 %v5759, %v8059
    %8061 = vmatpush1.msra.mxu0 %v8060
    %8062 = vmatprep.subr.mxu0 0.0
    %8063 = vmatpush1.msra.mxu0 0.0
    %8064 = vmatprep.subr.mxu0 0.0
    %8065 = vmatpush1.msra.mxu0 0.0
    %8066 = vmatprep.subr.mxu0 0.0
    %8067 = vmatpush1.msra.mxu0 0.0
    %8068 = vmatprep.subr.mxu0 0.0
    %8069 = vmatpush1.msra.mxu0 0.0
    %8070 = vmatprep.subr.mxu0 0.0
    %8071 = vmatpush1.msra.mxu0 0.0
    %8072 = vmatprep.subr.mxu0 0.0
    %8073 = vmatpush1.msra.mxu0 0.0
    %8074 = vmatprep.subr.mxu0 0.0
    %8075 = vmatpush1.msra.mxu0 0.0
    %8076 = vmatprep.subr.mxu0 0.0
    %8077 = vmatpush1.msra.mxu0 0.0
    %8078 = vmatprep.subr.mxu0 0.0
    %8079 = vmatpush1.msra.mxu0 0.0
    %8080 = vmatprep.subr.mxu0 0.0
    %8081 = vmatpush1.msra.mxu0 0.0
    %8082 = vmatprep.subr.mxu0 0.0
    %8083 = vmatpush1.msra.mxu0 0.0
    %8084 = vmatprep.subr.mxu0 0.0
    %8085 = vmatpush1.msra.mxu0 0.0
    %8086 = vmatprep.subr.mxu0 0.0
    %8087 = vmatpush1.msra.mxu0 0.0
    %8088 = vmatprep.subr.mxu0 0.0
    %8089 = vmatpush1.msra.mxu0 0.0
    %8090 = vmatprep.subr.mxu0 0.0
    %8091 = vmatpush1.msra.mxu0 0.0
    %8092 = vmatprep.subr.mxu0 0.0
    %8093 = vmatpush1.msra.mxu0 0.0
    %8094 = vmatprep.subr.mxu0 0.0
    %8095 = vmatpush1.msra.mxu0 0.0
    %8096 = vmatprep.subr.mxu0 0.0
    %8097 = vmatpush1.msra.mxu0 0.0
    %8098 = vmatprep.subr.mxu0 0.0
    %8099 = vmatpush1.msra.mxu0 0.0
    %8100 = vmatprep.subr.mxu0 0.0
    %8101 = vmatpush1.msra.mxu0 0.0
    %8102 = vmatprep.subr.mxu0 0.0
    %8103 = vmatpush1.msra.mxu0 0.0
    %8104 = vmatprep.subr.mxu0 0.0
    %8105 = vmatpush1.msra.mxu0 0.0
    %8106 = vmatprep.subr.mxu0 0.0
    %8107 = vmatpush1.msra.mxu0 0.0
    %8108 = vmatprep.subr.mxu0 0.0
    %8109 = vmatpush1.msra.mxu0 0.0
    %8110 = vmatprep.subr.mxu0 0.0
    %8111 = vmatpush1.msra.mxu0 0.0
    %8112 = vmatprep.subr.mxu0 0.0
    %8113 = vmatpush1.msra.mxu0 0.0
    %8114 = vmatprep.subr.mxu0 0.0
    %8115 = vmatpush1.msra.mxu0 0.0
    %8116 = vmatprep.subr.mxu0 0.0
    %8117 = vmatpush1.msra.mxu0 0.0
    %8118 = vmatprep.subr.mxu0 0.0
    %8119 = vmatpush1.msra.mxu0 0.0
    %8120 = vmatprep.subr.mxu0 0.0
    %8121 = vmatpush1.msra.mxu0 0.0
    %8122 = vmatprep.mubr.f32.mxu0 0.0
    %v8123 = vand.u32 %v7875, 4294901760
    %v8124 = vsub.f32 %v7875, %v8123
    %8125 = vmatmul.mubr.f32.gmra.mrb[0].mxu0 %v8124
    %v8126 = vpop.f32.mrb[0].mxu0
    %v8127 = vadd.f32 %v8045, %v8126
    %v8128 = vpop.f32.mrb[0].mxu0
    %8129 = vmatprep.mubr.f32.mxu0 0.0
    %v8130 = vand.u32 %v7878, 4294901760
    %v8131 = vsub.f32 %v7878, %v8130
    %8132 = vmatmul.mubr.f32.gmra.mrb[0].mxu0 %v8131
    %v8133 = vpop.f32.mrb[0].mxu0
    %v8134 = vadd.f32 %v8051, %v8133
    %v8135 = vpop.f32.mrb[0].mxu0
    %8136 = vdwg.mxu0
    %8137 = vmatprep.subr.mxu0 0.0
    %v8138 = vand.u32 %v5758, 4294901760
    %8139 = vmatpush1.msra.mxu0 %v8138
    %8140 = vmatprep.subr.mxu0 0.0
    %v8141 = vand.u32 %v5759, 4294901760
    %8142 = vmatpush1.msra.mxu0 %v8141
    %8143 = vmatprep.subr.mxu0 0.0
    %8144 = vmatpush1.msra.mxu0 0.0
    %8145 = vmatprep.subr.mxu0 0.0
    %8146 = vmatpush1.msra.mxu0 0.0
    %8147 = vmatprep.subr.mxu0 0.0
    %8148 = vmatpush1.msra.mxu0 0.0
    %8149 = vmatprep.subr.mxu0 0.0
    %8150 = vmatpush1.msra.mxu0 0.0
    %8151 = vmatprep.subr.mxu0 0.0
    %8152 = vmatpush1.msra.mxu0 0.0
    %8153 = vmatprep.subr.mxu0 0.0
    %8154 = vmatpush1.msra.mxu0 0.0
    %8155 = vmatprep.subr.mxu0 0.0
    %8156 = vmatpush1.msra.mxu0 0.0
    %8157 = vmatprep.subr.mxu0 0.0
    %8158 = vmatpush1.msra.mxu0 0.0
    %8159 = vmatprep.subr.mxu0 0.0
    %8160 = vmatpush1.msra.mxu0 0.0
    %8161 = vmatprep.subr.mxu0 0.0
    %8162 = vmatpush1.msra.mxu0 0.0
    %8163 = vmatprep.subr.mxu0 0.0
    %8164 = vmatpush1.msra.mxu0 0.0
    %8165 = vmatprep.subr.mxu0 0.0
    %8166 = vmatpush1.msra.mxu0 0.0
    %8167 = vmatprep.subr.mxu0 0.0
    %8168 = vmatpush1.msra.mxu0 0.0
    %8169 = vmatprep.subr.mxu0 0.0
    %8170 = vmatpush1.msra.mxu0 0.0
    %8171 = vmatprep.subr.mxu0 0.0
    %8172 = vmatpush1.msra.mxu0 0.0
    %8173 = vmatprep.subr.mxu0 0.0
    %8174 = vmatpush1.msra.mxu0 0.0
    %8175 = vmatprep.subr.mxu0 0.0
    %8176 = vmatpush1.msra.mxu0 0.0
    %8177 = vmatprep.subr.mxu0 0.0
    %8178 = vmatpush1.msra.mxu0 0.0
    %8179 = vmatprep.subr.mxu0 0.0
    %8180 = vmatpush1.msra.mxu0 0.0
    %8181 = vmatprep.subr.mxu0 0.0
    %8182 = vmatpush1.msra.mxu0 0.0
    %8183 = vmatprep.subr.mxu0 0.0
    %8184 = vmatpush1.msra.mxu0 0.0
    %8185 = vmatprep.subr.mxu0 0.0
    %8186 = vmatpush1.msra.mxu0 0.0
    %8187 = vmatprep.subr.mxu0 0.0
    %8188 = vmatpush1.msra.mxu0 0.0
    %8189 = vmatprep.subr.mxu0 0.0
    %8190 = vmatpush1.msra.mxu0 0.0
    %8191 = vmatprep.subr.mxu0 0.0
    %8192 = vmatpush1.msra.mxu0 0.0
    %8193 = vmatprep.subr.mxu0 0.0
    %8194 = vmatpush1.msra.mxu0 0.0
    %8195 = vmatprep.subr.mxu0 0.0
    %8196 = vmatpush1.msra.mxu0 0.0
    %8197 = vmatprep.subr.mxu0 0.0
    %8198 = vmatpush1.msra.mxu0 0.0
    %8199 = vmatprep.subr.mxu0 0.0
    %8200 = vmatpush1.msra.mxu0 0.0
    %8201 = vmatprep.subr.mxu0 0.0
    %8202 = vmatpush1.msra.mxu0 0.0
    %8203 = vmatprep.mubr.f32.mxu0 0.0
    %v8204 = vand.u32 %v7875, 4294901760
    %v8205 = vsub.f32 %v7875, %v8204
    %v8206 = vand.u32 %v8205, 4294901760
    %8207 = vmatmul.mubr.f32.gmra.mrb[0].mxu0 %v8206
    %v8208 = vpop.f32.mrb[0].mxu0
    %v8209 = vadd.f32 %v8127, %v8208
    %v8210 = vpop.f32.mrb[0].mxu0
    %8211 = vmatprep.mubr.f32.mxu0 0.0
    %v8212 = vand.u32 %v7878, 4294901760
    %v8213 = vsub.f32 %v7878, %v8212
    %v8214 = vand.u32 %v8213, 4294901760
    %8215 = vmatmul.mubr.f32.gmra.mrb[0].mxu0 %v8214
    %v8216 = vpop.f32.mrb[0].mxu0
    %v8217 = vadd.f32 %v8134, %v8216
    %v8218 = vpop.f32.mrb[0].mxu0
    %8219 = vdwg.mxu0
    %8220 = vmatprep.subr.mxu0 0.0
    %v8221 = vand.u32 %v5758, 4294901760
    %v8222 = vsub.f32 %v5758, %v8221
    %v8223 = vand.u32 %v8222, 4294901760
    %8224 = vmatpush1.msra.mxu0 %v8223
    %8225 = vmatprep.subr.mxu0 0.0
    %v8226 = vand.u32 %v5759, 4294901760
    %v8227 = vsub.f32 %v5759, %v8226
    %v8228 = vand.u32 %v8227, 4294901760
    %8229 = vmatpush1.msra.mxu0 %v8228
    %8230 = vmatprep.subr.mxu0 0.0
    %8231 = vmatpush1.msra.mxu0 0.0
    %8232 = vmatprep.subr.mxu0 0.0
    %8233 = vmatpush1.msra.mxu0 0.0
    %8234 = vmatprep.subr.mxu0 0.0
    %8235 = vmatpush1.msra.mxu0 0.0
    %8236 = vmatprep.subr.mxu0 0.0
    %8237 = vmatpush1.msra.mxu0 0.0
    %8238 = vmatprep.subr.mxu0 0.0
    %8239 = vmatpush1.msra.mxu0 0.0
    %8240 = vmatprep.subr.mxu0 0.0
    %8241 = vmatpush1.msra.mxu0 0.0
    %8242 = vmatprep.subr.mxu0 0.0
    %8243 = vmatpush1.msra.mxu0 0.0
    %8244 = vmatprep.subr.mxu0 0.0
    %8245 = vmatpush1.msra.mxu0 0.0
    %8246 = vmatprep.subr.mxu0 0.0
    %8247 = vmatpush1.msra.mxu0 0.0
    %8248 = vmatprep.subr.mxu0 0.0
    %8249 = vmatpush1.msra.mxu0 0.0
    %8250 = vmatprep.subr.mxu0 0.0
    %8251 = vmatpush1.msra.mxu0 0.0
    %8252 = vmatprep.subr.mxu0 0.0
    %8253 = vmatpush1.msra.mxu0 0.0
    %8254 = vmatprep.subr.mxu0 0.0
    %8255 = vmatpush1.msra.mxu0 0.0
    %8256 = vmatprep.subr.mxu0 0.0
    %8257 = vmatpush1.msra.mxu0 0.0
    %8258 = vmatprep.subr.mxu0 0.0
    %8259 = vmatpush1.msra.mxu0 0.0
    %8260 = vmatprep.subr.mxu0 0.0
    %8261 = vmatpush1.msra.mxu0 0.0
    %8262 = vmatprep.subr.mxu0 0.0
    %8263 = vmatpush1.msra.mxu0 0.0
    %8264 = vmatprep.subr.mxu0 0.0
    %8265 = vmatpush1.msra.mxu0 0.0
    %8266 = vmatprep.subr.mxu0 0.0
    %8267 = vmatpush1.msra.mxu0 0.0
    %8268 = vmatprep.subr.mxu0 0.0
    %8269 = vmatpush1.msra.mxu0 0.0
    %8270 = vmatprep.subr.mxu0 0.0
    %8271 = vmatpush1.msra.mxu0 0.0
    %8272 = vmatprep.subr.mxu0 0.0
    %8273 = vmatpush1.msra.mxu0 0.0
    %8274 = vmatprep.subr.mxu0 0.0
    %8275 = vmatpush1.msra.mxu0 0.0
    %8276 = vmatprep.subr.mxu0 0.0
    %8277 = vmatpush1.msra.mxu0 0.0
    %8278 = vmatprep.subr.mxu0 0.0
    %8279 = vmatpush1.msra.mxu0 0.0
    %8280 = vmatprep.subr.mxu0 0.0
    %8281 = vmatpush1.msra.mxu0 0.0
    %8282 = vmatprep.subr.mxu0 0.0
    %8283 = vmatpush1.msra.mxu0 0.0
    %8284 = vmatprep.subr.mxu0 0.0
    %8285 = vmatpush1.msra.mxu0 0.0
    %8286 = vmatprep.subr.mxu0 0.0
    %8287 = vmatpush1.msra.mxu0 0.0
    %8288 = vmatprep.subr.mxu0 0.0
    %8289 = vmatpush1.msra.mxu0 0.0
    %8290 = vmatprep.mubr.f32.mxu0 0.0
    %v8291 = vand.u32 %v7875, 4294901760
    %8292 = vmatmul.mubr.f32.gmra.mrb[0].mxu0 %v8291
    %v8293 = vpop.f32.mrb[0].mxu0
    %v8294 = vadd.f32 %v8209, %v8293
    %v8295 = vpop.f32.mrb[0].mxu0
    %8296 = vmatprep.mubr.f32.mxu0 0.0
    %v8297 = vand.u32 %v7878, 4294901760
    %8298 = vmatmul.mubr.f32.gmra.mrb[0].mxu0 %v8297
    %v8299 = vpop.f32.mrb[0].mxu0
    %v8300 = vadd.f32 %v8217, %v8299
    %v8301 = vpop.f32.mrb[0].mxu0
    %8302 = vdwg.mxu0
    %8303 = vmatprep.subr.mxu0 0.0
    %v8304 = vand.u32 %v5758, 4294901760
    %8305 = vmatpush1.msra.mxu0 %v8304
    %8306 = vmatprep.subr.mxu0 0.0
    %v8307 = vand.u32 %v5759, 4294901760
    %8308 = vmatpush1.msra.mxu0 %v8307
    %8309 = vmatprep.subr.mxu0 0.0
    %8310 = vmatpush1.msra.mxu0 0.0
    %8311 = vmatprep.subr.mxu0 0.0
    %8312 = vmatpush1.msra.mxu0 0.0
    %8313 = vmatprep.subr.mxu0 0.0
    %8314 = vmatpush1.msra.mxu0 0.0
    %8315 = vmatprep.subr.mxu0 0.0
    %8316 = vmatpush1.msra.mxu0 0.0
    %8317 = vmatprep.subr.mxu0 0.0
    %8318 = vmatpush1.msra.mxu0 0.0
    %8319 = vmatprep.subr.mxu0 0.0
    %8320 = vmatpush1.msra.mxu0 0.0
    %8321 = vmatprep.subr.mxu0 0.0
    %8322 = vmatpush1.msra.mxu0 0.0
    %8323 = vmatprep.subr.mxu0 0.0
    %8324 = vmatpush1.msra.mxu0 0.0
    %8325 = vmatprep.subr.mxu0 0.0
    %8326 = vmatpush1.msra.mxu0 0.0
    %8327 = vmatprep.subr.mxu0 0.0
    %8328 = vmatpush1.msra.mxu0 0.0
    %8329 = vmatprep.subr.mxu0 0.0
    %8330 = vmatpush1.msra.mxu0 0.0
    %8331 = vmatprep.subr.mxu0 0.0
    %8332 = vmatpush1.msra.mxu0 0.0
    %8333 = vmatprep.subr.mxu0 0.0
    %8334 = vmatpush1.msra.mxu0 0.0
    %8335 = vmatprep.subr.mxu0 0.0
    %8336 = vmatpush1.msra.mxu0 0.0
    %8337 = vmatprep.subr.mxu0 0.0
    %8338 = vmatpush1.msra.mxu0 0.0
    %8339 = vmatprep.subr.mxu0 0.0
    %8340 = vmatpush1.msra.mxu0 0.0
    %8341 = vmatprep.subr.mxu0 0.0
    %8342 = vmatpush1.msra.mxu0 0.0
    %8343 = vmatprep.subr.mxu0 0.0
    %8344 = vmatpush1.msra.mxu0 0.0
    %8345 = vmatprep.subr.mxu0 0.0
    %8346 = vmatpush1.msra.mxu0 0.0
    %8347 = vmatprep.subr.mxu0 0.0
    %8348 = vmatpush1.msra.mxu0 0.0
    %8349 = vmatprep.subr.mxu0 0.0
    %8350 = vmatpush1.msra.mxu0 0.0
    %8351 = vmatprep.subr.mxu0 0.0
    %8352 = vmatpush1.msra.mxu0 0.0
    %8353 = vmatprep.subr.mxu0 0.0
    %8354 = vmatpush1.msra.mxu0 0.0
    %8355 = vmatprep.subr.mxu0 0.0
    %8356 = vmatpush1.msra.mxu0 0.0
    %8357 = vmatprep.subr.mxu0 0.0
    %8358 = vmatpush1.msra.mxu0 0.0
    %8359 = vmatprep.subr.mxu0 0.0
    %8360 = vmatpush1.msra.mxu0 0.0
    %8361 = vmatprep.subr.mxu0 0.0
    %8362 = vmatpush1.msra.mxu0 0.0
    %8363 = vmatprep.subr.mxu0 0.0
    %8364 = vmatpush1.msra.mxu0 0.0
    %8365 = vmatprep.subr.mxu0 0.0
    %8366 = vmatpush1.msra.mxu0 0.0
    %8367 = vmatprep.subr.mxu0 0.0
    %8368 = vmatpush1.msra.mxu0 0.0
    %8369 = vmatprep.mubr.f32.mxu0 0.0
    %v8370 = vand.u32 %v7875, 4294901760
    %8371 = vmatmul.mubr.f32.gmra.mrb[0].mxu0 %v8370
    %v8372 = vpop.f32.mrb[0].mxu0
    %v8373 = vadd.f32 %v8294, %v8372
    %v8374 = vpop.f32.mrb[0].mxu0
    %8375 = vmatprep.mubr.f32.mxu0 0.0
    %v8376 = vand.u32 %v7878, 4294901760
    %8377 = vmatmul.mubr.f32.gmra.mrb[0].mxu0 %v8376
    %v8378 = vpop.f32.mrb[0].mxu0
    %v8379 = vadd.f32 %v8300, %v8378
    %v8380 = vpop.f32.mrb[0].mxu0
    %8381 = vdwg.mxu0
    %v8383 = vsel %vm664, %v6807, 0
    %v8386 = vsel %vm664, %v6813, 0
    %8388 = vmatprep.subr.mxu0 0.0
    %v8389 = vand.u32 %v5756, 4294901760
    %8390 = vmatpush1.msra.mxu0 %v8389
    %8391 = vmatprep.subr.mxu0 0.0
    %v8392 = vand.u32 %v5757, 4294901760
    %8393 = vmatpush1.msra.mxu0 %v8392
    %8394 = vmatprep.subr.mxu0 0.0
    %8395 = vmatpush1.msra.mxu0 0.0
    %8396 = vmatprep.subr.mxu0 0.0
    %8397 = vmatpush1.msra.mxu0 0.0
    %8398 = vmatprep.subr.mxu0 0.0
    %8399 = vmatpush1.msra.mxu0 0.0
    %8400 = vmatprep.subr.mxu0 0.0
    %8401 = vmatpush1.msra.mxu0 0.0
    %8402 = vmatprep.subr.mxu0 0.0
    %8403 = vmatpush1.msra.mxu0 0.0
    %8404 = vmatprep.subr.mxu0 0.0
    %8405 = vmatpush1.msra.mxu0 0.0
    %8406 = vmatprep.subr.mxu0 0.0
    %8407 = vmatpush1.msra.mxu0 0.0
    %8408 = vmatprep.subr.mxu0 0.0
    %8409 = vmatpush1.msra.mxu0 0.0
    %8410 = vmatprep.subr.mxu0 0.0
    %8411 = vmatpush1.msra.mxu0 0.0
    %8412 = vmatprep.subr.mxu0 0.0
    %8413 = vmatpush1.msra.mxu0 0.0
    %8414 = vmatprep.subr.mxu0 0.0
    %8415 = vmatpush1.msra.mxu0 0.0
    %8416 = vmatprep.subr.mxu0 0.0
    %8417 = vmatpush1.msra.mxu0 0.0
    %8418 = vmatprep.subr.mxu0 0.0
    %8419 = vmatpush1.msra.mxu0 0.0
    %8420 = vmatprep.subr.mxu0 0.0
    %8421 = vmatpush1.msra.mxu0 0.0
    %8422 = vmatprep.subr.mxu0 0.0
    %8423 = vmatpush1.msra.mxu0 0.0
    %8424 = vmatprep.subr.mxu0 0.0
    %8425 = vmatpush1.msra.mxu0 0.0
    %8426 = vmatprep.subr.mxu0 0.0
    %8427 = vmatpush1.msra.mxu0 0.0
    %8428 = vmatprep.subr.mxu0 0.0
    %8429 = vmatpush1.msra.mxu0 0.0
    %8430 = vmatprep.subr.mxu0 0.0
    %8431 = vmatpush1.msra.mxu0 0.0
    %8432 = vmatprep.subr.mxu0 0.0
    %8433 = vmatpush1.msra.mxu0 0.0
    %8434 = vmatprep.subr.mxu0 0.0
    %8435 = vmatpush1.msra.mxu0 0.0
    %8436 = vmatprep.subr.mxu0 0.0
    %8437 = vmatpush1.msra.mxu0 0.0
    %8438 = vmatprep.subr.mxu0 0.0
    %8439 = vmatpush1.msra.mxu0 0.0
    %8440 = vmatprep.subr.mxu0 0.0
    %8441 = vmatpush1.msra.mxu0 0.0
    %8442 = vmatprep.subr.mxu0 0.0
    %8443 = vmatpush1.msra.mxu0 0.0
    %8444 = vmatprep.subr.mxu0 0.0
    %8445 = vmatpush1.msra.mxu0 0.0
    %8446 = vmatprep.subr.mxu0 0.0
    %8447 = vmatpush1.msra.mxu0 0.0
    %8448 = vmatprep.subr.mxu0 0.0
    %8449 = vmatpush1.msra.mxu0 0.0
    %8450 = vmatprep.subr.mxu0 0.0
    %8451 = vmatpush1.msra.mxu0 0.0
    %8452 = vmatprep.subr.mxu0 0.0
    %8453 = vmatpush1.msra.mxu0 0.0
    %8454 = vmatprep.mubr.f32.mxu0 0.0
    %v8455 = vand.u32 %v8383, 4294901760
    %v8456 = vsub.f32 %v8383, %v8455
    %v8457 = vand.u32 %v8456, 4294901760
    %v8458 = vsub.f32 %v8456, %v8457
    %v8459 = vand.u32 %v8458, 4294901760
    %8460 = vmatmul.mubr.f32.gmra.mrb[0].mxu0 %v8459
    %v8461 = vpop.f32.mrb[0].mxu0
    %v8462 = vadd.f32 %v8373, %v8461
    %v8463 = vpop.f32.mrb[0].mxu0
    %8464 = vmatprep.mubr.f32.mxu0 0.0
    %v8465 = vand.u32 %v8386, 4294901760
    %v8466 = vsub.f32 %v8386, %v8465
    %v8467 = vand.u32 %v8466, 4294901760
    %v8468 = vsub.f32 %v8466, %v8467
    %v8469 = vand.u32 %v8468, 4294901760
    %8470 = vmatmul.mubr.f32.gmra.mrb[0].mxu0 %v8469
    %v8471 = vpop.f32.mrb[0].mxu0
    %v8472 = vadd.f32 %v8379, %v8471
    %v8473 = vpop.f32.mrb[0].mxu0
    %8474 = vdwg.mxu0
    %8475 = vmatprep.subr.mxu0 0.0
    %v8476 = vand.u32 %v5756, 4294901760
    %v8477 = vsub.f32 %v5756, %v8476
    %v8478 = vand.u32 %v8477, 4294901760
    %v8479 = vsub.f32 %v8477, %v8478
    %v8480 = vand.u32 %v8479, 4294901760
    %8481 = vmatpush1.msra.mxu0 %v8480
    %8482 = vmatprep.subr.mxu0 0.0
    %v8483 = vand.u32 %v5757, 4294901760
    %v8484 = vsub.f32 %v5757, %v8483
    %v8485 = vand.u32 %v8484, 4294901760
    %v8486 = vsub.f32 %v8484, %v8485
    %v8487 = vand.u32 %v8486, 4294901760
    %8488 = vmatpush1.msra.mxu0 %v8487
    %8489 = vmatprep.subr.mxu0 0.0
    %8490 = vmatpush1.msra.mxu0 0.0
    %8491 = vmatprep.subr.mxu0 0.0
    %8492 = vmatpush1.msra.mxu0 0.0
    %8493 = vmatprep.subr.mxu0 0.0
    %8494 = vmatpush1.msra.mxu0 0.0
    %8495 = vmatprep.subr.mxu0 0.0
    %8496 = vmatpush1.msra.mxu0 0.0
    %8497 = vmatprep.subr.mxu0 0.0
    %8498 = vmatpush1.msra.mxu0 0.0
    %8499 = vmatprep.subr.mxu0 0.0
    %8500 = vmatpush1.msra.mxu0 0.0
    %8501 = vmatprep.subr.mxu0 0.0
    %8502 = vmatpush1.msra.mxu0 0.0
    %8503 = vmatprep.subr.mxu0 0.0
    %8504 = vmatpush1.msra.mxu0 0.0
    %8505 = vmatprep.subr.mxu0 0.0
    %8506 = vmatpush1.msra.mxu0 0.0
    %8507 = vmatprep.subr.mxu0 0.0
    %8508 = vmatpush1.msra.mxu0 0.0
    %8509 = vmatprep.subr.mxu0 0.0
    %8510 = vmatpush1.msra.mxu0 0.0
    %8511 = vmatprep.subr.mxu0 0.0
    %8512 = vmatpush1.msra.mxu0 0.0
    %8513 = vmatprep.subr.mxu0 0.0
    %8514 = vmatpush1.msra.mxu0 0.0
    %8515 = vmatprep.subr.mxu0 0.0
    %8516 = vmatpush1.msra.mxu0 0.0
    %8517 = vmatprep.subr.mxu0 0.0
    %8518 = vmatpush1.msra.mxu0 0.0
    %8519 = vmatprep.subr.mxu0 0.0
    %8520 = vmatpush1.msra.mxu0 0.0
    %8521 = vmatprep.subr.mxu0 0.0
    %8522 = vmatpush1.msra.mxu0 0.0
    %8523 = vmatprep.subr.mxu0 0.0
    %8524 = vmatpush1.msra.mxu0 0.0
    %8525 = vmatprep.subr.mxu0 0.0
    %8526 = vmatpush1.msra.mxu0 0.0
    %8527 = vmatprep.subr.mxu0 0.0
    %8528 = vmatpush1.msra.mxu0 0.0
    %8529 = vmatprep.subr.mxu0 0.0
    %8530 = vmatpush1.msra.mxu0 0.0
    %8531 = vmatprep.subr.mxu0 0.0
    %8532 = vmatpush1.msra.mxu0 0.0
    %8533 = vmatprep.subr.mxu0 0.0
    %8534 = vmatpush1.msra.mxu0 0.0
    %8535 = vmatprep.subr.mxu0 0.0
    %8536 = vmatpush1.msra.mxu0 0.0
    %8537 = vmatprep.subr.mxu0 0.0
    %8538 = vmatpush1.msra.mxu0 0.0
    %8539 = vmatprep.subr.mxu0 0.0
    %8540 = vmatpush1.msra.mxu0 0.0
    %8541 = vmatprep.subr.mxu0 0.0
    %8542 = vmatpush1.msra.mxu0 0.0
    %8543 = vmatprep.subr.mxu0 0.0
    %8544 = vmatpush1.msra.mxu0 0.0
    %8545 = vmatprep.subr.mxu0 0.0
    %8546 = vmatpush1.msra.mxu0 0.0
    %8547 = vmatprep.subr.mxu0 0.0
    %8548 = vmatpush1.msra.mxu0 0.0
    %8549 = vmatprep.mubr.f32.mxu0 0.0
    %v8550 = vand.u32 %v8383, 4294901760
    %8551 = vmatmul.mubr.f32.gmra.mrb[0].mxu0 %v8550
    %v8552 = vpop.f32.mrb[0].mxu0
    %v8553 = vadd.f32 %v8462, %v8552
    %v8554 = vpop.f32.mrb[0].mxu0
    %8555 = vmatprep.mubr.f32.mxu0 0.0
    %v8556 = vand.u32 %v8386, 4294901760
    %8557 = vmatmul.mubr.f32.gmra.mrb[0].mxu0 %v8556
    %v8558 = vpop.f32.mrb[0].mxu0
    %v8559 = vadd.f32 %v8472, %v8558
    %v8560 = vpop.f32.mrb[0].mxu0
    %8561 = vdwg.mxu0
    %8562 = vmatprep.subr.mxu0 0.0
    %v8563 = vand.u32 %v5756, 4294901760
    %v8564 = vsub.f32 %v5756, %v8563
    %8565 = vmatpush1.msra.mxu0 %v8564
    %8566 = vmatprep.subr.mxu0 0.0
    %v8567 = vand.u32 %v5757, 4294901760
    %v8568 = vsub.f32 %v5757, %v8567
    %8569 = vmatpush1.msra.mxu0 %v8568
    %8570 = vmatprep.subr.mxu0 0.0
    %8571 = vmatpush1.msra.mxu0 0.0
    %8572 = vmatprep.subr.mxu0 0.0
    %8573 = vmatpush1.msra.mxu0 0.0
    %8574 = vmatprep.subr.mxu0 0.0
    %8575 = vmatpush1.msra.mxu0 0.0
    %8576 = vmatprep.subr.mxu0 0.0
    %8577 = vmatpush1.msra.mxu0 0.0
    %8578 = vmatprep.subr.mxu0 0.0
    %8579 = vmatpush1.msra.mxu0 0.0
    %8580 = vmatprep.subr.mxu0 0.0
    %8581 = vmatpush1.msra.mxu0 0.0
    %8582 = vmatprep.subr.mxu0 0.0
    %8583 = vmatpush1.msra.mxu0 0.0
    %8584 = vmatprep.subr.mxu0 0.0
    %8585 = vmatpush1.msra.mxu0 0.0
    %8586 = vmatprep.subr.mxu0 0.0
    %8587 = vmatpush1.msra.mxu0 0.0
    %8588 = vmatprep.subr.mxu0 0.0
    %8589 = vmatpush1.msra.mxu0 0.0
    %8590 = vmatprep.subr.mxu0 0.0
    %8591 = vmatpush1.msra.mxu0 0.0
    %8592 = vmatprep.subr.mxu0 0.0
    %8593 = vmatpush1.msra.mxu0 0.0
    %8594 = vmatprep.subr.mxu0 0.0
    %8595 = vmatpush1.msra.mxu0 0.0
    %8596 = vmatprep.subr.mxu0 0.0
    %8597 = vmatpush1.msra.mxu0 0.0
    %8598 = vmatprep.subr.mxu0 0.0
    %8599 = vmatpush1.msra.mxu0 0.0
    %8600 = vmatprep.subr.mxu0 0.0
    %8601 = vmatpush1.msra.mxu0 0.0
    %8602 = vmatprep.subr.mxu0 0.0
    %8603 = vmatpush1.msra.mxu0 0.0
    %8604 = vmatprep.subr.mxu0 0.0
    %8605 = vmatpush1.msra.mxu0 0.0
    %8606 = vmatprep.subr.mxu0 0.0
    %8607 = vmatpush1.msra.mxu0 0.0
    %8608 = vmatprep.subr.mxu0 0.0
    %8609 = vmatpush1.msra.mxu0 0.0
    %8610 = vmatprep.subr.mxu0 0.0
    %8611 = vmatpush1.msra.mxu0 0.0
    %8612 = vmatprep.subr.mxu0 0.0
    %8613 = vmatpush1.msra.mxu0 0.0
    %8614 = vmatprep.subr.mxu0 0.0
    %8615 = vmatpush1.msra.mxu0 0.0
    %8616 = vmatprep.subr.mxu0 0.0
    %8617 = vmatpush1.msra.mxu0 0.0
    %8618 = vmatprep.subr.mxu0 0.0
    %8619 = vmatpush1.msra.mxu0 0.0
    %8620 = vmatprep.subr.mxu0 0.0
    %8621 = vmatpush1.msra.mxu0 0.0
    %8622 = vmatprep.subr.mxu0 0.0
    %8623 = vmatpush1.msra.mxu0 0.0
    %8624 = vmatprep.subr.mxu0 0.0
    %8625 = vmatpush1.msra.mxu0 0.0
    %8626 = vmatprep.subr.mxu0 0.0
    %8627 = vmatpush1.msra.mxu0 0.0
    %8628 = vmatprep.subr.mxu0 0.0
    %8629 = vmatpush1.msra.mxu0 0.0
    %8630 = vmatprep.mubr.f32.mxu0 0.0
    %v8631 = vand.u32 %v8383, 4294901760
    %v8632 = vsub.f32 %v8383, %v8631
    %8633 = vmatmul.mubr.f32.gmra.mrb[0].mxu0 %v8632
    %v8634 = vpop.f32.mrb[0].mxu0
    %v8635 = vadd.f32 %v8553, %v8634
    %v8636 = vpop.f32.mrb[0].mxu0
    %8637 = vmatprep.mubr.f32.mxu0 0.0
    %v8638 = vand.u32 %v8386, 4294901760
    %v8639 = vsub.f32 %v8386, %v8638
    %8640 = vmatmul.mubr.f32.gmra.mrb[0].mxu0 %v8639
    %v8641 = vpop.f32.mrb[0].mxu0
    %v8642 = vadd.f32 %v8559, %v8641
    %v8643 = vpop.f32.mrb[0].mxu0
    %8644 = vdwg.mxu0
    %8645 = vmatprep.subr.mxu0 0.0
    %v8646 = vand.u32 %v5756, 4294901760
    %8647 = vmatpush1.msra.mxu0 %v8646
    %8648 = vmatprep.subr.mxu0 0.0
    %v8649 = vand.u32 %v5757, 4294901760
    %8650 = vmatpush1.msra.mxu0 %v8649
    %8651 = vmatprep.subr.mxu0 0.0
    %8652 = vmatpush1.msra.mxu0 0.0
    %8653 = vmatprep.subr.mxu0 0.0
    %8654 = vmatpush1.msra.mxu0 0.0
    %8655 = vmatprep.subr.mxu0 0.0
    %8656 = vmatpush1.msra.mxu0 0.0
    %8657 = vmatprep.subr.mxu0 0.0
    %8658 = vmatpush1.msra.mxu0 0.0
    %8659 = vmatprep.subr.mxu0 0.0
    %8660 = vmatpush1.msra.mxu0 0.0
    %8661 = vmatprep.subr.mxu0 0.0
    %8662 = vmatpush1.msra.mxu0 0.0
    %8663 = vmatprep.subr.mxu0 0.0
    %8664 = vmatpush1.msra.mxu0 0.0
    %8665 = vmatprep.subr.mxu0 0.0
    %8666 = vmatpush1.msra.mxu0 0.0
    %8667 = vmatprep.subr.mxu0 0.0
    %8668 = vmatpush1.msra.mxu0 0.0
    %8669 = vmatprep.subr.mxu0 0.0
    %8670 = vmatpush1.msra.mxu0 0.0
    %8671 = vmatprep.subr.mxu0 0.0
    %8672 = vmatpush1.msra.mxu0 0.0
    %8673 = vmatprep.subr.mxu0 0.0
    %8674 = vmatpush1.msra.mxu0 0.0
    %8675 = vmatprep.subr.mxu0 0.0
    %8676 = vmatpush1.msra.mxu0 0.0
    %8677 = vmatprep.subr.mxu0 0.0
    %8678 = vmatpush1.msra.mxu0 0.0
    %8679 = vmatprep.subr.mxu0 0.0
    %8680 = vmatpush1.msra.mxu0 0.0
    %8681 = vmatprep.subr.mxu0 0.0
    %8682 = vmatpush1.msra.mxu0 0.0
    %8683 = vmatprep.subr.mxu0 0.0
    %8684 = vmatpush1.msra.mxu0 0.0
    %8685 = vmatprep.subr.mxu0 0.0
    %8686 = vmatpush1.msra.mxu0 0.0
    %8687 = vmatprep.subr.mxu0 0.0
    %8688 = vmatpush1.msra.mxu0 0.0
    %8689 = vmatprep.subr.mxu0 0.0
    %8690 = vmatpush1.msra.mxu0 0.0
    %8691 = vmatprep.subr.mxu0 0.0
    %8692 = vmatpush1.msra.mxu0 0.0
    %8693 = vmatprep.subr.mxu0 0.0
    %8694 = vmatpush1.msra.mxu0 0.0
    %8695 = vmatprep.subr.mxu0 0.0
    %8696 = vmatpush1.msra.mxu0 0.0
    %8697 = vmatprep.subr.mxu0 0.0
    %8698 = vmatpush1.msra.mxu0 0.0
    %8699 = vmatprep.subr.mxu0 0.0
    %8700 = vmatpush1.msra.mxu0 0.0
    %8701 = vmatprep.subr.mxu0 0.0
    %8702 = vmatpush1.msra.mxu0 0.0
    %8703 = vmatprep.subr.mxu0 0.0
    %8704 = vmatpush1.msra.mxu0 0.0
    %8705 = vmatprep.subr.mxu0 0.0
    %8706 = vmatpush1.msra.mxu0 0.0
    %8707 = vmatprep.subr.mxu0 0.0
    %8708 = vmatpush1.msra.mxu0 0.0
    %8709 = vmatprep.subr.mxu0 0.0
    %8710 = vmatpush1.msra.mxu0 0.0
    %8711 = vmatprep.mubr.f32.mxu0 0.0
    %v8712 = vand.u32 %v8383, 4294901760
    %v8713 = vsub.f32 %v8383, %v8712
    %v8714 = vand.u32 %v8713, 4294901760
    %8715 = vmatmul.mubr.f32.gmra.mrb[0].mxu0 %v8714
    %v8716 = vpop.f32.mrb[0].mxu0
    %v8717 = vadd.f32 %v8635, %v8716
    %v8718 = vpop.f32.mrb[0].mxu0
    %8719 = vmatprep.mubr.f32.mxu0 0.0
    %v8720 = vand.u32 %v8386, 4294901760
    %v8721 = vsub.f32 %v8386, %v8720
    %v8722 = vand.u32 %v8721, 4294901760
    %8723 = vmatmul.mubr.f32.gmra.mrb[0].mxu0 %v8722
    %v8724 = vpop.f32.mrb[0].mxu0
    %v8725 = vadd.f32 %v8642, %v8724
    %v8726 = vpop.f32.mrb[0].mxu0
    %8727 = vdwg.mxu0
    %8728 = vmatprep.subr.mxu0 0.0
    %v8729 = vand.u32 %v5756, 4294901760
    %v8730 = vsub.f32 %v5756, %v8729
    %v8731 = vand.u32 %v8730, 4294901760
    %8732 = vmatpush1.msra.mxu0 %v8731
    %8733 = vmatprep.subr.mxu0 0.0
    %v8734 = vand.u32 %v5757, 4294901760
    %v8735 = vsub.f32 %v5757, %v8734
    %v8736 = vand.u32 %v8735, 4294901760
    %8737 = vmatpush1.msra.mxu0 %v8736
    %8738 = vmatprep.subr.mxu0 0.0
    %8739 = vmatpush1.msra.mxu0 0.0
    %8740 = vmatprep.subr.mxu0 0.0
    %8741 = vmatpush1.msra.mxu0 0.0
    %8742 = vmatprep.subr.mxu0 0.0
    %8743 = vmatpush1.msra.mxu0 0.0
    %8744 = vmatprep.subr.mxu0 0.0
    %8745 = vmatpush1.msra.mxu0 0.0
    %8746 = vmatprep.subr.mxu0 0.0
    %8747 = vmatpush1.msra.mxu0 0.0
    %8748 = vmatprep.subr.mxu0 0.0
    %8749 = vmatpush1.msra.mxu0 0.0
    %8750 = vmatprep.subr.mxu0 0.0
    %8751 = vmatpush1.msra.mxu0 0.0
    %8752 = vmatprep.subr.mxu0 0.0
    %8753 = vmatpush1.msra.mxu0 0.0
    %8754 = vmatprep.subr.mxu0 0.0
    %8755 = vmatpush1.msra.mxu0 0.0
    %8756 = vmatprep.subr.mxu0 0.0
    %8757 = vmatpush1.msra.mxu0 0.0
    %8758 = vmatprep.subr.mxu0 0.0
    %8759 = vmatpush1.msra.mxu0 0.0
    %8760 = vmatprep.subr.mxu0 0.0
    %8761 = vmatpush1.msra.mxu0 0.0
    %8762 = vmatprep.subr.mxu0 0.0
    %8763 = vmatpush1.msra.mxu0 0.0
    %8764 = vmatprep.subr.mxu0 0.0
    %8765 = vmatpush1.msra.mxu0 0.0
    %8766 = vmatprep.subr.mxu0 0.0
    %8767 = vmatpush1.msra.mxu0 0.0
    %8768 = vmatprep.subr.mxu0 0.0
    %8769 = vmatpush1.msra.mxu0 0.0
    %8770 = vmatprep.subr.mxu0 0.0
    %8771 = vmatpush1.msra.mxu0 0.0
    %8772 = vmatprep.subr.mxu0 0.0
    %8773 = vmatpush1.msra.mxu0 0.0
    %8774 = vmatprep.subr.mxu0 0.0
    %8775 = vmatpush1.msra.mxu0 0.0
    %8776 = vmatprep.subr.mxu0 0.0
    %8777 = vmatpush1.msra.mxu0 0.0
    %8778 = vmatprep.subr.mxu0 0.0
    %8779 = vmatpush1.msra.mxu0 0.0
    %8780 = vmatprep.subr.mxu0 0.0
    %8781 = vmatpush1.msra.mxu0 0.0
    %8782 = vmatprep.subr.mxu0 0.0
    %8783 = vmatpush1.msra.mxu0 0.0
    %8784 = vmatprep.subr.mxu0 0.0
    %8785 = vmatpush1.msra.mxu0 0.0
    %8786 = vmatprep.subr.mxu0 0.0
    %8787 = vmatpush1.msra.mxu0 0.0
    %8788 = vmatprep.subr.mxu0 0.0
    %8789 = vmatpush1.msra.mxu0 0.0
    %8790 = vmatprep.subr.mxu0 0.0
    %8791 = vmatpush1.msra.mxu0 0.0
    %8792 = vmatprep.subr.mxu0 0.0
    %8793 = vmatpush1.msra.mxu0 0.0
    %8794 = vmatprep.subr.mxu0 0.0
    %8795 = vmatpush1.msra.mxu0 0.0
    %8796 = vmatprep.subr.mxu0 0.0
    %8797 = vmatpush1.msra.mxu0 0.0
    %8798 = vmatprep.mubr.f32.mxu0 0.0
    %v8799 = vand.u32 %v8383, 4294901760
    %8800 = vmatmul.mubr.f32.gmra.mrb[0].mxu0 %v8799
    %v8801 = vpop.f32.mrb[0].mxu0
    %v8802 = vadd.f32 %v8717, %v8801
    %v8803 = vpop.f32.mrb[0].mxu0
    %8804 = vmatprep.mubr.f32.mxu0 0.0
    %v8805 = vand.u32 %v8386, 4294901760
    %8806 = vmatmul.mubr.f32.gmra.mrb[0].mxu0 %v8805
    %v8807 = vpop.f32.mrb[0].mxu0
    %v8808 = vadd.f32 %v8725, %v8807
    %v8809 = vpop.f32.mrb[0].mxu0
    %8810 = vdwg.mxu0
    %8811 = vmatprep.subr.mxu0 0.0
    %v8812 = vand.u32 %v5756, 4294901760
    %8813 = vmatpush1.msra.mxu0 %v8812
    %8814 = vmatprep.subr.mxu0 0.0
    %v8815 = vand.u32 %v5757, 4294901760
    %8816 = vmatpush1.msra.mxu0 %v8815
    %8817 = vmatprep.subr.mxu0 0.0
    %8818 = vmatpush1.msra.mxu0 0.0
    %8819 = vmatprep.subr.mxu0 0.0
    %8820 = vmatpush1.msra.mxu0 0.0
    %8821 = vmatprep.subr.mxu0 0.0
    %8822 = vmatpush1.msra.mxu0 0.0
    %8823 = vmatprep.subr.mxu0 0.0
    %8824 = vmatpush1.msra.mxu0 0.0
    %8825 = vmatprep.subr.mxu0 0.0
    %8826 = vmatpush1.msra.mxu0 0.0
    %8827 = vmatprep.subr.mxu0 0.0
    %8828 = vmatpush1.msra.mxu0 0.0
    %8829 = vmatprep.subr.mxu0 0.0
    %8830 = vmatpush1.msra.mxu0 0.0
    %8831 = vmatprep.subr.mxu0 0.0
    %8832 = vmatpush1.msra.mxu0 0.0
    %8833 = vmatprep.subr.mxu0 0.0
    %8834 = vmatpush1.msra.mxu0 0.0
    %8835 = vmatprep.subr.mxu0 0.0
    %8836 = vmatpush1.msra.mxu0 0.0
    %8837 = vmatprep.subr.mxu0 0.0
    %8838 = vmatpush1.msra.mxu0 0.0
    %8839 = vmatprep.subr.mxu0 0.0
    %8840 = vmatpush1.msra.mxu0 0.0
    %8841 = vmatprep.subr.mxu0 0.0
    %8842 = vmatpush1.msra.mxu0 0.0
    %8843 = vmatprep.subr.mxu0 0.0
    %8844 = vmatpush1.msra.mxu0 0.0
    %8845 = vmatprep.subr.mxu0 0.0
    %8846 = vmatpush1.msra.mxu0 0.0
    %8847 = vmatprep.subr.mxu0 0.0
    %8848 = vmatpush1.msra.mxu0 0.0
    %8849 = vmatprep.subr.mxu0 0.0
    %8850 = vmatpush1.msra.mxu0 0.0
    %8851 = vmatprep.subr.mxu0 0.0
    %8852 = vmatpush1.msra.mxu0 0.0
    %8853 = vmatprep.subr.mxu0 0.0
    %8854 = vmatpush1.msra.mxu0 0.0
    %8855 = vmatprep.subr.mxu0 0.0
    %8856 = vmatpush1.msra.mxu0 0.0
    %8857 = vmatprep.subr.mxu0 0.0
    %8858 = vmatpush1.msra.mxu0 0.0
    %8859 = vmatprep.subr.mxu0 0.0
    %8860 = vmatpush1.msra.mxu0 0.0
    %8861 = vmatprep.subr.mxu0 0.0
    %8862 = vmatpush1.msra.mxu0 0.0
    %8863 = vmatprep.subr.mxu0 0.0
    %8864 = vmatpush1.msra.mxu0 0.0
    %8865 = vmatprep.subr.mxu0 0.0
    %8866 = vmatpush1.msra.mxu0 0.0
    %8867 = vmatprep.subr.mxu0 0.0
    %8868 = vmatpush1.msra.mxu0 0.0
    %8869 = vmatprep.subr.mxu0 0.0
    %8870 = vmatpush1.msra.mxu0 0.0
    %8871 = vmatprep.subr.mxu0 0.0
    %8872 = vmatpush1.msra.mxu0 0.0
    %8873 = vmatprep.subr.mxu0 0.0
    %8874 = vmatpush1.msra.mxu0 0.0
    %8875 = vmatprep.subr.mxu0 0.0
    %8876 = vmatpush1.msra.mxu0 0.0
    %8877 = vmatprep.mubr.f32.mxu0 0.0
    %v8878 = vand.u32 %v8383, 4294901760
    %8879 = vmatmul.mubr.f32.gmra.mrb[0].mxu0 %v8878
    %v8880 = vpop.f32.mrb[0].mxu0
    %v8881 = vadd.f32 %v8802, %v8880
    %v8882 = vpop.f32.mrb[0].mxu0
    %8883 = vmatprep.mubr.f32.mxu0 0.0
    %v8884 = vand.u32 %v8386, 4294901760
    %8885 = vmatmul.mubr.f32.gmra.mrb[0].mxu0 %v8884
    %v8886 = vpop.f32.mrb[0].mxu0
    %v8887 = vadd.f32 %v8808, %v8886
    %v8888 = vpop.f32.mrb[0].mxu0
    %8889 = vdwg.mxu0
    %v8890 = vlaneseq
    %v8891 = vshrl.u32 %v8890, 7
    %v8892 = vsub.s32 2, %v8891
    %v8893 = vrot.slane %v5176, %v8892
    %v8894 = vadd.f32 %v8881, %v8893
    %v8895 = vadd.f32 %v8887, %v8893
    %v8896 = vadd.f32 %v8894, %v5214
    %v8897 = vadd.f32 %v8895, %v5215
    %v8898 = vsel %vm76, %v8896, 0.0
    %8899 = vadd.xlane.f32.xlu0 %v8898
    %v8900 = vpop.xlane.xlu0 %8899
    %v8901 = vsel %vm76, %v8897, 0.0
    %8902 = vadd.xlane.f32.xlu0 %v8901
    %v8903 = vpop.xlane.xlu0 %8902
    %v8904 = vmul.f32 %v8900, %v83
    %v8905 = vmul.f32 %v8903, %v83
    %v8906 = vsub.f32 %v8896, %v8904
    %v8907 = vsub.f32 %v8897, %v8905
    %v8908 = vmul.f32 %v8906, %v8906
    %v8909 = vmul.f32 %v8907, %v8907
    %v8910 = vsel %vm76, %v8908, 0.0
    %8911 = vadd.xlane.f32.xlu0 %v8910
    %v8912 = vpop.xlane.xlu0 %8911
    %v8913 = vsel %vm76, %v8909, 0.0
    %8914 = vadd.xlane.f32.xlu0 %v8913
    %v8915 = vpop.xlane.xlu0 %8914
    %v8916 = vmul.f32 %v8912, %v83
    %v8917 = vmul.f32 %v8915, %v83
    %v8918 = vadd.f32 %v8916, 1e-05
    %v8919 = vadd.f32 %v8917, 1e-05
    %v8920 = vrsqrt.pop %v8918
    %v8921 = vrsqrt.pop %v8919
    %v8922 = vmul.f32 %v8906, %v8920
    %v8923 = vmul.f32 %v8907, %v8921
    %v8924 = vlaneseq
    %v8925 = vshrl.u32 %v8924, 7
    %v8926 = vsub.s32 3, %v8925
    %v8927 = vrot.slane %v5176, %v8926
    %v8928 = vmul.f32 %v8922, %v8927
    %v8929 = vmul.f32 %v8923, %v8927
    %v8930 = vlaneseq
    %v8931 = vshrl.u32 %v8930, 7
    %v8932 = vsub.s32 4, %v8931
    %v8933 = vrot.slane %v5176, %v8932
    %v8934 = vadd.f32 %v8928, %v8933
    %v8935 = vadd.f32 %v8929, %v8933
    %s8936 = scalar_lea.vmem %s3, 64
    %v8937 = vld [vmem:[%s8936] sm:$0xff]
    %v8938 = vld [vmem:[%s8936 + $0x8] sm:$0xff]
    %v8939 = vld [vmem:[%s8936 + $0x10] sm:$0xff]
    %v8940 = vld [vmem:[%s8936 + $0x18] sm:$0xff]
    %v8941 = vld [vmem:[%s8936 + $0x20] sm:$0xff]
    %v8942 = vld [vmem:[%s8936 + $0x28] sm:$0xff]
    %v8943 = vld [vmem:[%s8936 + $0x30] sm:$0xff]
    %v8944 = vld [vmem:[%s8936 + $0x38] sm:$0xff]
    %v8945 = vlaneseq
    %v8946 = vshrl.u32 %v8945, 7
    %v8947 = vsub.s32 5, %v8946
    %v8948 = vrot.slane %v5176, %v8947
    %v8949 = vlaneseq
    %v8950 = vshrl.u32 %v8949, 7
    %v8951 = vsub.s32 5, %v8950
    %v8952 = vrot.slane %v5177, %v8951
    %v8954 = vsel %vm76, %v8934, 0
    %v8957 = vsel %vm76, %v8935, 0
    %v8959 = vand.u32 %v8938, 4294901760
    %8960 = vmatprep.subr.mxu0 %v8959
    %v8961 = vand.u32 %v8937, 4294901760
    %8962 = vmatpush1.msra.mxu0 %v8961
    %v8963 = vand.u32 %v8940, 4294901760
    %8964 = vmatprep.subr.mxu0 %v8963
    %v8965 = vand.u32 %v8939, 4294901760
    %8966 = vmatpush1.msra.mxu0 %v8965
    %v8967 = vand.u32 %v8942, 4294901760
    %8968 = vmatprep.subr.mxu0 %v8967
    %v8969 = vand.u32 %v8941, 4294901760
    %8970 = vmatpush1.msra.mxu0 %v8969
    %v8971 = vand.u32 %v8944, 4294901760
    %8972 = vmatprep.subr.mxu0 %v8971
    %v8973 = vand.u32 %v8943, 4294901760
    %8974 = vmatpush1.msra.mxu0 %v8973
    %8975 = vmatprep.subr.mxu0 0.0
    %8976 = vmatpush1.msra.mxu0 0.0
    %8977 = vmatprep.subr.mxu0 0.0
    %8978 = vmatpush1.msra.mxu0 0.0
    %8979 = vmatprep.subr.mxu0 0.0
    %8980 = vmatpush1.msra.mxu0 0.0
    %8981 = vmatprep.subr.mxu0 0.0
    %8982 = vmatpush1.msra.mxu0 0.0
    %8983 = vmatprep.subr.mxu0 0.0
    %8984 = vmatpush1.msra.mxu0 0.0
    %8985 = vmatprep.subr.mxu0 0.0
    %8986 = vmatpush1.msra.mxu0 0.0
    %8987 = vmatprep.subr.mxu0 0.0
    %8988 = vmatpush1.msra.mxu0 0.0
    %8989 = vmatprep.subr.mxu0 0.0
    %8990 = vmatpush1.msra.mxu0 0.0
    %8991 = vmatprep.subr.mxu0 0.0
    %8992 = vmatpush1.msra.mxu0 0.0
    %8993 = vmatprep.subr.mxu0 0.0
    %8994 = vmatpush1.msra.mxu0 0.0
    %8995 = vmatprep.subr.mxu0 0.0
    %8996 = vmatpush1.msra.mxu0 0.0
    %8997 = vmatprep.subr.mxu0 0.0
    %8998 = vmatpush1.msra.mxu0 0.0
    %8999 = vmatprep.subr.mxu0 0.0
    %9000 = vmatpush1.msra.mxu0 0.0
    %9001 = vmatprep.subr.mxu0 0.0
    %9002 = vmatpush1.msra.mxu0 0.0
    %9003 = vmatprep.subr.mxu0 0.0
    %9004 = vmatpush1.msra.mxu0 0.0
    %9005 = vmatprep.subr.mxu0 0.0
    %9006 = vmatpush1.msra.mxu0 0.0
    %9007 = vmatprep.subr.mxu0 0.0
    %9008 = vmatpush1.msra.mxu0 0.0
    %9009 = vmatprep.subr.mxu0 0.0
    %9010 = vmatpush1.msra.mxu0 0.0
    %9011 = vmatprep.subr.mxu0 0.0
    %9012 = vmatpush1.msra.mxu0 0.0
    %9013 = vmatprep.subr.mxu0 0.0
    %9014 = vmatpush1.msra.mxu0 0.0
    %9015 = vmatprep.subr.mxu0 0.0
    %9016 = vmatpush1.msra.mxu0 0.0
    %9017 = vmatprep.subr.mxu0 0.0
    %9018 = vmatpush1.msra.mxu0 0.0
    %9019 = vmatprep.subr.mxu0 0.0
    %9020 = vmatpush1.msra.mxu0 0.0
    %9021 = vmatprep.subr.mxu0 0.0
    %9022 = vmatpush1.msra.mxu0 0.0
    %9023 = vmatprep.subr.mxu0 0.0
    %9024 = vmatpush1.msra.mxu0 0.0
    %9025 = vmatprep.subr.mxu0 0.0
    %9026 = vmatpush1.msra.mxu0 0.0
    %9027 = vmatprep.subr.mxu0 0.0
    %9028 = vmatpush1.msra.mxu0 0.0
    %9029 = vmatprep.subr.mxu0 0.0
    %9030 = vmatpush1.msra.mxu0 0.0
    %9031 = vmatprep.mubr.f32.mxu0 0.0
    %v9032 = vand.u32 %v8954, 4294901760
    %v9033 = vsub.f32 %v8954, %v9032
    %v9034 = vand.u32 %v9033, 4294901760
    %v9035 = vsub.f32 %v9033, %v9034
    %v9036 = vand.u32 %v9035, 4294901760
    %9037 = vmatmul.mubr.f32.gmra.mrb[0].mxu0 %v9036
    %v9038 = vpop.f32.mrb[0].mxu0
    %v9039 = vadd.f32 %v8948, %v9038
    %v9040 = vpop.f32.mrb[0].mxu0
    %v9041 = vadd.f32 %v8952, %v9040
    %9042 = vmatprep.mubr.f32.mxu0 0.0
    %v9043 = vand.u32 %v8957, 4294901760
    %v9044 = vsub.f32 %v8957, %v9043
    %v9045 = vand.u32 %v9044, 4294901760
    %v9046 = vsub.f32 %v9044, %v9045
    %v9047 = vand.u32 %v9046, 4294901760
    %9048 = vmatmul.mubr.f32.gmra.mrb[0].mxu0 %v9047
    %v9049 = vpop.f32.mrb[0].mxu0
    %v9050 = vadd.f32 %v8948, %v9049
    %v9051 = vpop.f32.mrb[0].mxu0
    %v9052 = vadd.f32 %v8952, %v9051
    %9053 = vdwg.mxu0
    %v9054 = vand.u32 %v8938, 4294901760
    %v9055 = vsub.f32 %v8938, %v9054
    %v9056 = vand.u32 %v9055, 4294901760
    %v9057 = vsub.f32 %v9055, %v9056
    %v9058 = vand.u32 %v9057, 4294901760
    %9059 = vmatprep.subr.mxu0 %v9058
    %v9060 = vand.u32 %v8937, 4294901760
    %v9061 = vsub.f32 %v8937, %v9060
    %v9062 = vand.u32 %v9061, 4294901760
    %v9063 = vsub.f32 %v9061, %v9062
    %v9064 = vand.u32 %v9063, 4294901760
    %9065 = vmatpush1.msra.mxu0 %v9064
    %v9066 = vand.u32 %v8940, 4294901760
    %v9067 = vsub.f32 %v8940, %v9066
    %v9068 = vand.u32 %v9067, 4294901760
    %v9069 = vsub.f32 %v9067, %v9068
    %v9070 = vand.u32 %v9069, 4294901760
    %9071 = vmatprep.subr.mxu0 %v9070
    %v9072 = vand.u32 %v8939, 4294901760
    %v9073 = vsub.f32 %v8939, %v9072
    %v9074 = vand.u32 %v9073, 4294901760
    %v9075 = vsub.f32 %v9073, %v9074
    %v9076 = vand.u32 %v9075, 4294901760
    %9077 = vmatpush1.msra.mxu0 %v9076
    %v9078 = vand.u32 %v8942, 4294901760
    %v9079 = vsub.f32 %v8942, %v9078
    %v9080 = vand.u32 %v9079, 4294901760
    %v9081 = vsub.f32 %v9079, %v9080
    %v9082 = vand.u32 %v9081, 4294901760
    %9083 = vmatprep.subr.mxu0 %v9082
    %v9084 = vand.u32 %v8941, 4294901760
    %v9085 = vsub.f32 %v8941, %v9084
    %v9086 = vand.u32 %v9085, 4294901760
    %v9087 = vsub.f32 %v9085, %v9086
    %v9088 = vand.u32 %v9087, 4294901760
    %9089 = vmatpush1.msra.mxu0 %v9088
    %v9090 = vand.u32 %v8944, 4294901760
    %v9091 = vsub.f32 %v8944, %v9090
    %v9092 = vand.u32 %v9091, 4294901760
    %v9093 = vsub.f32 %v9091, %v9092
    %v9094 = vand.u32 %v9093, 4294901760
    %9095 = vmatprep.subr.mxu0 %v9094
    %v9096 = vand.u32 %v8943, 4294901760
    %v9097 = vsub.f32 %v8943, %v9096
    %v9098 = vand.u32 %v9097, 4294901760
    %v9099 = vsub.f32 %v9097, %v9098
    %v9100 = vand.u32 %v9099, 4294901760
    %9101 = vmatpush1.msra.mxu0 %v9100
    %9102 = vmatprep.subr.mxu0 0.0
    %9103 = vmatpush1.msra.mxu0 0.0
    %9104 = vmatprep.subr.mxu0 0.0
    %9105 = vmatpush1.msra.mxu0 0.0
    %9106 = vmatprep.subr.mxu0 0.0
    %9107 = vmatpush1.msra.mxu0 0.0
    %9108 = vmatprep.subr.mxu0 0.0
    %9109 = vmatpush1.msra.mxu0 0.0
    %9110 = vmatprep.subr.mxu0 0.0
    %9111 = vmatpush1.msra.mxu0 0.0
    %9112 = vmatprep.subr.mxu0 0.0
    %9113 = vmatpush1.msra.mxu0 0.0
    %9114 = vmatprep.subr.mxu0 0.0
    %9115 = vmatpush1.msra.mxu0 0.0
    %9116 = vmatprep.subr.mxu0 0.0
    %9117 = vmatpush1.msra.mxu0 0.0
    %9118 = vmatprep.subr.mxu0 0.0
    %9119 = vmatpush1.msra.mxu0 0.0
    %9120 = vmatprep.subr.mxu0 0.0
    %9121 = vmatpush1.msra.mxu0 0.0
    %9122 = vmatprep.subr.mxu0 0.0
    %9123 = vmatpush1.msra.mxu0 0.0
    %9124 = vmatprep.subr.mxu0 0.0
    %9125 = vmatpush1.msra.mxu0 0.0
    %9126 = vmatprep.subr.mxu0 0.0
    %9127 = vmatpush1.msra.mxu0 0.0
    %9128 = vmatprep.subr.mxu0 0.0
    %9129 = vmatpush1.msra.mxu0 0.0
    %9130 = vmatprep.subr.mxu0 0.0
    %9131 = vmatpush1.msra.mxu0 0.0
    %9132 = vmatprep.subr.mxu0 0.0
    %9133 = vmatpush1.msra.mxu0 0.0
    %9134 = vmatprep.subr.mxu0 0.0
    %9135 = vmatpush1.msra.mxu0 0.0
    %9136 = vmatprep.subr.mxu0 0.0
    %9137 = vmatpush1.msra.mxu0 0.0
    %9138 = vmatprep.subr.mxu0 0.0
    %9139 = vmatpush1.msra.mxu0 0.0
    %9140 = vmatprep.subr.mxu0 0.0
    %9141 = vmatpush1.msra.mxu0 0.0
    %9142 = vmatprep.subr.mxu0 0.0
    %9143 = vmatpush1.msra.mxu0 0.0
    %9144 = vmatprep.subr.mxu0 0.0
    %9145 = vmatpush1.msra.mxu0 0.0
    %9146 = vmatprep.subr.mxu0 0.0
    %9147 = vmatpush1.msra.mxu0 0.0
    %9148 = vmatprep.subr.mxu0 0.0
    %9149 = vmatpush1.msra.mxu0 0.0
    %9150 = vmatprep.subr.mxu0 0.0
    %9151 = vmatpush1.msra.mxu0 0.0
    %9152 = vmatprep.subr.mxu0 0.0
    %9153 = vmatpush1.msra.mxu0 0.0
    %9154 = vmatprep.subr.mxu0 0.0
    %9155 = vmatpush1.msra.mxu0 0.0
    %9156 = vmatprep.subr.mxu0 0.0
    %9157 = vmatpush1.msra.mxu0 0.0
    %9158 = vmatprep.mubr.f32.mxu0 0.0
    %v9159 = vand.u32 %v8954, 4294901760
    %9160 = vmatmul.mubr.f32.gmra.mrb[0].mxu0 %v9159
    %v9161 = vpop.f32.mrb[0].mxu0
    %v9162 = vadd.f32 %v9039, %v9161
    %v9163 = vpop.f32.mrb[0].mxu0
    %v9164 = vadd.f32 %v9041, %v9163
    %9165 = vmatprep.mubr.f32.mxu0 0.0
    %v9166 = vand.u32 %v8957, 4294901760
    %9167 = vmatmul.mubr.f32.gmra.mrb[0].mxu0 %v9166
    %v9168 = vpop.f32.mrb[0].mxu0
    %v9169 = vadd.f32 %v9050, %v9168
    %v9170 = vpop.f32.mrb[0].mxu0
    %v9171 = vadd.f32 %v9052, %v9170
    %9172 = vdwg.mxu0
    %v9173 = vand.u32 %v8938, 4294901760
    %v9174 = vsub.f32 %v8938, %v9173
    %9175 = vmatprep.subr.mxu0 %v9174
    %v9176 = vand.u32 %v8937, 4294901760
    %v9177 = vsub.f32 %v8937, %v9176
    %9178 = vmatpush1.msra.mxu0 %v9177
    %v9179 = vand.u32 %v8940, 4294901760
    %v9180 = vsub.f32 %v8940, %v9179
    %9181 = vmatprep.subr.mxu0 %v9180
    %v9182 = vand.u32 %v8939, 4294901760
    %v9183 = vsub.f32 %v8939, %v9182
    %9184 = vmatpush1.msra.mxu0 %v9183
    %v9185 = vand.u32 %v8942, 4294901760
    %v9186 = vsub.f32 %v8942, %v9185
    %9187 = vmatprep.subr.mxu0 %v9186
    %v9188 = vand.u32 %v8941, 4294901760
    %v9189 = vsub.f32 %v8941, %v9188
    %9190 = vmatpush1.msra.mxu0 %v9189
    %v9191 = vand.u32 %v8944, 4294901760
    %v9192 = vsub.f32 %v8944, %v9191
    %9193 = vmatprep.subr.mxu0 %v9192
    %v9194 = vand.u32 %v8943, 4294901760
    %v9195 = vsub.f32 %v8943, %v9194
    %9196 = vmatpush1.msra.mxu0 %v9195
    %9197 = vmatprep.subr.mxu0 0.0
    %9198 = vmatpush1.msra.mxu0 0.0
    %9199 = vmatprep.subr.mxu0 0.0
    %9200 = vmatpush1.msra.mxu0 0.0
    %9201 = vmatprep.subr.mxu0 0.0
    %9202 = vmatpush1.msra.mxu0 0.0
    %9203 = vmatprep.subr.mxu0 0.0
    %9204 = vmatpush1.msra.mxu0 0.0
    %9205 = vmatprep.subr.mxu0 0.0
    %9206 = vmatpush1.msra.mxu0 0.0
    %9207 = vmatprep.subr.mxu0 0.0
    %9208 = vmatpush1.msra.mxu0 0.0
    %9209 = vmatprep.subr.mxu0 0.0
    %9210 = vmatpush1.msra.mxu0 0.0
    %9211 = vmatprep.subr.mxu0 0.0
    %9212 = vmatpush1.msra.mxu0 0.0
    %9213 = vmatprep.subr.mxu0 0.0
    %9214 = vmatpush1.msra.mxu0 0.0
    %9215 = vmatprep.subr.mxu0 0.0
    %9216 = vmatpush1.msra.mxu0 0.0
    %9217 = vmatprep.subr.mxu0 0.0
    %9218 = vmatpush1.msra.mxu0 0.0
    %9219 = vmatprep.subr.mxu0 0.0
    %9220 = vmatpush1.msra.mxu0 0.0
    %9221 = vmatprep.subr.mxu0 0.0
    %9222 = vmatpush1.msra.mxu0 0.0
    %9223 = vmatprep.subr.mxu0 0.0
    %9224 = vmatpush1.msra.mxu0 0.0
    %9225 = vmatprep.subr.mxu0 0.0
    %9226 = vmatpush1.msra.mxu0 0.0
    %9227 = vmatprep.subr.mxu0 0.0
    %9228 = vmatpush1.msra.mxu0 0.0
    %9229 = vmatprep.subr.mxu0 0.0
    %9230 = vmatpush1.msra.mxu0 0.0
    %9231 = vmatprep.subr.mxu0 0.0
    %9232 = vmatpush1.msra.mxu0 0.0
    %9233 = vmatprep.subr.mxu0 0.0
    %9234 = vmatpush1.msra.mxu0 0.0
    %9235 = vmatprep.subr.mxu0 0.0
    %9236 = vmatpush1.msra.mxu0 0.0
    %9237 = vmatprep.subr.mxu0 0.0
    %9238 = vmatpush1.msra.mxu0 0.0
    %9239 = vmatprep.subr.mxu0 0.0
    %9240 = vmatpush1.msra.mxu0 0.0
    %9241 = vmatprep.subr.mxu0 0.0
    %9242 = vmatpush1.msra.mxu0 0.0
    %9243 = vmatprep.subr.mxu0 0.0
    %9244 = vmatpush1.msra.mxu0 0.0
    %9245 = vmatprep.subr.mxu0 0.0
    %9246 = vmatpush1.msra.mxu0 0.0
    %9247 = vmatprep.subr.mxu0 0.0
    %9248 = vmatpush1.msra.mxu0 0.0
    %9249 = vmatprep.subr.mxu0 0.0
    %9250 = vmatpush1.msra.mxu0 0.0
    %9251 = vmatprep.subr.mxu0 0.0
    %9252 = vmatpush1.msra.mxu0 0.0
    %9253 = vmatprep.mubr.f32.mxu0 0.0
    %v9254 = vand.u32 %v8954, 4294901760
    %v9255 = vsub.f32 %v8954, %v9254
    %9256 = vmatmul.mubr.f32.gmra.mrb[0].mxu0 %v9255
    %v9257 = vpop.f32.mrb[0].mxu0
    %v9258 = vadd.f32 %v9162, %v9257
    %v9259 = vpop.f32.mrb[0].mxu0
    %v9260 = vadd.f32 %v9164, %v9259
    %9261 = vmatprep.mubr.f32.mxu0 0.0
    %v9262 = vand.u32 %v8957, 4294901760
    %v9263 = vsub.f32 %v8957, %v9262
    %9264 = vmatmul.mubr.f32.gmra.mrb[0].mxu0 %v9263
    %v9265 = vpop.f32.mrb[0].mxu0
    %v9266 = vadd.f32 %v9169, %v9265
    %v9267 = vpop.f32.mrb[0].mxu0
    %v9268 = vadd.f32 %v9171, %v9267
    %9269 = vdwg.mxu0
    %v9270 = vand.u32 %v8938, 4294901760
    %9271 = vmatprep.subr.mxu0 %v9270
    %v9272 = vand.u32 %v8937, 4294901760
    %9273 = vmatpush1.msra.mxu0 %v9272
    %v9274 = vand.u32 %v8940, 4294901760
    %9275 = vmatprep.subr.mxu0 %v9274
    %v9276 = vand.u32 %v8939, 4294901760
    %9277 = vmatpush1.msra.mxu0 %v9276
    %v9278 = vand.u32 %v8942, 4294901760
    %9279 = vmatprep.subr.mxu0 %v9278
    %v9280 = vand.u32 %v8941, 4294901760
    %9281 = vmatpush1.msra.mxu0 %v9280
    %v9282 = vand.u32 %v8944, 4294901760
    %9283 = vmatprep.subr.mxu0 %v9282
    %v9284 = vand.u32 %v8943, 4294901760
    %9285 = vmatpush1.msra.mxu0 %v9284
    %9286 = vmatprep.subr.mxu0 0.0
    %9287 = vmatpush1.msra.mxu0 0.0
    %9288 = vmatprep.subr.mxu0 0.0
    %9289 = vmatpush1.msra.mxu0 0.0
    %9290 = vmatprep.subr.mxu0 0.0
    %9291 = vmatpush1.msra.mxu0 0.0
    %9292 = vmatprep.subr.mxu0 0.0
    %9293 = vmatpush1.msra.mxu0 0.0
    %9294 = vmatprep.subr.mxu0 0.0
    %9295 = vmatpush1.msra.mxu0 0.0
    %9296 = vmatprep.subr.mxu0 0.0
    %9297 = vmatpush1.msra.mxu0 0.0
    %9298 = vmatprep.subr.mxu0 0.0
    %9299 = vmatpush1.msra.mxu0 0.0
    %9300 = vmatprep.subr.mxu0 0.0
    %9301 = vmatpush1.msra.mxu0 0.0
    %9302 = vmatprep.subr.mxu0 0.0
    %9303 = vmatpush1.msra.mxu0 0.0
    %9304 = vmatprep.subr.mxu0 0.0
    %9305 = vmatpush1.msra.mxu0 0.0
    %9306 = vmatprep.subr.mxu0 0.0
    %9307 = vmatpush1.msra.mxu0 0.0
    %9308 = vmatprep.subr.mxu0 0.0
    %9309 = vmatpush1.msra.mxu0 0.0
    %9310 = vmatprep.subr.mxu0 0.0
    %9311 = vmatpush1.msra.mxu0 0.0
    %9312 = vmatprep.subr.mxu0 0.0
    %9313 = vmatpush1.msra.mxu0 0.0
    %9314 = vmatprep.subr.mxu0 0.0
    %9315 = vmatpush1.msra.mxu0 0.0
    %9316 = vmatprep.subr.mxu0 0.0
    %9317 = vmatpush1.msra.mxu0 0.0
    %9318 = vmatprep.subr.mxu0 0.0
    %9319 = vmatpush1.msra.mxu0 0.0
    %9320 = vmatprep.subr.mxu0 0.0
    %9321 = vmatpush1.msra.mxu0 0.0
    %9322 = vmatprep.subr.mxu0 0.0
    %9323 = vmatpush1.msra.mxu0 0.0
    %9324 = vmatprep.subr.mxu0 0.0
    %9325 = vmatpush1.msra.mxu0 0.0
    %9326 = vmatprep.subr.mxu0 0.0
    %9327 = vmatpush1.msra.mxu0 0.0
    %9328 = vmatprep.subr.mxu0 0.0
    %9329 = vmatpush1.msra.mxu0 0.0
    %9330 = vmatprep.subr.mxu0 0.0
    %9331 = vmatpush1.msra.mxu0 0.0
    %9332 = vmatprep.subr.mxu0 0.0
    %9333 = vmatpush1.msra.mxu0 0.0
    %9334 = vmatprep.subr.mxu0 0.0
    %9335 = vmatpush1.msra.mxu0 0.0
    %9336 = vmatprep.subr.mxu0 0.0
    %9337 = vmatpush1.msra.mxu0 0.0
    %9338 = vmatprep.subr.mxu0 0.0
    %9339 = vmatpush1.msra.mxu0 0.0
    %9340 = vmatprep.subr.mxu0 0.0
    %9341 = vmatpush1.msra.mxu0 0.0
    %9342 = vmatprep.mubr.f32.mxu0 0.0
    %v9343 = vand.u32 %v8954, 4294901760
    %v9344 = vsub.f32 %v8954, %v9343
    %v9345 = vand.u32 %v9344, 4294901760
    %9346 = vmatmul.mubr.f32.gmra.mrb[0].mxu0 %v9345
    %v9347 = vpop.f32.mrb[0].mxu0
    %v9348 = vadd.f32 %v9258, %v9347
    %v9349 = vpop.f32.mrb[0].mxu0
    %v9350 = vadd.f32 %v9260, %v9349
    %9351 = vmatprep.mubr.f32.mxu0 0.0
    %v9352 = vand.u32 %v8957, 4294901760
    %v9353 = vsub.f32 %v8957, %v9352
    %v9354 = vand.u32 %v9353, 4294901760
    %9355 = vmatmul.mubr.f32.gmra.mrb[0].mxu0 %v9354
    %v9356 = vpop.f32.mrb[0].mxu0
    %v9357 = vadd.f32 %v9266, %v9356
    %v9358 = vpop.f32.mrb[0].mxu0
    %v9359 = vadd.f32 %v9268, %v9358
    %9360 = vdwg.mxu0
    %v9361 = vand.u32 %v8938, 4294901760
    %v9362 = vsub.f32 %v8938, %v9361
    %v9363 = vand.u32 %v9362, 4294901760
    %9364 = vmatprep.subr.mxu0 %v9363
    %v9365 = vand.u32 %v8937, 4294901760
    %v9366 = vsub.f32 %v8937, %v9365
    %v9367 = vand.u32 %v9366, 4294901760
    %9368 = vmatpush1.msra.mxu0 %v9367
    %v9369 = vand.u32 %v8940, 4294901760
    %v9370 = vsub.f32 %v8940, %v9369
    %v9371 = vand.u32 %v9370, 4294901760
    %9372 = vmatprep.subr.mxu0 %v9371
    %v9373 = vand.u32 %v8939, 4294901760
    %v9374 = vsub.f32 %v8939, %v9373
    %v9375 = vand.u32 %v9374, 4294901760
    %9376 = vmatpush1.msra.mxu0 %v9375
    %v9377 = vand.u32 %v8942, 4294901760
    %v9378 = vsub.f32 %v8942, %v9377
    %v9379 = vand.u32 %v9378, 4294901760
    %9380 = vmatprep.subr.mxu0 %v9379
    %v9381 = vand.u32 %v8941, 4294901760
    %v9382 = vsub.f32 %v8941, %v9381
    %v9383 = vand.u32 %v9382, 4294901760
    %9384 = vmatpush1.msra.mxu0 %v9383
    %v9385 = vand.u32 %v8944, 4294901760
    %v9386 = vsub.f32 %v8944, %v9385
    %v9387 = vand.u32 %v9386, 4294901760
    %9388 = vmatprep.subr.mxu0 %v9387
    %v9389 = vand.u32 %v8943, 4294901760
    %v9390 = vsub.f32 %v8943, %v9389
    %v9391 = vand.u32 %v9390, 4294901760
    %9392 = vmatpush1.msra.mxu0 %v9391
    %9393 = vmatprep.subr.mxu0 0.0
    %9394 = vmatpush1.msra.mxu0 0.0
    %9395 = vmatprep.subr.mxu0 0.0
    %9396 = vmatpush1.msra.mxu0 0.0
    %9397 = vmatprep.subr.mxu0 0.0
    %9398 = vmatpush1.msra.mxu0 0.0
    %9399 = vmatprep.subr.mxu0 0.0
    %9400 = vmatpush1.msra.mxu0 0.0
    %9401 = vmatprep.subr.mxu0 0.0
    %9402 = vmatpush1.msra.mxu0 0.0
    %9403 = vmatprep.subr.mxu0 0.0
    %9404 = vmatpush1.msra.mxu0 0.0
    %9405 = vmatprep.subr.mxu0 0.0
    %9406 = vmatpush1.msra.mxu0 0.0
    %9407 = vmatprep.subr.mxu0 0.0
    %9408 = vmatpush1.msra.mxu0 0.0
    %9409 = vmatprep.subr.mxu0 0.0
    %9410 = vmatpush1.msra.mxu0 0.0
    %9411 = vmatprep.subr.mxu0 0.0
    %9412 = vmatpush1.msra.mxu0 0.0
    %9413 = vmatprep.subr.mxu0 0.0
    %9414 = vmatpush1.msra.mxu0 0.0
    %9415 = vmatprep.subr.mxu0 0.0
    %9416 = vmatpush1.msra.mxu0 0.0
    %9417 = vmatprep.subr.mxu0 0.0
    %9418 = vmatpush1.msra.mxu0 0.0
    %9419 = vmatprep.subr.mxu0 0.0
    %9420 = vmatpush1.msra.mxu0 0.0
    %9421 = vmatprep.subr.mxu0 0.0
    %9422 = vmatpush1.msra.mxu0 0.0
    %9423 = vmatprep.subr.mxu0 0.0
    %9424 = vmatpush1.msra.mxu0 0.0
    %9425 = vmatprep.subr.mxu0 0.0
    %9426 = vmatpush1.msra.mxu0 0.0
    %9427 = vmatprep.subr.mxu0 0.0
    %9428 = vmatpush1.msra.mxu0 0.0
    %9429 = vmatprep.subr.mxu0 0.0
    %9430 = vmatpush1.msra.mxu0 0.0
    %9431 = vmatprep.subr.mxu0 0.0
    %9432 = vmatpush1.msra.mxu0 0.0
    %9433 = vmatprep.subr.mxu0 0.0
    %9434 = vmatpush1.msra.mxu0 0.0
    %9435 = vmatprep.subr.mxu0 0.0
    %9436 = vmatpush1.msra.mxu0 0.0
    %9437 = vmatprep.subr.mxu0 0.0
    %9438 = vmatpush1.msra.mxu0 0.0
    %9439 = vmatprep.subr.mxu0 0.0
    %9440 = vmatpush1.msra.mxu0 0.0
    %9441 = vmatprep.subr.mxu0 0.0
    %9442 = vmatpush1.msra.mxu0 0.0
    %9443 = vmatprep.subr.mxu0 0.0
    %9444 = vmatpush1.msra.mxu0 0.0
    %9445 = vmatprep.subr.mxu0 0.0
    %9446 = vmatpush1.msra.mxu0 0.0
    %9447 = vmatprep.subr.mxu0 0.0
    %9448 = vmatpush1.msra.mxu0 0.0
    %9449 = vmatprep.mubr.f32.mxu0 0.0
    %v9450 = vand.u32 %v8954, 4294901760
    %9451 = vmatmul.mubr.f32.gmra.mrb[0].mxu0 %v9450
    %v9452 = vpop.f32.mrb[0].mxu0
    %v9453 = vadd.f32 %v9348, %v9452
    %v9454 = vpop.f32.mrb[0].mxu0
    %v9455 = vadd.f32 %v9350, %v9454
    %9456 = vmatprep.mubr.f32.mxu0 0.0
    %v9457 = vand.u32 %v8957, 4294901760
    %9458 = vmatmul.mubr.f32.gmra.mrb[0].mxu0 %v9457
    %v9459 = vpop.f32.mrb[0].mxu0
    %v9460 = vadd.f32 %v9357, %v9459
    %v9461 = vpop.f32.mrb[0].mxu0
    %v9462 = vadd.f32 %v9359, %v9461
    %9463 = vdwg.mxu0
    %v9464 = vand.u32 %v8938, 4294901760
    %9465 = vmatprep.subr.mxu0 %v9464
    %v9466 = vand.u32 %v8937, 4294901760
    %9467 = vmatpush1.msra.mxu0 %v9466
    %v9468 = vand.u32 %v8940, 4294901760
    %9469 = vmatprep.subr.mxu0 %v9468
    %v9470 = vand.u32 %v8939, 4294901760
    %9471 = vmatpush1.msra.mxu0 %v9470
    %v9472 = vand.u32 %v8942, 4294901760
    %9473 = vmatprep.subr.mxu0 %v9472
    %v9474 = vand.u32 %v8941, 4294901760
    %9475 = vmatpush1.msra.mxu0 %v9474
    %v9476 = vand.u32 %v8944, 4294901760
    %9477 = vmatprep.subr.mxu0 %v9476
    %v9478 = vand.u32 %v8943, 4294901760
    %9479 = vmatpush1.msra.mxu0 %v9478
    %9480 = vmatprep.subr.mxu0 0.0
    %9481 = vmatpush1.msra.mxu0 0.0
    %9482 = vmatprep.subr.mxu0 0.0
    %9483 = vmatpush1.msra.mxu0 0.0
    %9484 = vmatprep.subr.mxu0 0.0
    %9485 = vmatpush1.msra.mxu0 0.0
    %9486 = vmatprep.subr.mxu0 0.0
    %9487 = vmatpush1.msra.mxu0 0.0
    %9488 = vmatprep.subr.mxu0 0.0
    %9489 = vmatpush1.msra.mxu0 0.0
    %9490 = vmatprep.subr.mxu0 0.0
    %9491 = vmatpush1.msra.mxu0 0.0
    %9492 = vmatprep.subr.mxu0 0.0
    %9493 = vmatpush1.msra.mxu0 0.0
    %9494 = vmatprep.subr.mxu0 0.0
    %9495 = vmatpush1.msra.mxu0 0.0
    %9496 = vmatprep.subr.mxu0 0.0
    %9497 = vmatpush1.msra.mxu0 0.0
    %9498 = vmatprep.subr.mxu0 0.0
    %9499 = vmatpush1.msra.mxu0 0.0
    %9500 = vmatprep.subr.mxu0 0.0
    %9501 = vmatpush1.msra.mxu0 0.0
    %9502 = vmatprep.subr.mxu0 0.0
    %9503 = vmatpush1.msra.mxu0 0.0
    %9504 = vmatprep.subr.mxu0 0.0
    %9505 = vmatpush1.msra.mxu0 0.0
    %9506 = vmatprep.subr.mxu0 0.0
    %9507 = vmatpush1.msra.mxu0 0.0
    %9508 = vmatprep.subr.mxu0 0.0
    %9509 = vmatpush1.msra.mxu0 0.0
    %9510 = vmatprep.subr.mxu0 0.0
    %9511 = vmatpush1.msra.mxu0 0.0
    %9512 = vmatprep.subr.mxu0 0.0
    %9513 = vmatpush1.msra.mxu0 0.0
    %9514 = vmatprep.subr.mxu0 0.0
    %9515 = vmatpush1.msra.mxu0 0.0
    %9516 = vmatprep.subr.mxu0 0.0
    %9517 = vmatpush1.msra.mxu0 0.0
    %9518 = vmatprep.subr.mxu0 0.0
    %9519 = vmatpush1.msra.mxu0 0.0
    %9520 = vmatprep.subr.mxu0 0.0
    %9521 = vmatpush1.msra.mxu0 0.0
    %9522 = vmatprep.subr.mxu0 0.0
    %9523 = vmatpush1.msra.mxu0 0.0
    %9524 = vmatprep.subr.mxu0 0.0
    %9525 = vmatpush1.msra.mxu0 0.0
    %9526 = vmatprep.subr.mxu0 0.0
    %9527 = vmatpush1.msra.mxu0 0.0
    %9528 = vmatprep.subr.mxu0 0.0
    %9529 = vmatpush1.msra.mxu0 0.0
    %9530 = vmatprep.subr.mxu0 0.0
    %9531 = vmatpush1.msra.mxu0 0.0
    %9532 = vmatprep.subr.mxu0 0.0
    %9533 = vmatpush1.msra.mxu0 0.0
    %9534 = vmatprep.subr.mxu0 0.0
    %9535 = vmatpush1.msra.mxu0 0.0
    %9536 = vmatprep.mubr.f32.mxu0 0.0
    %v9537 = vand.u32 %v8954, 4294901760
    %9538 = vmatmul.mubr.f32.gmra.mrb[0].mxu0 %v9537
    %v9539 = vpop.f32.mrb[0].mxu0
    %v9540 = vadd.f32 %v9453, %v9539
    %v9541 = vpop.f32.mrb[0].mxu0
    %v9542 = vadd.f32 %v9455, %v9541
    %9543 = vmatprep.mubr.f32.mxu0 0.0
    %v9544 = vand.u32 %v8957, 4294901760
    %9545 = vmatmul.mubr.f32.gmra.mrb[0].mxu0 %v9544
    %v9546 = vpop.f32.mrb[0].mxu0
    %v9547 = vadd.f32 %v9460, %v9546
    %v9548 = vpop.f32.mrb[0].mxu0
    %v9549 = vadd.f32 %v9462, %v9548
    %9550 = vdwg.mxu0
    %v9551 = vmul.f32 %v9542, %v9542
    %v9552 = vmul.f32 %v9549, %v9549
    %v9553 = vmul.f32 %v9542, %v9551
    %v9554 = vmul.f32 %v9549, %v9552
    %v9555 = vmul.f32 %v9553, 0.044715
    %v9556 = vmul.f32 %v9554, 0.044715
    %v9557 = vadd.f32 %v9542, %v9555
    %v9558 = vadd.f32 %v9549, %v9556
    %v9559 = vmul.f32 %v9557, 0.7978846
    %v9560 = vmul.f32 %v9558, 0.7978846
    %v9561 = vtanh.pop %v9559
    %v9562 = vtanh.pop %v9560
    %v9563 = vadd.f32 %v9561, 1.0
    %v9564 = vadd.f32 %v9562, 1.0
    %v9565 = vmul.f32 %v9563, 0.5
    %v9566 = vmul.f32 %v9564, 0.5
    %v9567 = vmul.f32 %v9542, %v9565
    %v9568 = vmul.f32 %v9549, %v9566
    %v9569 = vmul.f32 %v9540, %v9567
    %v9570 = vmul.f32 %v9547, %v9568
    %s9571 = scalar_lea.vmem %s4, 128
    %v9572 = vld [vmem:[%s9571] sm:$0xff]
    %v9573 = vld [vmem:[%s9571 + $0x8] sm:$0xff]
    %v9574 = vld [vmem:[%s9571 + $0x10] sm:$0xff]
    %v9575 = vld [vmem:[%s9571 + $0x18] sm:$0xff]
    %v9576 = vld [vmem:[%s9571 + $0x20] sm:$0xff]
    %v9577 = vld [vmem:[%s9571 + $0x28] sm:$0xff]
    %v9578 = vld [vmem:[%s9571 + $0x30] sm:$0xff]
    %v9579 = vld [vmem:[%s9571 + $0x38] sm:$0xff]
    %v9580 = vld [vmem:[%s9571 + $0x40] sm:$0xff]
    %v9581 = vld [vmem:[%s9571 + $0x48] sm:$0xff]
    %v9582 = vld [vmem:[%s9571 + $0x50] sm:$0xff]
    %v9583 = vld [vmem:[%s9571 + $0x58] sm:$0xff]
    %v9584 = vld [vmem:[%s9571 + $0x60] sm:$0xff]
    %v9585 = vld [vmem:[%s9571 + $0x68] sm:$0xff]
    %v9586 = vld [vmem:[%s9571 + $0x70] sm:$0xff]
    %v9587 = vld [vmem:[%s9571 + $0x78] sm:$0xff]
    %v9588 = vlaneseq
    %v9589 = vshrl.u32 %v9588, 7
    %v9590 = vsub.s32 6, %v9589
    %v9591 = vrot.slane %v5176, %v9590
    %9592 = vmatprep.subr.mxu0 0.0
    %v9593 = vand.u32 %v9572, 4294901760
    %9594 = vmatpush1.msra.mxu0 %v9593
    %9595 = vmatprep.subr.mxu0 0.0
    %v9596 = vand.u32 %v9573, 4294901760
    %9597 = vmatpush1.msra.mxu0 %v9596
    %9598 = vmatprep.subr.mxu0 0.0
    %v9599 = vand.u32 %v9574, 4294901760
    %9600 = vmatpush1.msra.mxu0 %v9599
    %9601 = vmatprep.subr.mxu0 0.0
    %v9602 = vand.u32 %v9575, 4294901760
    %9603 = vmatpush1.msra.mxu0 %v9602
    %9604 = vmatprep.subr.mxu0 0.0
    %v9605 = vand.u32 %v9576, 4294901760
    %9606 = vmatpush1.msra.mxu0 %v9605
    %9607 = vmatprep.subr.mxu0 0.0
    %v9608 = vand.u32 %v9577, 4294901760
    %9609 = vmatpush1.msra.mxu0 %v9608
    %9610 = vmatprep.subr.mxu0 0.0
    %v9611 = vand.u32 %v9578, 4294901760
    %9612 = vmatpush1.msra.mxu0 %v9611
    %9613 = vmatprep.subr.mxu0 0.0
    %v9614 = vand.u32 %v9579, 4294901760
    %9615 = vmatpush1.msra.mxu0 %v9614
    %9616 = vmatprep.subr.mxu0 0.0
    %v9617 = vand.u32 %v9580, 4294901760
    %9618 = vmatpush1.msra.mxu0 %v9617
    %9619 = vmatprep.subr.mxu0 0.0
    %v9620 = vand.u32 %v9581, 4294901760
    %9621 = vmatpush1.msra.mxu0 %v9620
    %9622 = vmatprep.subr.mxu0 0.0
    %v9623 = vand.u32 %v9582, 4294901760
    %9624 = vmatpush1.msra.mxu0 %v9623
    %9625 = vmatprep.subr.mxu0 0.0
    %v9626 = vand.u32 %v9583, 4294901760
    %9627 = vmatpush1.msra.mxu0 %v9626
    %9628 = vmatprep.subr.mxu0 0.0
    %v9629 = vand.u32 %v9584, 4294901760
    %9630 = vmatpush1.msra.mxu0 %v9629
    %9631 = vmatprep.subr.mxu0 0.0
    %v9632 = vand.u32 %v9585, 4294901760
    %9633 = vmatpush1.msra.mxu0 %v9632
    %9634 = vmatprep.subr.mxu0 0.0
    %v9635 = vand.u32 %v9586, 4294901760
    %9636 = vmatpush1.msra.mxu0 %v9635
    %9637 = vmatprep.subr.mxu0 0.0
    %v9638 = vand.u32 %v9587, 4294901760
    %9639 = vmatpush1.msra.mxu0 %v9638
    %9640 = vmatprep.subr.mxu0 0.0
    %9641 = vmatpush1.msra.mxu0 0.0
    %9642 = vmatprep.subr.mxu0 0.0
    %9643 = vmatpush1.msra.mxu0 0.0
    %9644 = vmatprep.subr.mxu0 0.0
    %9645 = vmatpush1.msra.mxu0 0.0
    %9646 = vmatprep.subr.mxu0 0.0
    %9647 = vmatpush1.msra.mxu0 0.0
    %9648 = vmatprep.subr.mxu0 0.0
    %9649 = vmatpush1.msra.mxu0 0.0
    %9650 = vmatprep.subr.mxu0 0.0
    %9651 = vmatpush1.msra.mxu0 0.0
    %9652 = vmatprep.subr.mxu0 0.0
    %9653 = vmatpush1.msra.mxu0 0.0
    %9654 = vmatprep.subr.mxu0 0.0
    %9655 = vmatpush1.msra.mxu0 0.0
    %9656 = vmatprep.subr.mxu0 0.0
    %9657 = vmatpush1.msra.mxu0 0.0
    %9658 = vmatprep.subr.mxu0 0.0
    %9659 = vmatpush1.msra.mxu0 0.0
    %9660 = vmatprep.subr.mxu0 0.0
    %9661 = vmatpush1.msra.mxu0 0.0
    %9662 = vmatprep.subr.mxu0 0.0
    %9663 = vmatpush1.msra.mxu0 0.0
    %9664 = vmatprep.subr.mxu0 0.0
    %9665 = vmatpush1.msra.mxu0 0.0
    %9666 = vmatprep.subr.mxu0 0.0
    %9667 = vmatpush1.msra.mxu0 0.0
    %9668 = vmatprep.subr.mxu0 0.0
    %9669 = vmatpush1.msra.mxu0 0.0
    %9670 = vmatprep.subr.mxu0 0.0
    %9671 = vmatpush1.msra.mxu0 0.0
    %9672 = vmatprep.mubr.f32.mxu0 0.0
    %v9673 = vand.u32 %v9569, 4294901760
    %v9674 = vsub.f32 %v9569, %v9673
    %v9675 = vand.u32 %v9674, 4294901760
    %v9676 = vsub.f32 %v9674, %v9675
    %v9677 = vand.u32 %v9676, 4294901760
    %9678 = vmatmul.mubr.f32.gmra.mrb[0].mxu0 %v9677
    %v9679 = vpop.f32.mrb[0].mxu0
    %v9680 = vadd.f32 %v9591, %v9679
    %v9681 = vpop.f32.mrb[0].mxu0
    %9682 = vmatprep.mubr.f32.mxu0 0.0
    %v9683 = vand.u32 %v9570, 4294901760
    %v9684 = vsub.f32 %v9570, %v9683
    %v9685 = vand.u32 %v9684, 4294901760
    %v9686 = vsub.f32 %v9684, %v9685
    %v9687 = vand.u32 %v9686, 4294901760
    %9688 = vmatmul.mubr.f32.gmra.mrb[0].mxu0 %v9687
    %v9689 = vpop.f32.mrb[0].mxu0
    %v9690 = vadd.f32 %v9591, %v9689
    %v9691 = vpop.f32.mrb[0].mxu0
    %9692 = vdwg.mxu0
    %9693 = vmatprep.subr.mxu0 0.0
    %v9694 = vand.u32 %v9572, 4294901760
    %v9695 = vsub.f32 %v9572, %v9694
    %v9696 = vand.u32 %v9695, 4294901760
    %v9697 = vsub.f32 %v9695, %v9696
    %v9698 = vand.u32 %v9697, 4294901760
    %9699 = vmatpush1.msra.mxu0 %v9698
    %9700 = vmatprep.subr.mxu0 0.0
    %v9701 = vand.u32 %v9573, 4294901760
    %v9702 = vsub.f32 %v9573, %v9701
    %v9703 = vand.u32 %v9702, 4294901760
    %v9704 = vsub.f32 %v9702, %v9703
    %v9705 = vand.u32 %v9704, 4294901760
    %9706 = vmatpush1.msra.mxu0 %v9705
    %9707 = vmatprep.subr.mxu0 0.0
    %v9708 = vand.u32 %v9574, 4294901760
    %v9709 = vsub.f32 %v9574, %v9708
    %v9710 = vand.u32 %v9709, 4294901760
    %v9711 = vsub.f32 %v9709, %v9710
    %v9712 = vand.u32 %v9711, 4294901760
    %9713 = vmatpush1.msra.mxu0 %v9712
    %9714 = vmatprep.subr.mxu0 0.0
    %v9715 = vand.u32 %v9575, 4294901760
    %v9716 = vsub.f32 %v9575, %v9715
    %v9717 = vand.u32 %v9716, 4294901760
    %v9718 = vsub.f32 %v9716, %v9717
    %v9719 = vand.u32 %v9718, 4294901760
    %9720 = vmatpush1.msra.mxu0 %v9719
    %9721 = vmatprep.subr.mxu0 0.0
    %v9722 = vand.u32 %v9576, 4294901760
    %v9723 = vsub.f32 %v9576, %v9722
    %v9724 = vand.u32 %v9723, 4294901760
    %v9725 = vsub.f32 %v9723, %v9724
    %v9726 = vand.u32 %v9725, 4294901760
    %9727 = vmatpush1.msra.mxu0 %v9726
    %9728 = vmatprep.subr.mxu0 0.0
    %v9729 = vand.u32 %v9577, 4294901760
    %v9730 = vsub.f32 %v9577, %v9729
    %v9731 = vand.u32 %v9730, 4294901760
    %v9732 = vsub.f32 %v9730, %v9731
    %v9733 = vand.u32 %v9732, 4294901760
    %9734 = vmatpush1.msra.mxu0 %v9733
    %9735 = vmatprep.subr.mxu0 0.0
    %v9736 = vand.u32 %v9578, 4294901760
    %v9737 = vsub.f32 %v9578, %v9736
    %v9738 = vand.u32 %v9737, 4294901760
    %v9739 = vsub.f32 %v9737, %v9738
    %v9740 = vand.u32 %v9739, 4294901760
    %9741 = vmatpush1.msra.mxu0 %v9740
    %9742 = vmatprep.subr.mxu0 0.0
    %v9743 = vand.u32 %v9579, 4294901760
    %v9744 = vsub.f32 %v9579, %v9743
    %v9745 = vand.u32 %v9744, 4294901760
    %v9746 = vsub.f32 %v9744, %v9745
    %v9747 = vand.u32 %v9746, 4294901760
    %9748 = vmatpush1.msra.mxu0 %v9747
    %9749 = vmatprep.subr.mxu0 0.0
    %v9750 = vand.u32 %v9580, 4294901760
    %v9751 = vsub.f32 %v9580, %v9750
    %v9752 = vand.u32 %v9751, 4294901760
    %v9753 = vsub.f32 %v9751, %v9752
    %v9754 = vand.u32 %v9753, 4294901760
    %9755 = vmatpush1.msra.mxu0 %v9754
    %9756 = vmatprep.subr.mxu0 0.0
    %v9757 = vand.u32 %v9581, 4294901760
    %v9758 = vsub.f32 %v9581, %v9757
    %v9759 = vand.u32 %v9758, 4294901760
    %v9760 = vsub.f32 %v9758, %v9759
    %v9761 = vand.u32 %v9760, 4294901760
    %9762 = vmatpush1.msra.mxu0 %v9761
    %9763 = vmatprep.subr.mxu0 0.0
    %v9764 = vand.u32 %v9582, 4294901760
    %v9765 = vsub.f32 %v9582, %v9764
    %v9766 = vand.u32 %v9765, 4294901760
    %v9767 = vsub.f32 %v9765, %v9766
    %v9768 = vand.u32 %v9767, 4294901760
    %9769 = vmatpush1.msra.mxu0 %v9768
    %9770 = vmatprep.subr.mxu0 0.0
    %v9771 = vand.u32 %v9583, 4294901760
    %v9772 = vsub.f32 %v9583, %v9771
    %v9773 = vand.u32 %v9772, 4294901760
    %v9774 = vsub.f32 %v9772, %v9773
    %v9775 = vand.u32 %v9774, 4294901760
    %9776 = vmatpush1.msra.mxu0 %v9775
    %9777 = vmatprep.subr.mxu0 0.0
    %v9778 = vand.u32 %v9584, 4294901760
    %v9779 = vsub.f32 %v9584, %v9778
    %v9780 = vand.u32 %v9779, 4294901760
    %v9781 = vsub.f32 %v9779, %v9780
    %v9782 = vand.u32 %v9781, 4294901760
    %9783 = vmatpush1.msra.mxu0 %v9782
    %9784 = vmatprep.subr.mxu0 0.0
    %v9785 = vand.u32 %v9585, 4294901760
    %v9786 = vsub.f32 %v9585, %v9785
    %v9787 = vand.u32 %v9786, 4294901760
    %v9788 = vsub.f32 %v9786, %v9787
    %v9789 = vand.u32 %v9788, 4294901760
    %9790 = vmatpush1.msra.mxu0 %v9789
    %9791 = vmatprep.subr.mxu0 0.0
    %v9792 = vand.u32 %v9586, 4294901760
    %v9793 = vsub.f32 %v9586, %v9792
    %v9794 = vand.u32 %v9793, 4294901760
    %v9795 = vsub.f32 %v9793, %v9794
    %v9796 = vand.u32 %v9795, 4294901760
    %9797 = vmatpush1.msra.mxu0 %v9796
    %9798 = vmatprep.subr.mxu0 0.0
    %v9799 = vand.u32 %v9587, 4294901760
    %v9800 = vsub.f32 %v9587, %v9799
    %v9801 = vand.u32 %v9800, 4294901760
    %v9802 = vsub.f32 %v9800, %v9801
    %v9803 = vand.u32 %v9802, 4294901760
    %9804 = vmatpush1.msra.mxu0 %v9803
    %9805 = vmatprep.subr.mxu0 0.0
    %9806 = vmatpush1.msra.mxu0 0.0
    %9807 = vmatprep.subr.mxu0 0.0
    %9808 = vmatpush1.msra.mxu0 0.0
    %9809 = vmatprep.subr.mxu0 0.0
    %9810 = vmatpush1.msra.mxu0 0.0
    %9811 = vmatprep.subr.mxu0 0.0
    %9812 = vmatpush1.msra.mxu0 0.0
    %9813 = vmatprep.subr.mxu0 0.0
    %9814 = vmatpush1.msra.mxu0 0.0
    %9815 = vmatprep.subr.mxu0 0.0
    %9816 = vmatpush1.msra.mxu0 0.0
    %9817 = vmatprep.subr.mxu0 0.0
    %9818 = vmatpush1.msra.mxu0 0.0
    %9819 = vmatprep.subr.mxu0 0.0
    %9820 = vmatpush1.msra.mxu0 0.0
    %9821 = vmatprep.subr.mxu0 0.0
    %9822 = vmatpush1.msra.mxu0 0.0
    %9823 = vmatprep.subr.mxu0 0.0
    %9824 = vmatpush1.msra.mxu0 0.0
    %9825 = vmatprep.subr.mxu0 0.0
    %9826 = vmatpush1.msra.mxu0 0.0
    %9827 = vmatprep.subr.mxu0 0.0
    %9828 = vmatpush1.msra.mxu0 0.0
    %9829 = vmatprep.subr.mxu0 0.0
    %9830 = vmatpush1.msra.mxu0 0.0
    %9831 = vmatprep.subr.mxu0 0.0
    %9832 = vmatpush1.msra.mxu0 0.0
    %9833 = vmatprep.subr.mxu0 0.0
    %9834 = vmatpush1.msra.mxu0 0.0
    %9835 = vmatprep.subr.mxu0 0.0
    %9836 = vmatpush1.msra.mxu0 0.0
    %9837 = vmatprep.mubr.f32.mxu0 0.0
    %v9838 = vand.u32 %v9569, 4294901760
    %9839 = vmatmul.mubr.f32.gmra.mrb[0].mxu0 %v9838
    %v9840 = vpop.f32.mrb[0].mxu0
    %v9841 = vadd.f32 %v9680, %v9840
    %v9842 = vpop.f32.mrb[0].mxu0
    %9843 = vmatprep.mubr.f32.mxu0 0.0
    %v9844 = vand.u32 %v9570, 4294901760
    %9845 = vmatmul.mubr.f32.gmra.mrb[0].mxu0 %v9844
    %v9846 = vpop.f32.mrb[0].mxu0
    %v9847 = vadd.f32 %v9690, %v9846
    %v9848 = vpop.f32.mrb[0].mxu0
    %9849 = vdwg.mxu0
    %9850 = vmatprep.subr.mxu0 0.0
    %v9851 = vand.u32 %v9572, 4294901760
    %v9852 = vsub.f32 %v9572, %v9851
    %9853 = vmatpush1.msra.mxu0 %v9852
    %9854 = vmatprep.subr.mxu0 0.0
    %v9855 = vand.u32 %v9573, 4294901760
    %v9856 = vsub.f32 %v9573, %v9855
    %9857 = vmatpush1.msra.mxu0 %v9856
    %9858 = vmatprep.subr.mxu0 0.0
    %v9859 = vand.u32 %v9574, 4294901760
    %v9860 = vsub.f32 %v9574, %v9859
    %9861 = vmatpush1.msra.mxu0 %v9860
    %9862 = vmatprep.subr.mxu0 0.0
    %v9863 = vand.u32 %v9575, 4294901760
    %v9864 = vsub.f32 %v9575, %v9863
    %9865 = vmatpush1.msra.mxu0 %v9864
    %9866 = vmatprep.subr.mxu0 0.0
    %v9867 = vand.u32 %v9576, 4294901760
    %v9868 = vsub.f32 %v9576, %v9867
    %9869 = vmatpush1.msra.mxu0 %v9868
    %9870 = vmatprep.subr.mxu0 0.0
    %v9871 = vand.u32 %v9577, 4294901760
    %v9872 = vsub.f32 %v9577, %v9871
    %9873 = vmatpush1.msra.mxu0 %v9872
    %9874 = vmatprep.subr.mxu0 0.0
    %v9875 = vand.u32 %v9578, 4294901760
    %v9876 = vsub.f32 %v9578, %v9875
    %9877 = vmatpush1.msra.mxu0 %v9876
    %9878 = vmatprep.subr.mxu0 0.0
    %v9879 = vand.u32 %v9579, 4294901760
    %v9880 = vsub.f32 %v9579, %v9879
    %9881 = vmatpush1.msra.mxu0 %v9880
    %9882 = vmatprep.subr.mxu0 0.0
    %v9883 = vand.u32 %v9580, 4294901760
    %v9884 = vsub.f32 %v9580, %v9883
    %9885 = vmatpush1.msra.mxu0 %v9884
    %9886 = vmatprep.subr.mxu0 0.0
    %v9887 = vand.u32 %v9581, 4294901760
    %v9888 = vsub.f32 %v9581, %v9887
    %9889 = vmatpush1.msra.mxu0 %v9888
    %9890 = vmatprep.subr.mxu0 0.0
    %v9891 = vand.u32 %v9582, 4294901760
    %v9892 = vsub.f32 %v9582, %v9891
    %9893 = vmatpush1.msra.mxu0 %v9892
    %9894 = vmatprep.subr.mxu0 0.0
    %v9895 = vand.u32 %v9583, 4294901760
    %v9896 = vsub.f32 %v9583, %v9895
    %9897 = vmatpush1.msra.mxu0 %v9896
    %9898 = vmatprep.subr.mxu0 0.0
    %v9899 = vand.u32 %v9584, 4294901760
    %v9900 = vsub.f32 %v9584, %v9899
    %9901 = vmatpush1.msra.mxu0 %v9900
    %9902 = vmatprep.subr.mxu0 0.0
    %v9903 = vand.u32 %v9585, 4294901760
    %v9904 = vsub.f32 %v9585, %v9903
    %9905 = vmatpush1.msra.mxu0 %v9904
    %9906 = vmatprep.subr.mxu0 0.0
    %v9907 = vand.u32 %v9586, 4294901760
    %v9908 = vsub.f32 %v9586, %v9907
    %9909 = vmatpush1.msra.mxu0 %v9908
    %9910 = vmatprep.subr.mxu0 0.0
    %v9911 = vand.u32 %v9587, 4294901760
    %v9912 = vsub.f32 %v9587, %v9911
    %9913 = vmatpush1.msra.mxu0 %v9912
    %9914 = vmatprep.subr.mxu0 0.0
    %9915 = vmatpush1.msra.mxu0 0.0
    %9916 = vmatprep.subr.mxu0 0.0
    %9917 = vmatpush1.msra.mxu0 0.0
    %9918 = vmatprep.subr.mxu0 0.0
    %9919 = vmatpush1.msra.mxu0 0.0
    %9920 = vmatprep.subr.mxu0 0.0
    %9921 = vmatpush1.msra.mxu0 0.0
    %9922 = vmatprep.subr.mxu0 0.0
    %9923 = vmatpush1.msra.mxu0 0.0
    %9924 = vmatprep.subr.mxu0 0.0
    %9925 = vmatpush1.msra.mxu0 0.0
    %9926 = vmatprep.subr.mxu0 0.0
    %9927 = vmatpush1.msra.mxu0 0.0
    %9928 = vmatprep.subr.mxu0 0.0
    %9929 = vmatpush1.msra.mxu0 0.0
    %9930 = vmatprep.subr.mxu0 0.0
    %9931 = vmatpush1.msra.mxu0 0.0
    %9932 = vmatprep.subr.mxu0 0.0
    %9933 = vmatpush1.msra.mxu0 0.0
    %9934 = vmatprep.subr.mxu0 0.0
    %9935 = vmatpush1.msra.mxu0 0.0
    %9936 = vmatprep.subr.mxu0 0.0
    %9937 = vmatpush1.msra.mxu0 0.0
    %9938 = vmatprep.subr.mxu0 0.0
    %9939 = vmatpush1.msra.mxu0 0.0
    %9940 = vmatprep.subr.mxu0 0.0
    %9941 = vmatpush1.msra.mxu0 0.0
    %9942 = vmatprep.subr.mxu0 0.0
    %9943 = vmatpush1.msra.mxu0 0.0
    %9944 = vmatprep.subr.mxu0 0.0
    %9945 = vmatpush1.msra.mxu0 0.0
    %9946 = vmatprep.mubr.f32.mxu0 0.0
    %v9947 = vand.u32 %v9569, 4294901760
    %v9948 = vsub.f32 %v9569, %v9947
    %9949 = vmatmul.mubr.f32.gmra.mrb[0].mxu0 %v9948
    %v9950 = vpop.f32.mrb[0].mxu0
    %v9951 = vadd.f32 %v9841, %v9950
    %v9952 = vpop.f32.mrb[0].mxu0
    %9953 = vmatprep.mubr.f32.mxu0 0.0
    %v9954 = vand.u32 %v9570, 4294901760
    %v9955 = vsub.f32 %v9570, %v9954
    %9956 = vmatmul.mubr.f32.gmra.mrb[0].mxu0 %v9955
    %v9957 = vpop.f32.mrb[0].mxu0
    %v9958 = vadd.f32 %v9847, %v9957
    %v9959 = vpop.f32.mrb[0].mxu0
    %9960 = vdwg.mxu0
    %9961 = vmatprep.subr.mxu0 0.0
    %v9962 = vand.u32 %v9572, 4294901760
    %9963 = vmatpush1.msra.mxu0 %v9962
    %9964 = vmatprep.subr.mxu0 0.0
    %v9965 = vand.u32 %v9573, 4294901760
    %9966 = vmatpush1.msra.mxu0 %v9965
    %9967 = vmatprep.subr.mxu0 0.0
    %v9968 = vand.u32 %v9574, 4294901760
    %9969 = vmatpush1.msra.mxu0 %v9968
    %9970 = vmatprep.subr.mxu0 0.0
    %v9971 = vand.u32 %v9575, 4294901760
    %9972 = vmatpush1.msra.mxu0 %v9971
    %9973 = vmatprep.subr.mxu0 0.0
    %v9974 = vand.u32 %v9576, 4294901760
    %9975 = vmatpush1.msra.mxu0 %v9974
    %9976 = vmatprep.subr.mxu0 0.0
    %v9977 = vand.u32 %v9577, 4294901760
    %9978 = vmatpush1.msra.mxu0 %v9977
    %9979 = vmatprep.subr.mxu0 0.0
    %v9980 = vand.u32 %v9578, 4294901760
    %9981 = vmatpush1.msra.mxu0 %v9980
    %9982 = vmatprep.subr.mxu0 0.0
    %v9983 = vand.u32 %v9579, 4294901760
    %9984 = vmatpush1.msra.mxu0 %v9983
    %9985 = vmatprep.subr.mxu0 0.0
    %v9986 = vand.u32 %v9580, 4294901760
    %9987 = vmatpush1.msra.mxu0 %v9986
    %9988 = vmatprep.subr.mxu0 0.0
    %v9989 = vand.u32 %v9581, 4294901760
    %9990 = vmatpush1.msra.mxu0 %v9989
    %9991 = vmatprep.subr.mxu0 0.0
    %v9992 = vand.u32 %v9582, 4294901760
    %9993 = vmatpush1.msra.mxu0 %v9992
    %9994 = vmatprep.subr.mxu0 0.0
    %v9995 = vand.u32 %v9583, 4294901760
    %9996 = vmatpush1.msra.mxu0 %v9995
    %9997 = vmatprep.subr.mxu0 0.0
    %v9998 = vand.u32 %v9584, 4294901760
    %9999 = vmatpush1.msra.mxu0 %v9998
    %10000 = vmatprep.subr.mxu0 0.0
    %v10001 = vand.u32 %v9585, 4294901760
    %10002 = vmatpush1.msra.mxu0 %v10001
    %10003 = vmatprep.subr.mxu0 0.0
    %v10004 = vand.u32 %v9586, 4294901760
    %10005 = vmatpush1.msra.mxu0 %v10004
    %10006 = vmatprep.subr.mxu0 0.0
    %v10007 = vand.u32 %v9587, 4294901760
    %10008 = vmatpush1.msra.mxu0 %v10007
    %10009 = vmatprep.subr.mxu0 0.0
    %10010 = vmatpush1.msra.mxu0 0.0
    %10011 = vmatprep.subr.mxu0 0.0
    %10012 = vmatpush1.msra.mxu0 0.0
    %10013 = vmatprep.subr.mxu0 0.0
    %10014 = vmatpush1.msra.mxu0 0.0
    %10015 = vmatprep.subr.mxu0 0.0
    %10016 = vmatpush1.msra.mxu0 0.0
    %10017 = vmatprep.subr.mxu0 0.0
    %10018 = vmatpush1.msra.mxu0 0.0
    %10019 = vmatprep.subr.mxu0 0.0
    %10020 = vmatpush1.msra.mxu0 0.0
    %10021 = vmatprep.subr.mxu0 0.0
    %10022 = vmatpush1.msra.mxu0 0.0
    %10023 = vmatprep.subr.mxu0 0.0
    %10024 = vmatpush1.msra.mxu0 0.0
    %10025 = vmatprep.subr.mxu0 0.0
    %10026 = vmatpush1.msra.mxu0 0.0
    %10027 = vmatprep.subr.mxu0 0.0
    %10028 = vmatpush1.msra.mxu0 0.0
    %10029 = vmatprep.subr.mxu0 0.0
    %10030 = vmatpush1.msra.mxu0 0.0
    %10031 = vmatprep.subr.mxu0 0.0
    %10032 = vmatpush1.msra.mxu0 0.0
    %10033 = vmatprep.subr.mxu0 0.0
    %10034 = vmatpush1.msra.mxu0 0.0
    %10035 = vmatprep.subr.mxu0 0.0
    %10036 = vmatpush1.msra.mxu0 0.0
    %10037 = vmatprep.subr.mxu0 0.0
    %10038 = vmatpush1.msra.mxu0 0.0
    %10039 = vmatprep.subr.mxu0 0.0
    %10040 = vmatpush1.msra.mxu0 0.0
    %10041 = vmatprep.mubr.f32.mxu0 0.0
    %v10042 = vand.u32 %v9569, 4294901760
    %v10043 = vsub.f32 %v9569, %v10042
    %v10044 = vand.u32 %v10043, 4294901760
    %10045 = vmatmul.mubr.f32.gmra.mrb[0].mxu0 %v10044
    %v10046 = vpop.f32.mrb[0].mxu0
    %v10047 = vadd.f32 %v9951, %v10046
    %v10048 = vpop.f32.mrb[0].mxu0
    %10049 = vmatprep.mubr.f32.mxu0 0.0
    %v10050 = vand.u32 %v9570, 4294901760
    %v10051 = vsub.f32 %v9570, %v10050
    %v10052 = vand.u32 %v10051, 4294901760
    %10053 = vmatmul.mubr.f32.gmra.mrb[0].mxu0 %v10052
    %v10054 = vpop.f32.mrb[0].mxu0
    %v10055 = vadd.f32 %v9958, %v10054
    %v10056 = vpop.f32.mrb[0].mxu0
    %10057 = vdwg.mxu0
    %10058 = vmatprep.subr.mxu0 0.0
    %v10059 = vand.u32 %v9572, 4294901760
    %v10060 = vsub.f32 %v9572, %v10059
    %v10061 = vand.u32 %v10060, 4294901760
    %10062 = vmatpush1.msra.mxu0 %v10061
    %10063 = vmatprep.subr.mxu0 0.0
    %v10064 = vand.u32 %v9573, 4294901760
    %v10065 = vsub.f32 %v9573, %v10064
    %v10066 = vand.u32 %v10065, 4294901760
    %10067 = vmatpush1.msra.mxu0 %v10066
    %10068 = vmatprep.subr.mxu0 0.0
    %v10069 = vand.u32 %v9574, 4294901760
    %v10070 = vsub.f32 %v9574, %v10069
    %v10071 = vand.u32 %v10070, 4294901760
    %10072 = vmatpush1.msra.mxu0 %v10071
    %10073 = vmatprep.subr.mxu0 0.0
    %v10074 = vand.u32 %v9575, 4294901760
    %v10075 = vsub.f32 %v9575, %v10074
    %v10076 = vand.u32 %v10075, 4294901760
    %10077 = vmatpush1.msra.mxu0 %v10076
    %10078 = vmatprep.subr.mxu0 0.0
    %v10079 = vand.u32 %v9576, 4294901760
    %v10080 = vsub.f32 %v9576, %v10079
    %v10081 = vand.u32 %v10080, 4294901760
    %10082 = vmatpush1.msra.mxu0 %v10081
    %10083 = vmatprep.subr.mxu0 0.0
    %v10084 = vand.u32 %v9577, 4294901760
    %v10085 = vsub.f32 %v9577, %v10084
    %v10086 = vand.u32 %v10085, 4294901760
    %10087 = vmatpush1.msra.mxu0 %v10086
    %10088 = vmatprep.subr.mxu0 0.0
    %v10089 = vand.u32 %v9578, 4294901760
    %v10090 = vsub.f32 %v9578, %v10089
    %v10091 = vand.u32 %v10090, 4294901760
    %10092 = vmatpush1.msra.mxu0 %v10091
    %10093 = vmatprep.subr.mxu0 0.0
    %v10094 = vand.u32 %v9579, 4294901760
    %v10095 = vsub.f32 %v9579, %v10094
    %v10096 = vand.u32 %v10095, 4294901760
    %10097 = vmatpush1.msra.mxu0 %v10096
    %10098 = vmatprep.subr.mxu0 0.0
    %v10099 = vand.u32 %v9580, 4294901760
    %v10100 = vsub.f32 %v9580, %v10099
    %v10101 = vand.u32 %v10100, 4294901760
    %10102 = vmatpush1.msra.mxu0 %v10101
    %10103 = vmatprep.subr.mxu0 0.0
    %v10104 = vand.u32 %v9581, 4294901760
    %v10105 = vsub.f32 %v9581, %v10104
    %v10106 = vand.u32 %v10105, 4294901760
    %10107 = vmatpush1.msra.mxu0 %v10106
    %10108 = vmatprep.subr.mxu0 0.0
    %v10109 = vand.u32 %v9582, 4294901760
    %v10110 = vsub.f32 %v9582, %v10109
    %v10111 = vand.u32 %v10110, 4294901760
    %10112 = vmatpush1.msra.mxu0 %v10111
    %10113 = vmatprep.subr.mxu0 0.0
    %v10114 = vand.u32 %v9583, 4294901760
    %v10115 = vsub.f32 %v9583, %v10114
    %v10116 = vand.u32 %v10115, 4294901760
    %10117 = vmatpush1.msra.mxu0 %v10116
    %10118 = vmatprep.subr.mxu0 0.0
    %v10119 = vand.u32 %v9584, 4294901760
    %v10120 = vsub.f32 %v9584, %v10119
    %v10121 = vand.u32 %v10120, 4294901760
    %10122 = vmatpush1.msra.mxu0 %v10121
    %10123 = vmatprep.subr.mxu0 0.0
    %v10124 = vand.u32 %v9585, 4294901760
    %v10125 = vsub.f32 %v9585, %v10124
    %v10126 = vand.u32 %v10125, 4294901760
    %10127 = vmatpush1.msra.mxu0 %v10126
    %10128 = vmatprep.subr.mxu0 0.0
    %v10129 = vand.u32 %v9586, 4294901760
    %v10130 = vsub.f32 %v9586, %v10129
    %v10131 = vand.u32 %v10130, 4294901760
    %10132 = vmatpush1.msra.mxu0 %v10131
    %10133 = vmatprep.subr.mxu0 0.0
    %v10134 = vand.u32 %v9587, 4294901760
    %v10135 = vsub.f32 %v9587, %v10134
    %v10136 = vand.u32 %v10135, 4294901760
    %10137 = vmatpush1.msra.mxu0 %v10136
    %10138 = vmatprep.subr.mxu0 0.0
    %10139 = vmatpush1.msra.mxu0 0.0
    %10140 = vmatprep.subr.mxu0 0.0
    %10141 = vmatpush1.msra.mxu0 0.0
    %10142 = vmatprep.subr.mxu0 0.0
    %10143 = vmatpush1.msra.mxu0 0.0
    %10144 = vmatprep.subr.mxu0 0.0
    %10145 = vmatpush1.msra.mxu0 0.0
    %10146 = vmatprep.subr.mxu0 0.0
    %10147 = vmatpush1.msra.mxu0 0.0
    %10148 = vmatprep.subr.mxu0 0.0
    %10149 = vmatpush1.msra.mxu0 0.0
    %10150 = vmatprep.subr.mxu0 0.0
    %10151 = vmatpush1.msra.mxu0 0.0
    %10152 = vmatprep.subr.mxu0 0.0
    %10153 = vmatpush1.msra.mxu0 0.0
    %10154 = vmatprep.subr.mxu0 0.0
    %10155 = vmatpush1.msra.mxu0 0.0
    %10156 = vmatprep.subr.mxu0 0.0
    %10157 = vmatpush1.msra.mxu0 0.0
    %10158 = vmatprep.subr.mxu0 0.0
    %10159 = vmatpush1.msra.mxu0 0.0
    %10160 = vmatprep.subr.mxu0 0.0
    %10161 = vmatpush1.msra.mxu0 0.0
    %10162 = vmatprep.subr.mxu0 0.0
    %10163 = vmatpush1.msra.mxu0 0.0
    %10164 = vmatprep.subr.mxu0 0.0
    %10165 = vmatpush1.msra.mxu0 0.0
    %10166 = vmatprep.subr.mxu0 0.0
    %10167 = vmatpush1.msra.mxu0 0.0
    %10168 = vmatprep.subr.mxu0 0.0
    %10169 = vmatpush1.msra.mxu0 0.0
    %10170 = vmatprep.mubr.f32.mxu0 0.0
    %v10171 = vand.u32 %v9569, 4294901760
    %10172 = vmatmul.mubr.f32.gmra.mrb[0].mxu0 %v10171
    %v10173 = vpop.f32.mrb[0].mxu0
    %v10174 = vadd.f32 %v10047, %v10173
    %v10175 = vpop.f32.mrb[0].mxu0
    %10176 = vmatprep.mubr.f32.mxu0 0.0
    %v10177 = vand.u32 %v9570, 4294901760
    %10178 = vmatmul.mubr.f32.gmra.mrb[0].mxu0 %v10177
    %v10179 = vpop.f32.mrb[0].mxu0
    %v10180 = vadd.f32 %v10055, %v10179
    %v10181 = vpop.f32.mrb[0].mxu0
    %10182 = vdwg.mxu0
    %10183 = vmatprep.subr.mxu0 0.0
    %v10184 = vand.u32 %v9572, 4294901760
    %10185 = vmatpush1.msra.mxu0 %v10184
    %10186 = vmatprep.subr.mxu0 0.0
    %v10187 = vand.u32 %v9573, 4294901760
    %10188 = vmatpush1.msra.mxu0 %v10187
    %10189 = vmatprep.subr.mxu0 0.0
    %v10190 = vand.u32 %v9574, 4294901760
    %10191 = vmatpush1.msra.mxu0 %v10190
    %10192 = vmatprep.subr.mxu0 0.0
    %v10193 = vand.u32 %v9575, 4294901760
    %10194 = vmatpush1.msra.mxu0 %v10193
    %10195 = vmatprep.subr.mxu0 0.0
    %v10196 = vand.u32 %v9576, 4294901760
    %10197 = vmatpush1.msra.mxu0 %v10196
    %10198 = vmatprep.subr.mxu0 0.0
    %v10199 = vand.u32 %v9577, 4294901760
    %10200 = vmatpush1.msra.mxu0 %v10199
    %10201 = vmatprep.subr.mxu0 0.0
    %v10202 = vand.u32 %v9578, 4294901760
    %10203 = vmatpush1.msra.mxu0 %v10202
    %10204 = vmatprep.subr.mxu0 0.0
    %v10205 = vand.u32 %v9579, 4294901760
    %10206 = vmatpush1.msra.mxu0 %v10205
    %10207 = vmatprep.subr.mxu0 0.0
    %v10208 = vand.u32 %v9580, 4294901760
    %10209 = vmatpush1.msra.mxu0 %v10208
    %10210 = vmatprep.subr.mxu0 0.0
    %v10211 = vand.u32 %v9581, 4294901760
    %10212 = vmatpush1.msra.mxu0 %v10211
    %10213 = vmatprep.subr.mxu0 0.0
    %v10214 = vand.u32 %v9582, 4294901760
    %10215 = vmatpush1.msra.mxu0 %v10214
    %10216 = vmatprep.subr.mxu0 0.0
    %v10217 = vand.u32 %v9583, 4294901760
    %10218 = vmatpush1.msra.mxu0 %v10217
    %10219 = vmatprep.subr.mxu0 0.0
    %v10220 = vand.u32 %v9584, 4294901760
    %10221 = vmatpush1.msra.mxu0 %v10220
    %10222 = vmatprep.subr.mxu0 0.0
    %v10223 = vand.u32 %v9585, 4294901760
    %10224 = vmatpush1.msra.mxu0 %v10223
    %10225 = vmatprep.subr.mxu0 0.0
    %v10226 = vand.u32 %v9586, 4294901760
    %10227 = vmatpush1.msra.mxu0 %v10226
    %10228 = vmatprep.subr.mxu0 0.0
    %v10229 = vand.u32 %v9587, 4294901760
    %10230 = vmatpush1.msra.mxu0 %v10229
    %10231 = vmatprep.subr.mxu0 0.0
    %10232 = vmatpush1.msra.mxu0 0.0
    %10233 = vmatprep.subr.mxu0 0.0
    %10234 = vmatpush1.msra.mxu0 0.0
    %10235 = vmatprep.subr.mxu0 0.0
    %10236 = vmatpush1.msra.mxu0 0.0
    %10237 = vmatprep.subr.mxu0 0.0
    %10238 = vmatpush1.msra.mxu0 0.0
    %10239 = vmatprep.subr.mxu0 0.0
    %10240 = vmatpush1.msra.mxu0 0.0
    %10241 = vmatprep.subr.mxu0 0.0
    %10242 = vmatpush1.msra.mxu0 0.0
    %10243 = vmatprep.subr.mxu0 0.0
    %10244 = vmatpush1.msra.mxu0 0.0
    %10245 = vmatprep.subr.mxu0 0.0
    %10246 = vmatpush1.msra.mxu0 0.0
    %10247 = vmatprep.subr.mxu0 0.0
    %10248 = vmatpush1.msra.mxu0 0.0
    %10249 = vmatprep.subr.mxu0 0.0
    %10250 = vmatpush1.msra.mxu0 0.0
    %10251 = vmatprep.subr.mxu0 0.0
    %10252 = vmatpush1.msra.mxu0 0.0
    %10253 = vmatprep.subr.mxu0 0.0
    %10254 = vmatpush1.msra.mxu0 0.0
    %10255 = vmatprep.subr.mxu0 0.0
    %10256 = vmatpush1.msra.mxu0 0.0
    %10257 = vmatprep.subr.mxu0 0.0
    %10258 = vmatpush1.msra.mxu0 0.0
    %10259 = vmatprep.subr.mxu0 0.0
    %10260 = vmatpush1.msra.mxu0 0.0
    %10261 = vmatprep.subr.mxu0 0.0
    %10262 = vmatpush1.msra.mxu0 0.0
    %10263 = vmatprep.mubr.f32.mxu0 0.0
    %v10264 = vand.u32 %v9569, 4294901760
    %10265 = vmatmul.mubr.f32.gmra.mrb[0].mxu0 %v10264
    %v10266 = vpop.f32.mrb[0].mxu0
    %v10267 = vadd.f32 %v10174, %v10266
    %v10268 = vpop.f32.mrb[0].mxu0
    %10269 = vmatprep.mubr.f32.mxu0 0.0
    %v10270 = vand.u32 %v9570, 4294901760
    %10271 = vmatmul.mubr.f32.gmra.mrb[0].mxu0 %v10270
    %v10272 = vpop.f32.mrb[0].mxu0
    %v10273 = vadd.f32 %v10180, %v10272
    %v10274 = vpop.f32.mrb[0].mxu0
    %10275 = vdwg.mxu0
    %v10276 = vadd.f32 %v10267, %v8934
    %v10277 = vadd.f32 %v10273, %v8935
    %v10278 = vld [vmem:[%s6] sm:$0xff]
    %v10279 = vld [vmem:[%s6 + $0x8] sm:$0xff]
    %v10280 = vld [vmem:[%s6 + $0x10] sm:$0xff]
    %v10281 = vld [vmem:[%s6 + $0x18] sm:$0xff]
    %v10282 = vld [vmem:[%s6 + $0x20] sm:$0xff]
    %v10283 = vld [vmem:[%s6 + $0x28] sm:$0xff]
    %v10284 = vld [vmem:[%s6 + $0x30] sm:$0xff]
    %v10285 = vld [vmem:[%s6 + $0x38] sm:$0xff]
    %v10286 = vld [vmem:[%s6 + $0x40] sm:$0xff]
    %v10287 = vld [vmem:[%s6 + $0x48] sm:$0xff]
    %v10288 = vld [vmem:[%s6 + $0x50] sm:$0xff]
    %v10289 = vld [vmem:[%s6 + $0x58] sm:$0xff]
    %v10290 = vld [vmem:[%s6 + $0x60] sm:$0xff]
    %v10291 = vld [vmem:[%s6 + $0x68] sm:$0xff]
    %v10292 = vld [vmem:[%s6 + $0x70] sm:$0xff]
    %v10293 = vld [vmem:[%s6 + $0x78] sm:$0xff]
    %v10294 = vld [vmem:[%s6 + $0x80] sm:$0xff]
    %v10295 = vld [vmem:[%s6 + $0x88] sm:$0xff]
    %v10296 = vld [vmem:[%s6 + $0x90] sm:$0xff]
    %v10297 = vld [vmem:[%s6 + $0x98] sm:$0xff]
    %v10298 = vld [vmem:[%s6 + $0xa0] sm:$0x1]
    %v10299 = vld [vmem:[%s6 + $0xa8] sm:$0x1]
    %v10300 = vlaneseq
    %v10301 = vshrl.u32 %v10300, 7
    %v10302 = vsub.s32 0, %v10301
    %v10303 = vrot.slane %v10298, %v10302
    %v10305 = vsel %vm76, %v10276, 0
    %v10308 = vsel %vm76, %v10277, 0
    %10310 = vmatprep.subr.mxu0 0.0
    %v10311 = vand.u32 %v10278, 4294901760
    %10312 = vmatpush1.msra.mxu0 %v10311
    %10313 = vmatprep.subr.mxu0 0.0
    %v10314 = vand.u32 %v10279, 4294901760
    %10315 = vmatpush1.msra.mxu0 %v10314
    %10316 = vmatprep.subr.mxu0 0.0
    %v10317 = vand.u32 %v10280, 4294901760
    %10318 = vmatpush1.msra.mxu0 %v10317
    %10319 = vmatprep.subr.mxu0 0.0
    %v10320 = vand.u32 %v10281, 4294901760
    %10321 = vmatpush1.msra.mxu0 %v10320
    %10322 = vmatprep.subr.mxu0 0.0
    %10323 = vmatpush1.msra.mxu0 0.0
    %10324 = vmatprep.subr.mxu0 0.0
    %10325 = vmatpush1.msra.mxu0 0.0
    %10326 = vmatprep.subr.mxu0 0.0
    %10327 = vmatpush1.msra.mxu0 0.0
    %10328 = vmatprep.subr.mxu0 0.0
    %10329 = vmatpush1.msra.mxu0 0.0
    %10330 = vmatprep.subr.mxu0 0.0
    %10331 = vmatpush1.msra.mxu0 0.0
    %10332 = vmatprep.subr.mxu0 0.0
    %10333 = vmatpush1.msra.mxu0 0.0
    %10334 = vmatprep.subr.mxu0 0.0
    %10335 = vmatpush1.msra.mxu0 0.0
    %10336 = vmatprep.subr.mxu0 0.0
    %10337 = vmatpush1.msra.mxu0 0.0
    %10338 = vmatprep.subr.mxu0 0.0
    %10339 = vmatpush1.msra.mxu0 0.0
    %10340 = vmatprep.subr.mxu0 0.0
    %10341 = vmatpush1.msra.mxu0 0.0
    %10342 = vmatprep.subr.mxu0 0.0
    %10343 = vmatpush1.msra.mxu0 0.0
    %10344 = vmatprep.subr.mxu0 0.0
    %10345 = vmatpush1.msra.mxu0 0.0
    %10346 = vmatprep.subr.mxu0 0.0
    %10347 = vmatpush1.msra.mxu0 0.0
    %10348 = vmatprep.subr.mxu0 0.0
    %10349 = vmatpush1.msra.mxu0 0.0
    %10350 = vmatprep.subr.mxu0 0.0
    %10351 = vmatpush1.msra.mxu0 0.0
    %10352 = vmatprep.subr.mxu0 0.0
    %10353 = vmatpush1.msra.mxu0 0.0
    %10354 = vmatprep.subr.mxu0 0.0
    %10355 = vmatpush1.msra.mxu0 0.0
    %10356 = vmatprep.subr.mxu0 0.0
    %10357 = vmatpush1.msra.mxu0 0.0
    %10358 = vmatprep.subr.mxu0 0.0
    %10359 = vmatpush1.msra.mxu0 0.0
    %10360 = vmatprep.subr.mxu0 0.0
    %10361 = vmatpush1.msra.mxu0 0.0
    %10362 = vmatprep.subr.mxu0 0.0
    %10363 = vmatpush1.msra.mxu0 0.0
    %10364 = vmatprep.subr.mxu0 0.0
    %10365 = vmatpush1.msra.mxu0 0.0
    %10366 = vmatprep.subr.mxu0 0.0
    %10367 = vmatpush1.msra.mxu0 0.0
    %10368 = vmatprep.subr.mxu0 0.0
    %10369 = vmatpush1.msra.mxu0 0.0
    %10370 = vmatprep.subr.mxu0 0.0
    %10371 = vmatpush1.msra.mxu0 0.0
    %10372 = vmatprep.subr.mxu0 0.0
    %10373 = vmatpush1.msra.mxu0 0.0
    %10374 = vmatprep.subr.mxu0 0.0
    %10375 = vmatpush1.msra.mxu0 0.0
    %10376 = vmatprep.subr.mxu0 0.0
    %10377 = vmatpush1.msra.mxu0 0.0
    %10378 = vmatprep.mubr.f32.mxu0 0.0
    %v10379 = vand.u32 %v10305, 4294901760
    %v10380 = vsub.f32 %v10305, %v10379
    %v10381 = vand.u32 %v10380, 4294901760
    %v10382 = vsub.f32 %v10380, %v10381
    %v10383 = vand.u32 %v10382, 4294901760
    %10384 = vmatmul.mubr.f32.gmra.mrb[0].mxu0 %v10383
    %v10385 = vpop.f32.mrb[0].mxu0
    %v10386 = vadd.f32 %v10303, %v10385
    %v10387 = vpop.f32.mrb[0].mxu0
    %10388 = vmatprep.mubr.f32.mxu0 0.0
    %v10389 = vand.u32 %v10308, 4294901760
    %v10390 = vsub.f32 %v10308, %v10389
    %v10391 = vand.u32 %v10390, 4294901760
    %v10392 = vsub.f32 %v10390, %v10391
    %v10393 = vand.u32 %v10392, 4294901760
    %10394 = vmatmul.mubr.f32.gmra.mrb[0].mxu0 %v10393
    %v10395 = vpop.f32.mrb[0].mxu0
    %v10396 = vadd.f32 %v10303, %v10395
    %v10397 = vpop.f32.mrb[0].mxu0
    %10398 = vdwg.mxu0
    %10399 = vmatprep.subr.mxu0 0.0
    %v10400 = vand.u32 %v10278, 4294901760
    %v10401 = vsub.f32 %v10278, %v10400
    %v10402 = vand.u32 %v10401, 4294901760
    %v10403 = vsub.f32 %v10401, %v10402
    %v10404 = vand.u32 %v10403, 4294901760
    %10405 = vmatpush1.msra.mxu0 %v10404
    %10406 = vmatprep.subr.mxu0 0.0
    %v10407 = vand.u32 %v10279, 4294901760
    %v10408 = vsub.f32 %v10279, %v10407
    %v10409 = vand.u32 %v10408, 4294901760
    %v10410 = vsub.f32 %v10408, %v10409
    %v10411 = vand.u32 %v10410, 4294901760
    %10412 = vmatpush1.msra.mxu0 %v10411
    %10413 = vmatprep.subr.mxu0 0.0
    %v10414 = vand.u32 %v10280, 4294901760
    %v10415 = vsub.f32 %v10280, %v10414
    %v10416 = vand.u32 %v10415, 4294901760
    %v10417 = vsub.f32 %v10415, %v10416
    %v10418 = vand.u32 %v10417, 4294901760
    %10419 = vmatpush1.msra.mxu0 %v10418
    %10420 = vmatprep.subr.mxu0 0.0
    %v10421 = vand.u32 %v10281, 4294901760
    %v10422 = vsub.f32 %v10281, %v10421
    %v10423 = vand.u32 %v10422, 4294901760
    %v10424 = vsub.f32 %v10422, %v10423
    %v10425 = vand.u32 %v10424, 4294901760
    %10426 = vmatpush1.msra.mxu0 %v10425
    %10427 = vmatprep.subr.mxu0 0.0
    %10428 = vmatpush1.msra.mxu0 0.0
    %10429 = vmatprep.subr.mxu0 0.0
    %10430 = vmatpush1.msra.mxu0 0.0
    %10431 = vmatprep.subr.mxu0 0.0
    %10432 = vmatpush1.msra.mxu0 0.0
    %10433 = vmatprep.subr.mxu0 0.0
    %10434 = vmatpush1.msra.mxu0 0.0
    %10435 = vmatprep.subr.mxu0 0.0
    %10436 = vmatpush1.msra.mxu0 0.0
    %10437 = vmatprep.subr.mxu0 0.0
    %10438 = vmatpush1.msra.mxu0 0.0
    %10439 = vmatprep.subr.mxu0 0.0
    %10440 = vmatpush1.msra.mxu0 0.0
    %10441 = vmatprep.subr.mxu0 0.0
    %10442 = vmatpush1.msra.mxu0 0.0
    %10443 = vmatprep.subr.mxu0 0.0
    %10444 = vmatpush1.msra.mxu0 0.0
    %10445 = vmatprep.subr.mxu0 0.0
    %10446 = vmatpush1.msra.mxu0 0.0
    %10447 = vmatprep.subr.mxu0 0.0
    %10448 = vmatpush1.msra.mxu0 0.0
    %10449 = vmatprep.subr.mxu0 0.0
    %10450 = vmatpush1.msra.mxu0 0.0
    %10451 = vmatprep.subr.mxu0 0.0
    %10452 = vmatpush1.msra.mxu0 0.0
    %10453 = vmatprep.subr.mxu0 0.0
    %10454 = vmatpush1.msra.mxu0 0.0
    %10455 = vmatprep.subr.mxu0 0.0
    %10456 = vmatpush1.msra.mxu0 0.0
    %10457 = vmatprep.subr.mxu0 0.0
    %10458 = vmatpush1.msra.mxu0 0.0
    %10459 = vmatprep.subr.mxu0 0.0
    %10460 = vmatpush1.msra.mxu0 0.0
    %10461 = vmatprep.subr.mxu0 0.0
    %10462 = vmatpush1.msra.mxu0 0.0
    %10463 = vmatprep.subr.mxu0 0.0
    %10464 = vmatpush1.msra.mxu0 0.0
    %10465 = vmatprep.subr.mxu0 0.0
    %10466 = vmatpush1.msra.mxu0 0.0
    %10467 = vmatprep.subr.mxu0 0.0
    %10468 = vmatpush1.msra.mxu0 0.0
    %10469 = vmatprep.subr.mxu0 0.0
    %10470 = vmatpush1.msra.mxu0 0.0
    %10471 = vmatprep.subr.mxu0 0.0
    %10472 = vmatpush1.msra.mxu0 0.0
    %10473 = vmatprep.subr.mxu0 0.0
    %10474 = vmatpush1.msra.mxu0 0.0
    %10475 = vmatprep.subr.mxu0 0.0
    %10476 = vmatpush1.msra.mxu0 0.0
    %10477 = vmatprep.subr.mxu0 0.0
    %10478 = vmatpush1.msra.mxu0 0.0
    %10479 = vmatprep.subr.mxu0 0.0
    %10480 = vmatpush1.msra.mxu0 0.0
    %10481 = vmatprep.subr.mxu0 0.0
    %10482 = vmatpush1.msra.mxu0 0.0
    %10483 = vmatprep.mubr.f32.mxu0 0.0
    %v10484 = vand.u32 %v10305, 4294901760
    %10485 = vmatmul.mubr.f32.gmra.mrb[0].mxu0 %v10484
    %v10486 = vpop.f32.mrb[0].mxu0
    %v10487 = vadd.f32 %v10386, %v10486
    %v10488 = vpop.f32.mrb[0].mxu0
    %10489 = vmatprep.mubr.f32.mxu0 0.0
    %v10490 = vand.u32 %v10308, 4294901760
    %10491 = vmatmul.mubr.f32.gmra.mrb[0].mxu0 %v10490
    %v10492 = vpop.f32.mrb[0].mxu0
    %v10493 = vadd.f32 %v10396, %v10492
    %v10494 = vpop.f32.mrb[0].mxu0
    %10495 = vdwg.mxu0
    %10496 = vmatprep.subr.mxu0 0.0
    %v10497 = vand.u32 %v10278, 4294901760
    %v10498 = vsub.f32 %v10278, %v10497
    %10499 = vmatpush1.msra.mxu0 %v10498
    %10500 = vmatprep.subr.mxu0 0.0
    %v10501 = vand.u32 %v10279, 4294901760
    %v10502 = vsub.f32 %v10279, %v10501
    %10503 = vmatpush1.msra.mxu0 %v10502
    %10504 = vmatprep.subr.mxu0 0.0
    %v10505 = vand.u32 %v10280, 4294901760
    %v10506 = vsub.f32 %v10280, %v10505
    %10507 = vmatpush1.msra.mxu0 %v10506
    %10508 = vmatprep.subr.mxu0 0.0
    %v10509 = vand.u32 %v10281, 4294901760
    %v10510 = vsub.f32 %v10281, %v10509
    %10511 = vmatpush1.msra.mxu0 %v10510
    %10512 = vmatprep.subr.mxu0 0.0
    %10513 = vmatpush1.msra.mxu0 0.0
    %10514 = vmatprep.subr.mxu0 0.0
    %10515 = vmatpush1.msra.mxu0 0.0
    %10516 = vmatprep.subr.mxu0 0.0
    %10517 = vmatpush1.msra.mxu0 0.0
    %10518 = vmatprep.subr.mxu0 0.0
    %10519 = vmatpush1.msra.mxu0 0.0
    %10520 = vmatprep.subr.mxu0 0.0
    %10521 = vmatpush1.msra.mxu0 0.0
    %10522 = vmatprep.subr.mxu0 0.0
    %10523 = vmatpush1.msra.mxu0 0.0
    %10524 = vmatprep.subr.mxu0 0.0
    %10525 = vmatpush1.msra.mxu0 0.0
    %10526 = vmatprep.subr.mxu0 0.0
    %10527 = vmatpush1.msra.mxu0 0.0
    %10528 = vmatprep.subr.mxu0 0.0
    %10529 = vmatpush1.msra.mxu0 0.0
    %10530 = vmatprep.subr.mxu0 0.0
    %10531 = vmatpush1.msra.mxu0 0.0
    %10532 = vmatprep.subr.mxu0 0.0
    %10533 = vmatpush1.msra.mxu0 0.0
    %10534 = vmatprep.subr.mxu0 0.0
    %10535 = vmatpush1.msra.mxu0 0.0
    %10536 = vmatprep.subr.mxu0 0.0
    %10537 = vmatpush1.msra.mxu0 0.0
    %10538 = vmatprep.subr.mxu0 0.0
    %10539 = vmatpush1.msra.mxu0 0.0
    %10540 = vmatprep.subr.mxu0 0.0
    %10541 = vmatpush1.msra.mxu0 0.0
    %10542 = vmatprep.subr.mxu0 0.0
    %10543 = vmatpush1.msra.mxu0 0.0
    %10544 = vmatprep.subr.mxu0 0.0
    %10545 = vmatpush1.msra.mxu0 0.0
    %10546 = vmatprep.subr.mxu0 0.0
    %10547 = vmatpush1.msra.mxu0 0.0
    %10548 = vmatprep.subr.mxu0 0.0
    %10549 = vmatpush1.msra.mxu0 0.0
    %10550 = vmatprep.subr.mxu0 0.0
    %10551 = vmatpush1.msra.mxu0 0.0
    %10552 = vmatprep.subr.mxu0 0.0
    %10553 = vmatpush1.msra.mxu0 0.0
    %10554 = vmatprep.subr.mxu0 0.0
    %10555 = vmatpush1.msra.mxu0 0.0
    %10556 = vmatprep.subr.mxu0 0.0
    %10557 = vmatpush1.msra.mxu0 0.0
    %10558 = vmatprep.subr.mxu0 0.0
    %10559 = vmatpush1.msra.mxu0 0.0
    %10560 = vmatprep.subr.mxu0 0.0
    %10561 = vmatpush1.msra.mxu0 0.0
    %10562 = vmatprep.subr.mxu0 0.0
    %10563 = vmatpush1.msra.mxu0 0.0
    %10564 = vmatprep.subr.mxu0 0.0
    %10565 = vmatpush1.msra.mxu0 0.0
    %10566 = vmatprep.subr.mxu0 0.0
    %10567 = vmatpush1.msra.mxu0 0.0
    %10568 = vmatprep.mubr.f32.mxu0 0.0
    %v10569 = vand.u32 %v10305, 4294901760
    %v10570 = vsub.f32 %v10305, %v10569
    %10571 = vmatmul.mubr.f32.gmra.mrb[0].mxu0 %v10570
    %v10572 = vpop.f32.mrb[0].mxu0
    %v10573 = vadd.f32 %v10487, %v10572
    %v10574 = vpop.f32.mrb[0].mxu0
    %10575 = vmatprep.mubr.f32.mxu0 0.0
    %v10576 = vand.u32 %v10308, 4294901760
    %v10577 = vsub.f32 %v10308, %v10576
    %10578 = vmatmul.mubr.f32.gmra.mrb[0].mxu0 %v10577
    %v10579 = vpop.f32.mrb[0].mxu0
    %v10580 = vadd.f32 %v10493, %v10579
    %v10581 = vpop.f32.mrb[0].mxu0
    %10582 = vdwg.mxu0
    %10583 = vmatprep.subr.mxu0 0.0
    %v10584 = vand.u32 %v10278, 4294901760
    %10585 = vmatpush1.msra.mxu0 %v10584
    %10586 = vmatprep.subr.mxu0 0.0
    %v10587 = vand.u32 %v10279, 4294901760
    %10588 = vmatpush1.msra.mxu0 %v10587
    %10589 = vmatprep.subr.mxu0 0.0
    %v10590 = vand.u32 %v10280, 4294901760
    %10591 = vmatpush1.msra.mxu0 %v10590
    %10592 = vmatprep.subr.mxu0 0.0
    %v10593 = vand.u32 %v10281, 4294901760
    %10594 = vmatpush1.msra.mxu0 %v10593
    %10595 = vmatprep.subr.mxu0 0.0
    %10596 = vmatpush1.msra.mxu0 0.0
    %10597 = vmatprep.subr.mxu0 0.0
    %10598 = vmatpush1.msra.mxu0 0.0
    %10599 = vmatprep.subr.mxu0 0.0
    %10600 = vmatpush1.msra.mxu0 0.0
    %10601 = vmatprep.subr.mxu0 0.0
    %10602 = vmatpush1.msra.mxu0 0.0
    %10603 = vmatprep.subr.mxu0 0.0
    %10604 = vmatpush1.msra.mxu0 0.0
    %10605 = vmatprep.subr.mxu0 0.0
    %10606 = vmatpush1.msra.mxu0 0.0
    %10607 = vmatprep.subr.mxu0 0.0
    %10608 = vmatpush1.msra.mxu0 0.0
    %10609 = vmatprep.subr.mxu0 0.0
    %10610 = vmatpush1.msra.mxu0 0.0
    %10611 = vmatprep.subr.mxu0 0.0
    %10612 = vmatpush1.msra.mxu0 0.0
    %10613 = vmatprep.subr.mxu0 0.0
    %10614 = vmatpush1.msra.mxu0 0.0
    %10615 = vmatprep.subr.mxu0 0.0
    %10616 = vmatpush1.msra.mxu0 0.0
    %10617 = vmatprep.subr.mxu0 0.0
    %10618 = vmatpush1.msra.mxu0 0.0
    %10619 = vmatprep.subr.mxu0 0.0
    %10620 = vmatpush1.msra.mxu0 0.0
    %10621 = vmatprep.subr.mxu0 0.0
    %10622 = vmatpush1.msra.mxu0 0.0
    %10623 = vmatprep.subr.mxu0 0.0
    %10624 = vmatpush1.msra.mxu0 0.0
    %10625 = vmatprep.subr.mxu0 0.0
    %10626 = vmatpush1.msra.mxu0 0.0
    %10627 = vmatprep.subr.mxu0 0.0
    %10628 = vmatpush1.msra.mxu0 0.0
    %10629 = vmatprep.subr.mxu0 0.0
    %10630 = vmatpush1.msra.mxu0 0.0
    %10631 = vmatprep.subr.mxu0 0.0
    %10632 = vmatpush1.msra.mxu0 0.0
    %10633 = vmatprep.subr.mxu0 0.0
    %10634 = vmatpush1.msra.mxu0 0.0
    %10635 = vmatprep.subr.mxu0 0.0
    %10636 = vmatpush1.msra.mxu0 0.0
    %10637 = vmatprep.subr.mxu0 0.0
    %10638 = vmatpush1.msra.mxu0 0.0
    %10639 = vmatprep.subr.mxu0 0.0
    %10640 = vmatpush1.msra.mxu0 0.0
    %10641 = vmatprep.subr.mxu0 0.0
    %10642 = vmatpush1.msra.mxu0 0.0
    %10643 = vmatprep.subr.mxu0 0.0
    %10644 = vmatpush1.msra.mxu0 0.0
    %10645 = vmatprep.subr.mxu0 0.0
    %10646 = vmatpush1.msra.mxu0 0.0
    %10647 = vmatprep.subr.mxu0 0.0
    %10648 = vmatpush1.msra.mxu0 0.0
    %10649 = vmatprep.subr.mxu0 0.0
    %10650 = vmatpush1.msra.mxu0 0.0
    %10651 = vmatprep.mubr.f32.mxu0 0.0
    %v10652 = vand.u32 %v10305, 4294901760
    %v10653 = vsub.f32 %v10305, %v10652
    %v10654 = vand.u32 %v10653, 4294901760
    %10655 = vmatmul.mubr.f32.gmra.mrb[0].mxu0 %v10654
    %v10656 = vpop.f32.mrb[0].mxu0
    %v10657 = vadd.f32 %v10573, %v10656
    %v10658 = vpop.f32.mrb[0].mxu0
    %10659 = vmatprep.mubr.f32.mxu0 0.0
    %v10660 = vand.u32 %v10308, 4294901760
    %v10661 = vsub.f32 %v10308, %v10660
    %v10662 = vand.u32 %v10661, 4294901760
    %10663 = vmatmul.mubr.f32.gmra.mrb[0].mxu0 %v10662
    %v10664 = vpop.f32.mrb[0].mxu0
    %v10665 = vadd.f32 %v10580, %v10664
    %v10666 = vpop.f32.mrb[0].mxu0
    %10667 = vdwg.mxu0
    %10668 = vmatprep.subr.mxu0 0.0
    %v10669 = vand.u32 %v10278, 4294901760
    %v10670 = vsub.f32 %v10278, %v10669
    %v10671 = vand.u32 %v10670, 4294901760
    %10672 = vmatpush1.msra.mxu0 %v10671
    %10673 = vmatprep.subr.mxu0 0.0
    %v10674 = vand.u32 %v10279, 4294901760
    %v10675 = vsub.f32 %v10279, %v10674
    %v10676 = vand.u32 %v10675, 4294901760
    %10677 = vmatpush1.msra.mxu0 %v10676
    %10678 = vmatprep.subr.mxu0 0.0
    %v10679 = vand.u32 %v10280, 4294901760
    %v10680 = vsub.f32 %v10280, %v10679
    %v10681 = vand.u32 %v10680, 4294901760
    %10682 = vmatpush1.msra.mxu0 %v10681
    %10683 = vmatprep.subr.mxu0 0.0
    %v10684 = vand.u32 %v10281, 4294901760
    %v10685 = vsub.f32 %v10281, %v10684
    %v10686 = vand.u32 %v10685, 4294901760
    %10687 = vmatpush1.msra.mxu0 %v10686
    %10688 = vmatprep.subr.mxu0 0.0
    %10689 = vmatpush1.msra.mxu0 0.0
    %10690 = vmatprep.subr.mxu0 0.0
    %10691 = vmatpush1.msra.mxu0 0.0
    %10692 = vmatprep.subr.mxu0 0.0
    %10693 = vmatpush1.msra.mxu0 0.0
    %10694 = vmatprep.subr.mxu0 0.0
    %10695 = vmatpush1.msra.mxu0 0.0
    %10696 = vmatprep.subr.mxu0 0.0
    %10697 = vmatpush1.msra.mxu0 0.0
    %10698 = vmatprep.subr.mxu0 0.0
    %10699 = vmatpush1.msra.mxu0 0.0
    %10700 = vmatprep.subr.mxu0 0.0
    %10701 = vmatpush1.msra.mxu0 0.0
    %10702 = vmatprep.subr.mxu0 0.0
    %10703 = vmatpush1.msra.mxu0 0.0
    %10704 = vmatprep.subr.mxu0 0.0
    %10705 = vmatpush1.msra.mxu0 0.0
    %10706 = vmatprep.subr.mxu0 0.0
    %10707 = vmatpush1.msra.mxu0 0.0
    %10708 = vmatprep.subr.mxu0 0.0
    %10709 = vmatpush1.msra.mxu0 0.0
    %10710 = vmatprep.subr.mxu0 0.0
    %10711 = vmatpush1.msra.mxu0 0.0
    %10712 = vmatprep.subr.mxu0 0.0
    %10713 = vmatpush1.msra.mxu0 0.0
    %10714 = vmatprep.subr.mxu0 0.0
    %10715 = vmatpush1.msra.mxu0 0.0
    %10716 = vmatprep.subr.mxu0 0.0
    %10717 = vmatpush1.msra.mxu0 0.0
    %10718 = vmatprep.subr.mxu0 0.0
    %10719 = vmatpush1.msra.mxu0 0.0
    %10720 = vmatprep.subr.mxu0 0.0
    %10721 = vmatpush1.msra.mxu0 0.0
    %10722 = vmatprep.subr.mxu0 0.0
    %10723 = vmatpush1.msra.mxu0 0.0
    %10724 = vmatprep.subr.mxu0 0.0
    %10725 = vmatpush1.msra.mxu0 0.0
    %10726 = vmatprep.subr.mxu0 0.0
    %10727 = vmatpush1.msra.mxu0 0.0
    %10728 = vmatprep.subr.mxu0 0.0
    %10729 = vmatpush1.msra.mxu0 0.0
    %10730 = vmatprep.subr.mxu0 0.0
    %10731 = vmatpush1.msra.mxu0 0.0
    %10732 = vmatprep.subr.mxu0 0.0
    %10733 = vmatpush1.msra.mxu0 0.0
    %10734 = vmatprep.subr.mxu0 0.0
    %10735 = vmatpush1.msra.mxu0 0.0
    %10736 = vmatprep.subr.mxu0 0.0
    %10737 = vmatpush1.msra.mxu0 0.0
    %10738 = vmatprep.subr.mxu0 0.0
    %10739 = vmatpush1.msra.mxu0 0.0
    %10740 = vmatprep.subr.mxu0 0.0
    %10741 = vmatpush1.msra.mxu0 0.0
    %10742 = vmatprep.subr.mxu0 0.0
    %10743 = vmatpush1.msra.mxu0 0.0
    %10744 = vmatprep.mubr.f32.mxu0 0.0
    %v10745 = vand.u32 %v10305, 4294901760
    %10746 = vmatmul.mubr.f32.gmra.mrb[0].mxu0 %v10745
    %v10747 = vpop.f32.mrb[0].mxu0
    %v10748 = vadd.f32 %v10657, %v10747
    %v10749 = vpop.f32.mrb[0].mxu0
    %10750 = vmatprep.mubr.f32.mxu0 0.0
    %v10751 = vand.u32 %v10308, 4294901760
    %10752 = vmatmul.mubr.f32.gmra.mrb[0].mxu0 %v10751
    %v10753 = vpop.f32.mrb[0].mxu0
    %v10754 = vadd.f32 %v10665, %v10753
    %v10755 = vpop.f32.mrb[0].mxu0
    %10756 = vdwg.mxu0
    %10757 = vmatprep.subr.mxu0 0.0
    %v10758 = vand.u32 %v10278, 4294901760
    %10759 = vmatpush1.msra.mxu0 %v10758
    %10760 = vmatprep.subr.mxu0 0.0
    %v10761 = vand.u32 %v10279, 4294901760
    %10762 = vmatpush1.msra.mxu0 %v10761
    %10763 = vmatprep.subr.mxu0 0.0
    %v10764 = vand.u32 %v10280, 4294901760
    %10765 = vmatpush1.msra.mxu0 %v10764
    %10766 = vmatprep.subr.mxu0 0.0
    %v10767 = vand.u32 %v10281, 4294901760
    %10768 = vmatpush1.msra.mxu0 %v10767
    %10769 = vmatprep.subr.mxu0 0.0
    %10770 = vmatpush1.msra.mxu0 0.0
    %10771 = vmatprep.subr.mxu0 0.0
    %10772 = vmatpush1.msra.mxu0 0.0
    %10773 = vmatprep.subr.mxu0 0.0
    %10774 = vmatpush1.msra.mxu0 0.0
    %10775 = vmatprep.subr.mxu0 0.0
    %10776 = vmatpush1.msra.mxu0 0.0
    %10777 = vmatprep.subr.mxu0 0.0
    %10778 = vmatpush1.msra.mxu0 0.0
    %10779 = vmatprep.subr.mxu0 0.0
    %10780 = vmatpush1.msra.mxu0 0.0
    %10781 = vmatprep.subr.mxu0 0.0
    %10782 = vmatpush1.msra.mxu0 0.0
    %10783 = vmatprep.subr.mxu0 0.0
    %10784 = vmatpush1.msra.mxu0 0.0
    %10785 = vmatprep.subr.mxu0 0.0
    %10786 = vmatpush1.msra.mxu0 0.0
    %10787 = vmatprep.subr.mxu0 0.0
    %10788 = vmatpush1.msra.mxu0 0.0
    %10789 = vmatprep.subr.mxu0 0.0
    %10790 = vmatpush1.msra.mxu0 0.0
    %10791 = vmatprep.subr.mxu0 0.0
    %10792 = vmatpush1.msra.mxu0 0.0
    %10793 = vmatprep.subr.mxu0 0.0
    %10794 = vmatpush1.msra.mxu0 0.0
    %10795 = vmatprep.subr.mxu0 0.0
    %10796 = vmatpush1.msra.mxu0 0.0
    %10797 = vmatprep.subr.mxu0 0.0
    %10798 = vmatpush1.msra.mxu0 0.0
    %10799 = vmatprep.subr.mxu0 0.0
    %10800 = vmatpush1.msra.mxu0 0.0
    %10801 = vmatprep.subr.mxu0 0.0
    %10802 = vmatpush1.msra.mxu0 0.0
    %10803 = vmatprep.subr.mxu0 0.0
    %10804 = vmatpush1.msra.mxu0 0.0
    %10805 = vmatprep.subr.mxu0 0.0
    %10806 = vmatpush1.msra.mxu0 0.0
    %10807 = vmatprep.subr.mxu0 0.0
    %10808 = vmatpush1.msra.mxu0 0.0
    %10809 = vmatprep.subr.mxu0 0.0
    %10810 = vmatpush1.msra.mxu0 0.0
    %10811 = vmatprep.subr.mxu0 0.0
    %10812 = vmatpush1.msra.mxu0 0.0
    %10813 = vmatprep.subr.mxu0 0.0
    %10814 = vmatpush1.msra.mxu0 0.0
    %10815 = vmatprep.subr.mxu0 0.0
    %10816 = vmatpush1.msra.mxu0 0.0
    %10817 = vmatprep.subr.mxu0 0.0
    %10818 = vmatpush1.msra.mxu0 0.0
    %10819 = vmatprep.subr.mxu0 0.0
    %10820 = vmatpush1.msra.mxu0 0.0
    %10821 = vmatprep.subr.mxu0 0.0
    %10822 = vmatpush1.msra.mxu0 0.0
    %10823 = vmatprep.subr.mxu0 0.0
    %10824 = vmatpush1.msra.mxu0 0.0
    %10825 = vmatprep.mubr.f32.mxu0 0.0
    %v10826 = vand.u32 %v10305, 4294901760
    %10827 = vmatmul.mubr.f32.gmra.mrb[0].mxu0 %v10826
    %v10828 = vpop.f32.mrb[0].mxu0
    %v10829 = vadd.f32 %v10748, %v10828
    %v10830 = vpop.f32.mrb[0].mxu0
    %10831 = vmatprep.mubr.f32.mxu0 0.0
    %v10832 = vand.u32 %v10308, 4294901760
    %10833 = vmatmul.mubr.f32.gmra.mrb[0].mxu0 %v10832
    %v10834 = vpop.f32.mrb[0].mxu0
    %v10835 = vadd.f32 %v10754, %v10834
    %v10836 = vpop.f32.mrb[0].mxu0
    %10837 = vdwg.mxu0
    %v10838 = vmax.f32 %v10829, 0.0
    %v10839 = vmax.f32 %v10835, 0.0
    %v10840 = vlaneseq
    %v10841 = vshrl.u32 %v10840, 7
    %v10842 = vsub.s32 0, %v10841
    %v10843 = vrot.slane %v10299, %v10842
    %10844 = vmatprep.subr.mxu0 0.0
    %v10845 = vand.u32 %v10282, 4294901760
    %10846 = vmatpush1.msra.mxu0 %v10845
    %10847 = vmatprep.subr.mxu0 0.0
    %v10848 = vand.u32 %v10283, 4294901760
    %10849 = vmatpush1.msra.mxu0 %v10848
    %10850 = vmatprep.subr.mxu0 0.0
    %v10851 = vand.u32 %v10284, 4294901760
    %10852 = vmatpush1.msra.mxu0 %v10851
    %10853 = vmatprep.subr.mxu0 0.0
    %v10854 = vand.u32 %v10285, 4294901760
    %10855 = vmatpush1.msra.mxu0 %v10854
    %10856 = vmatprep.subr.mxu0 0.0
    %v10857 = vand.u32 %v10286, 4294901760
    %10858 = vmatpush1.msra.mxu0 %v10857
    %10859 = vmatprep.subr.mxu0 0.0
    %v10860 = vand.u32 %v10287, 4294901760
    %10861 = vmatpush1.msra.mxu0 %v10860
    %10862 = vmatprep.subr.mxu0 0.0
    %v10863 = vand.u32 %v10288, 4294901760
    %10864 = vmatpush1.msra.mxu0 %v10863
    %10865 = vmatprep.subr.mxu0 0.0
    %v10866 = vand.u32 %v10289, 4294901760
    %10867 = vmatpush1.msra.mxu0 %v10866
    %10868 = vmatprep.subr.mxu0 0.0
    %v10869 = vand.u32 %v10290, 4294901760
    %10870 = vmatpush1.msra.mxu0 %v10869
    %10871 = vmatprep.subr.mxu0 0.0
    %v10872 = vand.u32 %v10291, 4294901760
    %10873 = vmatpush1.msra.mxu0 %v10872
    %10874 = vmatprep.subr.mxu0 0.0
    %v10875 = vand.u32 %v10292, 4294901760
    %10876 = vmatpush1.msra.mxu0 %v10875
    %10877 = vmatprep.subr.mxu0 0.0
    %v10878 = vand.u32 %v10293, 4294901760
    %10879 = vmatpush1.msra.mxu0 %v10878
    %10880 = vmatprep.subr.mxu0 0.0
    %v10881 = vand.u32 %v10294, 4294901760
    %10882 = vmatpush1.msra.mxu0 %v10881
    %10883 = vmatprep.subr.mxu0 0.0
    %v10884 = vand.u32 %v10295, 4294901760
    %10885 = vmatpush1.msra.mxu0 %v10884
    %10886 = vmatprep.subr.mxu0 0.0
    %v10887 = vand.u32 %v10296, 4294901760
    %10888 = vmatpush1.msra.mxu0 %v10887
    %10889 = vmatprep.subr.mxu0 0.0
    %v10890 = vand.u32 %v10297, 4294901760
    %10891 = vmatpush1.msra.mxu0 %v10890
    %10892 = vmatprep.subr.mxu0 0.0
    %10893 = vmatpush1.msra.mxu0 0.0
    %10894 = vmatprep.subr.mxu0 0.0
    %10895 = vmatpush1.msra.mxu0 0.0
    %10896 = vmatprep.subr.mxu0 0.0
    %10897 = vmatpush1.msra.mxu0 0.0
    %10898 = vmatprep.subr.mxu0 0.0
    %10899 = vmatpush1.msra.mxu0 0.0
    %10900 = vmatprep.subr.mxu0 0.0
    %10901 = vmatpush1.msra.mxu0 0.0
    %10902 = vmatprep.subr.mxu0 0.0
    %10903 = vmatpush1.msra.mxu0 0.0
    %10904 = vmatprep.subr.mxu0 0.0
    %10905 = vmatpush1.msra.mxu0 0.0
    %10906 = vmatprep.subr.mxu0 0.0
    %10907 = vmatpush1.msra.mxu0 0.0
    %10908 = vmatprep.subr.mxu0 0.0
    %10909 = vmatpush1.msra.mxu0 0.0
    %10910 = vmatprep.subr.mxu0 0.0
    %10911 = vmatpush1.msra.mxu0 0.0
    %10912 = vmatprep.subr.mxu0 0.0
    %10913 = vmatpush1.msra.mxu0 0.0
    %10914 = vmatprep.subr.mxu0 0.0
    %10915 = vmatpush1.msra.mxu0 0.0
    %10916 = vmatprep.subr.mxu0 0.0
    %10917 = vmatpush1.msra.mxu0 0.0
    %10918 = vmatprep.subr.mxu0 0.0
    %10919 = vmatpush1.msra.mxu0 0.0
    %10920 = vmatprep.subr.mxu0 0.0
    %10921 = vmatpush1.msra.mxu0 0.0
    %10922 = vmatprep.subr.mxu0 0.0
    %10923 = vmatpush1.msra.mxu0 0.0
    %10924 = vmatprep.mubr.f32.mxu0 0.0
    %v10925 = vand.u32 %v10838, 4294901760
    %v10926 = vsub.f32 %v10838, %v10925
    %v10927 = vand.u32 %v10926, 4294901760
    %v10928 = vsub.f32 %v10926, %v10927
    %v10929 = vand.u32 %v10928, 4294901760
    %10930 = vmatmul.mubr.f32.gmra.mrb[0].mxu0 %v10929
    %v10931 = vpop.f32.mrb[0].mxu0
    %v10932 = vadd.f32 %v10843, %v10931
    %v10933 = vpop.f32.mrb[0].mxu0
    %10934 = vmatprep.mubr.f32.mxu0 0.0
    %v10935 = vand.u32 %v10839, 4294901760
    %v10936 = vsub.f32 %v10839, %v10935
    %v10937 = vand.u32 %v10936, 4294901760
    %v10938 = vsub.f32 %v10936, %v10937
    %v10939 = vand.u32 %v10938, 4294901760
    %10940 = vmatmul.mubr.f32.gmra.mrb[0].mxu0 %v10939
    %v10941 = vpop.f32.mrb[0].mxu0
    %v10942 = vadd.f32 %v10843, %v10941
    %v10943 = vpop.f32.mrb[0].mxu0
    %10944 = vdwg.mxu0
    %10945 = vmatprep.subr.mxu0 0.0
    %v10946 = vand.u32 %v10282, 4294901760
    %v10947 = vsub.f32 %v10282, %v10946
    %v10948 = vand.u32 %v10947, 4294901760
    %v10949 = vsub.f32 %v10947, %v10948
    %v10950 = vand.u32 %v10949, 4294901760
    %10951 = vmatpush1.msra.mxu0 %v10950
    %10952 = vmatprep.subr.mxu0 0.0
    %v10953 = vand.u32 %v10283, 4294901760
    %v10954 = vsub.f32 %v10283, %v10953
    %v10955 = vand.u32 %v10954, 4294901760
    %v10956 = vsub.f32 %v10954, %v10955
    %v10957 = vand.u32 %v10956, 4294901760
    %10958 = vmatpush1.msra.mxu0 %v10957
    %10959 = vmatprep.subr.mxu0 0.0
    %v10960 = vand.u32 %v10284, 4294901760
    %v10961 = vsub.f32 %v10284, %v10960
    %v10962 = vand.u32 %v10961, 4294901760
    %v10963 = vsub.f32 %v10961, %v10962
    %v10964 = vand.u32 %v10963, 4294901760
    %10965 = vmatpush1.msra.mxu0 %v10964
    %10966 = vmatprep.subr.mxu0 0.0
    %v10967 = vand.u32 %v10285, 4294901760
    %v10968 = vsub.f32 %v10285, %v10967
    %v10969 = vand.u32 %v10968, 4294901760
    %v10970 = vsub.f32 %v10968, %v10969
    %v10971 = vand.u32 %v10970, 4294901760
    %10972 = vmatpush1.msra.mxu0 %v10971
    %10973 = vmatprep.subr.mxu0 0.0
    %v10974 = vand.u32 %v10286, 4294901760
    %v10975 = vsub.f32 %v10286, %v10974
    %v10976 = vand.u32 %v10975, 4294901760
    %v10977 = vsub.f32 %v10975, %v10976
    %v10978 = vand.u32 %v10977, 4294901760
    %10979 = vmatpush1.msra.mxu0 %v10978
    %10980 = vmatprep.subr.mxu0 0.0
    %v10981 = vand.u32 %v10287, 4294901760
    %v10982 = vsub.f32 %v10287, %v10981
    %v10983 = vand.u32 %v10982, 4294901760
    %v10984 = vsub.f32 %v10982, %v10983
    %v10985 = vand.u32 %v10984, 4294901760
    %10986 = vmatpush1.msra.mxu0 %v10985
    %10987 = vmatprep.subr.mxu0 0.0
    %v10988 = vand.u32 %v10288, 4294901760
    %v10989 = vsub.f32 %v10288, %v10988
    %v10990 = vand.u32 %v10989, 4294901760
    %v10991 = vsub.f32 %v10989, %v10990
    %v10992 = vand.u32 %v10991, 4294901760
    %10993 = vmatpush1.msra.mxu0 %v10992
    %10994 = vmatprep.subr.mxu0 0.0
    %v10995 = vand.u32 %v10289, 4294901760
    %v10996 = vsub.f32 %v10289, %v10995
    %v10997 = vand.u32 %v10996, 4294901760
    %v10998 = vsub.f32 %v10996, %v10997
    %v10999 = vand.u32 %v10998, 4294901760
    %11000 = vmatpush1.msra.mxu0 %v10999
    %11001 = vmatprep.subr.mxu0 0.0
    %v11002 = vand.u32 %v10290, 4294901760
    %v11003 = vsub.f32 %v10290, %v11002
    %v11004 = vand.u32 %v11003, 4294901760
    %v11005 = vsub.f32 %v11003, %v11004
    %v11006 = vand.u32 %v11005, 4294901760
    %11007 = vmatpush1.msra.mxu0 %v11006
    %11008 = vmatprep.subr.mxu0 0.0
    %v11009 = vand.u32 %v10291, 4294901760
    %v11010 = vsub.f32 %v10291, %v11009
    %v11011 = vand.u32 %v11010, 4294901760
    %v11012 = vsub.f32 %v11010, %v11011
    %v11013 = vand.u32 %v11012, 4294901760
    %11014 = vmatpush1.msra.mxu0 %v11013
    %11015 = vmatprep.subr.mxu0 0.0
    %v11016 = vand.u32 %v10292, 4294901760
    %v11017 = vsub.f32 %v10292, %v11016
    %v11018 = vand.u32 %v11017, 4294901760
    %v11019 = vsub.f32 %v11017, %v11018
    %v11020 = vand.u32 %v11019, 4294901760
    %11021 = vmatpush1.msra.mxu0 %v11020
    %11022 = vmatprep.subr.mxu0 0.0
    %v11023 = vand.u32 %v10293, 4294901760
    %v11024 = vsub.f32 %v10293, %v11023
    %v11025 = vand.u32 %v11024, 4294901760
    %v11026 = vsub.f32 %v11024, %v11025
    %v11027 = vand.u32 %v11026, 4294901760
    %11028 = vmatpush1.msra.mxu0 %v11027
    %11029 = vmatprep.subr.mxu0 0.0
    %v11030 = vand.u32 %v10294, 4294901760
    %v11031 = vsub.f32 %v10294, %v11030
    %v11032 = vand.u32 %v11031, 4294901760
    %v11033 = vsub.f32 %v11031, %v11032
    %v11034 = vand.u32 %v11033, 4294901760
    %11035 = vmatpush1.msra.mxu0 %v11034
    %11036 = vmatprep.subr.mxu0 0.0
    %v11037 = vand.u32 %v10295, 4294901760
    %v11038 = vsub.f32 %v10295, %v11037
    %v11039 = vand.u32 %v11038, 4294901760
    %v11040 = vsub.f32 %v11038, %v11039
    %v11041 = vand.u32 %v11040, 4294901760
    %11042 = vmatpush1.msra.mxu0 %v11041
    %11043 = vmatprep.subr.mxu0 0.0
    %v11044 = vand.u32 %v10296, 4294901760
    %v11045 = vsub.f32 %v10296, %v11044
    %v11046 = vand.u32 %v11045, 4294901760
    %v11047 = vsub.f32 %v11045, %v11046
    %v11048 = vand.u32 %v11047, 4294901760
    %11049 = vmatpush1.msra.mxu0 %v11048
    %11050 = vmatprep.subr.mxu0 0.0
    %v11051 = vand.u32 %v10297, 4294901760
    %v11052 = vsub.f32 %v10297, %v11051
    %v11053 = vand.u32 %v11052, 4294901760
    %v11054 = vsub.f32 %v11052, %v11053
    %v11055 = vand.u32 %v11054, 4294901760
    %11056 = vmatpush1.msra.mxu0 %v11055
    %11057 = vmatprep.subr.mxu0 0.0
    %11058 = vmatpush1.msra.mxu0 0.0
    %11059 = vmatprep.subr.mxu0 0.0
    %11060 = vmatpush1.msra.mxu0 0.0
    %11061 = vmatprep.subr.mxu0 0.0
    %11062 = vmatpush1.msra.mxu0 0.0
    %11063 = vmatprep.subr.mxu0 0.0
    %11064 = vmatpush1.msra.mxu0 0.0
    %11065 = vmatprep.subr.mxu0 0.0
    %11066 = vmatpush1.msra.mxu0 0.0
    %11067 = vmatprep.subr.mxu0 0.0
    %11068 = vmatpush1.msra.mxu0 0.0
    %11069 = vmatprep.subr.mxu0 0.0
    %11070 = vmatpush1.msra.mxu0 0.0
    %11071 = vmatprep.subr.mxu0 0.0
    %11072 = vmatpush1.msra.mxu0 0.0
    %11073 = vmatprep.subr.mxu0 0.0
    %11074 = vmatpush1.msra.mxu0 0.0
    %11075 = vmatprep.subr.mxu0 0.0
    %11076 = vmatpush1.msra.mxu0 0.0
    %11077 = vmatprep.subr.mxu0 0.0
    %11078 = vmatpush1.msra.mxu0 0.0
    %11079 = vmatprep.subr.mxu0 0.0
    %11080 = vmatpush1.msra.mxu0 0.0
    %11081 = vmatprep.subr.mxu0 0.0
    %11082 = vmatpush1.msra.mxu0 0.0
    %11083 = vmatprep.subr.mxu0 0.0
    %11084 = vmatpush1.msra.mxu0 0.0
    %11085 = vmatprep.subr.mxu0 0.0
    %11086 = vmatpush1.msra.mxu0 0.0
    %11087 = vmatprep.subr.mxu0 0.0
    %11088 = vmatpush1.msra.mxu0 0.0
    %11089 = vmatprep.mubr.f32.mxu0 0.0
    %v11090 = vand.u32 %v10838, 4294901760
    %11091 = vmatmul.mubr.f32.gmra.mrb[0].mxu0 %v11090
    %v11092 = vpop.f32.mrb[0].mxu0
    %v11093 = vadd.f32 %v10932, %v11092
    %v11094 = vpop.f32.mrb[0].mxu0
    %11095 = vmatprep.mubr.f32.mxu0 0.0
    %v11096 = vand.u32 %v10839, 4294901760
    %11097 = vmatmul.mubr.f32.gmra.mrb[0].mxu0 %v11096
    %v11098 = vpop.f32.mrb[0].mxu0
    %v11099 = vadd.f32 %v10942, %v11098
    %v11100 = vpop.f32.mrb[0].mxu0
    %11101 = vdwg.mxu0
    %11102 = vmatprep.subr.mxu0 0.0
    %v11103 = vand.u32 %v10282, 4294901760
    %v11104 = vsub.f32 %v10282, %v11103
    %11105 = vmatpush1.msra.mxu0 %v11104
    %11106 = vmatprep.subr.mxu0 0.0
    %v11107 = vand.u32 %v10283, 4294901760
    %v11108 = vsub.f32 %v10283, %v11107
    %11109 = vmatpush1.msra.mxu0 %v11108
    %11110 = vmatprep.subr.mxu0 0.0
    %v11111 = vand.u32 %v10284, 4294901760
    %v11112 = vsub.f32 %v10284, %v11111
    %11113 = vmatpush1.msra.mxu0 %v11112
    %11114 = vmatprep.subr.mxu0 0.0
    %v11115 = vand.u32 %v10285, 4294901760
    %v11116 = vsub.f32 %v10285, %v11115
    %11117 = vmatpush1.msra.mxu0 %v11116
    %11118 = vmatprep.subr.mxu0 0.0
    %v11119 = vand.u32 %v10286, 4294901760
    %v11120 = vsub.f32 %v10286, %v11119
    %11121 = vmatpush1.msra.mxu0 %v11120
    %11122 = vmatprep.subr.mxu0 0.0
    %v11123 = vand.u32 %v10287, 4294901760
    %v11124 = vsub.f32 %v10287, %v11123
    %11125 = vmatpush1.msra.mxu0 %v11124
    %11126 = vmatprep.subr.mxu0 0.0
    %v11127 = vand.u32 %v10288, 4294901760
    %v11128 = vsub.f32 %v10288, %v11127
    %11129 = vmatpush1.msra.mxu0 %v11128
    %11130 = vmatprep.subr.mxu0 0.0
    %v11131 = vand.u32 %v10289, 4294901760
    %v11132 = vsub.f32 %v10289, %v11131
    %11133 = vmatpush1.msra.mxu0 %v11132
    %11134 = vmatprep.subr.mxu0 0.0
    %v11135 = vand.u32 %v10290, 4294901760
    %v11136 = vsub.f32 %v10290, %v11135
    %11137 = vmatpush1.msra.mxu0 %v11136
    %11138 = vmatprep.subr.mxu0 0.0
    %v11139 = vand.u32 %v10291, 4294901760
    %v11140 = vsub.f32 %v10291, %v11139
    %11141 = vmatpush1.msra.mxu0 %v11140
    %11142 = vmatprep.subr.mxu0 0.0
    %v11143 = vand.u32 %v10292, 4294901760
    %v11144 = vsub.f32 %v10292, %v11143
    %11145 = vmatpush1.msra.mxu0 %v11144
    %11146 = vmatprep.subr.mxu0 0.0
    %v11147 = vand.u32 %v10293, 4294901760
    %v11148 = vsub.f32 %v10293, %v11147
    %11149 = vmatpush1.msra.mxu0 %v11148
    %11150 = vmatprep.subr.mxu0 0.0
    %v11151 = vand.u32 %v10294, 4294901760
    %v11152 = vsub.f32 %v10294, %v11151
    %11153 = vmatpush1.msra.mxu0 %v11152
    %11154 = vmatprep.subr.mxu0 0.0
    %v11155 = vand.u32 %v10295, 4294901760
    %v11156 = vsub.f32 %v10295, %v11155
    %11157 = vmatpush1.msra.mxu0 %v11156
    %11158 = vmatprep.subr.mxu0 0.0
    %v11159 = vand.u32 %v10296, 4294901760
    %v11160 = vsub.f32 %v10296, %v11159
    %11161 = vmatpush1.msra.mxu0 %v11160
    %11162 = vmatprep.subr.mxu0 0.0
    %v11163 = vand.u32 %v10297, 4294901760
    %v11164 = vsub.f32 %v10297, %v11163
    %11165 = vmatpush1.msra.mxu0 %v11164
    %11166 = vmatprep.subr.mxu0 0.0
    %11167 = vmatpush1.msra.mxu0 0.0
    %11168 = vmatprep.subr.mxu0 0.0
    %11169 = vmatpush1.msra.mxu0 0.0
    %11170 = vmatprep.subr.mxu0 0.0
    %11171 = vmatpush1.msra.mxu0 0.0
    %11172 = vmatprep.subr.mxu0 0.0
    %11173 = vmatpush1.msra.mxu0 0.0
    %11174 = vmatprep.subr.mxu0 0.0
    %11175 = vmatpush1.msra.mxu0 0.0
    %11176 = vmatprep.subr.mxu0 0.0
    %11177 = vmatpush1.msra.mxu0 0.0
    %11178 = vmatprep.subr.mxu0 0.0
    %11179 = vmatpush1.msra.mxu0 0.0
    %11180 = vmatprep.subr.mxu0 0.0
    %11181 = vmatpush1.msra.mxu0 0.0
    %11182 = vmatprep.subr.mxu0 0.0
    %11183 = vmatpush1.msra.mxu0 0.0
    %11184 = vmatprep.subr.mxu0 0.0
    %11185 = vmatpush1.msra.mxu0 0.0
    %11186 = vmatprep.subr.mxu0 0.0
    %11187 = vmatpush1.msra.mxu0 0.0
    %11188 = vmatprep.subr.mxu0 0.0
    %11189 = vmatpush1.msra.mxu0 0.0
    %11190 = vmatprep.subr.mxu0 0.0
    %11191 = vmatpush1.msra.mxu0 0.0
    %11192 = vmatprep.subr.mxu0 0.0
    %11193 = vmatpush1.msra.mxu0 0.0
    %11194 = vmatprep.subr.mxu0 0.0
    %11195 = vmatpush1.msra.mxu0 0.0
    %11196 = vmatprep.subr.mxu0 0.0
    %11197 = vmatpush1.msra.mxu0 0.0
    %11198 = vmatprep.mubr.f32.mxu0 0.0
    %v11199 = vand.u32 %v10838, 4294901760
    %v11200 = vsub.f32 %v10838, %v11199
    %11201 = vmatmul.mubr.f32.gmra.mrb[0].mxu0 %v11200
    %v11202 = vpop.f32.mrb[0].mxu0
    %v11203 = vadd.f32 %v11093, %v11202
    %v11204 = vpop.f32.mrb[0].mxu0
    %11205 = vmatprep.mubr.f32.mxu0 0.0
    %v11206 = vand.u32 %v10839, 4294901760
    %v11207 = vsub.f32 %v10839, %v11206
    %11208 = vmatmul.mubr.f32.gmra.mrb[0].mxu0 %v11207
    %v11209 = vpop.f32.mrb[0].mxu0
    %v11210 = vadd.f32 %v11099, %v11209
    %v11211 = vpop.f32.mrb[0].mxu0
    %11212 = vdwg.mxu0
    %11213 = vmatprep.subr.mxu0 0.0
    %v11214 = vand.u32 %v10282, 4294901760
    %11215 = vmatpush1.msra.mxu0 %v11214
    %11216 = vmatprep.subr.mxu0 0.0
    %v11217 = vand.u32 %v10283, 4294901760
    %11218 = vmatpush1.msra.mxu0 %v11217
    %11219 = vmatprep.subr.mxu0 0.0
    %v11220 = vand.u32 %v10284, 4294901760
    %11221 = vmatpush1.msra.mxu0 %v11220
    %11222 = vmatprep.subr.mxu0 0.0
    %v11223 = vand.u32 %v10285, 4294901760
    %11224 = vmatpush1.msra.mxu0 %v11223
    %11225 = vmatprep.subr.mxu0 0.0
    %v11226 = vand.u32 %v10286, 4294901760
    %11227 = vmatpush1.msra.mxu0 %v11226
    %11228 = vmatprep.subr.mxu0 0.0
    %v11229 = vand.u32 %v10287, 4294901760
    %11230 = vmatpush1.msra.mxu0 %v11229
    %11231 = vmatprep.subr.mxu0 0.0
    %v11232 = vand.u32 %v10288, 4294901760
    %11233 = vmatpush1.msra.mxu0 %v11232
    %11234 = vmatprep.subr.mxu0 0.0
    %v11235 = vand.u32 %v10289, 4294901760
    %11236 = vmatpush1.msra.mxu0 %v11235
    %11237 = vmatprep.subr.mxu0 0.0
    %v11238 = vand.u32 %v10290, 4294901760
    %11239 = vmatpush1.msra.mxu0 %v11238
    %11240 = vmatprep.subr.mxu0 0.0
    %v11241 = vand.u32 %v10291, 4294901760
    %11242 = vmatpush1.msra.mxu0 %v11241
    %11243 = vmatprep.subr.mxu0 0.0
    %v11244 = vand.u32 %v10292, 4294901760
    %11245 = vmatpush1.msra.mxu0 %v11244
    %11246 = vmatprep.subr.mxu0 0.0
    %v11247 = vand.u32 %v10293, 4294901760
    %11248 = vmatpush1.msra.mxu0 %v11247
    %11249 = vmatprep.subr.mxu0 0.0
    %v11250 = vand.u32 %v10294, 4294901760
    %11251 = vmatpush1.msra.mxu0 %v11250
    %11252 = vmatprep.subr.mxu0 0.0
    %v11253 = vand.u32 %v10295, 4294901760
    %11254 = vmatpush1.msra.mxu0 %v11253
    %11255 = vmatprep.subr.mxu0 0.0
    %v11256 = vand.u32 %v10296, 4294901760
    %11257 = vmatpush1.msra.mxu0 %v11256
    %11258 = vmatprep.subr.mxu0 0.0
    %v11259 = vand.u32 %v10297, 4294901760
    %11260 = vmatpush1.msra.mxu0 %v11259
    %11261 = vmatprep.subr.mxu0 0.0
    %11262 = vmatpush1.msra.mxu0 0.0
    %11263 = vmatprep.subr.mxu0 0.0
    %11264 = vmatpush1.msra.mxu0 0.0
    %11265 = vmatprep.subr.mxu0 0.0
    %11266 = vmatpush1.msra.mxu0 0.0
    %11267 = vmatprep.subr.mxu0 0.0
    %11268 = vmatpush1.msra.mxu0 0.0
    %11269 = vmatprep.subr.mxu0 0.0
    %11270 = vmatpush1.msra.mxu0 0.0
    %11271 = vmatprep.subr.mxu0 0.0
    %11272 = vmatpush1.msra.mxu0 0.0
    %11273 = vmatprep.subr.mxu0 0.0
    %11274 = vmatpush1.msra.mxu0 0.0
    %11275 = vmatprep.subr.mxu0 0.0
    %11276 = vmatpush1.msra.mxu0 0.0
    %11277 = vmatprep.subr.mxu0 0.0
    %11278 = vmatpush1.msra.mxu0 0.0
    %11279 = vmatprep.subr.mxu0 0.0
    %11280 = vmatpush1.msra.mxu0 0.0
    %11281 = vmatprep.subr.mxu0 0.0
    %11282 = vmatpush1.msra.mxu0 0.0
    %11283 = vmatprep.subr.mxu0 0.0
    %11284 = vmatpush1.msra.mxu0 0.0
    %11285 = vmatprep.subr.mxu0 0.0
    %11286 = vmatpush1.msra.mxu0 0.0
    %11287 = vmatprep.subr.mxu0 0.0
    %11288 = vmatpush1.msra.mxu0 0.0
    %11289 = vmatprep.subr.mxu0 0.0
    %11290 = vmatpush1.msra.mxu0 0.0
    %11291 = vmatprep.subr.mxu0 0.0
    %11292 = vmatpush1.msra.mxu0 0.0
    %11293 = vmatprep.mubr.f32.mxu0 0.0
    %v11294 = vand.u32 %v10838, 4294901760
    %v11295 = vsub.f32 %v10838, %v11294
    %v11296 = vand.u32 %v11295, 4294901760
    %11297 = vmatmul.mubr.f32.gmra.mrb[0].mxu0 %v11296
    %v11298 = vpop.f32.mrb[0].mxu0
    %v11299 = vadd.f32 %v11203, %v11298
    %v11300 = vpop.f32.mrb[0].mxu0
    %11301 = vmatprep.mubr.f32.mxu0 0.0
    %v11302 = vand.u32 %v10839, 4294901760
    %v11303 = vsub.f32 %v10839, %v11302
    %v11304 = vand.u32 %v11303, 4294901760
    %11305 = vmatmul.mubr.f32.gmra.mrb[0].mxu0 %v11304
    %v11306 = vpop.f32.mrb[0].mxu0
    %v11307 = vadd.f32 %v11210, %v11306
    %v11308 = vpop.f32.mrb[0].mxu0
    %11309 = vdwg.mxu0
    %11310 = vmatprep.subr.mxu0 0.0
    %v11311 = vand.u32 %v10282, 4294901760
    %v11312 = vsub.f32 %v10282, %v11311
    %v11313 = vand.u32 %v11312, 4294901760
    %11314 = vmatpush1.msra.mxu0 %v11313
    %11315 = vmatprep.subr.mxu0 0.0
    %v11316 = vand.u32 %v10283, 4294901760
    %v11317 = vsub.f32 %v10283, %v11316
    %v11318 = vand.u32 %v11317, 4294901760
    %11319 = vmatpush1.msra.mxu0 %v11318
    %11320 = vmatprep.subr.mxu0 0.0
    %v11321 = vand.u32 %v10284, 4294901760
    %v11322 = vsub.f32 %v10284, %v11321
    %v11323 = vand.u32 %v11322, 4294901760
    %11324 = vmatpush1.msra.mxu0 %v11323
    %11325 = vmatprep.subr.mxu0 0.0
    %v11326 = vand.u32 %v10285, 4294901760
    %v11327 = vsub.f32 %v10285, %v11326
    %v11328 = vand.u32 %v11327, 4294901760
    %11329 = vmatpush1.msra.mxu0 %v11328
    %11330 = vmatprep.subr.mxu0 0.0
    %v11331 = vand.u32 %v10286, 4294901760
    %v11332 = vsub.f32 %v10286, %v11331
    %v11333 = vand.u32 %v11332, 4294901760
    %11334 = vmatpush1.msra.mxu0 %v11333
    %11335 = vmatprep.subr.mxu0 0.0
    %v11336 = vand.u32 %v10287, 4294901760
    %v11337 = vsub.f32 %v10287, %v11336
    %v11338 = vand.u32 %v11337, 4294901760
    %11339 = vmatpush1.msra.mxu0 %v11338
    %11340 = vmatprep.subr.mxu0 0.0
    %v11341 = vand.u32 %v10288, 4294901760
    %v11342 = vsub.f32 %v10288, %v11341
    %v11343 = vand.u32 %v11342, 4294901760
    %11344 = vmatpush1.msra.mxu0 %v11343
    %11345 = vmatprep.subr.mxu0 0.0
    %v11346 = vand.u32 %v10289, 4294901760
    %v11347 = vsub.f32 %v10289, %v11346
    %v11348 = vand.u32 %v11347, 4294901760
    %11349 = vmatpush1.msra.mxu0 %v11348
    %11350 = vmatprep.subr.mxu0 0.0
    %v11351 = vand.u32 %v10290, 4294901760
    %v11352 = vsub.f32 %v10290, %v11351
    %v11353 = vand.u32 %v11352, 4294901760
    %11354 = vmatpush1.msra.mxu0 %v11353
    %11355 = vmatprep.subr.mxu0 0.0
    %v11356 = vand.u32 %v10291, 4294901760
    %v11357 = vsub.f32 %v10291, %v11356
    %v11358 = vand.u32 %v11357, 4294901760
    %11359 = vmatpush1.msra.mxu0 %v11358
    %11360 = vmatprep.subr.mxu0 0.0
    %v11361 = vand.u32 %v10292, 4294901760
    %v11362 = vsub.f32 %v10292, %v11361
    %v11363 = vand.u32 %v11362, 4294901760
    %11364 = vmatpush1.msra.mxu0 %v11363
    %11365 = vmatprep.subr.mxu0 0.0
    %v11366 = vand.u32 %v10293, 4294901760
    %v11367 = vsub.f32 %v10293, %v11366
    %v11368 = vand.u32 %v11367, 4294901760
    %11369 = vmatpush1.msra.mxu0 %v11368
    %11370 = vmatprep.subr.mxu0 0.0
    %v11371 = vand.u32 %v10294, 4294901760
    %v11372 = vsub.f32 %v10294, %v11371
    %v11373 = vand.u32 %v11372, 4294901760
    %11374 = vmatpush1.msra.mxu0 %v11373
    %11375 = vmatprep.subr.mxu0 0.0
    %v11376 = vand.u32 %v10295, 4294901760
    %v11377 = vsub.f32 %v10295, %v11376
    %v11378 = vand.u32 %v11377, 4294901760
    %11379 = vmatpush1.msra.mxu0 %v11378
    %11380 = vmatprep.subr.mxu0 0.0
    %v11381 = vand.u32 %v10296, 4294901760
    %v11382 = vsub.f32 %v10296, %v11381
    %v11383 = vand.u32 %v11382, 4294901760
    %11384 = vmatpush1.msra.mxu0 %v11383
    %11385 = vmatprep.subr.mxu0 0.0
    %v11386 = vand.u32 %v10297, 4294901760
    %v11387 = vsub.f32 %v10297, %v11386
    %v11388 = vand.u32 %v11387, 4294901760
    %11389 = vmatpush1.msra.mxu0 %v11388
    %11390 = vmatprep.subr.mxu0 0.0
    %11391 = vmatpush1.msra.mxu0 0.0
    %11392 = vmatprep.subr.mxu0 0.0
    %11393 = vmatpush1.msra.mxu0 0.0
    %11394 = vmatprep.subr.mxu0 0.0
    %11395 = vmatpush1.msra.mxu0 0.0
    %11396 = vmatprep.subr.mxu0 0.0
    %11397 = vmatpush1.msra.mxu0 0.0
    %11398 = vmatprep.subr.mxu0 0.0
    %11399 = vmatpush1.msra.mxu0 0.0
    %11400 = vmatprep.subr.mxu0 0.0
    %11401 = vmatpush1.msra.mxu0 0.0
    %11402 = vmatprep.subr.mxu0 0.0
    %11403 = vmatpush1.msra.mxu0 0.0
    %11404 = vmatprep.subr.mxu0 0.0
    %11405 = vmatpush1.msra.mxu0 0.0
    %11406 = vmatprep.subr.mxu0 0.0
    %11407 = vmatpush1.msra.mxu0 0.0
    %11408 = vmatprep.subr.mxu0 0.0
    %11409 = vmatpush1.msra.mxu0 0.0
    %11410 = vmatprep.subr.mxu0 0.0
    %11411 = vmatpush1.msra.mxu0 0.0
    %11412 = vmatprep.subr.mxu0 0.0
    %11413 = vmatpush1.msra.mxu0 0.0
    %11414 = vmatprep.subr.mxu0 0.0
    %11415 = vmatpush1.msra.mxu0 0.0
    %11416 = vmatprep.subr.mxu0 0.0
    %11417 = vmatpush1.msra.mxu0 0.0
    %11418 = vmatprep.subr.mxu0 0.0
    %11419 = vmatpush1.msra.mxu0 0.0
    %11420 = vmatprep.subr.mxu0 0.0
    %11421 = vmatpush1.msra.mxu0 0.0
    %11422 = vmatprep.mubr.f32.mxu0 0.0
    %v11423 = vand.u32 %v10838, 4294901760
    %11424 = vmatmul.mubr.f32.gmra.mrb[0].mxu0 %v11423
    %v11425 = vpop.f32.mrb[0].mxu0
    %v11426 = vadd.f32 %v11299, %v11425
    %v11427 = vpop.f32.mrb[0].mxu0
    %11428 = vmatprep.mubr.f32.mxu0 0.0
    %v11429 = vand.u32 %v10839, 4294901760
    %11430 = vmatmul.mubr.f32.gmra.mrb[0].mxu0 %v11429
    %v11431 = vpop.f32.mrb[0].mxu0
    %v11432 = vadd.f32 %v11307, %v11431
    %v11433 = vpop.f32.mrb[0].mxu0
    %11434 = vdwg.mxu0
    %11435 = vmatprep.subr.mxu0 0.0
    %v11436 = vand.u32 %v10282, 4294901760
    %11437 = vmatpush1.msra.mxu0 %v11436
    %11438 = vmatprep.subr.mxu0 0.0
    %v11439 = vand.u32 %v10283, 4294901760
    %11440 = vmatpush1.msra.mxu0 %v11439
    %11441 = vmatprep.subr.mxu0 0.0
    %v11442 = vand.u32 %v10284, 4294901760
    %11443 = vmatpush1.msra.mxu0 %v11442
    %11444 = vmatprep.subr.mxu0 0.0
    %v11445 = vand.u32 %v10285, 4294901760
    %11446 = vmatpush1.msra.mxu0 %v11445
    %11447 = vmatprep.subr.mxu0 0.0
    %v11448 = vand.u32 %v10286, 4294901760
    %11449 = vmatpush1.msra.mxu0 %v11448
    %11450 = vmatprep.subr.mxu0 0.0
    %v11451 = vand.u32 %v10287, 4294901760
    %11452 = vmatpush1.msra.mxu0 %v11451
    %11453 = vmatprep.subr.mxu0 0.0
    %v11454 = vand.u32 %v10288, 4294901760
    %11455 = vmatpush1.msra.mxu0 %v11454
    %11456 = vmatprep.subr.mxu0 0.0
    %v11457 = vand.u32 %v10289, 4294901760
    %11458 = vmatpush1.msra.mxu0 %v11457
    %11459 = vmatprep.subr.mxu0 0.0
    %v11460 = vand.u32 %v10290, 4294901760
    %11461 = vmatpush1.msra.mxu0 %v11460
    %11462 = vmatprep.subr.mxu0 0.0
    %v11463 = vand.u32 %v10291, 4294901760
    %11464 = vmatpush1.msra.mxu0 %v11463
    %11465 = vmatprep.subr.mxu0 0.0
    %v11466 = vand.u32 %v10292, 4294901760
    %11467 = vmatpush1.msra.mxu0 %v11466
    %11468 = vmatprep.subr.mxu0 0.0
    %v11469 = vand.u32 %v10293, 4294901760
    %11470 = vmatpush1.msra.mxu0 %v11469
    %11471 = vmatprep.subr.mxu0 0.0
    %v11472 = vand.u32 %v10294, 4294901760
    %11473 = vmatpush1.msra.mxu0 %v11472
    %11474 = vmatprep.subr.mxu0 0.0
    %v11475 = vand.u32 %v10295, 4294901760
    %11476 = vmatpush1.msra.mxu0 %v11475
    %11477 = vmatprep.subr.mxu0 0.0
    %v11478 = vand.u32 %v10296, 4294901760
    %11479 = vmatpush1.msra.mxu0 %v11478
    %11480 = vmatprep.subr.mxu0 0.0
    %v11481 = vand.u32 %v10297, 4294901760
    %11482 = vmatpush1.msra.mxu0 %v11481
    %11483 = vmatprep.subr.mxu0 0.0
    %11484 = vmatpush1.msra.mxu0 0.0
    %11485 = vmatprep.subr.mxu0 0.0
    %11486 = vmatpush1.msra.mxu0 0.0
    %11487 = vmatprep.subr.mxu0 0.0
    %11488 = vmatpush1.msra.mxu0 0.0
    %11489 = vmatprep.subr.mxu0 0.0
    %11490 = vmatpush1.msra.mxu0 0.0
    %11491 = vmatprep.subr.mxu0 0.0
    %11492 = vmatpush1.msra.mxu0 0.0
    %11493 = vmatprep.subr.mxu0 0.0
    %11494 = vmatpush1.msra.mxu0 0.0
    %11495 = vmatprep.subr.mxu0 0.0
    %11496 = vmatpush1.msra.mxu0 0.0
    %11497 = vmatprep.subr.mxu0 0.0
    %11498 = vmatpush1.msra.mxu0 0.0
    %11499 = vmatprep.subr.mxu0 0.0
    %11500 = vmatpush1.msra.mxu0 0.0
    %11501 = vmatprep.subr.mxu0 0.0
    %11502 = vmatpush1.msra.mxu0 0.0
    %11503 = vmatprep.subr.mxu0 0.0
    %11504 = vmatpush1.msra.mxu0 0.0
    %11505 = vmatprep.subr.mxu0 0.0
    %11506 = vmatpush1.msra.mxu0 0.0
    %11507 = vmatprep.subr.mxu0 0.0
    %11508 = vmatpush1.msra.mxu0 0.0
    %11509 = vmatprep.subr.mxu0 0.0
    %11510 = vmatpush1.msra.mxu0 0.0
    %11511 = vmatprep.subr.mxu0 0.0
    %11512 = vmatpush1.msra.mxu0 0.0
    %11513 = vmatprep.subr.mxu0 0.0
    %11514 = vmatpush1.msra.mxu0 0.0
    %11515 = vmatprep.mubr.f32.mxu0 0.0
    %v11516 = vand.u32 %v10838, 4294901760
    %11517 = vmatmul.mubr.f32.gmra.mrb[0].mxu0 %v11516
    %v11518 = vpop.f32.mrb[0].mxu0
    %v11519 = vadd.f32 %v11426, %v11518
    %v11520 = vpop.f32.mrb[0].mxu0
    %11521 = vmatprep.mubr.f32.mxu0 0.0
    %v11522 = vand.u32 %v10839, 4294901760
    %11523 = vmatmul.mubr.f32.gmra.mrb[0].mxu0 %v11522
    %v11524 = vpop.f32.mrb[0].mxu0
    %v11525 = vadd.f32 %v11432, %v11524
    %v11526 = vpop.f32.mrb[0].mxu0
    %11527 = vdwg.mxu0
    %11528 = vst [vmem:[%s7] sm:$0xff] %v11519
    %11529 = vst [vmem:[%s7 + $0x8] sm:$0xff] %v11525
    // Predicated region
    $region38: #{saint_forward.1} parent=1 // pred_check
      _
    $region39: #{saint_forward.1} parent=1 // pred_check_branch
      %11531 = sbr.rel (0) target = $region41
    $region40: #{saint_forward.1} parent=1 // pred_region
      _
    $region41: #{saint_forward.1} parent=1 // pred_fallthru
      _
    // Predicated region
    $region42: #{saint_forward.1} parent=1 // pred_check
      _
    $region43: #{saint_forward.1} parent=1 // pred_check_branch
      %11533 = sbr.rel (0) target = $region45
    $region44: #{saint_forward.1} parent=1 // pred_region
      _
    $region45: #{saint_forward.1} parent=1 // pred_fallthru
      _
    %11534 = vsyncpa [#allocation3], 1
    %11535 = vsyncpa [#allocation5], 1

</llo_original>
